<compile_context>
chip_gen: v7x
topology: tpu7x:2x2x1
jax: 0.10.0
libtpu: 0.0.40
codegen_flags: <defaults>
</compile_context>

<pallas_src>
import functools

import jax
import jax.numpy as jnp
from jax import lax
from jax.experimental import pallas as pl
from jax.experimental.pallas import tpu as pltpu


def _round_up(x, m):
    return ((x + m - 1) // m) * m


def _icfa_lstm_kernel(x_ref, w_in_ref, b_in_ref, w_hh_ref, w_d_ref, b_d_ref,
                      out_ref, gates_scr, h_all_scr, *, mh, unroll):
    """One grid step = full recurrence for one block of batch rows.

    Per-block layouts (time-major, lane-dense):
      x_ref    : (T, Bb, M*F)       arctan-normalized input
      w_in_ref : (M*F, 4*M*H)       assoc folded into input proj, cols (gate,m,h)
      b_in_ref : (1, 4*M*H)
      w_hh_ref : (M*H, 4*M*H)       block-diagonal hidden->gates
      w_d_ref  : (M*H, MO_pad)      block-diagonal per-map-unit dense (padded)
      b_d_ref  : (1, MO_pad)
      out_ref  : (T, Bb, MO_pad)
      gates_scr: (T, Bb, 4*M*H)     precomputed input contribution to gates
      h_all_scr: (T, Bb, M*H)       h_t for every timestep
    Gate column-block order is (i, f, o, g).
    """
    seq_len, bb, mf = x_ref.shape

    # (1) Time-parallel input projection + folded ICFA assoc for ALL
    #     timesteps and batch rows of this block: one tall MXU matmul.
    x2d = x_ref[...].reshape(seq_len * bb, mf)
    g_in = (jnp.dot(x2d.astype(w_in_ref.dtype), w_in_ref[...],
                    preferred_element_type=jnp.float32)
            + b_in_ref[...])                                  # (T*Bb, 4*M*H)
    gates_scr[...] = g_in.reshape(seq_len, bb, 4 * mh)

    # (2) Sequential recurrence.  h/c live in vregs via the fori_loop carry
    #     (no per-step VMEM round-trip); zero-init every grid step, so the
    #     "parallel" batch-block axis cannot leak state between blocks.
    def step(t, carry):
        h, c = carry
        g = gates_scr[t] + jnp.dot(h.astype(w_hh_ref.dtype), w_hh_ref[...],
                                   preferred_element_type=jnp.float32)
        # sigmoid only on the (i, f, o) blocks, tanh only on the g block.
        sg = jax.nn.sigmoid(g[:, :3 * mh])
        gg = jnp.tanh(g[:, 3 * mh:])
        i_g = sg[:, 0 * mh:1 * mh]
        f_g = sg[:, 1 * mh:2 * mh]
        o_g = sg[:, 2 * mh:3 * mh]
        c_new = f_g * c + i_g * gg
        h_new = o_g * jnp.tanh(c_new)
        h_all_scr[t] = h_new
        return h_new, c_new

    h0 = jnp.zeros((bb, mh), jnp.float32)
    c0 = jnp.zeros((bb, mh), jnp.float32)
    lax.fori_loop(0, seq_len, step, (h0, c0), unroll=unroll)

    # (3) Time-parallel output dense for ALL timesteps, one lane-dense store.
    h2d = h_all_scr[...].reshape(seq_len * bb, mh)
    out = (jnp.dot(h2d.astype(w_d_ref.dtype), w_d_ref[...],
                   preferred_element_type=jnp.float32)
           + b_d_ref[...])                                    # (T*Bb, MO_pad)
    out_ref[...] = out.reshape(seq_len, bb, -1).astype(out_ref.dtype)


def _build_fused_weights(params, *, map_units, in_features, hidden_units,
                         out_features, out_pad, use_assoc, mxu_dtype):
    """Fold assoc into W_ih, block-diagonalize per-map-unit weights, and
    reorder gate blocks from torch (i,f,g,o) to kernel (i,f,o,g)."""
    M, F, H, O = map_units, in_features, hidden_units, out_features
    perm = jnp.array([0, 1, 3, 2])  # torch (i,f,g,o) -> kernel (i,f,o,g)

    A = (params['A'].astype(jnp.float32) if use_assoc
         else jnp.broadcast_to(jnp.eye(M, dtype=jnp.float32)[:, :, None],
                               (M, M, F)))
    W_ih = params['W_ih'].astype(jnp.float32)
    W_hh = params['W_hh'].astype(jnp.float32)
    b = params['b'].astype(jnp.float32)
    W_d = params['W_d'].astype(jnp.float32)
    b_d = params['b_d'].astype(jnp.float32)

    # C[m, n, f, gate, h] = A[m, n, f] * W_ih[m, f, gate, h]; columns ordered
    # (gate, m, h) so in-kernel gate slices are 128-multiple lane blocks.
    C = (A[:, :, :, None] * W_ih[:, None, :, :]).reshape(M, M, F, 4, H)
    C = jnp.take(C, perm, axis=3)
    W_in = jnp.transpose(C, (1, 2, 3, 0, 4)).reshape(M * F, 4 * M * H)
    b_in = jnp.transpose(jnp.take(b.reshape(M, 4, H), perm, axis=1),
                         (1, 0, 2)).reshape(1, 4 * M * H)

    eye = jnp.eye(M, dtype=jnp.float32)
    # Block-diagonal hidden->gates and dense: per-map-unit batched matmuls
    # become single plain 2D MXU matmuls (no in-kernel transposes).
    W_hh_r = jnp.take(W_hh.reshape(M, H, 4, H), perm, axis=2)
    W_hh_big = jnp.einsum('migo,mn->migno', W_hh_r, eye).reshape(M * H,
                                                                 4 * M * H)
    W_d_big = jnp.einsum('mho,mn->mhno', W_d, eye).reshape(M * H, M * O)
    b_d_big = b_d.reshape(1, M * O)
    if out_pad > M * O:  # pad dense columns so the output store is lane-dense
        W_d_big = jnp.pad(W_d_big, ((0, 0), (0, out_pad - M * O)))
        b_d_big = jnp.pad(b_d_big, ((0, 0), (0, out_pad - M * O)))

    return (W_in.astype(mxu_dtype), b_in.astype(jnp.float32),
            W_hh_big.astype(mxu_dtype), W_d_big.astype(mxu_dtype),
            b_d_big.astype(jnp.float32))


def rnn_base_forward(x, params, *, use_assoc=True, batch_first=True,
                     mxu_dtype=jnp.float32, batch_block=None):
    """Pallas implementation of RNNBase.forward (mode='ICFA-LSTM')."""
    if not batch_first:
        x = jnp.transpose(x, (1, 0, 2, 3))            # -> (B, T, M, F)
    B, T, M, F = x.shape
    H = params['W_hh'].shape[1]
    O = params['b_d'].shape[-1]
    MF, MH, MO = M * F, M * H, M * O
    MO_pad = _round_up(MO, 128)

    # Batch block: fills vreg sublanes / MXU rows in the serial recurrence.
    # Either one block covering the (padded) batch, or 8-aligned blocks.
    if batch_block is None:
        batch_block = B if B <= 8 else min(32, _round_up(B, 8))
    Bb = max(1, batch_block)
    if Bb < B and Bb % 8 != 0:
        Bb = _round_up(Bb, 8)
    B_pad = max(Bb, _round_up(B, Bb))
    num_blocks = B_pad // Bb

    # ArcTanNorm to (-1, 1); time-major lane-dense layout (T, B, M*F).
    # TODO(synk): atan has no guaranteed Mosaic lowering, so it stays in the
    # JAX wrapper; allow_input_fusion lets XLA fuse it into the kernel input.
    x_norm = (jnp.arctan(x.astype(jnp.float32)) * (2.0 / jnp.pi)
              ).reshape(B, T, MF)
    x_tm = jnp.transpose(x_norm, (1, 0, 2))           # (T, B, M*F)
    if B_pad != B:
        x_tm = jnp.pad(x_tm, ((0, 0), (0, B_pad - B), (0, 0)))

    W_in, b_in, W_hh_big, W_d_big, b_d_big = _build_fused_weights(
        params, map_units=M, in_features=F, hidden_units=H, out_features=O,
        out_pad=MO_pad, use_assoc=use_assoc, mxu_dtype=mxu_dtype)

    kernel = functools.partial(_icfa_lstm_kernel, mh=MH,
                               unroll=min(T, 8) if T > 0 else 1)

    flops = 2 * B_pad * T * (MF * 4 * MH       # input proj (+assoc)
                             + MH * 4 * MH     # recurrence
                             + MH * MO_pad)    # dense
    cost = pl.CostEstimate(
        flops=int(flops),
        transcendentals=int(B_pad * T * 5 * MH),
        bytes_accessed=int(4 * (B_pad * T * MF + B_pad * T * MO_pad
                                + W_in.size + b_in.size + W_hh_big.size
                                + W_d_big.size + b_d_big.size)))

    out = pl.pallas_call(
        kernel,
        out_shape=jax.ShapeDtypeStruct((T, B_pad, MO_pad), jnp.float32),
        grid=(num_blocks,),                    # independent batch blocks
        in_specs=[
            pl.BlockSpec((T, Bb, MF), lambda b: (0, b, 0)),
            pl.BlockSpec((MF, 4 * MH), lambda b: (0, 0)),
            pl.BlockSpec((1, 4 * MH), lambda b: (0, 0)),
            pl.BlockSpec((MH, 4 * MH), lambda b: (0, 0)),
            pl.BlockSpec((MH, MO_pad), lambda b: (0, 0)),
            pl.BlockSpec((1, MO_pad), lambda b: (0, 0)),
        ],
        out_specs=pl.BlockSpec((T, Bb, MO_pad), lambda b: (0, b, 0)),
        scratch_shapes=[
            pltpu.VMEM((T, Bb, 4 * MH), jnp.float32),  # gates_in for all t
            pltpu.VMEM((T, Bb, MH), jnp.float32),      # h_t for all t
        ],
        compiler_params=pltpu.CompilerParams(
            # Independent batch blocks -> sharded across v7x's 2 TensorCores;
            # harmless (sequential) on v5e/v6e.
            dimension_semantics=("parallel",),
            # Allow XLA to fuse the arctan/transpose producer into the
            # activation operand (avoids an extra HBM round-trip for x_norm).
            allow_input_fusion=[True, False, False, False, False, False]),
        cost_estimate=cost,
    )(x_tm, W_in, b_in, W_hh_big, W_d_big, b_d_big)

    out = out[:, :B, :MO].reshape(T, B, M, O)
    if batch_first:
        out = jnp.transpose(out, (1, 0, 2, 3))
    return out


def rnn_base_reference(x, params, *, hidden_units, use_assoc=True,
                       batch_first=True):
    """Pure-JAX reference (mirrors the torch module) for correctness checks."""
    if batch_first:
        x = jnp.transpose(x, (1, 0, 2, 3))
    T, B, M, F = x.shape
    H = hidden_units
    h = jnp.zeros((B, M, H), jnp.float32)
    c = jnp.zeros((B, M, H), jnp.float32)
    outs = []
    for t in range(T):
        y = jnp.arctan(x[t].astype(jnp.float32)) * (2.0 / jnp.pi)
        if use_assoc:
            y = jnp.einsum('mnf,bnf->bmf', params['A'], y)
        gates = (jnp.einsum('bmf,mfg->bmg', y, params['W_ih'])
                 + jnp.einsum('bmh,mhg->bmg', h, params['W_hh'])
                 + params['b'][None])
        i = jax.nn.sigmoid(gates[..., :H])
        f = jax.nn.sigmoid(gates[..., H:2 * H])
        g = jnp.tanh(gates[..., 2 * H:3 * H])
        o = jax.nn.sigmoid(gates[..., 3 * H:])
        c = f * c + i * g
        h = o * jnp.tanh(c)
        outs.append(jnp.einsum('bmh,mho->bmo', h, params['W_d'])
                    + params['b_d'][None])
    out = jnp.stack(outs, 0)
    return jnp.transpose(out, (1, 0, 2, 3)) if batch_first else out


def init_params(key, *, map_units, in_features, hidden_units, out_features):
    """Deterministic synthetic parameter init (uniform, torch-RNN style)."""
    M, F, H, O = map_units, in_features, hidden_units, out_features
    k = 1.0 / jnp.sqrt(jnp.float32(H))
    ks = jax.random.split(key, 6)
    u = lambda kk, shape, s: jax.random.uniform(kk, shape, jnp.float32, -s, s)
    return {
        'A': u(ks[0], (M, M, F), 1.0 / M),
        'W_ih': u(ks[1], (M, F, 4 * H), k),
        'W_hh': u(ks[2], (M, H, 4 * H), k),
        'b': u(ks[3], (M, 4 * H), k),
        'W_d': u(ks[4], (M, H, O), k),
        'b_d': u(ks[5], (M, O), k),
    }


if __name__ == "__main__":
    # RNNBase(mode='ICFA-LSTM', map_units=8, in_features=16,
    #         hidden_units=32, out_features=8, batch_first=True)
    B, T, M, F, H, O = 2, 8, 8, 16, 32, 8

    key = jax.random.PRNGKey(0)
    kx, kp = jax.random.split(key)
    x = jax.random.normal(kx, (B, T, M, F), jnp.float32) * 3.0
    params = init_params(kp, map_units=M, in_features=F,
                         hidden_units=H, out_features=O)

    fwd = jax.jit(functools.partial(rnn_base_forward, use_assoc=True,
                                    batch_first=True))
    out = jax.block_until_ready(fwd(x, params))
    assert out.shape == (B, T, M, O), out.shape

    ref = rnn_base_reference(x, params, hidden_units=H, use_assoc=True,
                             batch_first=True)
    max_err = float(jnp.max(jnp.abs(out - ref)))
    assert jnp.allclose(out, ref, rtol=1e-4, atol=1e-4), max_err

    print("KERNEL_OK")
</pallas_src>

<mosaic_0001>
module attributes {stable_mosaic.version = 11 : i64} {
  func.func @_icfa_lstm_kernel(%arg0: i32, %arg1: memref<8x2x128xf32, #tpu.memory_space<vmem>>, %arg2: memref<128x1024xf32, #tpu.memory_space<vmem>>, %arg3: memref<1x1024xf32, #tpu.memory_space<vmem>>, %arg4: memref<256x1024xf32, #tpu.memory_space<vmem>>, %arg5: memref<256x128xf32, #tpu.memory_space<vmem>>, %arg6: memref<1x128xf32, #tpu.memory_space<vmem>>, %arg7: memref<8x2x128xf32, #tpu.memory_space<vmem>>, %arg8: memref<8x2x1024xf32, #tpu.memory_space<vmem>>, %arg9: memref<8x2x256xf32, #tpu.memory_space<vmem>>) attributes {dimension_semantics = [#tpu.dimension_semantics<parallel>], iteration_bounds = array<i64: 1>, scalar_prefetch = 0 : i64, scratch_operands = 2 : i64, tpu.core_type = #tpu.core_type<tc>, window_params = [{transform_indices = @transform_0, window_bounds = array<i64: 8, 2, 128>}, {pipeline_mode = #tpu.pipeline_mode<synchronous>, transform_indices = @transform_1, window_bounds = array<i64: 128, 1024>}, {pipeline_mode = #tpu.pipeline_mode<synchronous>, transform_indices = @transform_2, window_bounds = array<i64: 1, 1024>}, {pipeline_mode = #tpu.pipeline_mode<synchronous>, transform_indices = @transform_3, window_bounds = array<i64: 256, 1024>}, {pipeline_mode = #tpu.pipeline_mode<synchronous>, transform_indices = @transform_4, window_bounds = array<i64: 256, 128>}, {pipeline_mode = #tpu.pipeline_mode<synchronous>, transform_indices = @transform_5, window_bounds = array<i64: 1, 128>}, {transform_indices = @transform_6, window_bounds = array<i64: 8, 2, 128>}]} {
    %c0 = arith.constant 0 : index
    %c0_0 = arith.constant 0 : index
    %c0_1 = arith.constant 0 : index
    %0 = vector.load %arg1[%c0, %c0_0, %c0_1] : memref<8x2x128xf32, #tpu.memory_space<vmem>>, vector<8x2x128xf32>
    %1 = vector.shape_cast %0 : vector<8x2x128xf32> to vector<16x128xf32>
    %c0_2 = arith.constant 0 : index
    %c0_3 = arith.constant 0 : index
    %2 = vector.load %arg2[%c0_2, %c0_3] : memref<128x1024xf32, #tpu.memory_space<vmem>>, vector<128x1024xf32>
    %cst = arith.constant dense<0.000000e+00> : vector<16x1024xf32>
    %3 = tpu.matmul %1, %2, %cst {dimension_numbers = #tpu.dot_dimension_numbers<[1], [0], [0], [1], [0, 0, 1, 1], [], []>} : vector<16x128xf32>, vector<128x1024xf32>, vector<16x1024xf32> -> vector<16x1024xf32>
    %c0_4 = arith.constant 0 : index
    %c0_5 = arith.constant 0 : index
    %4 = vector.load %arg3[%c0_4, %c0_5] : memref<1x1024xf32, #tpu.memory_space<vmem>>, vector<1x1024xf32>
    %5 = vector.broadcast %4 : vector<1x1024xf32> to vector<16x1024xf32>
    %6 = arith.addf %3, %5 : vector<16x1024xf32>
    %7 = vector.shape_cast %6 : vector<16x1024xf32> to vector<8x2x1024xf32>
    %c0_6 = arith.constant 0 : index
    %c0_7 = arith.constant 0 : index
    %c0_8 = arith.constant 0 : index
    %8 = vector.load %arg8[%c0_6, %c0_7, %c0_8] : memref<8x2x1024xf32, #tpu.memory_space<vmem>>, vector<8x2x1024xf32>
    tpu.vector_store %arg8[%c0_6, %c0_7, %c0_8], %7 {strides = array<i32>} : memref<8x2x1024xf32, #tpu.memory_space<vmem>>, vector<8x2x1024xf32>,
    %cst_9 = arith.constant 0.000000e+00 : f32
    %9 = vector.broadcast %cst_9 : f32 to vector<2x256xf32>
    %cst_10 = arith.constant 0.000000e+00 : f32
    %10 = vector.broadcast %cst_10 : f32 to vector<2x256xf32>
    %c0_i32 = arith.constant 0 : i32
    %11 = arith.index_cast %c0_i32 : i32 to index
    %c0_11 = arith.constant 0 : index
    %c0_12 = arith.constant 0 : index
    %12 = vector.load %arg8[%11, %c0_11, %c0_12] : memref<8x2x1024xf32, #tpu.memory_space<vmem>>, vector<1x2x1024xf32>
    %13 = vector.shape_cast %12 : vector<1x2x1024xf32> to vector<2x1024xf32>
    %c0_13 = arith.constant 0 : index
    %c0_14 = arith.constant 0 : index
    %14 = vector.load %arg4[%c0_13, %c0_14] : memref<256x1024xf32, #tpu.memory_space<vmem>>, vector<256x1024xf32>
    %cst_15 = arith.constant dense<0.000000e+00> : vector<2x1024xf32>
    %15 = tpu.matmul %9, %14, %cst_15 {dimension_numbers = #tpu.dot_dimension_numbers<[1], [0], [0], [1], [0, 0, 1, 1], [], []>} : vector<2x256xf32>, vector<256x1024xf32>, vector<2x1024xf32> -> vector<2x1024xf32>
    %16 = arith.addf %13, %15 : vector<2x1024xf32>
    %17 = vector.extract_strided_slice %16 {offsets = [0, 0], sizes = [2, 768], strides = [1, 1]} : vector<2x1024xf32> to vector<2x768xf32>
    %18 = arith.negf %17 : vector<2x768xf32>
    %19 = math.exp %18 : vector<2x768xf32>
    %cst_16 = arith.constant 1.000000e+00 : f32
    %20 = vector.broadcast %cst_16 : f32 to vector<2x768xf32>
    %21 = arith.addf %20, %19 : vector<2x768xf32>
    %22 = arith.divf %20, %21 : vector<2x768xf32>
    %23 = vector.extract_strided_slice %16 {offsets = [0, 768], sizes = [2, 256], strides = [1, 1]} : vector<2x1024xf32> to vector<2x256xf32>
    %24 = math.tanh %23 : vector<2x256xf32>
    %25 = vector.extract_strided_slice %22 {offsets = [0, 0], sizes = [2, 256], strides = [1, 1]} : vector<2x768xf32> to vector<2x256xf32>
    %26 = vector.extract_strided_slice %22 {offsets = [0, 256], sizes = [2, 256], strides = [1, 1]} : vector<2x768xf32> to vector<2x256xf32>
    %27 = vector.extract_strided_slice %22 {offsets = [0, 512], sizes = [2, 256], strides = [1, 1]} : vector<2x768xf32> to vector<2x256xf32>
    %28 = arith.mulf %26, %10 : vector<2x256xf32>
    %29 = arith.mulf %25, %24 : vector<2x256xf32>
    %30 = arith.addf %28, %29 : vector<2x256xf32>
    %31 = math.tanh %30 : vector<2x256xf32>
    %32 = arith.mulf %27, %31 : vector<2x256xf32>
    %33 = arith.index_cast %c0_i32 : i32 to index
    %c0_17 = arith.constant 0 : index
    %c0_18 = arith.constant 0 : index
    %34 = vector.load %arg9[%33, %c0_17, %c0_18] : memref<8x2x256xf32, #tpu.memory_space<vmem>>, vector<1x2x256xf32>
    %35 = vector.shape_cast %34 : vector<1x2x256xf32> to vector<2x256xf32>
    %36 = vector.shape_cast %32 : vector<2x256xf32> to vector<1x2x256xf32>
    tpu.vector_store %arg9[%33, %c0_17, %c0_18], %36 {strides = array<i32>} : memref<8x2x256xf32, #tpu.memory_space<vmem>>, vector<1x2x256xf32>,
    %c1_i32 = arith.constant 1 : i32
    %37 = arith.index_cast %c1_i32 : i32 to index
    %c0_19 = arith.constant 0 : index
    %c0_20 = arith.constant 0 : index
    %38 = vector.load %arg8[%37, %c0_19, %c0_20] : memref<8x2x1024xf32, #tpu.memory_space<vmem>>, vector<1x2x1024xf32>
    %39 = vector.shape_cast %38 : vector<1x2x1024xf32> to vector<2x1024xf32>
    %c0_21 = arith.constant 0 : index
    %c0_22 = arith.constant 0 : index
    %40 = vector.load %arg4[%c0_21, %c0_22] : memref<256x1024xf32, #tpu.memory_space<vmem>>, vector<256x1024xf32>
    %cst_23 = arith.constant dense<0.000000e+00> : vector<2x1024xf32>
    %41 = tpu.matmul %32, %40, %cst_23 {dimension_numbers = #tpu.dot_dimension_numbers<[1], [0], [0], [1], [0, 0, 1, 1], [], []>} : vector<2x256xf32>, vector<256x1024xf32>, vector<2x1024xf32> -> vector<2x1024xf32>
    %42 = arith.addf %39, %41 : vector<2x1024xf32>
    %43 = vector.extract_strided_slice %42 {offsets = [0, 0], sizes = [2, 768], strides = [1, 1]} : vector<2x1024xf32> to vector<2x768xf32>
    %44 = arith.negf %43 : vector<2x768xf32>
    %45 = math.exp %44 : vector<2x768xf32>
    %cst_24 = arith.constant 1.000000e+00 : f32
    %46 = vector.broadcast %cst_24 : f32 to vector<2x768xf32>
    %47 = arith.addf %46, %45 : vector<2x768xf32>
    %48 = arith.divf %46, %47 : vector<2x768xf32>
    %49 = vector.extract_strided_slice %42 {offsets = [0, 768], sizes = [2, 256], strides = [1, 1]} : vector<2x1024xf32> to vector<2x256xf32>
    %50 = math.tanh %49 : vector<2x256xf32>
    %51 = vector.extract_strided_slice %48 {offsets = [0, 0], sizes = [2, 256], strides = [1, 1]} : vector<2x768xf32> to vector<2x256xf32>
    %52 = vector.extract_strided_slice %48 {offsets = [0, 256], sizes = [2, 256], strides = [1, 1]} : vector<2x768xf32> to vector<2x256xf32>
    %53 = vector.extract_strided_slice %48 {offsets = [0, 512], sizes = [2, 256], strides = [1, 1]} : vector<2x768xf32> to vector<2x256xf32>
    %54 = arith.mulf %52, %30 : vector<2x256xf32>
    %55 = arith.mulf %51, %50 : vector<2x256xf32>
    %56 = arith.addf %54, %55 : vector<2x256xf32>
    %57 = math.tanh %56 : vector<2x256xf32>
    %58 = arith.mulf %53, %57 : vector<2x256xf32>
    %59 = arith.index_cast %c1_i32 : i32 to index
    %c0_25 = arith.constant 0 : index
    %c0_26 = arith.constant 0 : index
    %60 = vector.load %arg9[%59, %c0_25, %c0_26] : memref<8x2x256xf32, #tpu.memory_space<vmem>>, vector<1x2x256xf32>
    %61 = vector.shape_cast %60 : vector<1x2x256xf32> to vector<2x256xf32>
    %62 = vector.shape_cast %58 : vector<2x256xf32> to vector<1x2x256xf32>
    tpu.vector_store %arg9[%59, %c0_25, %c0_26], %62 {strides = array<i32>} : memref<8x2x256xf32, #tpu.memory_space<vmem>>, vector<1x2x256xf32>,
    %c2_i32 = arith.constant 2 : i32
    %63 = arith.index_cast %c2_i32 : i32 to index
    %c0_27 = arith.constant 0 : index
    %c0_28 = arith.constant 0 : index
    %64 = vector.load %arg8[%63, %c0_27, %c0_28] : memref<8x2x1024xf32, #tpu.memory_space<vmem>>, vector<1x2x1024xf32>
    %65 = vector.shape_cast %64 : vector<1x2x1024xf32> to vector<2x1024xf32>
    %c0_29 = arith.constant 0 : index
    %c0_30 = arith.constant 0 : index
    %66 = vector.load %arg4[%c0_29, %c0_30] : memref<256x1024xf32, #tpu.memory_space<vmem>>, vector<256x1024xf32>
    %cst_31 = arith.constant dense<0.000000e+00> : vector<2x1024xf32>
    %67 = tpu.matmul %58, %66, %cst_31 {dimension_numbers = #tpu.dot_dimension_numbers<[1], [0], [0], [1], [0, 0, 1, 1], [], []>} : vector<2x256xf32>, vector<256x1024xf32>, vector<2x1024xf32> -> vector<2x1024xf32>
    %68 = arith.addf %65, %67 : vector<2x1024xf32>
    %69 = vector.extract_strided_slice %68 {offsets = [0, 0], sizes = [2, 768], strides = [1, 1]} : vector<2x1024xf32> to vector<2x768xf32>
    %70 = arith.negf %69 : vector<2x768xf32>
    %71 = math.exp %70 : vector<2x768xf32>
    %cst_32 = arith.constant 1.000000e+00 : f32
    %72 = vector.broadcast %cst_32 : f32 to vector<2x768xf32>
    %73 = arith.addf %72, %71 : vector<2x768xf32>
    %74 = arith.divf %72, %73 : vector<2x768xf32>
    %75 = vector.extract_strided_slice %68 {offsets = [0, 768], sizes = [2, 256], strides = [1, 1]} : vector<2x1024xf32> to vector<2x256xf32>
    %76 = math.tanh %75 : vector<2x256xf32>
    %77 = vector.extract_strided_slice %74 {offsets = [0, 0], sizes = [2, 256], strides = [1, 1]} : vector<2x768xf32> to vector<2x256xf32>
    %78 = vector.extract_strided_slice %74 {offsets = [0, 256], sizes = [2, 256], strides = [1, 1]} : vector<2x768xf32> to vector<2x256xf32>
    %79 = vector.extract_strided_slice %74 {offsets = [0, 512], sizes = [2, 256], strides = [1, 1]} : vector<2x768xf32> to vector<2x256xf32>
    %80 = arith.mulf %78, %56 : vector<2x256xf32>
    %81 = arith.mulf %77, %76 : vector<2x256xf32>
    %82 = arith.addf %80, %81 : vector<2x256xf32>
    %83 = math.tanh %82 : vector<2x256xf32>
    %84 = arith.mulf %79, %83 : vector<2x256xf32>
    %85 = arith.index_cast %c2_i32 : i32 to index
    %c0_33 = arith.constant 0 : index
    %c0_34 = arith.constant 0 : index
    %86 = vector.load %arg9[%85, %c0_33, %c0_34] : memref<8x2x256xf32, #tpu.memory_space<vmem>>, vector<1x2x256xf32>
    %87 = vector.shape_cast %86 : vector<1x2x256xf32> to vector<2x256xf32>
    %88 = vector.shape_cast %84 : vector<2x256xf32> to vector<1x2x256xf32>
    tpu.vector_store %arg9[%85, %c0_33, %c0_34], %88 {strides = array<i32>} : memref<8x2x256xf32, #tpu.memory_space<vmem>>, vector<1x2x256xf32>,
    %c3_i32 = arith.constant 3 : i32
    %89 = arith.index_cast %c3_i32 : i32 to index
    %c0_35 = arith.constant 0 : index
    %c0_36 = arith.constant 0 : index
    %90 = vector.load %arg8[%89, %c0_35, %c0_36] : memref<8x2x1024xf32, #tpu.memory_space<vmem>>, vector<1x2x1024xf32>
    %91 = vector.shape_cast %90 : vector<1x2x1024xf32> to vector<2x1024xf32>
    %c0_37 = arith.constant 0 : index
    %c0_38 = arith.constant 0 : index
    %92 = vector.load %arg4[%c0_37, %c0_38] : memref<256x1024xf32, #tpu.memory_space<vmem>>, vector<256x1024xf32>
    %cst_39 = arith.constant dense<0.000000e+00> : vector<2x1024xf32>
    %93 = tpu.matmul %84, %92, %cst_39 {dimension_numbers = #tpu.dot_dimension_numbers<[1], [0], [0], [1], [0, 0, 1, 1], [], []>} : vector<2x256xf32>, vector<256x1024xf32>, vector<2x1024xf32> -> vector<2x1024xf32>
    %94 = arith.addf %91, %93 : vector<2x1024xf32>
    %95 = vector.extract_strided_slice %94 {offsets = [0, 0], sizes = [2, 768], strides = [1, 1]} : vector<2x1024xf32> to vector<2x768xf32>
    %96 = arith.negf %95 : vector<2x768xf32>
    %97 = math.exp %96 : vector<2x768xf32>
    %cst_40 = arith.constant 1.000000e+00 : f32
    %98 = vector.broadcast %cst_40 : f32 to vector<2x768xf32>
    %99 = arith.addf %98, %97 : vector<2x768xf32>
    %100 = arith.divf %98, %99 : vector<2x768xf32>
    %101 = vector.extract_strided_slice %94 {offsets = [0, 768], sizes = [2, 256], strides = [1, 1]} : vector<2x1024xf32> to vector<2x256xf32>
    %102 = math.tanh %101 : vector<2x256xf32>
    %103 = vector.extract_strided_slice %100 {offsets = [0, 0], sizes = [2, 256], strides = [1, 1]} : vector<2x768xf32> to vector<2x256xf32>
    %104 = vector.extract_strided_slice %100 {offsets = [0, 256], sizes = [2, 256], strides = [1, 1]} : vector<2x768xf32> to vector<2x256xf32>
    %105 = vector.extract_strided_slice %100 {offsets = [0, 512], sizes = [2, 256], strides = [1, 1]} : vector<2x768xf32> to vector<2x256xf32>
    %106 = arith.mulf %104, %82 : vector<2x256xf32>
    %107 = arith.mulf %103, %102 : vector<2x256xf32>
    %108 = arith.addf %106, %107 : vector<2x256xf32>
    %109 = math.tanh %108 : vector<2x256xf32>
    %110 = arith.mulf %105, %109 : vector<2x256xf32>
    %111 = arith.index_cast %c3_i32 : i32 to index
    %c0_41 = arith.constant 0 : index
    %c0_42 = arith.constant 0 : index
    %112 = vector.load %arg9[%111, %c0_41, %c0_42] : memref<8x2x256xf32, #tpu.memory_space<vmem>>, vector<1x2x256xf32>
    %113 = vector.shape_cast %112 : vector<1x2x256xf32> to vector<2x256xf32>
    %114 = vector.shape_cast %110 : vector<2x256xf32> to vector<1x2x256xf32>
    tpu.vector_store %arg9[%111, %c0_41, %c0_42], %114 {strides = array<i32>} : memref<8x2x256xf32, #tpu.memory_space<vmem>>, vector<1x2x256xf32>,
    %c4_i32 = arith.constant 4 : i32
    %115 = arith.index_cast %c4_i32 : i32 to index
    %c0_43 = arith.constant 0 : index
    %c0_44 = arith.constant 0 : index
    %116 = vector.load %arg8[%115, %c0_43, %c0_44] : memref<8x2x1024xf32, #tpu.memory_space<vmem>>, vector<1x2x1024xf32>
    %117 = vector.shape_cast %116 : vector<1x2x1024xf32> to vector<2x1024xf32>
    %c0_45 = arith.constant 0 : index
    %c0_46 = arith.constant 0 : index
    %118 = vector.load %arg4[%c0_45, %c0_46] : memref<256x1024xf32, #tpu.memory_space<vmem>>, vector<256x1024xf32>
    %cst_47 = arith.constant dense<0.000000e+00> : vector<2x1024xf32>
    %119 = tpu.matmul %110, %118, %cst_47 {dimension_numbers = #tpu.dot_dimension_numbers<[1], [0], [0], [1], [0, 0, 1, 1], [], []>} : vector<2x256xf32>, vector<256x1024xf32>, vector<2x1024xf32> -> vector<2x1024xf32>
    %120 = arith.addf %117, %119 : vector<2x1024xf32>
    %121 = vector.extract_strided_slice %120 {offsets = [0, 0], sizes = [2, 768], strides = [1, 1]} : vector<2x1024xf32> to vector<2x768xf32>
    %122 = arith.negf %121 : vector<2x768xf32>
    %123 = math.exp %122 : vector<2x768xf32>
    %cst_48 = arith.constant 1.000000e+00 : f32
    %124 = vector.broadcast %cst_48 : f32 to vector<2x768xf32>
    %125 = arith.addf %124, %123 : vector<2x768xf32>
    %126 = arith.divf %124, %125 : vector<2x768xf32>
    %127 = vector.extract_strided_slice %120 {offsets = [0, 768], sizes = [2, 256], strides = [1, 1]} : vector<2x1024xf32> to vector<2x256xf32>
    %128 = math.tanh %127 : vector<2x256xf32>
    %129 = vector.extract_strided_slice %126 {offsets = [0, 0], sizes = [2, 256], strides = [1, 1]} : vector<2x768xf32> to vector<2x256xf32>
    %130 = vector.extract_strided_slice %126 {offsets = [0, 256], sizes = [2, 256], strides = [1, 1]} : vector<2x768xf32> to vector<2x256xf32>
    %131 = vector.extract_strided_slice %126 {offsets = [0, 512], sizes = [2, 256], strides = [1, 1]} : vector<2x768xf32> to vector<2x256xf32>
    %132 = arith.mulf %130, %108 : vector<2x256xf32>
    %133 = arith.mulf %129, %128 : vector<2x256xf32>
    %134 = arith.addf %132, %133 : vector<2x256xf32>
    %135 = math.tanh %134 : vector<2x256xf32>
    %136 = arith.mulf %131, %135 : vector<2x256xf32>
    %137 = arith.index_cast %c4_i32 : i32 to index
    %c0_49 = arith.constant 0 : index
    %c0_50 = arith.constant 0 : index
    %138 = vector.load %arg9[%137, %c0_49, %c0_50] : memref<8x2x256xf32, #tpu.memory_space<vmem>>, vector<1x2x256xf32>
    %139 = vector.shape_cast %138 : vector<1x2x256xf32> to vector<2x256xf32>
    %140 = vector.shape_cast %136 : vector<2x256xf32> to vector<1x2x256xf32>
    tpu.vector_store %arg9[%137, %c0_49, %c0_50], %140 {strides = array<i32>} : memref<8x2x256xf32, #tpu.memory_space<vmem>>, vector<1x2x256xf32>,
    %c5_i32 = arith.constant 5 : i32
    %141 = arith.index_cast %c5_i32 : i32 to index
    %c0_51 = arith.constant 0 : index
    %c0_52 = arith.constant 0 : index
    %142 = vector.load %arg8[%141, %c0_51, %c0_52] : memref<8x2x1024xf32, #tpu.memory_space<vmem>>, vector<1x2x1024xf32>
    %143 = vector.shape_cast %142 : vector<1x2x1024xf32> to vector<2x1024xf32>
    %c0_53 = arith.constant 0 : index
    %c0_54 = arith.constant 0 : index
    %144 = vector.load %arg4[%c0_53, %c0_54] : memref<256x1024xf32, #tpu.memory_space<vmem>>, vector<256x1024xf32>
    %cst_55 = arith.constant dense<0.000000e+00> : vector<2x1024xf32>
    %145 = tpu.matmul %136, %144, %cst_55 {dimension_numbers = #tpu.dot_dimension_numbers<[1], [0], [0], [1], [0, 0, 1, 1], [], []>} : vector<2x256xf32>, vector<256x1024xf32>, vector<2x1024xf32> -> vector<2x1024xf32>
    %146 = arith.addf %143, %145 : vector<2x1024xf32>
    %147 = vector.extract_strided_slice %146 {offsets = [0, 0], sizes = [2, 768], strides = [1, 1]} : vector<2x1024xf32> to vector<2x768xf32>
    %148 = arith.negf %147 : vector<2x768xf32>
    %149 = math.exp %148 : vector<2x768xf32>
    %cst_56 = arith.constant 1.000000e+00 : f32
    %150 = vector.broadcast %cst_56 : f32 to vector<2x768xf32>
    %151 = arith.addf %150, %149 : vector<2x768xf32>
    %152 = arith.divf %150, %151 : vector<2x768xf32>
    %153 = vector.extract_strided_slice %146 {offsets = [0, 768], sizes = [2, 256], strides = [1, 1]} : vector<2x1024xf32> to vector<2x256xf32>
    %154 = math.tanh %153 : vector<2x256xf32>
    %155 = vector.extract_strided_slice %152 {offsets = [0, 0], sizes = [2, 256], strides = [1, 1]} : vector<2x768xf32> to vector<2x256xf32>
    %156 = vector.extract_strided_slice %152 {offsets = [0, 256], sizes = [2, 256], strides = [1, 1]} : vector<2x768xf32> to vector<2x256xf32>
    %157 = vector.extract_strided_slice %152 {offsets = [0, 512], sizes = [2, 256], strides = [1, 1]} : vector<2x768xf32> to vector<2x256xf32>
    %158 = arith.mulf %156, %134 : vector<2x256xf32>
    %159 = arith.mulf %155, %154 : vector<2x256xf32>
    %160 = arith.addf %158, %159 : vector<2x256xf32>
    %161 = math.tanh %160 : vector<2x256xf32>
    %162 = arith.mulf %157, %161 : vector<2x256xf32>
    %163 = arith.index_cast %c5_i32 : i32 to index
    %c0_57 = arith.constant 0 : index
    %c0_58 = arith.constant 0 : index
    %164 = vector.load %arg9[%163, %c0_57, %c0_58] : memref<8x2x256xf32, #tpu.memory_space<vmem>>, vector<1x2x256xf32>
    %165 = vector.shape_cast %164 : vector<1x2x256xf32> to vector<2x256xf32>
    %166 = vector.shape_cast %162 : vector<2x256xf32> to vector<1x2x256xf32>
    tpu.vector_store %arg9[%163, %c0_57, %c0_58], %166 {strides = array<i32>} : memref<8x2x256xf32, #tpu.memory_space<vmem>>, vector<1x2x256xf32>,
    %c6_i32 = arith.constant 6 : i32
    %167 = arith.index_cast %c6_i32 : i32 to index
    %c0_59 = arith.constant 0 : index
    %c0_60 = arith.constant 0 : index
    %168 = vector.load %arg8[%167, %c0_59, %c0_60] : memref<8x2x1024xf32, #tpu.memory_space<vmem>>, vector<1x2x1024xf32>
    %169 = vector.shape_cast %168 : vector<1x2x1024xf32> to vector<2x1024xf32>
    %c0_61 = arith.constant 0 : index
    %c0_62 = arith.constant 0 : index
    %170 = vector.load %arg4[%c0_61, %c0_62] : memref<256x1024xf32, #tpu.memory_space<vmem>>, vector<256x1024xf32>
    %cst_63 = arith.constant dense<0.000000e+00> : vector<2x1024xf32>
    %171 = tpu.matmul %162, %170, %cst_63 {dimension_numbers = #tpu.dot_dimension_numbers<[1], [0], [0], [1], [0, 0, 1, 1], [], []>} : vector<2x256xf32>, vector<256x1024xf32>, vector<2x1024xf32> -> vector<2x1024xf32>
    %172 = arith.addf %169, %171 : vector<2x1024xf32>
    %173 = vector.extract_strided_slice %172 {offsets = [0, 0], sizes = [2, 768], strides = [1, 1]} : vector<2x1024xf32> to vector<2x768xf32>
    %174 = arith.negf %173 : vector<2x768xf32>
    %175 = math.exp %174 : vector<2x768xf32>
    %cst_64 = arith.constant 1.000000e+00 : f32
    %176 = vector.broadcast %cst_64 : f32 to vector<2x768xf32>
    %177 = arith.addf %176, %175 : vector<2x768xf32>
    %178 = arith.divf %176, %177 : vector<2x768xf32>
    %179 = vector.extract_strided_slice %172 {offsets = [0, 768], sizes = [2, 256], strides = [1, 1]} : vector<2x1024xf32> to vector<2x256xf32>
    %180 = math.tanh %179 : vector<2x256xf32>
    %181 = vector.extract_strided_slice %178 {offsets = [0, 0], sizes = [2, 256], strides = [1, 1]} : vector<2x768xf32> to vector<2x256xf32>
    %182 = vector.extract_strided_slice %178 {offsets = [0, 256], sizes = [2, 256], strides = [1, 1]} : vector<2x768xf32> to vector<2x256xf32>
    %183 = vector.extract_strided_slice %178 {offsets = [0, 512], sizes = [2, 256], strides = [1, 1]} : vector<2x768xf32> to vector<2x256xf32>
    %184 = arith.mulf %182, %160 : vector<2x256xf32>
    %185 = arith.mulf %181, %180 : vector<2x256xf32>
    %186 = arith.addf %184, %185 : vector<2x256xf32>
    %187 = math.tanh %186 : vector<2x256xf32>
    %188 = arith.mulf %183, %187 : vector<2x256xf32>
    %189 = arith.index_cast %c6_i32 : i32 to index
    %c0_65 = arith.constant 0 : index
    %c0_66 = arith.constant 0 : index
    %190 = vector.load %arg9[%189, %c0_65, %c0_66] : memref<8x2x256xf32, #tpu.memory_space<vmem>>, vector<1x2x256xf32>
    %191 = vector.shape_cast %190 : vector<1x2x256xf32> to vector<2x256xf32>
    %192 = vector.shape_cast %188 : vector<2x256xf32> to vector<1x2x256xf32>
    tpu.vector_store %arg9[%189, %c0_65, %c0_66], %192 {strides = array<i32>} : memref<8x2x256xf32, #tpu.memory_space<vmem>>, vector<1x2x256xf32>,
    %c7_i32 = arith.constant 7 : i32
    %193 = arith.index_cast %c7_i32 : i32 to index
    %c0_67 = arith.constant 0 : index
    %c0_68 = arith.constant 0 : index
    %194 = vector.load %arg8[%193, %c0_67, %c0_68] : memref<8x2x1024xf32, #tpu.memory_space<vmem>>, vector<1x2x1024xf32>
    %195 = vector.shape_cast %194 : vector<1x2x1024xf32> to vector<2x1024xf32>
    %c0_69 = arith.constant 0 : index
    %c0_70 = arith.constant 0 : index
    %196 = vector.load %arg4[%c0_69, %c0_70] : memref<256x1024xf32, #tpu.memory_space<vmem>>, vector<256x1024xf32>
    %cst_71 = arith.constant dense<0.000000e+00> : vector<2x1024xf32>
    %197 = tpu.matmul %188, %196, %cst_71 {dimension_numbers = #tpu.dot_dimension_numbers<[1], [0], [0], [1], [0, 0, 1, 1], [], []>} : vector<2x256xf32>, vector<256x1024xf32>, vector<2x1024xf32> -> vector<2x1024xf32>
    %198 = arith.addf %195, %197 : vector<2x1024xf32>
    %199 = vector.extract_strided_slice %198 {offsets = [0, 0], sizes = [2, 768], strides = [1, 1]} : vector<2x1024xf32> to vector<2x768xf32>
    %200 = arith.negf %199 : vector<2x768xf32>
    %201 = math.exp %200 : vector<2x768xf32>
    %cst_72 = arith.constant 1.000000e+00 : f32
    %202 = vector.broadcast %cst_72 : f32 to vector<2x768xf32>
    %203 = arith.addf %202, %201 : vector<2x768xf32>
    %204 = arith.divf %202, %203 : vector<2x768xf32>
    %205 = vector.extract_strided_slice %198 {offsets = [0, 768], sizes = [2, 256], strides = [1, 1]} : vector<2x1024xf32> to vector<2x256xf32>
    %206 = math.tanh %205 : vector<2x256xf32>
    %207 = vector.extract_strided_slice %204 {offsets = [0, 0], sizes = [2, 256], strides = [1, 1]} : vector<2x768xf32> to vector<2x256xf32>
    %208 = vector.extract_strided_slice %204 {offsets = [0, 256], sizes = [2, 256], strides = [1, 1]} : vector<2x768xf32> to vector<2x256xf32>
    %209 = vector.extract_strided_slice %204 {offsets = [0, 512], sizes = [2, 256], strides = [1, 1]} : vector<2x768xf32> to vector<2x256xf32>
    %210 = arith.mulf %208, %186 : vector<2x256xf32>
    %211 = arith.mulf %207, %206 : vector<2x256xf32>
    %212 = arith.addf %210, %211 : vector<2x256xf32>
    %213 = math.tanh %212 : vector<2x256xf32>
    %214 = arith.mulf %209, %213 : vector<2x256xf32>
    %215 = arith.index_cast %c7_i32 : i32 to index
    %c0_73 = arith.constant 0 : index
    %c0_74 = arith.constant 0 : index
    %216 = vector.load %arg9[%215, %c0_73, %c0_74] : memref<8x2x256xf32, #tpu.memory_space<vmem>>, vector<1x2x256xf32>
    %217 = vector.shape_cast %216 : vector<1x2x256xf32> to vector<2x256xf32>
    %218 = vector.shape_cast %214 : vector<2x256xf32> to vector<1x2x256xf32>
    tpu.vector_store %arg9[%215, %c0_73, %c0_74], %218 {strides = array<i32>} : memref<8x2x256xf32, #tpu.memory_space<vmem>>, vector<1x2x256xf32>,
    %c8_i32 = arith.constant 8 : i32
    %c0_75 = arith.constant 0 : index
    %c0_76 = arith.constant 0 : index
    %c0_77 = arith.constant 0 : index
    %219 = vector.load %arg9[%c0_75, %c0_76, %c0_77] : memref<8x2x256xf32, #tpu.memory_space<vmem>>, vector<8x2x256xf32>
    %220 = vector.shape_cast %219 : vector<8x2x256xf32> to vector<16x256xf32>
    %c0_78 = arith.constant 0 : index
    %c0_79 = arith.constant 0 : index
    %221 = vector.load %arg5[%c0_78, %c0_79] : memref<256x128xf32, #tpu.memory_space<vmem>>, vector<256x128xf32>
    %cst_80 = arith.constant dense<0.000000e+00> : vector<16x128xf32>
    %222 = tpu.matmul %220, %221, %cst_80 {dimension_numbers = #tpu.dot_dimension_numbers<[1], [0], [0], [1], [0, 0, 1, 1], [], []>} : vector<16x256xf32>, vector<256x128xf32>, vector<16x128xf32> -> vector<16x128xf32>
    %c0_81 = arith.constant 0 : index
    %c0_82 = arith.constant 0 : index
    %223 = vector.load %arg6[%c0_81, %c0_82] : memref<1x128xf32, #tpu.memory_space<vmem>>, vector<1x128xf32>
    %224 = vector.broadcast %223 : vector<1x128xf32> to vector<16x128xf32>
    %225 = arith.addf %222, %224 : vector<16x128xf32>
    %226 = vector.shape_cast %225 : vector<16x128xf32> to vector<8x2x128xf32>
    %c0_83 = arith.constant 0 : index
    %c0_84 = arith.constant 0 : index
    %c0_85 = arith.constant 0 : index
    %227 = vector.load %arg7[%c0_83, %c0_84, %c0_85] : memref<8x2x128xf32, #tpu.memory_space<vmem>>, vector<8x2x128xf32>
    tpu.vector_store %arg7[%c0_83, %c0_84, %c0_85], %226 {strides = array<i32>} : memref<8x2x128xf32, #tpu.memory_space<vmem>>, vector<8x2x128xf32>,
    return
  }
  func.func @transform_0(%arg0: i32) -> (i32, i32, i32) {
    %c0_i32 = arith.constant 0 : i32
    %c0_i32_0 = arith.constant 0 : i32
    %c0_i32_1 = arith.constant 0 : i32
    return %c0_i32, %arg0, %c0_i32_0 : i32, i32, i32
  }
  func.func @transform_1(%arg0: i32) -> (i32, i32) {
    %c0_i32 = arith.constant 0 : i32
    %c0_i32_0 = arith.constant 0 : i32
    %c0_i32_1 = arith.constant 0 : i32
    return %c0_i32, %c0_i32_0 : i32, i32
  }
  func.func @transform_2(%arg0: i32) -> (i32, i32) {
    %c0_i32 = arith.constant 0 : i32
    %c0_i32_0 = arith.constant 0 : i32
    %c0_i32_1 = arith.constant 0 : i32
    return %c0_i32, %c0_i32_0 : i32, i32
  }
  func.func @transform_3(%arg0: i32) -> (i32, i32) {
    %c0_i32 = arith.constant 0 : i32
    %c0_i32_0 = arith.constant 0 : i32
    %c0_i32_1 = arith.constant 0 : i32
    return %c0_i32, %c0_i32_0 : i32, i32
  }
  func.func @transform_4(%arg0: i32) -> (i32, i32) {
    %c0_i32 = arith.constant 0 : i32
    %c0_i32_0 = arith.constant 0 : i32
    %c0_i32_1 = arith.constant 0 : i32
    return %c0_i32, %c0_i32_0 : i32, i32
  }
  func.func @transform_5(%arg0: i32) -> (i32, i32) {
    %c0_i32 = arith.constant 0 : i32
    %c0_i32_0 = arith.constant 0 : i32
    %c0_i32_1 = arith.constant 0 : i32
    return %c0_i32, %c0_i32_0 : i32, i32
  }
  func.func @transform_6(%arg0: i32) -> (i32, i32, i32) {
    %c0_i32 = arith.constant 0 : i32
    %c0_i32_0 = arith.constant 0 : i32
    %c0_i32_1 = arith.constant 0 : i32
    return %c0_i32, %arg0, %c0_i32_0 : i32, i32, i32
  }
}

</mosaic_0001>

<llo_original>
// kernel: rnn_base_forward.2
$region0: #{rnn_base_forward.2}
  #allocation0 [shape = 'u32[]', space=smem, size = 0x4, offset = 0x4, fixed_abs, tag = 'smem constant byte address 0x4 - core index']
  #allocation1 [shape = 'u32[144,128]{1,0:T(1,128)}', space=vmem, size = 0x12000, scoped, tag = 'internal scratch']
  #allocation2 [shape = 'f32[8,2,1024]{2,1,0:T(2,128)}', space=vmem, size = 0x10000, scoped, tag = 'scratch operand']
  #allocation3 [shape = 'f32[8,2,256]{2,1,0:T(2,128)}', space=vmem, size = 0x4000, scoped, tag = 'scratch operand']
  %s0 = inlined_call_operand.vmem [shape: f32[128,1024], index: 0, kind: input, shape index: {}]
  %s1 = inlined_call_operand.vmem [shape: f32[1,1024], index: 1, kind: input, shape index: {}]
  %s2 = inlined_call_operand.vmem [shape: f32[256,1024], index: 2, kind: input, shape index: {}]
  %s3 = inlined_call_operand.vmem [shape: f32[256,128], index: 3, kind: input, shape index: {}]
  %s4 = inlined_call_operand.vmem [shape: f32[1,128], index: 4, kind: input, shape index: {}]
  %s5 = inlined_call_operand.vmem [shape: f32[2,8,128], index: 5, kind: input, shape index: {}]
  %s6 = inlined_call_operand.vmem [shape: f32[8,2,128], index: 6, kind: output, shape index: {}]
  %s7 = sld [smem:[#allocation0]]
  $region34: #{rnn_base_forward.2} parent=0
    _
  %s9 = ssub.s32 1, %s7
  %s10 = scalar_select 0, %s9, %s7
  $region1: #{rnn_base_forward.2} parent=0
    #allocation4 [shape = 'u8[8192]{0}', space=vmem, size = 0x2000, dematerialized = true, scoped, tag = 'FusionAdapter Buffer %fusion.1 = f32[8,2,128]{2,1,0:T(2,128)} fusion(%param_5.1), kind=kLoop, calls=%fused_computation.9.clone, metadata={op_name="jit(rnn_base_forward)/transpose" stack_frame_id=9}']
    // Predicated region
    $region2: #{rnn_base_forward.2} parent=1 // pred_check
      _
    $region3: #{rnn_base_forward.2} parent=1 // pred_check_branch
      %12 = sbr.rel (0) target = $region5
    $region4: #{rnn_base_forward.2} parent=1 // pred_region
      _
    $region5: #{rnn_base_forward.2} parent=1 // pred_fallthru
      _
    // Predicated region
    $region6: #{rnn_base_forward.2} parent=1 // pred_check
      _
    $region7: #{rnn_base_forward.2} parent=1 // pred_check_branch
      %14 = sbr.rel (0) target = $region9
    $region8: #{rnn_base_forward.2} parent=1 // pred_region
      _
    $region9: #{rnn_base_forward.2} parent=1 // pred_fallthru
      _
    // Predicated region
    $region10: #{rnn_base_forward.2} parent=1 // pred_check
      _
    $region11: #{rnn_base_forward.2} parent=1 // pred_check_branch
      %16 = sbr.rel (0) target = $region13
    $region12: #{rnn_base_forward.2} parent=1 // pred_region
      _
    $region13: #{rnn_base_forward.2} parent=1 // pred_fallthru
      _
    // Predicated region
    $region14: #{rnn_base_forward.2} parent=1 // pred_check
      _
    $region15: #{rnn_base_forward.2} parent=1 // pred_check_branch
      %18 = sbr.rel (0) target = $region17
    $region16: #{rnn_base_forward.2} parent=1 // pred_region
      _
    $region17: #{rnn_base_forward.2} parent=1 // pred_fallthru
      _
    // Predicated region
    $region18: #{rnn_base_forward.2} parent=1 // pred_check
      _
    $region19: #{rnn_base_forward.2} parent=1 // pred_check_branch
      %20 = sbr.rel (0) target = $region21
    $region20: #{rnn_base_forward.2} parent=1 // pred_region
      _
    $region21: #{rnn_base_forward.2} parent=1 // pred_fallthru
      _
    // Predicated region
    $region22: #{rnn_base_forward.2} parent=1 // pred_check
      _
    $region23: #{rnn_base_forward.2} parent=1 // pred_check_branch
      %22 = sbr.rel (0) target = $region25
    $region24: #{rnn_base_forward.2} parent=1 // pred_region
      _
    $region25: #{rnn_base_forward.2} parent=1 // pred_fallthru
      _
    %v23 = vld [vmem:[%s5] sm:$0x3]
    %25 = vst [vmem:[#allocation4] sm:$0x3] %v23
    %s26 = scalar_lea.vmem %s5, 2
    %v27 = vld [vmem:[%s26] sm:$0x3]
    %s28 = scalar_lea.vmem [#allocation4], 2
    %30 = vst [vmem:[%s28] sm:$0x3] %v27
    %s31 = scalar_lea.vmem %s5, 4
    %v32 = vld [vmem:[%s31] sm:$0x3]
    %s33 = scalar_lea.vmem [#allocation4], 4
    %35 = vst [vmem:[%s33] sm:$0x3] %v32
    %s36 = scalar_lea.vmem %s5, 6
    %v37 = vld [vmem:[%s36] sm:$0x3]
    %s38 = scalar_lea.vmem [#allocation4], 6
    %40 = vst [vmem:[%s38] sm:$0x3] %v37
    %s41 = scalar_lea.vmem %s5, 8
    %v42 = vld [vmem:[%s41] sm:$0x3]
    %s43 = scalar_lea.vmem [#allocation4], 8
    %45 = vst [vmem:[%s43] sm:$0x3] %v42
    %s46 = scalar_lea.vmem %s5, 10
    %v47 = vld [vmem:[%s46] sm:$0x3]
    %s48 = scalar_lea.vmem [#allocation4], 10
    %50 = vst [vmem:[%s48] sm:$0x3] %v47
    %s51 = scalar_lea.vmem %s5, 12
    %v52 = vld [vmem:[%s51] sm:$0x3]
    %s53 = scalar_lea.vmem [#allocation4], 12
    %55 = vst [vmem:[%s53] sm:$0x3] %v52
    %s56 = scalar_lea.vmem %s5, 14
    %v57 = vld [vmem:[%s56] sm:$0x3]
    %s58 = scalar_lea.vmem [#allocation4], 14
    %60 = vst [vmem:[%s58] sm:$0x3] %v57
    %v61 = vld [vmem:[#allocation4] sm:$0x3]
    %v62 = vld [vmem:[#allocation4 + $0x2] sm:$0x3]
    %v63 = vld [vmem:[#allocation4 + $0x4] sm:$0x3]
    %v64 = vld [vmem:[#allocation4 + $0x6] sm:$0x3]
    %v65 = vld [vmem:[#allocation4 + $0x8] sm:$0x3]
    %v66 = vld [vmem:[#allocation4 + $0xa] sm:$0x3]
    %v67 = vld [vmem:[#allocation4 + $0xc] sm:$0x3]
    %v68 = vld [vmem:[#allocation4 + $0xe] sm:$0x3]
    %v69 = vld [vmem:[%s0] sm:$0xff]
    %v70 = vld [vmem:[%s0 + $0x8] sm:$0xff]
    %v71 = vld [vmem:[%s0 + $0x10] sm:$0xff]
    %v72 = vld [vmem:[%s0 + $0x18] sm:$0xff]
    %v73 = vld [vmem:[%s0 + $0x20] sm:$0xff]
    %v74 = vld [vmem:[%s0 + $0x28] sm:$0xff]
    %v75 = vld [vmem:[%s0 + $0x30] sm:$0xff]
    %v76 = vld [vmem:[%s0 + $0x38] sm:$0xff]
    %v77 = vld [vmem:[%s0 + $0x40] sm:$0xff]
    %v78 = vld [vmem:[%s0 + $0x48] sm:$0xff]
    %v79 = vld [vmem:[%s0 + $0x50] sm:$0xff]
    %v80 = vld [vmem:[%s0 + $0x58] sm:$0xff]
    %v81 = vld [vmem:[%s0 + $0x60] sm:$0xff]
    %v82 = vld [vmem:[%s0 + $0x68] sm:$0xff]
    %v83 = vld [vmem:[%s0 + $0x70] sm:$0xff]
    %v84 = vld [vmem:[%s0 + $0x78] sm:$0xff]
    %v85 = vld [vmem:[%s0 + $0x80] sm:$0xff]
    %v86 = vld [vmem:[%s0 + $0x88] sm:$0xff]
    %v87 = vld [vmem:[%s0 + $0x90] sm:$0xff]
    %v88 = vld [vmem:[%s0 + $0x98] sm:$0xff]
    %v89 = vld [vmem:[%s0 + $0xa0] sm:$0xff]
    %v90 = vld [vmem:[%s0 + $0xa8] sm:$0xff]
    %v91 = vld [vmem:[%s0 + $0xb0] sm:$0xff]
    %v92 = vld [vmem:[%s0 + $0xb8] sm:$0xff]
    %v93 = vld [vmem:[%s0 + $0xc0] sm:$0xff]
    %v94 = vld [vmem:[%s0 + $0xc8] sm:$0xff]
    %v95 = vld [vmem:[%s0 + $0xd0] sm:$0xff]
    %v96 = vld [vmem:[%s0 + $0xd8] sm:$0xff]
    %v97 = vld [vmem:[%s0 + $0xe0] sm:$0xff]
    %v98 = vld [vmem:[%s0 + $0xe8] sm:$0xff]
    %v99 = vld [vmem:[%s0 + $0xf0] sm:$0xff]
    %v100 = vld [vmem:[%s0 + $0xf8] sm:$0xff]
    %v101 = vld [vmem:[%s0 + $0x100] sm:$0xff]
    %v102 = vld [vmem:[%s0 + $0x108] sm:$0xff]
    %v103 = vld [vmem:[%s0 + $0x110] sm:$0xff]
    %v104 = vld [vmem:[%s0 + $0x118] sm:$0xff]
    %v105 = vld [vmem:[%s0 + $0x120] sm:$0xff]
    %v106 = vld [vmem:[%s0 + $0x128] sm:$0xff]
    %v107 = vld [vmem:[%s0 + $0x130] sm:$0xff]
    %v108 = vld [vmem:[%s0 + $0x138] sm:$0xff]
    %v109 = vld [vmem:[%s0 + $0x140] sm:$0xff]
    %v110 = vld [vmem:[%s0 + $0x148] sm:$0xff]
    %v111 = vld [vmem:[%s0 + $0x150] sm:$0xff]
    %v112 = vld [vmem:[%s0 + $0x158] sm:$0xff]
    %v113 = vld [vmem:[%s0 + $0x160] sm:$0xff]
    %v114 = vld [vmem:[%s0 + $0x168] sm:$0xff]
    %v115 = vld [vmem:[%s0 + $0x170] sm:$0xff]
    %v116 = vld [vmem:[%s0 + $0x178] sm:$0xff]
    %v117 = vld [vmem:[%s0 + $0x180] sm:$0xff]
    %v118 = vld [vmem:[%s0 + $0x188] sm:$0xff]
    %v119 = vld [vmem:[%s0 + $0x190] sm:$0xff]
    %v120 = vld [vmem:[%s0 + $0x198] sm:$0xff]
    %v121 = vld [vmem:[%s0 + $0x1a0] sm:$0xff]
    %v122 = vld [vmem:[%s0 + $0x1a8] sm:$0xff]
    %v123 = vld [vmem:[%s0 + $0x1b0] sm:$0xff]
    %v124 = vld [vmem:[%s0 + $0x1b8] sm:$0xff]
    %v125 = vld [vmem:[%s0 + $0x1c0] sm:$0xff]
    %v126 = vld [vmem:[%s0 + $0x1c8] sm:$0xff]
    %v127 = vld [vmem:[%s0 + $0x1d0] sm:$0xff]
    %v128 = vld [vmem:[%s0 + $0x1d8] sm:$0xff]
    %v129 = vld [vmem:[%s0 + $0x1e0] sm:$0xff]
    %v130 = vld [vmem:[%s0 + $0x1e8] sm:$0xff]
    %v131 = vld [vmem:[%s0 + $0x1f0] sm:$0xff]
    %v132 = vld [vmem:[%s0 + $0x1f8] sm:$0xff]
    %v133 = vld [vmem:[%s0 + $0x200] sm:$0xff]
    %v134 = vld [vmem:[%s0 + $0x208] sm:$0xff]
    %v135 = vld [vmem:[%s0 + $0x210] sm:$0xff]
    %v136 = vld [vmem:[%s0 + $0x218] sm:$0xff]
    %v137 = vld [vmem:[%s0 + $0x220] sm:$0xff]
    %v138 = vld [vmem:[%s0 + $0x228] sm:$0xff]
    %v139 = vld [vmem:[%s0 + $0x230] sm:$0xff]
    %v140 = vld [vmem:[%s0 + $0x238] sm:$0xff]
    %v141 = vld [vmem:[%s0 + $0x240] sm:$0xff]
    %v142 = vld [vmem:[%s0 + $0x248] sm:$0xff]
    %v143 = vld [vmem:[%s0 + $0x250] sm:$0xff]
    %v144 = vld [vmem:[%s0 + $0x258] sm:$0xff]
    %v145 = vld [vmem:[%s0 + $0x260] sm:$0xff]
    %v146 = vld [vmem:[%s0 + $0x268] sm:$0xff]
    %v147 = vld [vmem:[%s0 + $0x270] sm:$0xff]
    %v148 = vld [vmem:[%s0 + $0x278] sm:$0xff]
    %v149 = vld [vmem:[%s0 + $0x280] sm:$0xff]
    %v150 = vld [vmem:[%s0 + $0x288] sm:$0xff]
    %v151 = vld [vmem:[%s0 + $0x290] sm:$0xff]
    %v152 = vld [vmem:[%s0 + $0x298] sm:$0xff]
    %v153 = vld [vmem:[%s0 + $0x2a0] sm:$0xff]
    %v154 = vld [vmem:[%s0 + $0x2a8] sm:$0xff]
    %v155 = vld [vmem:[%s0 + $0x2b0] sm:$0xff]
    %v156 = vld [vmem:[%s0 + $0x2b8] sm:$0xff]
    %v157 = vld [vmem:[%s0 + $0x2c0] sm:$0xff]
    %v158 = vld [vmem:[%s0 + $0x2c8] sm:$0xff]
    %v159 = vld [vmem:[%s0 + $0x2d0] sm:$0xff]
    %v160 = vld [vmem:[%s0 + $0x2d8] sm:$0xff]
    %v161 = vld [vmem:[%s0 + $0x2e0] sm:$0xff]
    %v162 = vld [vmem:[%s0 + $0x2e8] sm:$0xff]
    %v163 = vld [vmem:[%s0 + $0x2f0] sm:$0xff]
    %v164 = vld [vmem:[%s0 + $0x2f8] sm:$0xff]
    %v165 = vld [vmem:[%s0 + $0x300] sm:$0xff]
    %v166 = vld [vmem:[%s0 + $0x308] sm:$0xff]
    %v167 = vld [vmem:[%s0 + $0x310] sm:$0xff]
    %v168 = vld [vmem:[%s0 + $0x318] sm:$0xff]
    %v169 = vld [vmem:[%s0 + $0x320] sm:$0xff]
    %v170 = vld [vmem:[%s0 + $0x328] sm:$0xff]
    %v171 = vld [vmem:[%s0 + $0x330] sm:$0xff]
    %v172 = vld [vmem:[%s0 + $0x338] sm:$0xff]
    %v173 = vld [vmem:[%s0 + $0x340] sm:$0xff]
    %v174 = vld [vmem:[%s0 + $0x348] sm:$0xff]
    %v175 = vld [vmem:[%s0 + $0x350] sm:$0xff]
    %v176 = vld [vmem:[%s0 + $0x358] sm:$0xff]
    %v177 = vld [vmem:[%s0 + $0x360] sm:$0xff]
    %v178 = vld [vmem:[%s0 + $0x368] sm:$0xff]
    %v179 = vld [vmem:[%s0 + $0x370] sm:$0xff]
    %v180 = vld [vmem:[%s0 + $0x378] sm:$0xff]
    %v181 = vld [vmem:[%s0 + $0x380] sm:$0xff]
    %v182 = vld [vmem:[%s0 + $0x388] sm:$0xff]
    %v183 = vld [vmem:[%s0 + $0x390] sm:$0xff]
    %v184 = vld [vmem:[%s0 + $0x398] sm:$0xff]
    %v185 = vld [vmem:[%s0 + $0x3a0] sm:$0xff]
    %v186 = vld [vmem:[%s0 + $0x3a8] sm:$0xff]
    %v187 = vld [vmem:[%s0 + $0x3b0] sm:$0xff]
    %v188 = vld [vmem:[%s0 + $0x3b8] sm:$0xff]
    %v189 = vld [vmem:[%s0 + $0x3c0] sm:$0xff]
    %v190 = vld [vmem:[%s0 + $0x3c8] sm:$0xff]
    %v191 = vld [vmem:[%s0 + $0x3d0] sm:$0xff]
    %v192 = vld [vmem:[%s0 + $0x3d8] sm:$0xff]
    %v193 = vld [vmem:[%s0 + $0x3e0] sm:$0xff]
    %v194 = vld [vmem:[%s0 + $0x3e8] sm:$0xff]
    %v195 = vld [vmem:[%s0 + $0x3f0] sm:$0xff]
    %v196 = vld [vmem:[%s0 + $0x3f8] sm:$0xff]
    %v197 = vld [vmem:[%s1] sm:$0xff]
    %v199 = vlaneseq
    %v200 = vshrl.u32 %v199, 7
    %v201 = vsub.s32 0, %v200
    %v202 = vrot.slane %v197, %v201
    %v203 = vlaneseq
    %v204 = vshrl.u32 %v203, 7
    %v205 = vsub.s32 1, %v204
    %v206 = vrot.slane %v197, %v205
    %v207 = vlaneseq
    %v208 = vshrl.u32 %v207, 7
    %v209 = vsub.s32 2, %v208
    %v210 = vrot.slane %v197, %v209
    %v211 = vlaneseq
    %v212 = vshrl.u32 %v211, 7
    %v213 = vsub.s32 3, %v212
    %v214 = vrot.slane %v197, %v213
    %v215 = vlaneseq
    %v216 = vshrl.u32 %v215, 7
    %v217 = vsub.s32 4, %v216
    %v218 = vrot.slane %v197, %v217
    %v219 = vlaneseq
    %v220 = vshrl.u32 %v219, 7
    %v221 = vsub.s32 5, %v220
    %v222 = vrot.slane %v197, %v221
    %v223 = vlaneseq
    %v224 = vshrl.u32 %v223, 7
    %v225 = vsub.s32 6, %v224
    %v226 = vrot.slane %v197, %v225
    %v227 = vlaneseq
    %v228 = vshrl.u32 %v227, 7
    %v229 = vsub.s32 7, %v228
    %v230 = vrot.slane %v197, %v229
    %v247 = vcombine.low %v61, %v62
    %v248 = vcombine.low %v63, %v64
    %v250 = vunpack.c.l.s4 1983009808
    %v251 = vunpack.c.0.s8 %v250
    %v252 = vlaneseq
    %v253 = vshrl.u32 %v252, 7
    %v254 = vsub.s32 %v251, %v253
    %v255 = vrot.slane %v247, %v254
    %v257 = vunpack.c.l.s4 1983009808
    %v258 = vunpack.c.0.s8 %v257
    %v259 = vlaneseq
    %v260 = vshrl.u32 %v259, 7
    %v261 = vsub.s32 %v258, %v260
    %v262 = vrot.slane %v248, %v261
    %v263 = vcombine.low %v255, %v262
    %v264 = vcombine.low %v65, %v66
    %v265 = vcombine.low %v67, %v68
    %v267 = vunpack.c.l.s4 1983009808
    %v268 = vunpack.c.0.s8 %v267
    %v269 = vlaneseq
    %v270 = vshrl.u32 %v269, 7
    %v271 = vsub.s32 %v268, %v270
    %v272 = vrot.slane %v264, %v271
    %v274 = vunpack.c.l.s4 1983009808
    %v275 = vunpack.c.0.s8 %v274
    %v276 = vlaneseq
    %v277 = vshrl.u32 %v276, 7
    %v278 = vsub.s32 %v275, %v277
    %v279 = vrot.slane %v265, %v278
    %v280 = vcombine.low %v272, %v279
    %283 = vmatprep.subr.mxu0 %v70
    %284 = vmatpush1.msra.mxu0 %v69
    %285 = vmatprep.subr.mxu0 %v78
    %286 = vmatpush1.msra.mxu0 %v77
    %287 = vmatprep.subr.mxu0 %v86
    %288 = vmatpush1.msra.mxu0 %v85
    %289 = vmatprep.subr.mxu0 %v94
    %290 = vmatpush1.msra.mxu0 %v93
    %291 = vmatprep.subr.mxu0 %v102
    %292 = vmatpush1.msra.mxu0 %v101
    %293 = vmatprep.subr.mxu0 %v110
    %294 = vmatpush1.msra.mxu0 %v109
    %295 = vmatprep.subr.mxu0 %v118
    %296 = vmatpush1.msra.mxu0 %v117
    %297 = vmatprep.subr.mxu0 %v126
    %298 = vmatpush1.msra.mxu0 %v125
    %299 = vmatprep.subr.mxu0 %v134
    %300 = vmatpush1.msra.mxu0 %v133
    %301 = vmatprep.subr.mxu0 %v142
    %302 = vmatpush1.msra.mxu0 %v141
    %303 = vmatprep.subr.mxu0 %v150
    %304 = vmatpush1.msra.mxu0 %v149
    %305 = vmatprep.subr.mxu0 %v158
    %306 = vmatpush1.msra.mxu0 %v157
    %307 = vmatprep.subr.mxu0 %v166
    %308 = vmatpush1.msra.mxu0 %v165
    %309 = vmatprep.subr.mxu0 %v174
    %310 = vmatpush1.msra.mxu0 %v173
    %311 = vmatprep.subr.mxu0 %v182
    %312 = vmatpush1.msra.mxu0 %v181
    %313 = vmatprep.subr.mxu0 %v190
    %314 = vmatpush1.msra.mxu0 %v189
    %315 = vmatprep.subr.mxu0 0.0
    %316 = vmatpush1.msra.mxu0 0.0
    %317 = vmatprep.subr.mxu0 0.0
    %318 = vmatpush1.msra.mxu0 0.0
    %319 = vmatprep.subr.mxu0 0.0
    %320 = vmatpush1.msra.mxu0 0.0
    %321 = vmatprep.subr.mxu0 0.0
    %322 = vmatpush1.msra.mxu0 0.0
    %323 = vmatprep.subr.mxu0 0.0
    %324 = vmatpush1.msra.mxu0 0.0
    %325 = vmatprep.subr.mxu0 0.0
    %326 = vmatpush1.msra.mxu0 0.0
    %327 = vmatprep.subr.mxu0 0.0
    %328 = vmatpush1.msra.mxu0 0.0
    %329 = vmatprep.subr.mxu0 0.0
    %330 = vmatpush1.msra.mxu0 0.0
    %331 = vmatprep.subr.mxu0 0.0
    %332 = vmatpush1.msra.mxu0 0.0
    %333 = vmatprep.subr.mxu0 0.0
    %334 = vmatpush1.msra.mxu0 0.0
    %335 = vmatprep.subr.mxu0 0.0
    %336 = vmatpush1.msra.mxu0 0.0
    %337 = vmatprep.subr.mxu0 0.0
    %338 = vmatpush1.msra.mxu0 0.0
    %339 = vmatprep.subr.mxu0 0.0
    %340 = vmatpush1.msra.mxu0 0.0
    %341 = vmatprep.subr.mxu0 0.0
    %342 = vmatpush1.msra.mxu0 0.0
    %343 = vmatprep.subr.mxu0 0.0
    %344 = vmatpush1.msra.mxu0 0.0
    %345 = vmatprep.subr.mxu0 0.0
    %346 = vmatpush1.msra.mxu0 0.0
    %347 = vmatprep.mubr.f32.mxu0 0.0
    %348 = vmatmul.mubr.f32.gmra.mrb[0].mxu0 %v263
    %v349 = vpop.f32.mrb[0].mxu0
    %v350 = vadd.f32 %v202, %v349
    %v351 = vpop.f32.mrb[0].mxu0
    %v352 = vadd.f32 %v206, %v351
    %353 = vmatprep.mubr.f32.mxu0 0.0
    %354 = vmatmul.mubr.f32.gmra.mrb[0].mxu0 %v280
    %v355 = vpop.f32.mrb[0].mxu0
    %v356 = vadd.f32 %v202, %v355
    %v357 = vpop.f32.mrb[0].mxu0
    %v358 = vadd.f32 %v206, %v357
    %359 = vdwg.mxu0
    %360 = vmatprep.subr.mxu0 %v72
    %361 = vmatpush1.msra.mxu0 %v71
    %362 = vmatprep.subr.mxu0 %v80
    %363 = vmatpush1.msra.mxu0 %v79
    %364 = vmatprep.subr.mxu0 %v88
    %365 = vmatpush1.msra.mxu0 %v87
    %366 = vmatprep.subr.mxu0 %v96
    %367 = vmatpush1.msra.mxu0 %v95
    %368 = vmatprep.subr.mxu0 %v104
    %369 = vmatpush1.msra.mxu0 %v103
    %370 = vmatprep.subr.mxu0 %v112
    %371 = vmatpush1.msra.mxu0 %v111
    %372 = vmatprep.subr.mxu0 %v120
    %373 = vmatpush1.msra.mxu0 %v119
    %374 = vmatprep.subr.mxu0 %v128
    %375 = vmatpush1.msra.mxu0 %v127
    %376 = vmatprep.subr.mxu0 %v136
    %377 = vmatpush1.msra.mxu0 %v135
    %378 = vmatprep.subr.mxu0 %v144
    %379 = vmatpush1.msra.mxu0 %v143
    %380 = vmatprep.subr.mxu0 %v152
    %381 = vmatpush1.msra.mxu0 %v151
    %382 = vmatprep.subr.mxu0 %v160
    %383 = vmatpush1.msra.mxu0 %v159
    %384 = vmatprep.subr.mxu0 %v168
    %385 = vmatpush1.msra.mxu0 %v167
    %386 = vmatprep.subr.mxu0 %v176
    %387 = vmatpush1.msra.mxu0 %v175
    %388 = vmatprep.subr.mxu0 %v184
    %389 = vmatpush1.msra.mxu0 %v183
    %390 = vmatprep.subr.mxu0 %v192
    %391 = vmatpush1.msra.mxu0 %v191
    %392 = vmatprep.subr.mxu0 0.0
    %393 = vmatpush1.msra.mxu0 0.0
    %394 = vmatprep.subr.mxu0 0.0
    %395 = vmatpush1.msra.mxu0 0.0
    %396 = vmatprep.subr.mxu0 0.0
    %397 = vmatpush1.msra.mxu0 0.0
    %398 = vmatprep.subr.mxu0 0.0
    %399 = vmatpush1.msra.mxu0 0.0
    %400 = vmatprep.subr.mxu0 0.0
    %401 = vmatpush1.msra.mxu0 0.0
    %402 = vmatprep.subr.mxu0 0.0
    %403 = vmatpush1.msra.mxu0 0.0
    %404 = vmatprep.subr.mxu0 0.0
    %405 = vmatpush1.msra.mxu0 0.0
    %406 = vmatprep.subr.mxu0 0.0
    %407 = vmatpush1.msra.mxu0 0.0
    %408 = vmatprep.subr.mxu0 0.0
    %409 = vmatpush1.msra.mxu0 0.0
    %410 = vmatprep.subr.mxu0 0.0
    %411 = vmatpush1.msra.mxu0 0.0
    %412 = vmatprep.subr.mxu0 0.0
    %413 = vmatpush1.msra.mxu0 0.0
    %414 = vmatprep.subr.mxu0 0.0
    %415 = vmatpush1.msra.mxu0 0.0
    %416 = vmatprep.subr.mxu0 0.0
    %417 = vmatpush1.msra.mxu0 0.0
    %418 = vmatprep.subr.mxu0 0.0
    %419 = vmatpush1.msra.mxu0 0.0
    %420 = vmatprep.subr.mxu0 0.0
    %421 = vmatpush1.msra.mxu0 0.0
    %422 = vmatprep.subr.mxu0 0.0
    %423 = vmatpush1.msra.mxu0 0.0
    %424 = vmatprep.mubr.f32.mxu0 0.0
    %425 = vmatmul.mubr.f32.gmra.mrb[0].mxu0 %v263
    %v426 = vpop.f32.mrb[0].mxu0
    %v427 = vadd.f32 %v210, %v426
    %v428 = vpop.f32.mrb[0].mxu0
    %v429 = vadd.f32 %v214, %v428
    %430 = vmatprep.mubr.f32.mxu0 0.0
    %431 = vmatmul.mubr.f32.gmra.mrb[0].mxu0 %v280
    %v432 = vpop.f32.mrb[0].mxu0
    %v433 = vadd.f32 %v210, %v432
    %v434 = vpop.f32.mrb[0].mxu0
    %v435 = vadd.f32 %v214, %v434
    %436 = vdwg.mxu0
    %437 = vmatprep.subr.mxu0 %v74
    %438 = vmatpush1.msra.mxu0 %v73
    %439 = vmatprep.subr.mxu0 %v82
    %440 = vmatpush1.msra.mxu0 %v81
    %441 = vmatprep.subr.mxu0 %v90
    %442 = vmatpush1.msra.mxu0 %v89
    %443 = vmatprep.subr.mxu0 %v98
    %444 = vmatpush1.msra.mxu0 %v97
    %445 = vmatprep.subr.mxu0 %v106
    %446 = vmatpush1.msra.mxu0 %v105
    %447 = vmatprep.subr.mxu0 %v114
    %448 = vmatpush1.msra.mxu0 %v113
    %449 = vmatprep.subr.mxu0 %v122
    %450 = vmatpush1.msra.mxu0 %v121
    %451 = vmatprep.subr.mxu0 %v130
    %452 = vmatpush1.msra.mxu0 %v129
    %453 = vmatprep.subr.mxu0 %v138
    %454 = vmatpush1.msra.mxu0 %v137
    %455 = vmatprep.subr.mxu0 %v146
    %456 = vmatpush1.msra.mxu0 %v145
    %457 = vmatprep.subr.mxu0 %v154
    %458 = vmatpush1.msra.mxu0 %v153
    %459 = vmatprep.subr.mxu0 %v162
    %460 = vmatpush1.msra.mxu0 %v161
    %461 = vmatprep.subr.mxu0 %v170
    %462 = vmatpush1.msra.mxu0 %v169
    %463 = vmatprep.subr.mxu0 %v178
    %464 = vmatpush1.msra.mxu0 %v177
    %465 = vmatprep.subr.mxu0 %v186
    %466 = vmatpush1.msra.mxu0 %v185
    %467 = vmatprep.subr.mxu0 %v194
    %468 = vmatpush1.msra.mxu0 %v193
    %469 = vmatprep.subr.mxu0 0.0
    %470 = vmatpush1.msra.mxu0 0.0
    %471 = vmatprep.subr.mxu0 0.0
    %472 = vmatpush1.msra.mxu0 0.0
    %473 = vmatprep.subr.mxu0 0.0
    %474 = vmatpush1.msra.mxu0 0.0
    %475 = vmatprep.subr.mxu0 0.0
    %476 = vmatpush1.msra.mxu0 0.0
    %477 = vmatprep.subr.mxu0 0.0
    %478 = vmatpush1.msra.mxu0 0.0
    %479 = vmatprep.subr.mxu0 0.0
    %480 = vmatpush1.msra.mxu0 0.0
    %481 = vmatprep.subr.mxu0 0.0
    %482 = vmatpush1.msra.mxu0 0.0
    %483 = vmatprep.subr.mxu0 0.0
    %484 = vmatpush1.msra.mxu0 0.0
    %485 = vmatprep.subr.mxu0 0.0
    %486 = vmatpush1.msra.mxu0 0.0
    %487 = vmatprep.subr.mxu0 0.0
    %488 = vmatpush1.msra.mxu0 0.0
    %489 = vmatprep.subr.mxu0 0.0
    %490 = vmatpush1.msra.mxu0 0.0
    %491 = vmatprep.subr.mxu0 0.0
    %492 = vmatpush1.msra.mxu0 0.0
    %493 = vmatprep.subr.mxu0 0.0
    %494 = vmatpush1.msra.mxu0 0.0
    %495 = vmatprep.subr.mxu0 0.0
    %496 = vmatpush1.msra.mxu0 0.0
    %497 = vmatprep.subr.mxu0 0.0
    %498 = vmatpush1.msra.mxu0 0.0
    %499 = vmatprep.subr.mxu0 0.0
    %500 = vmatpush1.msra.mxu0 0.0
    %501 = vmatprep.mubr.f32.mxu0 0.0
    %502 = vmatmul.mubr.f32.gmra.mrb[0].mxu0 %v263
    %v503 = vpop.f32.mrb[0].mxu0
    %v504 = vadd.f32 %v218, %v503
    %v505 = vpop.f32.mrb[0].mxu0
    %v506 = vadd.f32 %v222, %v505
    %507 = vmatprep.mubr.f32.mxu0 0.0
    %508 = vmatmul.mubr.f32.gmra.mrb[0].mxu0 %v280
    %v509 = vpop.f32.mrb[0].mxu0
    %v510 = vadd.f32 %v218, %v509
    %v511 = vpop.f32.mrb[0].mxu0
    %v512 = vadd.f32 %v222, %v511
    %513 = vdwg.mxu0
    %514 = vmatprep.subr.mxu0 %v76
    %515 = vmatpush1.msra.mxu0 %v75
    %516 = vmatprep.subr.mxu0 %v84
    %517 = vmatpush1.msra.mxu0 %v83
    %518 = vmatprep.subr.mxu0 %v92
    %519 = vmatpush1.msra.mxu0 %v91
    %520 = vmatprep.subr.mxu0 %v100
    %521 = vmatpush1.msra.mxu0 %v99
    %522 = vmatprep.subr.mxu0 %v108
    %523 = vmatpush1.msra.mxu0 %v107
    %524 = vmatprep.subr.mxu0 %v116
    %525 = vmatpush1.msra.mxu0 %v115
    %526 = vmatprep.subr.mxu0 %v124
    %527 = vmatpush1.msra.mxu0 %v123
    %528 = vmatprep.subr.mxu0 %v132
    %529 = vmatpush1.msra.mxu0 %v131
    %530 = vmatprep.subr.mxu0 %v140
    %531 = vmatpush1.msra.mxu0 %v139
    %532 = vmatprep.subr.mxu0 %v148
    %533 = vmatpush1.msra.mxu0 %v147
    %534 = vmatprep.subr.mxu0 %v156
    %535 = vmatpush1.msra.mxu0 %v155
    %536 = vmatprep.subr.mxu0 %v164
    %537 = vmatpush1.msra.mxu0 %v163
    %538 = vmatprep.subr.mxu0 %v172
    %539 = vmatpush1.msra.mxu0 %v171
    %540 = vmatprep.subr.mxu0 %v180
    %541 = vmatpush1.msra.mxu0 %v179
    %542 = vmatprep.subr.mxu0 %v188
    %543 = vmatpush1.msra.mxu0 %v187
    %544 = vmatprep.subr.mxu0 %v196
    %545 = vmatpush1.msra.mxu0 %v195
    %546 = vmatprep.subr.mxu0 0.0
    %547 = vmatpush1.msra.mxu0 0.0
    %548 = vmatprep.subr.mxu0 0.0
    %549 = vmatpush1.msra.mxu0 0.0
    %550 = vmatprep.subr.mxu0 0.0
    %551 = vmatpush1.msra.mxu0 0.0
    %552 = vmatprep.subr.mxu0 0.0
    %553 = vmatpush1.msra.mxu0 0.0
    %554 = vmatprep.subr.mxu0 0.0
    %555 = vmatpush1.msra.mxu0 0.0
    %556 = vmatprep.subr.mxu0 0.0
    %557 = vmatpush1.msra.mxu0 0.0
    %558 = vmatprep.subr.mxu0 0.0
    %559 = vmatpush1.msra.mxu0 0.0
    %560 = vmatprep.subr.mxu0 0.0
    %561 = vmatpush1.msra.mxu0 0.0
    %562 = vmatprep.subr.mxu0 0.0
    %563 = vmatpush1.msra.mxu0 0.0
    %564 = vmatprep.subr.mxu0 0.0
    %565 = vmatpush1.msra.mxu0 0.0
    %566 = vmatprep.subr.mxu0 0.0
    %567 = vmatpush1.msra.mxu0 0.0
    %568 = vmatprep.subr.mxu0 0.0
    %569 = vmatpush1.msra.mxu0 0.0
    %570 = vmatprep.subr.mxu0 0.0
    %571 = vmatpush1.msra.mxu0 0.0
    %572 = vmatprep.subr.mxu0 0.0
    %573 = vmatpush1.msra.mxu0 0.0
    %574 = vmatprep.subr.mxu0 0.0
    %575 = vmatpush1.msra.mxu0 0.0
    %576 = vmatprep.subr.mxu0 0.0
    %577 = vmatpush1.msra.mxu0 0.0
    %578 = vmatprep.mubr.f32.mxu0 0.0
    %579 = vmatmul.mubr.f32.gmra.mrb[0].mxu0 %v263
    %v580 = vpop.f32.mrb[0].mxu0
    %v581 = vadd.f32 %v226, %v580
    %v582 = vpop.f32.mrb[0].mxu0
    %v583 = vadd.f32 %v230, %v582
    %584 = vmatprep.mubr.f32.mxu0 0.0
    %585 = vmatmul.mubr.f32.gmra.mrb[0].mxu0 %v280
    %v586 = vpop.f32.mrb[0].mxu0
    %v587 = vadd.f32 %v226, %v586
    %v588 = vpop.f32.mrb[0].mxu0
    %v589 = vadd.f32 %v230, %v588
    %590 = vdwg.mxu0
    %v607 = vcombine.low %v350, %v352
    %v608 = vcombine.high %v350, %v352
    %v609 = vcombine.low %v427, %v429
    %v610 = vcombine.high %v427, %v429
    %v612 = vunpack.c.l.s4 1983009808
    %v613 = vunpack.c.0.s8 %v612
    %v614 = vlaneseq
    %v615 = vshrl.u32 %v614, 7
    %v616 = vsub.s32 %v613, %v615
    %v617 = vrot.slane %v607, %v616
    %v619 = vunpack.c.l.s4 1983009808
    %v620 = vunpack.c.0.s8 %v619
    %v621 = vlaneseq
    %v622 = vshrl.u32 %v621, 7
    %v623 = vsub.s32 %v620, %v622
    %v624 = vrot.slane %v608, %v623
    %v626 = vunpack.c.l.s4 1983009808
    %v627 = vunpack.c.0.s8 %v626
    %v628 = vlaneseq
    %v629 = vshrl.u32 %v628, 7
    %v630 = vsub.s32 %v627, %v629
    %v631 = vrot.slane %v609, %v630
    %v633 = vunpack.c.l.s4 1983009808
    %v634 = vunpack.c.0.s8 %v633
    %v635 = vlaneseq
    %v636 = vshrl.u32 %v635, 7
    %v637 = vsub.s32 %v634, %v636
    %v638 = vrot.slane %v610, %v637
    %v639 = vcombine.low %v617, %v631
    %v640 = vcombine.high %v617, %v631
    %v641 = vcombine.low %v624, %v638
    %v642 = vcombine.high %v624, %v638
    %v643 = vcombine.low %v504, %v506
    %v644 = vcombine.high %v504, %v506
    %v645 = vcombine.low %v581, %v583
    %v646 = vcombine.high %v581, %v583
    %v648 = vunpack.c.l.s4 1983009808
    %v649 = vunpack.c.0.s8 %v648
    %v650 = vlaneseq
    %v651 = vshrl.u32 %v650, 7
    %v652 = vsub.s32 %v649, %v651
    %v653 = vrot.slane %v643, %v652
    %v655 = vunpack.c.l.s4 1983009808
    %v656 = vunpack.c.0.s8 %v655
    %v657 = vlaneseq
    %v658 = vshrl.u32 %v657, 7
    %v659 = vsub.s32 %v656, %v658
    %v660 = vrot.slane %v644, %v659
    %v662 = vunpack.c.l.s4 1983009808
    %v663 = vunpack.c.0.s8 %v662
    %v664 = vlaneseq
    %v665 = vshrl.u32 %v664, 7
    %v666 = vsub.s32 %v663, %v665
    %v667 = vrot.slane %v645, %v666
    %v669 = vunpack.c.l.s4 1983009808
    %v670 = vunpack.c.0.s8 %v669
    %v671 = vlaneseq
    %v672 = vshrl.u32 %v671, 7
    %v673 = vsub.s32 %v670, %v672
    %v674 = vrot.slane %v646, %v673
    %v675 = vcombine.low %v653, %v667
    %v676 = vcombine.high %v653, %v667
    %v677 = vcombine.low %v660, %v674
    %v678 = vcombine.high %v660, %v674
    %v679 = vcombine.low %v356, %v358
    %v680 = vcombine.high %v356, %v358
    %v681 = vcombine.low %v433, %v435
    %v682 = vcombine.high %v433, %v435
    %v684 = vunpack.c.l.s4 1983009808
    %v685 = vunpack.c.0.s8 %v684
    %v686 = vlaneseq
    %v687 = vshrl.u32 %v686, 7
    %v688 = vsub.s32 %v685, %v687
    %v689 = vrot.slane %v679, %v688
    %v691 = vunpack.c.l.s4 1983009808
    %v692 = vunpack.c.0.s8 %v691
    %v693 = vlaneseq
    %v694 = vshrl.u32 %v693, 7
    %v695 = vsub.s32 %v692, %v694
    %v696 = vrot.slane %v680, %v695
    %v698 = vunpack.c.l.s4 1983009808
    %v699 = vunpack.c.0.s8 %v698
    %v700 = vlaneseq
    %v701 = vshrl.u32 %v700, 7
    %v702 = vsub.s32 %v699, %v701
    %v703 = vrot.slane %v681, %v702
    %v705 = vunpack.c.l.s4 1983009808
    %v706 = vunpack.c.0.s8 %v705
    %v707 = vlaneseq
    %v708 = vshrl.u32 %v707, 7
    %v709 = vsub.s32 %v706, %v708
    %v710 = vrot.slane %v682, %v709
    %v711 = vcombine.low %v689, %v703
    %v712 = vcombine.high %v689, %v703
    %v713 = vcombine.low %v696, %v710
    %v714 = vcombine.high %v696, %v710
    %v715 = vcombine.low %v510, %v512
    %v716 = vcombine.high %v510, %v512
    %v717 = vcombine.low %v587, %v589
    %v718 = vcombine.high %v587, %v589
    %v720 = vunpack.c.l.s4 1983009808
    %v721 = vunpack.c.0.s8 %v720
    %v722 = vlaneseq
    %v723 = vshrl.u32 %v722, 7
    %v724 = vsub.s32 %v721, %v723
    %v725 = vrot.slane %v715, %v724
    %v727 = vunpack.c.l.s4 1983009808
    %v728 = vunpack.c.0.s8 %v727
    %v729 = vlaneseq
    %v730 = vshrl.u32 %v729, 7
    %v731 = vsub.s32 %v728, %v730
    %v732 = vrot.slane %v716, %v731
    %v734 = vunpack.c.l.s4 1983009808
    %v735 = vunpack.c.0.s8 %v734
    %v736 = vlaneseq
    %v737 = vshrl.u32 %v736, 7
    %v738 = vsub.s32 %v735, %v737
    %v739 = vrot.slane %v717, %v738
    %v741 = vunpack.c.l.s4 1983009808
    %v742 = vunpack.c.0.s8 %v741
    %v743 = vlaneseq
    %v744 = vshrl.u32 %v743, 7
    %v745 = vsub.s32 %v742, %v744
    %v746 = vrot.slane %v718, %v745
    %v747 = vcombine.low %v725, %v739
    %v748 = vcombine.high %v725, %v739
    %v749 = vcombine.low %v732, %v746
    %v750 = vcombine.high %v732, %v746
    %767 = vst [vmem:[#allocation2] sm:$0xff] %v639
    %768 = vst [vmem:[#allocation2 + $0x8] sm:$0xff] %v675
    %769 = vst [vmem:[#allocation2 + $0x10] sm:$0xff] %v640
    %770 = vst [vmem:[#allocation2 + $0x18] sm:$0xff] %v676
    %771 = vst [vmem:[#allocation2 + $0x20] sm:$0xff] %v641
    %772 = vst [vmem:[#allocation2 + $0x28] sm:$0xff] %v677
    %773 = vst [vmem:[#allocation2 + $0x30] sm:$0xff] %v642
    %774 = vst [vmem:[#allocation2 + $0x38] sm:$0xff] %v678
    %775 = vst [vmem:[#allocation2 + $0x40] sm:$0xff] %v711
    %776 = vst [vmem:[#allocation2 + $0x48] sm:$0xff] %v747
    %777 = vst [vmem:[#allocation2 + $0x50] sm:$0xff] %v712
    %778 = vst [vmem:[#allocation2 + $0x58] sm:$0xff] %v748
    %779 = vst [vmem:[#allocation2 + $0x60] sm:$0xff] %v713
    %780 = vst [vmem:[#allocation2 + $0x68] sm:$0xff] %v749
    %781 = vst [vmem:[#allocation2 + $0x70] sm:$0xff] %v714
    %782 = vst [vmem:[#allocation2 + $0x78] sm:$0xff] %v750
    %v783 = vld [vmem:[#allocation2] sm:$0xff]
    %v784 = vld [vmem:[#allocation2 + $0x8] sm:$0xff]
    %v785 = vld [vmem:[%s2] sm:$0xff]
    %v786 = vld [vmem:[%s2 + $0x8] sm:$0xff]
    %v787 = vld [vmem:[%s2 + $0x10] sm:$0xff]
    %v788 = vld [vmem:[%s2 + $0x18] sm:$0xff]
    %v789 = vld [vmem:[%s2 + $0x20] sm:$0xff]
    %v790 = vld [vmem:[%s2 + $0x28] sm:$0xff]
    %v791 = vld [vmem:[%s2 + $0x30] sm:$0xff]
    %v792 = vld [vmem:[%s2 + $0x38] sm:$0xff]
    %v793 = vld [vmem:[%s2 + $0x40] sm:$0xff]
    %v794 = vld [vmem:[%s2 + $0x48] sm:$0xff]
    %v795 = vld [vmem:[%s2 + $0x50] sm:$0xff]
    %v796 = vld [vmem:[%s2 + $0x58] sm:$0xff]
    %v797 = vld [vmem:[%s2 + $0x60] sm:$0xff]
    %v798 = vld [vmem:[%s2 + $0x68] sm:$0xff]
    %v799 = vld [vmem:[%s2 + $0x70] sm:$0xff]
    %v800 = vld [vmem:[%s2 + $0x78] sm:$0xff]
    %v801 = vld [vmem:[%s2 + $0x80] sm:$0xff]
    %v802 = vld [vmem:[%s2 + $0x88] sm:$0xff]
    %v803 = vld [vmem:[%s2 + $0x90] sm:$0xff]
    %v804 = vld [vmem:[%s2 + $0x98] sm:$0xff]
    %v805 = vld [vmem:[%s2 + $0xa0] sm:$0xff]
    %v806 = vld [vmem:[%s2 + $0xa8] sm:$0xff]
    %v807 = vld [vmem:[%s2 + $0xb0] sm:$0xff]
    %v808 = vld [vmem:[%s2 + $0xb8] sm:$0xff]
    %v809 = vld [vmem:[%s2 + $0xc0] sm:$0xff]
    %v810 = vld [vmem:[%s2 + $0xc8] sm:$0xff]
    %v811 = vld [vmem:[%s2 + $0xd0] sm:$0xff]
    %v812 = vld [vmem:[%s2 + $0xd8] sm:$0xff]
    %v813 = vld [vmem:[%s2 + $0xe0] sm:$0xff]
    %v814 = vld [vmem:[%s2 + $0xe8] sm:$0xff]
    %v815 = vld [vmem:[%s2 + $0xf0] sm:$0xff]
    %v816 = vld [vmem:[%s2 + $0xf8] sm:$0xff]
    %v817 = vld [vmem:[%s2 + $0x100] sm:$0xff]
    %v818 = vld [vmem:[%s2 + $0x108] sm:$0xff]
    %v819 = vld [vmem:[%s2 + $0x110] sm:$0xff]
    %v820 = vld [vmem:[%s2 + $0x118] sm:$0xff]
    %v821 = vld [vmem:[%s2 + $0x120] sm:$0xff]
    %v822 = vld [vmem:[%s2 + $0x128] sm:$0xff]
    %v823 = vld [vmem:[%s2 + $0x130] sm:$0xff]
    %v824 = vld [vmem:[%s2 + $0x138] sm:$0xff]
    %v825 = vld [vmem:[%s2 + $0x140] sm:$0xff]
    %v826 = vld [vmem:[%s2 + $0x148] sm:$0xff]
    %v827 = vld [vmem:[%s2 + $0x150] sm:$0xff]
    %v828 = vld [vmem:[%s2 + $0x158] sm:$0xff]
    %v829 = vld [vmem:[%s2 + $0x160] sm:$0xff]
    %v830 = vld [vmem:[%s2 + $0x168] sm:$0xff]
    %v831 = vld [vmem:[%s2 + $0x170] sm:$0xff]
    %v832 = vld [vmem:[%s2 + $0x178] sm:$0xff]
    %v833 = vld [vmem:[%s2 + $0x180] sm:$0xff]
    %v834 = vld [vmem:[%s2 + $0x188] sm:$0xff]
    %v835 = vld [vmem:[%s2 + $0x190] sm:$0xff]
    %v836 = vld [vmem:[%s2 + $0x198] sm:$0xff]
    %v837 = vld [vmem:[%s2 + $0x1a0] sm:$0xff]
    %v838 = vld [vmem:[%s2 + $0x1a8] sm:$0xff]
    %v839 = vld [vmem:[%s2 + $0x1b0] sm:$0xff]
    %v840 = vld [vmem:[%s2 + $0x1b8] sm:$0xff]
    %v841 = vld [vmem:[%s2 + $0x1c0] sm:$0xff]
    %v842 = vld [vmem:[%s2 + $0x1c8] sm:$0xff]
    %v843 = vld [vmem:[%s2 + $0x1d0] sm:$0xff]
    %v844 = vld [vmem:[%s2 + $0x1d8] sm:$0xff]
    %v845 = vld [vmem:[%s2 + $0x1e0] sm:$0xff]
    %v846 = vld [vmem:[%s2 + $0x1e8] sm:$0xff]
    %v847 = vld [vmem:[%s2 + $0x1f0] sm:$0xff]
    %v848 = vld [vmem:[%s2 + $0x1f8] sm:$0xff]
    %v849 = vld [vmem:[%s2 + $0x200] sm:$0xff]
    %v850 = vld [vmem:[%s2 + $0x208] sm:$0xff]
    %v851 = vld [vmem:[%s2 + $0x210] sm:$0xff]
    %v852 = vld [vmem:[%s2 + $0x218] sm:$0xff]
    %v853 = vld [vmem:[%s2 + $0x220] sm:$0xff]
    %v854 = vld [vmem:[%s2 + $0x228] sm:$0xff]
    %v855 = vld [vmem:[%s2 + $0x230] sm:$0xff]
    %v856 = vld [vmem:[%s2 + $0x238] sm:$0xff]
    %v857 = vld [vmem:[%s2 + $0x240] sm:$0xff]
    %v858 = vld [vmem:[%s2 + $0x248] sm:$0xff]
    %v859 = vld [vmem:[%s2 + $0x250] sm:$0xff]
    %v860 = vld [vmem:[%s2 + $0x258] sm:$0xff]
    %v861 = vld [vmem:[%s2 + $0x260] sm:$0xff]
    %v862 = vld [vmem:[%s2 + $0x268] sm:$0xff]
    %v863 = vld [vmem:[%s2 + $0x270] sm:$0xff]
    %v864 = vld [vmem:[%s2 + $0x278] sm:$0xff]
    %v865 = vld [vmem:[%s2 + $0x280] sm:$0xff]
    %v866 = vld [vmem:[%s2 + $0x288] sm:$0xff]
    %v867 = vld [vmem:[%s2 + $0x290] sm:$0xff]
    %v868 = vld [vmem:[%s2 + $0x298] sm:$0xff]
    %v869 = vld [vmem:[%s2 + $0x2a0] sm:$0xff]
    %v870 = vld [vmem:[%s2 + $0x2a8] sm:$0xff]
    %v871 = vld [vmem:[%s2 + $0x2b0] sm:$0xff]
    %v872 = vld [vmem:[%s2 + $0x2b8] sm:$0xff]
    %v873 = vld [vmem:[%s2 + $0x2c0] sm:$0xff]
    %v874 = vld [vmem:[%s2 + $0x2c8] sm:$0xff]
    %v875 = vld [vmem:[%s2 + $0x2d0] sm:$0xff]
    %v876 = vld [vmem:[%s2 + $0x2d8] sm:$0xff]
    %v877 = vld [vmem:[%s2 + $0x2e0] sm:$0xff]
    %v878 = vld [vmem:[%s2 + $0x2e8] sm:$0xff]
    %v879 = vld [vmem:[%s2 + $0x2f0] sm:$0xff]
    %v880 = vld [vmem:[%s2 + $0x2f8] sm:$0xff]
    %v881 = vld [vmem:[%s2 + $0x300] sm:$0xff]
    %v882 = vld [vmem:[%s2 + $0x308] sm:$0xff]
    %v883 = vld [vmem:[%s2 + $0x310] sm:$0xff]
    %v884 = vld [vmem:[%s2 + $0x318] sm:$0xff]
    %v885 = vld [vmem:[%s2 + $0x320] sm:$0xff]
    %v886 = vld [vmem:[%s2 + $0x328] sm:$0xff]
    %v887 = vld [vmem:[%s2 + $0x330] sm:$0xff]
    %v888 = vld [vmem:[%s2 + $0x338] sm:$0xff]
    %v889 = vld [vmem:[%s2 + $0x340] sm:$0xff]
    %v890 = vld [vmem:[%s2 + $0x348] sm:$0xff]
    %v891 = vld [vmem:[%s2 + $0x350] sm:$0xff]
    %v892 = vld [vmem:[%s2 + $0x358] sm:$0xff]
    %v893 = vld [vmem:[%s2 + $0x360] sm:$0xff]
    %v894 = vld [vmem:[%s2 + $0x368] sm:$0xff]
    %v895 = vld [vmem:[%s2 + $0x370] sm:$0xff]
    %v896 = vld [vmem:[%s2 + $0x378] sm:$0xff]
    %v897 = vld [vmem:[%s2 + $0x380] sm:$0xff]
    %v898 = vld [vmem:[%s2 + $0x388] sm:$0xff]
    %v899 = vld [vmem:[%s2 + $0x390] sm:$0xff]
    %v900 = vld [vmem:[%s2 + $0x398] sm:$0xff]
    %v901 = vld [vmem:[%s2 + $0x3a0] sm:$0xff]
    %v902 = vld [vmem:[%s2 + $0x3a8] sm:$0xff]
    %v903 = vld [vmem:[%s2 + $0x3b0] sm:$0xff]
    %v904 = vld [vmem:[%s2 + $0x3b8] sm:$0xff]
    %v905 = vld [vmem:[%s2 + $0x3c0] sm:$0xff]
    %v906 = vld [vmem:[%s2 + $0x3c8] sm:$0xff]
    %v907 = vld [vmem:[%s2 + $0x3d0] sm:$0xff]
    %v908 = vld [vmem:[%s2 + $0x3d8] sm:$0xff]
    %v909 = vld [vmem:[%s2 + $0x3e0] sm:$0xff]
    %v910 = vld [vmem:[%s2 + $0x3e8] sm:$0xff]
    %v911 = vld [vmem:[%s2 + $0x3f0] sm:$0xff]
    %v912 = vld [vmem:[%s2 + $0x3f8] sm:$0xff]
    %v913 = vld [vmem:[%s2 + $0x400] sm:$0xff]
    %v914 = vld [vmem:[%s2 + $0x408] sm:$0xff]
    %v915 = vld [vmem:[%s2 + $0x410] sm:$0xff]
    %v916 = vld [vmem:[%s2 + $0x418] sm:$0xff]
    %v917 = vld [vmem:[%s2 + $0x420] sm:$0xff]
    %v918 = vld [vmem:[%s2 + $0x428] sm:$0xff]
    %v919 = vld [vmem:[%s2 + $0x430] sm:$0xff]
    %v920 = vld [vmem:[%s2 + $0x438] sm:$0xff]
    %v921 = vld [vmem:[%s2 + $0x440] sm:$0xff]
    %v922 = vld [vmem:[%s2 + $0x448] sm:$0xff]
    %v923 = vld [vmem:[%s2 + $0x450] sm:$0xff]
    %v924 = vld [vmem:[%s2 + $0x458] sm:$0xff]
    %v925 = vld [vmem:[%s2 + $0x460] sm:$0xff]
    %v926 = vld [vmem:[%s2 + $0x468] sm:$0xff]
    %v927 = vld [vmem:[%s2 + $0x470] sm:$0xff]
    %v928 = vld [vmem:[%s2 + $0x478] sm:$0xff]
    %v929 = vld [vmem:[%s2 + $0x480] sm:$0xff]
    %v930 = vld [vmem:[%s2 + $0x488] sm:$0xff]
    %v931 = vld [vmem:[%s2 + $0x490] sm:$0xff]
    %v932 = vld [vmem:[%s2 + $0x498] sm:$0xff]
    %v933 = vld [vmem:[%s2 + $0x4a0] sm:$0xff]
    %v934 = vld [vmem:[%s2 + $0x4a8] sm:$0xff]
    %v935 = vld [vmem:[%s2 + $0x4b0] sm:$0xff]
    %v936 = vld [vmem:[%s2 + $0x4b8] sm:$0xff]
    %v937 = vld [vmem:[%s2 + $0x4c0] sm:$0xff]
    %v938 = vld [vmem:[%s2 + $0x4c8] sm:$0xff]
    %v939 = vld [vmem:[%s2 + $0x4d0] sm:$0xff]
    %v940 = vld [vmem:[%s2 + $0x4d8] sm:$0xff]
    %v941 = vld [vmem:[%s2 + $0x4e0] sm:$0xff]
    %v942 = vld [vmem:[%s2 + $0x4e8] sm:$0xff]
    %v943 = vld [vmem:[%s2 + $0x4f0] sm:$0xff]
    %v944 = vld [vmem:[%s2 + $0x4f8] sm:$0xff]
    %v945 = vld [vmem:[%s2 + $0x500] sm:$0xff]
    %v946 = vld [vmem:[%s2 + $0x508] sm:$0xff]
    %v947 = vld [vmem:[%s2 + $0x510] sm:$0xff]
    %v948 = vld [vmem:[%s2 + $0x518] sm:$0xff]
    %v949 = vld [vmem:[%s2 + $0x520] sm:$0xff]
    %v950 = vld [vmem:[%s2 + $0x528] sm:$0xff]
    %v951 = vld [vmem:[%s2 + $0x530] sm:$0xff]
    %v952 = vld [vmem:[%s2 + $0x538] sm:$0xff]
    %v953 = vld [vmem:[%s2 + $0x540] sm:$0xff]
    %v954 = vld [vmem:[%s2 + $0x548] sm:$0xff]
    %v955 = vld [vmem:[%s2 + $0x550] sm:$0xff]
    %v956 = vld [vmem:[%s2 + $0x558] sm:$0xff]
    %v957 = vld [vmem:[%s2 + $0x560] sm:$0xff]
    %v958 = vld [vmem:[%s2 + $0x568] sm:$0xff]
    %v959 = vld [vmem:[%s2 + $0x570] sm:$0xff]
    %v960 = vld [vmem:[%s2 + $0x578] sm:$0xff]
    %v961 = vld [vmem:[%s2 + $0x580] sm:$0xff]
    %v962 = vld [vmem:[%s2 + $0x588] sm:$0xff]
    %v963 = vld [vmem:[%s2 + $0x590] sm:$0xff]
    %v964 = vld [vmem:[%s2 + $0x598] sm:$0xff]
    %v965 = vld [vmem:[%s2 + $0x5a0] sm:$0xff]
    %v966 = vld [vmem:[%s2 + $0x5a8] sm:$0xff]
    %v967 = vld [vmem:[%s2 + $0x5b0] sm:$0xff]
    %v968 = vld [vmem:[%s2 + $0x5b8] sm:$0xff]
    %v969 = vld [vmem:[%s2 + $0x5c0] sm:$0xff]
    %v970 = vld [vmem:[%s2 + $0x5c8] sm:$0xff]
    %v971 = vld [vmem:[%s2 + $0x5d0] sm:$0xff]
    %v972 = vld [vmem:[%s2 + $0x5d8] sm:$0xff]
    %v973 = vld [vmem:[%s2 + $0x5e0] sm:$0xff]
    %v974 = vld [vmem:[%s2 + $0x5e8] sm:$0xff]
    %v975 = vld [vmem:[%s2 + $0x5f0] sm:$0xff]
    %v976 = vld [vmem:[%s2 + $0x5f8] sm:$0xff]
    %v977 = vld [vmem:[%s2 + $0x600] sm:$0xff]
    %v978 = vld [vmem:[%s2 + $0x608] sm:$0xff]
    %v979 = vld [vmem:[%s2 + $0x610] sm:$0xff]
    %v980 = vld [vmem:[%s2 + $0x618] sm:$0xff]
    %v981 = vld [vmem:[%s2 + $0x620] sm:$0xff]
    %v982 = vld [vmem:[%s2 + $0x628] sm:$0xff]
    %v983 = vld [vmem:[%s2 + $0x630] sm:$0xff]
    %v984 = vld [vmem:[%s2 + $0x638] sm:$0xff]
    %v985 = vld [vmem:[%s2 + $0x640] sm:$0xff]
    %v986 = vld [vmem:[%s2 + $0x648] sm:$0xff]
    %v987 = vld [vmem:[%s2 + $0x650] sm:$0xff]
    %v988 = vld [vmem:[%s2 + $0x658] sm:$0xff]
    %v989 = vld [vmem:[%s2 + $0x660] sm:$0xff]
    %v990 = vld [vmem:[%s2 + $0x668] sm:$0xff]
    %v991 = vld [vmem:[%s2 + $0x670] sm:$0xff]
    %v992 = vld [vmem:[%s2 + $0x678] sm:$0xff]
    %v993 = vld [vmem:[%s2 + $0x680] sm:$0xff]
    %v994 = vld [vmem:[%s2 + $0x688] sm:$0xff]
    %v995 = vld [vmem:[%s2 + $0x690] sm:$0xff]
    %v996 = vld [vmem:[%s2 + $0x698] sm:$0xff]
    %v997 = vld [vmem:[%s2 + $0x6a0] sm:$0xff]
    %v998 = vld [vmem:[%s2 + $0x6a8] sm:$0xff]
    %v999 = vld [vmem:[%s2 + $0x6b0] sm:$0xff]
    %v1000 = vld [vmem:[%s2 + $0x6b8] sm:$0xff]
    %v1001 = vld [vmem:[%s2 + $0x6c0] sm:$0xff]
    %v1002 = vld [vmem:[%s2 + $0x6c8] sm:$0xff]
    %v1003 = vld [vmem:[%s2 + $0x6d0] sm:$0xff]
    %v1004 = vld [vmem:[%s2 + $0x6d8] sm:$0xff]
    %v1005 = vld [vmem:[%s2 + $0x6e0] sm:$0xff]
    %v1006 = vld [vmem:[%s2 + $0x6e8] sm:$0xff]
    %v1007 = vld [vmem:[%s2 + $0x6f0] sm:$0xff]
    %v1008 = vld [vmem:[%s2 + $0x6f8] sm:$0xff]
    %v1009 = vld [vmem:[%s2 + $0x700] sm:$0xff]
    %v1010 = vld [vmem:[%s2 + $0x708] sm:$0xff]
    %v1011 = vld [vmem:[%s2 + $0x710] sm:$0xff]
    %v1012 = vld [vmem:[%s2 + $0x718] sm:$0xff]
    %v1013 = vld [vmem:[%s2 + $0x720] sm:$0xff]
    %v1014 = vld [vmem:[%s2 + $0x728] sm:$0xff]
    %v1015 = vld [vmem:[%s2 + $0x730] sm:$0xff]
    %v1016 = vld [vmem:[%s2 + $0x738] sm:$0xff]
    %v1017 = vld [vmem:[%s2 + $0x740] sm:$0xff]
    %v1018 = vld [vmem:[%s2 + $0x748] sm:$0xff]
    %v1019 = vld [vmem:[%s2 + $0x750] sm:$0xff]
    %v1020 = vld [vmem:[%s2 + $0x758] sm:$0xff]
    %v1021 = vld [vmem:[%s2 + $0x760] sm:$0xff]
    %v1022 = vld [vmem:[%s2 + $0x768] sm:$0xff]
    %v1023 = vld [vmem:[%s2 + $0x770] sm:$0xff]
    %v1024 = vld [vmem:[%s2 + $0x778] sm:$0xff]
    %v1025 = vld [vmem:[%s2 + $0x780] sm:$0xff]
    %v1026 = vld [vmem:[%s2 + $0x788] sm:$0xff]
    %v1027 = vld [vmem:[%s2 + $0x790] sm:$0xff]
    %v1028 = vld [vmem:[%s2 + $0x798] sm:$0xff]
    %v1029 = vld [vmem:[%s2 + $0x7a0] sm:$0xff]
    %v1030 = vld [vmem:[%s2 + $0x7a8] sm:$0xff]
    %v1031 = vld [vmem:[%s2 + $0x7b0] sm:$0xff]
    %v1032 = vld [vmem:[%s2 + $0x7b8] sm:$0xff]
    %v1033 = vld [vmem:[%s2 + $0x7c0] sm:$0xff]
    %v1034 = vld [vmem:[%s2 + $0x7c8] sm:$0xff]
    %v1035 = vld [vmem:[%s2 + $0x7d0] sm:$0xff]
    %v1036 = vld [vmem:[%s2 + $0x7d8] sm:$0xff]
    %v1037 = vld [vmem:[%s2 + $0x7e0] sm:$0xff]
    %v1038 = vld [vmem:[%s2 + $0x7e8] sm:$0xff]
    %v1039 = vld [vmem:[%s2 + $0x7f0] sm:$0xff]
    %v1040 = vld [vmem:[%s2 + $0x7f8] sm:$0xff]
    %1041 = vmatprep.subr.mxu0 %v786
    %1042 = vmatpush1.msra.mxu0 %v785
    %1043 = vmatprep.subr.mxu0 %v794
    %1044 = vmatpush1.msra.mxu0 %v793
    %1045 = vmatprep.subr.mxu0 %v802
    %1046 = vmatpush1.msra.mxu0 %v801
    %1047 = vmatprep.subr.mxu0 %v810
    %1048 = vmatpush1.msra.mxu0 %v809
    %1049 = vmatprep.subr.mxu0 %v818
    %1050 = vmatpush1.msra.mxu0 %v817
    %1051 = vmatprep.subr.mxu0 %v826
    %1052 = vmatpush1.msra.mxu0 %v825
    %1053 = vmatprep.subr.mxu0 %v834
    %1054 = vmatpush1.msra.mxu0 %v833
    %1055 = vmatprep.subr.mxu0 %v842
    %1056 = vmatpush1.msra.mxu0 %v841
    %1057 = vmatprep.subr.mxu0 %v850
    %1058 = vmatpush1.msra.mxu0 %v849
    %1059 = vmatprep.subr.mxu0 %v858
    %1060 = vmatpush1.msra.mxu0 %v857
    %1061 = vmatprep.subr.mxu0 %v866
    %1062 = vmatpush1.msra.mxu0 %v865
    %1063 = vmatprep.subr.mxu0 %v874
    %1064 = vmatpush1.msra.mxu0 %v873
    %1065 = vmatprep.subr.mxu0 %v882
    %1066 = vmatpush1.msra.mxu0 %v881
    %1067 = vmatprep.subr.mxu0 %v890
    %1068 = vmatpush1.msra.mxu0 %v889
    %1069 = vmatprep.subr.mxu0 %v898
    %1070 = vmatpush1.msra.mxu0 %v897
    %1071 = vmatprep.subr.mxu0 %v906
    %1072 = vmatpush1.msra.mxu0 %v905
    %1073 = vmatprep.subr.mxu0 %v914
    %1074 = vmatpush1.msra.mxu0 %v913
    %1075 = vmatprep.subr.mxu0 %v922
    %1076 = vmatpush1.msra.mxu0 %v921
    %1077 = vmatprep.subr.mxu0 %v930
    %1078 = vmatpush1.msra.mxu0 %v929
    %1079 = vmatprep.subr.mxu0 %v938
    %1080 = vmatpush1.msra.mxu0 %v937
    %1081 = vmatprep.subr.mxu0 %v946
    %1082 = vmatpush1.msra.mxu0 %v945
    %1083 = vmatprep.subr.mxu0 %v954
    %1084 = vmatpush1.msra.mxu0 %v953
    %1085 = vmatprep.subr.mxu0 %v962
    %1086 = vmatpush1.msra.mxu0 %v961
    %1087 = vmatprep.subr.mxu0 %v970
    %1088 = vmatpush1.msra.mxu0 %v969
    %1089 = vmatprep.subr.mxu0 %v978
    %1090 = vmatpush1.msra.mxu0 %v977
    %1091 = vmatprep.subr.mxu0 %v986
    %1092 = vmatpush1.msra.mxu0 %v985
    %1093 = vmatprep.subr.mxu0 %v994
    %1094 = vmatpush1.msra.mxu0 %v993
    %1095 = vmatprep.subr.mxu0 %v1002
    %1096 = vmatpush1.msra.mxu0 %v1001
    %1097 = vmatprep.subr.mxu0 %v1010
    %1098 = vmatpush1.msra.mxu0 %v1009
    %1099 = vmatprep.subr.mxu0 %v1018
    %1100 = vmatpush1.msra.mxu0 %v1017
    %1101 = vmatprep.subr.mxu0 %v1026
    %1102 = vmatpush1.msra.mxu0 %v1025
    %1103 = vmatprep.subr.mxu0 %v1034
    %1104 = vmatpush1.msra.mxu0 %v1033
    %1105 = vmatprep.mubr.f32.mxu0 0.0
    %1106 = vmatmul.mubr.f32.gmra.mrb[0].mxu0 0.0
    %v1107 = vpop.f32.mrb[0].mxu0
    %v1108 = vadd.f32 0.0, %v1107
    %v1109 = vpop.f32.mrb[0].mxu0
    %v1110 = vadd.f32 0.0, %v1109
    %1111 = vdwg.mxu0
    %1112 = vmatprep.subr.mxu0 %v788
    %1113 = vmatpush1.msra.mxu0 %v787
    %1114 = vmatprep.subr.mxu0 %v796
    %1115 = vmatpush1.msra.mxu0 %v795
    %1116 = vmatprep.subr.mxu0 %v804
    %1117 = vmatpush1.msra.mxu0 %v803
    %1118 = vmatprep.subr.mxu0 %v812
    %1119 = vmatpush1.msra.mxu0 %v811
    %1120 = vmatprep.subr.mxu0 %v820
    %1121 = vmatpush1.msra.mxu0 %v819
    %1122 = vmatprep.subr.mxu0 %v828
    %1123 = vmatpush1.msra.mxu0 %v827
    %1124 = vmatprep.subr.mxu0 %v836
    %1125 = vmatpush1.msra.mxu0 %v835
    %1126 = vmatprep.subr.mxu0 %v844
    %1127 = vmatpush1.msra.mxu0 %v843
    %1128 = vmatprep.subr.mxu0 %v852
    %1129 = vmatpush1.msra.mxu0 %v851
    %1130 = vmatprep.subr.mxu0 %v860
    %1131 = vmatpush1.msra.mxu0 %v859
    %1132 = vmatprep.subr.mxu0 %v868
    %1133 = vmatpush1.msra.mxu0 %v867
    %1134 = vmatprep.subr.mxu0 %v876
    %1135 = vmatpush1.msra.mxu0 %v875
    %1136 = vmatprep.subr.mxu0 %v884
    %1137 = vmatpush1.msra.mxu0 %v883
    %1138 = vmatprep.subr.mxu0 %v892
    %1139 = vmatpush1.msra.mxu0 %v891
    %1140 = vmatprep.subr.mxu0 %v900
    %1141 = vmatpush1.msra.mxu0 %v899
    %1142 = vmatprep.subr.mxu0 %v908
    %1143 = vmatpush1.msra.mxu0 %v907
    %1144 = vmatprep.subr.mxu0 %v916
    %1145 = vmatpush1.msra.mxu0 %v915
    %1146 = vmatprep.subr.mxu0 %v924
    %1147 = vmatpush1.msra.mxu0 %v923
    %1148 = vmatprep.subr.mxu0 %v932
    %1149 = vmatpush1.msra.mxu0 %v931
    %1150 = vmatprep.subr.mxu0 %v940
    %1151 = vmatpush1.msra.mxu0 %v939
    %1152 = vmatprep.subr.mxu0 %v948
    %1153 = vmatpush1.msra.mxu0 %v947
    %1154 = vmatprep.subr.mxu0 %v956
    %1155 = vmatpush1.msra.mxu0 %v955
    %1156 = vmatprep.subr.mxu0 %v964
    %1157 = vmatpush1.msra.mxu0 %v963
    %1158 = vmatprep.subr.mxu0 %v972
    %1159 = vmatpush1.msra.mxu0 %v971
    %1160 = vmatprep.subr.mxu0 %v980
    %1161 = vmatpush1.msra.mxu0 %v979
    %1162 = vmatprep.subr.mxu0 %v988
    %1163 = vmatpush1.msra.mxu0 %v987
    %1164 = vmatprep.subr.mxu0 %v996
    %1165 = vmatpush1.msra.mxu0 %v995
    %1166 = vmatprep.subr.mxu0 %v1004
    %1167 = vmatpush1.msra.mxu0 %v1003
    %1168 = vmatprep.subr.mxu0 %v1012
    %1169 = vmatpush1.msra.mxu0 %v1011
    %1170 = vmatprep.subr.mxu0 %v1020
    %1171 = vmatpush1.msra.mxu0 %v1019
    %1172 = vmatprep.subr.mxu0 %v1028
    %1173 = vmatpush1.msra.mxu0 %v1027
    %1174 = vmatprep.subr.mxu0 %v1036
    %1175 = vmatpush1.msra.mxu0 %v1035
    %1176 = vmatprep.mubr.f32.mxu0 0.0
    %1177 = vmatmul.mubr.f32.gmra.mrb[0].mxu0 0.0
    %v1178 = vpop.f32.mrb[0].mxu0
    %v1179 = vadd.f32 0.0, %v1178
    %v1180 = vpop.f32.mrb[0].mxu0
    %v1181 = vadd.f32 0.0, %v1180
    %1182 = vdwg.mxu0
    %1183 = vmatprep.subr.mxu0 %v790
    %1184 = vmatpush1.msra.mxu0 %v789
    %1185 = vmatprep.subr.mxu0 %v798
    %1186 = vmatpush1.msra.mxu0 %v797
    %1187 = vmatprep.subr.mxu0 %v806
    %1188 = vmatpush1.msra.mxu0 %v805
    %1189 = vmatprep.subr.mxu0 %v814
    %1190 = vmatpush1.msra.mxu0 %v813
    %1191 = vmatprep.subr.mxu0 %v822
    %1192 = vmatpush1.msra.mxu0 %v821
    %1193 = vmatprep.subr.mxu0 %v830
    %1194 = vmatpush1.msra.mxu0 %v829
    %1195 = vmatprep.subr.mxu0 %v838
    %1196 = vmatpush1.msra.mxu0 %v837
    %1197 = vmatprep.subr.mxu0 %v846
    %1198 = vmatpush1.msra.mxu0 %v845
    %1199 = vmatprep.subr.mxu0 %v854
    %1200 = vmatpush1.msra.mxu0 %v853
    %1201 = vmatprep.subr.mxu0 %v862
    %1202 = vmatpush1.msra.mxu0 %v861
    %1203 = vmatprep.subr.mxu0 %v870
    %1204 = vmatpush1.msra.mxu0 %v869
    %1205 = vmatprep.subr.mxu0 %v878
    %1206 = vmatpush1.msra.mxu0 %v877
    %1207 = vmatprep.subr.mxu0 %v886
    %1208 = vmatpush1.msra.mxu0 %v885
    %1209 = vmatprep.subr.mxu0 %v894
    %1210 = vmatpush1.msra.mxu0 %v893
    %1211 = vmatprep.subr.mxu0 %v902
    %1212 = vmatpush1.msra.mxu0 %v901
    %1213 = vmatprep.subr.mxu0 %v910
    %1214 = vmatpush1.msra.mxu0 %v909
    %1215 = vmatprep.subr.mxu0 %v918
    %1216 = vmatpush1.msra.mxu0 %v917
    %1217 = vmatprep.subr.mxu0 %v926
    %1218 = vmatpush1.msra.mxu0 %v925
    %1219 = vmatprep.subr.mxu0 %v934
    %1220 = vmatpush1.msra.mxu0 %v933
    %1221 = vmatprep.subr.mxu0 %v942
    %1222 = vmatpush1.msra.mxu0 %v941
    %1223 = vmatprep.subr.mxu0 %v950
    %1224 = vmatpush1.msra.mxu0 %v949
    %1225 = vmatprep.subr.mxu0 %v958
    %1226 = vmatpush1.msra.mxu0 %v957
    %1227 = vmatprep.subr.mxu0 %v966
    %1228 = vmatpush1.msra.mxu0 %v965
    %1229 = vmatprep.subr.mxu0 %v974
    %1230 = vmatpush1.msra.mxu0 %v973
    %1231 = vmatprep.subr.mxu0 %v982
    %1232 = vmatpush1.msra.mxu0 %v981
    %1233 = vmatprep.subr.mxu0 %v990
    %1234 = vmatpush1.msra.mxu0 %v989
    %1235 = vmatprep.subr.mxu0 %v998
    %1236 = vmatpush1.msra.mxu0 %v997
    %1237 = vmatprep.subr.mxu0 %v1006
    %1238 = vmatpush1.msra.mxu0 %v1005
    %1239 = vmatprep.subr.mxu0 %v1014
    %1240 = vmatpush1.msra.mxu0 %v1013
    %1241 = vmatprep.subr.mxu0 %v1022
    %1242 = vmatpush1.msra.mxu0 %v1021
    %1243 = vmatprep.subr.mxu0 %v1030
    %1244 = vmatpush1.msra.mxu0 %v1029
    %1245 = vmatprep.subr.mxu0 %v1038
    %1246 = vmatpush1.msra.mxu0 %v1037
    %1247 = vmatprep.mubr.f32.mxu0 0.0
    %1248 = vmatmul.mubr.f32.gmra.mrb[0].mxu0 0.0
    %v1249 = vpop.f32.mrb[0].mxu0
    %v1250 = vadd.f32 0.0, %v1249
    %v1251 = vpop.f32.mrb[0].mxu0
    %v1252 = vadd.f32 0.0, %v1251
    %1253 = vdwg.mxu0
    %1254 = vmatprep.subr.mxu0 %v792
    %1255 = vmatpush1.msra.mxu0 %v791
    %1256 = vmatprep.subr.mxu0 %v800
    %1257 = vmatpush1.msra.mxu0 %v799
    %1258 = vmatprep.subr.mxu0 %v808
    %1259 = vmatpush1.msra.mxu0 %v807
    %1260 = vmatprep.subr.mxu0 %v816
    %1261 = vmatpush1.msra.mxu0 %v815
    %1262 = vmatprep.subr.mxu0 %v824
    %1263 = vmatpush1.msra.mxu0 %v823
    %1264 = vmatprep.subr.mxu0 %v832
    %1265 = vmatpush1.msra.mxu0 %v831
    %1266 = vmatprep.subr.mxu0 %v840
    %1267 = vmatpush1.msra.mxu0 %v839
    %1268 = vmatprep.subr.mxu0 %v848
    %1269 = vmatpush1.msra.mxu0 %v847
    %1270 = vmatprep.subr.mxu0 %v856
    %1271 = vmatpush1.msra.mxu0 %v855
    %1272 = vmatprep.subr.mxu0 %v864
    %1273 = vmatpush1.msra.mxu0 %v863
    %1274 = vmatprep.subr.mxu0 %v872
    %1275 = vmatpush1.msra.mxu0 %v871
    %1276 = vmatprep.subr.mxu0 %v880
    %1277 = vmatpush1.msra.mxu0 %v879
    %1278 = vmatprep.subr.mxu0 %v888
    %1279 = vmatpush1.msra.mxu0 %v887
    %1280 = vmatprep.subr.mxu0 %v896
    %1281 = vmatpush1.msra.mxu0 %v895
    %1282 = vmatprep.subr.mxu0 %v904
    %1283 = vmatpush1.msra.mxu0 %v903
    %1284 = vmatprep.subr.mxu0 %v912
    %1285 = vmatpush1.msra.mxu0 %v911
    %1286 = vmatprep.subr.mxu0 %v920
    %1287 = vmatpush1.msra.mxu0 %v919
    %1288 = vmatprep.subr.mxu0 %v928
    %1289 = vmatpush1.msra.mxu0 %v927
    %1290 = vmatprep.subr.mxu0 %v936
    %1291 = vmatpush1.msra.mxu0 %v935
    %1292 = vmatprep.subr.mxu0 %v944
    %1293 = vmatpush1.msra.mxu0 %v943
    %1294 = vmatprep.subr.mxu0 %v952
    %1295 = vmatpush1.msra.mxu0 %v951
    %1296 = vmatprep.subr.mxu0 %v960
    %1297 = vmatpush1.msra.mxu0 %v959
    %1298 = vmatprep.subr.mxu0 %v968
    %1299 = vmatpush1.msra.mxu0 %v967
    %1300 = vmatprep.subr.mxu0 %v976
    %1301 = vmatpush1.msra.mxu0 %v975
    %1302 = vmatprep.subr.mxu0 %v984
    %1303 = vmatpush1.msra.mxu0 %v983
    %1304 = vmatprep.subr.mxu0 %v992
    %1305 = vmatpush1.msra.mxu0 %v991
    %1306 = vmatprep.subr.mxu0 %v1000
    %1307 = vmatpush1.msra.mxu0 %v999
    %1308 = vmatprep.subr.mxu0 %v1008
    %1309 = vmatpush1.msra.mxu0 %v1007
    %1310 = vmatprep.subr.mxu0 %v1016
    %1311 = vmatpush1.msra.mxu0 %v1015
    %1312 = vmatprep.subr.mxu0 %v1024
    %1313 = vmatpush1.msra.mxu0 %v1023
    %1314 = vmatprep.subr.mxu0 %v1032
    %1315 = vmatpush1.msra.mxu0 %v1031
    %1316 = vmatprep.subr.mxu0 %v1040
    %1317 = vmatpush1.msra.mxu0 %v1039
    %1318 = vmatprep.mubr.f32.mxu0 0.0
    %1319 = vmatmul.mubr.f32.gmra.mrb[0].mxu0 0.0
    %v1320 = vpop.f32.mrb[0].mxu0
    %v1321 = vadd.f32 0.0, %v1320
    %v1322 = vpop.f32.mrb[0].mxu0
    %v1323 = vadd.f32 0.0, %v1322
    %1324 = vdwg.mxu0
    %v1333 = vcombine.low %v1108, %v1110
    %v1334 = vcombine.low %v1179, %v1181
    %v1336 = vunpack.c.l.s4 1983009808
    %v1337 = vunpack.c.0.s8 %v1336
    %v1338 = vlaneseq
    %v1339 = vshrl.u32 %v1338, 7
    %v1340 = vsub.s32 %v1337, %v1339
    %v1341 = vrot.slane %v1333, %v1340
    %v1343 = vunpack.c.l.s4 1983009808
    %v1344 = vunpack.c.0.s8 %v1343
    %v1345 = vlaneseq
    %v1346 = vshrl.u32 %v1345, 7
    %v1347 = vsub.s32 %v1344, %v1346
    %v1348 = vrot.slane %v1334, %v1347
    %v1349 = vcombine.low %v1341, %v1348
    %v1350 = vcombine.low %v1250, %v1252
    %v1351 = vcombine.low %v1321, %v1323
    %v1353 = vunpack.c.l.s4 1983009808
    %v1354 = vunpack.c.0.s8 %v1353
    %v1355 = vlaneseq
    %v1356 = vshrl.u32 %v1355, 7
    %v1357 = vsub.s32 %v1354, %v1356
    %v1358 = vrot.slane %v1350, %v1357
    %v1360 = vunpack.c.l.s4 1983009808
    %v1361 = vunpack.c.0.s8 %v1360
    %v1362 = vlaneseq
    %v1363 = vshrl.u32 %v1362, 7
    %v1364 = vsub.s32 %v1361, %v1363
    %v1365 = vrot.slane %v1351, %v1364
    %v1366 = vcombine.low %v1358, %v1365
    %v1369 = vadd.f32 %v783, %v1349
    %v1370 = vadd.f32 %v784, %v1366
    %v1371 = vxor.u32 %v1369, 2147483648
    %v1372 = vxor.u32 %v1370, 2147483648
    %v1373 = vmul.f32 %v1371, 1.442695
    %v1374 = vpow.pop %v1373
    %v1375 = vmul.f32 %v1372, 1.442695
    %v1376 = vpow.pop %v1375
    %v1377 = vadd.f32 %v1374, 1.0
    %v1378 = vadd.f32 %v1376, 1.0
    %v1379 = vrcp.pop %v1377
    %v1380 = vmul.f32 1.0, %v1379
    %v1381 = vrcp.pop %v1378
    %v1382 = vmul.f32 1.0, %v1381
    %v1384 = vrot.slane %v1370, 4
    %v1386 = vtanh.pop %v1384
    %v1388 = vrot.slane %v1380, 4
    %v1390 = vmul.f32 %v1388, 0.0
    %v1391 = vmul.f32 %v1380, %v1386
    %v1392 = vadd.f32 %v1390, %v1391
    %v1393 = vtanh.pop %v1392
    %v1394 = vmul.f32 %v1382, %v1393
    %1395 = vst [vmem:[#allocation3] sm:$0xf] %v1394
    %s1396 = scalar_lea.vmem [#allocation2], 16
    %v1397 = vld [vmem:[%s1396] sm:$0xff]
    %v1398 = vld [vmem:[%s1396 + $0x8] sm:$0xff]
    %v1399 = vld [vmem:[%s2] sm:$0xff]
    %v1400 = vld [vmem:[%s2 + $0x8] sm:$0xff]
    %v1401 = vld [vmem:[%s2 + $0x10] sm:$0xff]
    %v1402 = vld [vmem:[%s2 + $0x18] sm:$0xff]
    %v1403 = vld [vmem:[%s2 + $0x20] sm:$0xff]
    %v1404 = vld [vmem:[%s2 + $0x28] sm:$0xff]
    %v1405 = vld [vmem:[%s2 + $0x30] sm:$0xff]
    %v1406 = vld [vmem:[%s2 + $0x38] sm:$0xff]
    %v1407 = vld [vmem:[%s2 + $0x40] sm:$0xff]
    %v1408 = vld [vmem:[%s2 + $0x48] sm:$0xff]
    %v1409 = vld [vmem:[%s2 + $0x50] sm:$0xff]
    %v1410 = vld [vmem:[%s2 + $0x58] sm:$0xff]
    %v1411 = vld [vmem:[%s2 + $0x60] sm:$0xff]
    %v1412 = vld [vmem:[%s2 + $0x68] sm:$0xff]
    %v1413 = vld [vmem:[%s2 + $0x70] sm:$0xff]
    %v1414 = vld [vmem:[%s2 + $0x78] sm:$0xff]
    %v1415 = vld [vmem:[%s2 + $0x80] sm:$0xff]
    %v1416 = vld [vmem:[%s2 + $0x88] sm:$0xff]
    %v1417 = vld [vmem:[%s2 + $0x90] sm:$0xff]
    %v1418 = vld [vmem:[%s2 + $0x98] sm:$0xff]
    %v1419 = vld [vmem:[%s2 + $0xa0] sm:$0xff]
    %v1420 = vld [vmem:[%s2 + $0xa8] sm:$0xff]
    %v1421 = vld [vmem:[%s2 + $0xb0] sm:$0xff]
    %v1422 = vld [vmem:[%s2 + $0xb8] sm:$0xff]
    %v1423 = vld [vmem:[%s2 + $0xc0] sm:$0xff]
    %v1424 = vld [vmem:[%s2 + $0xc8] sm:$0xff]
    %v1425 = vld [vmem:[%s2 + $0xd0] sm:$0xff]
    %v1426 = vld [vmem:[%s2 + $0xd8] sm:$0xff]
    %v1427 = vld [vmem:[%s2 + $0xe0] sm:$0xff]
    %v1428 = vld [vmem:[%s2 + $0xe8] sm:$0xff]
    %v1429 = vld [vmem:[%s2 + $0xf0] sm:$0xff]
    %v1430 = vld [vmem:[%s2 + $0xf8] sm:$0xff]
    %v1431 = vld [vmem:[%s2 + $0x100] sm:$0xff]
    %v1432 = vld [vmem:[%s2 + $0x108] sm:$0xff]
    %v1433 = vld [vmem:[%s2 + $0x110] sm:$0xff]
    %v1434 = vld [vmem:[%s2 + $0x118] sm:$0xff]
    %v1435 = vld [vmem:[%s2 + $0x120] sm:$0xff]
    %v1436 = vld [vmem:[%s2 + $0x128] sm:$0xff]
    %v1437 = vld [vmem:[%s2 + $0x130] sm:$0xff]
    %v1438 = vld [vmem:[%s2 + $0x138] sm:$0xff]
    %v1439 = vld [vmem:[%s2 + $0x140] sm:$0xff]
    %v1440 = vld [vmem:[%s2 + $0x148] sm:$0xff]
    %v1441 = vld [vmem:[%s2 + $0x150] sm:$0xff]
    %v1442 = vld [vmem:[%s2 + $0x158] sm:$0xff]
    %v1443 = vld [vmem:[%s2 + $0x160] sm:$0xff]
    %v1444 = vld [vmem:[%s2 + $0x168] sm:$0xff]
    %v1445 = vld [vmem:[%s2 + $0x170] sm:$0xff]
    %v1446 = vld [vmem:[%s2 + $0x178] sm:$0xff]
    %v1447 = vld [vmem:[%s2 + $0x180] sm:$0xff]
    %v1448 = vld [vmem:[%s2 + $0x188] sm:$0xff]
    %v1449 = vld [vmem:[%s2 + $0x190] sm:$0xff]
    %v1450 = vld [vmem:[%s2 + $0x198] sm:$0xff]
    %v1451 = vld [vmem:[%s2 + $0x1a0] sm:$0xff]
    %v1452 = vld [vmem:[%s2 + $0x1a8] sm:$0xff]
    %v1453 = vld [vmem:[%s2 + $0x1b0] sm:$0xff]
    %v1454 = vld [vmem:[%s2 + $0x1b8] sm:$0xff]
    %v1455 = vld [vmem:[%s2 + $0x1c0] sm:$0xff]
    %v1456 = vld [vmem:[%s2 + $0x1c8] sm:$0xff]
    %v1457 = vld [vmem:[%s2 + $0x1d0] sm:$0xff]
    %v1458 = vld [vmem:[%s2 + $0x1d8] sm:$0xff]
    %v1459 = vld [vmem:[%s2 + $0x1e0] sm:$0xff]
    %v1460 = vld [vmem:[%s2 + $0x1e8] sm:$0xff]
    %v1461 = vld [vmem:[%s2 + $0x1f0] sm:$0xff]
    %v1462 = vld [vmem:[%s2 + $0x1f8] sm:$0xff]
    %v1463 = vld [vmem:[%s2 + $0x200] sm:$0xff]
    %v1464 = vld [vmem:[%s2 + $0x208] sm:$0xff]
    %v1465 = vld [vmem:[%s2 + $0x210] sm:$0xff]
    %v1466 = vld [vmem:[%s2 + $0x218] sm:$0xff]
    %v1467 = vld [vmem:[%s2 + $0x220] sm:$0xff]
    %v1468 = vld [vmem:[%s2 + $0x228] sm:$0xff]
    %v1469 = vld [vmem:[%s2 + $0x230] sm:$0xff]
    %v1470 = vld [vmem:[%s2 + $0x238] sm:$0xff]
    %v1471 = vld [vmem:[%s2 + $0x240] sm:$0xff]
    %v1472 = vld [vmem:[%s2 + $0x248] sm:$0xff]
    %v1473 = vld [vmem:[%s2 + $0x250] sm:$0xff]
    %v1474 = vld [vmem:[%s2 + $0x258] sm:$0xff]
    %v1475 = vld [vmem:[%s2 + $0x260] sm:$0xff]
    %v1476 = vld [vmem:[%s2 + $0x268] sm:$0xff]
    %v1477 = vld [vmem:[%s2 + $0x270] sm:$0xff]
    %v1478 = vld [vmem:[%s2 + $0x278] sm:$0xff]
    %v1479 = vld [vmem:[%s2 + $0x280] sm:$0xff]
    %v1480 = vld [vmem:[%s2 + $0x288] sm:$0xff]
    %v1481 = vld [vmem:[%s2 + $0x290] sm:$0xff]
    %v1482 = vld [vmem:[%s2 + $0x298] sm:$0xff]
    %v1483 = vld [vmem:[%s2 + $0x2a0] sm:$0xff]
    %v1484 = vld [vmem:[%s2 + $0x2a8] sm:$0xff]
    %v1485 = vld [vmem:[%s2 + $0x2b0] sm:$0xff]
    %v1486 = vld [vmem:[%s2 + $0x2b8] sm:$0xff]
    %v1487 = vld [vmem:[%s2 + $0x2c0] sm:$0xff]
    %v1488 = vld [vmem:[%s2 + $0x2c8] sm:$0xff]
    %v1489 = vld [vmem:[%s2 + $0x2d0] sm:$0xff]
    %v1490 = vld [vmem:[%s2 + $0x2d8] sm:$0xff]
    %v1491 = vld [vmem:[%s2 + $0x2e0] sm:$0xff]
    %v1492 = vld [vmem:[%s2 + $0x2e8] sm:$0xff]
    %v1493 = vld [vmem:[%s2 + $0x2f0] sm:$0xff]
    %v1494 = vld [vmem:[%s2 + $0x2f8] sm:$0xff]
    %v1495 = vld [vmem:[%s2 + $0x300] sm:$0xff]
    %v1496 = vld [vmem:[%s2 + $0x308] sm:$0xff]
    %v1497 = vld [vmem:[%s2 + $0x310] sm:$0xff]
    %v1498 = vld [vmem:[%s2 + $0x318] sm:$0xff]
    %v1499 = vld [vmem:[%s2 + $0x320] sm:$0xff]
    %v1500 = vld [vmem:[%s2 + $0x328] sm:$0xff]
    %v1501 = vld [vmem:[%s2 + $0x330] sm:$0xff]
    %v1502 = vld [vmem:[%s2 + $0x338] sm:$0xff]
    %v1503 = vld [vmem:[%s2 + $0x340] sm:$0xff]
    %v1504 = vld [vmem:[%s2 + $0x348] sm:$0xff]
    %v1505 = vld [vmem:[%s2 + $0x350] sm:$0xff]
    %v1506 = vld [vmem:[%s2 + $0x358] sm:$0xff]
    %v1507 = vld [vmem:[%s2 + $0x360] sm:$0xff]
    %v1508 = vld [vmem:[%s2 + $0x368] sm:$0xff]
    %v1509 = vld [vmem:[%s2 + $0x370] sm:$0xff]
    %v1510 = vld [vmem:[%s2 + $0x378] sm:$0xff]
    %v1511 = vld [vmem:[%s2 + $0x380] sm:$0xff]
    %v1512 = vld [vmem:[%s2 + $0x388] sm:$0xff]
    %v1513 = vld [vmem:[%s2 + $0x390] sm:$0xff]
    %v1514 = vld [vmem:[%s2 + $0x398] sm:$0xff]
    %v1515 = vld [vmem:[%s2 + $0x3a0] sm:$0xff]
    %v1516 = vld [vmem:[%s2 + $0x3a8] sm:$0xff]
    %v1517 = vld [vmem:[%s2 + $0x3b0] sm:$0xff]
    %v1518 = vld [vmem:[%s2 + $0x3b8] sm:$0xff]
    %v1519 = vld [vmem:[%s2 + $0x3c0] sm:$0xff]
    %v1520 = vld [vmem:[%s2 + $0x3c8] sm:$0xff]
    %v1521 = vld [vmem:[%s2 + $0x3d0] sm:$0xff]
    %v1522 = vld [vmem:[%s2 + $0x3d8] sm:$0xff]
    %v1523 = vld [vmem:[%s2 + $0x3e0] sm:$0xff]
    %v1524 = vld [vmem:[%s2 + $0x3e8] sm:$0xff]
    %v1525 = vld [vmem:[%s2 + $0x3f0] sm:$0xff]
    %v1526 = vld [vmem:[%s2 + $0x3f8] sm:$0xff]
    %v1527 = vld [vmem:[%s2 + $0x400] sm:$0xff]
    %v1528 = vld [vmem:[%s2 + $0x408] sm:$0xff]
    %v1529 = vld [vmem:[%s2 + $0x410] sm:$0xff]
    %v1530 = vld [vmem:[%s2 + $0x418] sm:$0xff]
    %v1531 = vld [vmem:[%s2 + $0x420] sm:$0xff]
    %v1532 = vld [vmem:[%s2 + $0x428] sm:$0xff]
    %v1533 = vld [vmem:[%s2 + $0x430] sm:$0xff]
    %v1534 = vld [vmem:[%s2 + $0x438] sm:$0xff]
    %v1535 = vld [vmem:[%s2 + $0x440] sm:$0xff]
    %v1536 = vld [vmem:[%s2 + $0x448] sm:$0xff]
    %v1537 = vld [vmem:[%s2 + $0x450] sm:$0xff]
    %v1538 = vld [vmem:[%s2 + $0x458] sm:$0xff]
    %v1539 = vld [vmem:[%s2 + $0x460] sm:$0xff]
    %v1540 = vld [vmem:[%s2 + $0x468] sm:$0xff]
    %v1541 = vld [vmem:[%s2 + $0x470] sm:$0xff]
    %v1542 = vld [vmem:[%s2 + $0x478] sm:$0xff]
    %v1543 = vld [vmem:[%s2 + $0x480] sm:$0xff]
    %v1544 = vld [vmem:[%s2 + $0x488] sm:$0xff]
    %v1545 = vld [vmem:[%s2 + $0x490] sm:$0xff]
    %v1546 = vld [vmem:[%s2 + $0x498] sm:$0xff]
    %v1547 = vld [vmem:[%s2 + $0x4a0] sm:$0xff]
    %v1548 = vld [vmem:[%s2 + $0x4a8] sm:$0xff]
    %v1549 = vld [vmem:[%s2 + $0x4b0] sm:$0xff]
    %v1550 = vld [vmem:[%s2 + $0x4b8] sm:$0xff]
    %v1551 = vld [vmem:[%s2 + $0x4c0] sm:$0xff]
    %v1552 = vld [vmem:[%s2 + $0x4c8] sm:$0xff]
    %v1553 = vld [vmem:[%s2 + $0x4d0] sm:$0xff]
    %v1554 = vld [vmem:[%s2 + $0x4d8] sm:$0xff]
    %v1555 = vld [vmem:[%s2 + $0x4e0] sm:$0xff]
    %v1556 = vld [vmem:[%s2 + $0x4e8] sm:$0xff]
    %v1557 = vld [vmem:[%s2 + $0x4f0] sm:$0xff]
    %v1558 = vld [vmem:[%s2 + $0x4f8] sm:$0xff]
    %v1559 = vld [vmem:[%s2 + $0x500] sm:$0xff]
    %v1560 = vld [vmem:[%s2 + $0x508] sm:$0xff]
    %v1561 = vld [vmem:[%s2 + $0x510] sm:$0xff]
    %v1562 = vld [vmem:[%s2 + $0x518] sm:$0xff]
    %v1563 = vld [vmem:[%s2 + $0x520] sm:$0xff]
    %v1564 = vld [vmem:[%s2 + $0x528] sm:$0xff]
    %v1565 = vld [vmem:[%s2 + $0x530] sm:$0xff]
    %v1566 = vld [vmem:[%s2 + $0x538] sm:$0xff]
    %v1567 = vld [vmem:[%s2 + $0x540] sm:$0xff]
    %v1568 = vld [vmem:[%s2 + $0x548] sm:$0xff]
    %v1569 = vld [vmem:[%s2 + $0x550] sm:$0xff]
    %v1570 = vld [vmem:[%s2 + $0x558] sm:$0xff]
    %v1571 = vld [vmem:[%s2 + $0x560] sm:$0xff]
    %v1572 = vld [vmem:[%s2 + $0x568] sm:$0xff]
    %v1573 = vld [vmem:[%s2 + $0x570] sm:$0xff]
    %v1574 = vld [vmem:[%s2 + $0x578] sm:$0xff]
    %v1575 = vld [vmem:[%s2 + $0x580] sm:$0xff]
    %v1576 = vld [vmem:[%s2 + $0x588] sm:$0xff]
    %v1577 = vld [vmem:[%s2 + $0x590] sm:$0xff]
    %v1578 = vld [vmem:[%s2 + $0x598] sm:$0xff]
    %v1579 = vld [vmem:[%s2 + $0x5a0] sm:$0xff]
    %v1580 = vld [vmem:[%s2 + $0x5a8] sm:$0xff]
    %v1581 = vld [vmem:[%s2 + $0x5b0] sm:$0xff]
    %v1582 = vld [vmem:[%s2 + $0x5b8] sm:$0xff]
    %v1583 = vld [vmem:[%s2 + $0x5c0] sm:$0xff]
    %v1584 = vld [vmem:[%s2 + $0x5c8] sm:$0xff]
    %v1585 = vld [vmem:[%s2 + $0x5d0] sm:$0xff]
    %v1586 = vld [vmem:[%s2 + $0x5d8] sm:$0xff]
    %v1587 = vld [vmem:[%s2 + $0x5e0] sm:$0xff]
    %v1588 = vld [vmem:[%s2 + $0x5e8] sm:$0xff]
    %v1589 = vld [vmem:[%s2 + $0x5f0] sm:$0xff]
    %v1590 = vld [vmem:[%s2 + $0x5f8] sm:$0xff]
    %v1591 = vld [vmem:[%s2 + $0x600] sm:$0xff]
    %v1592 = vld [vmem:[%s2 + $0x608] sm:$0xff]
    %v1593 = vld [vmem:[%s2 + $0x610] sm:$0xff]
    %v1594 = vld [vmem:[%s2 + $0x618] sm:$0xff]
    %v1595 = vld [vmem:[%s2 + $0x620] sm:$0xff]
    %v1596 = vld [vmem:[%s2 + $0x628] sm:$0xff]
    %v1597 = vld [vmem:[%s2 + $0x630] sm:$0xff]
    %v1598 = vld [vmem:[%s2 + $0x638] sm:$0xff]
    %v1599 = vld [vmem:[%s2 + $0x640] sm:$0xff]
    %v1600 = vld [vmem:[%s2 + $0x648] sm:$0xff]
    %v1601 = vld [vmem:[%s2 + $0x650] sm:$0xff]
    %v1602 = vld [vmem:[%s2 + $0x658] sm:$0xff]
    %v1603 = vld [vmem:[%s2 + $0x660] sm:$0xff]
    %v1604 = vld [vmem:[%s2 + $0x668] sm:$0xff]
    %v1605 = vld [vmem:[%s2 + $0x670] sm:$0xff]
    %v1606 = vld [vmem:[%s2 + $0x678] sm:$0xff]
    %v1607 = vld [vmem:[%s2 + $0x680] sm:$0xff]
    %v1608 = vld [vmem:[%s2 + $0x688] sm:$0xff]
    %v1609 = vld [vmem:[%s2 + $0x690] sm:$0xff]
    %v1610 = vld [vmem:[%s2 + $0x698] sm:$0xff]
    %v1611 = vld [vmem:[%s2 + $0x6a0] sm:$0xff]
    %v1612 = vld [vmem:[%s2 + $0x6a8] sm:$0xff]
    %v1613 = vld [vmem:[%s2 + $0x6b0] sm:$0xff]
    %v1614 = vld [vmem:[%s2 + $0x6b8] sm:$0xff]
    %v1615 = vld [vmem:[%s2 + $0x6c0] sm:$0xff]
    %v1616 = vld [vmem:[%s2 + $0x6c8] sm:$0xff]
    %v1617 = vld [vmem:[%s2 + $0x6d0] sm:$0xff]
    %v1618 = vld [vmem:[%s2 + $0x6d8] sm:$0xff]
    %v1619 = vld [vmem:[%s2 + $0x6e0] sm:$0xff]
    %v1620 = vld [vmem:[%s2 + $0x6e8] sm:$0xff]
    %v1621 = vld [vmem:[%s2 + $0x6f0] sm:$0xff]
    %v1622 = vld [vmem:[%s2 + $0x6f8] sm:$0xff]
    %v1623 = vld [vmem:[%s2 + $0x700] sm:$0xff]
    %v1624 = vld [vmem:[%s2 + $0x708] sm:$0xff]
    %v1625 = vld [vmem:[%s2 + $0x710] sm:$0xff]
    %v1626 = vld [vmem:[%s2 + $0x718] sm:$0xff]
    %v1627 = vld [vmem:[%s2 + $0x720] sm:$0xff]
    %v1628 = vld [vmem:[%s2 + $0x728] sm:$0xff]
    %v1629 = vld [vmem:[%s2 + $0x730] sm:$0xff]
    %v1630 = vld [vmem:[%s2 + $0x738] sm:$0xff]
    %v1631 = vld [vmem:[%s2 + $0x740] sm:$0xff]
    %v1632 = vld [vmem:[%s2 + $0x748] sm:$0xff]
    %v1633 = vld [vmem:[%s2 + $0x750] sm:$0xff]
    %v1634 = vld [vmem:[%s2 + $0x758] sm:$0xff]
    %v1635 = vld [vmem:[%s2 + $0x760] sm:$0xff]
    %v1636 = vld [vmem:[%s2 + $0x768] sm:$0xff]
    %v1637 = vld [vmem:[%s2 + $0x770] sm:$0xff]
    %v1638 = vld [vmem:[%s2 + $0x778] sm:$0xff]
    %v1639 = vld [vmem:[%s2 + $0x780] sm:$0xff]
    %v1640 = vld [vmem:[%s2 + $0x788] sm:$0xff]
    %v1641 = vld [vmem:[%s2 + $0x790] sm:$0xff]
    %v1642 = vld [vmem:[%s2 + $0x798] sm:$0xff]
    %v1643 = vld [vmem:[%s2 + $0x7a0] sm:$0xff]
    %v1644 = vld [vmem:[%s2 + $0x7a8] sm:$0xff]
    %v1645 = vld [vmem:[%s2 + $0x7b0] sm:$0xff]
    %v1646 = vld [vmem:[%s2 + $0x7b8] sm:$0xff]
    %v1647 = vld [vmem:[%s2 + $0x7c0] sm:$0xff]
    %v1648 = vld [vmem:[%s2 + $0x7c8] sm:$0xff]
    %v1649 = vld [vmem:[%s2 + $0x7d0] sm:$0xff]
    %v1650 = vld [vmem:[%s2 + $0x7d8] sm:$0xff]
    %v1651 = vld [vmem:[%s2 + $0x7e0] sm:$0xff]
    %v1652 = vld [vmem:[%s2 + $0x7e8] sm:$0xff]
    %v1653 = vld [vmem:[%s2 + $0x7f0] sm:$0xff]
    %v1654 = vld [vmem:[%s2 + $0x7f8] sm:$0xff]
    %v1657 = vunpack.c.l.s4 1983009808
    %v1658 = vunpack.c.0.s8 %v1657
    %v1659 = vlaneseq
    %v1660 = vshrl.u32 %v1659, 7
    %v1661 = vsub.s32 %v1658, %v1660
    %v1662 = vrot.slane %v1394, %v1661
    %v1663 = vcombine.high %v1662, %v1662
    %1666 = vmatprep.subr.mxu0 %v1400
    %1667 = vmatpush1.msra.mxu0 %v1399
    %1668 = vmatprep.subr.mxu0 %v1408
    %1669 = vmatpush1.msra.mxu0 %v1407
    %1670 = vmatprep.subr.mxu0 %v1416
    %1671 = vmatpush1.msra.mxu0 %v1415
    %1672 = vmatprep.subr.mxu0 %v1424
    %1673 = vmatpush1.msra.mxu0 %v1423
    %1674 = vmatprep.subr.mxu0 %v1432
    %1675 = vmatpush1.msra.mxu0 %v1431
    %1676 = vmatprep.subr.mxu0 %v1440
    %1677 = vmatpush1.msra.mxu0 %v1439
    %1678 = vmatprep.subr.mxu0 %v1448
    %1679 = vmatpush1.msra.mxu0 %v1447
    %1680 = vmatprep.subr.mxu0 %v1456
    %1681 = vmatpush1.msra.mxu0 %v1455
    %1682 = vmatprep.subr.mxu0 %v1464
    %1683 = vmatpush1.msra.mxu0 %v1463
    %1684 = vmatprep.subr.mxu0 %v1472
    %1685 = vmatpush1.msra.mxu0 %v1471
    %1686 = vmatprep.subr.mxu0 %v1480
    %1687 = vmatpush1.msra.mxu0 %v1479
    %1688 = vmatprep.subr.mxu0 %v1488
    %1689 = vmatpush1.msra.mxu0 %v1487
    %1690 = vmatprep.subr.mxu0 %v1496
    %1691 = vmatpush1.msra.mxu0 %v1495
    %1692 = vmatprep.subr.mxu0 %v1504
    %1693 = vmatpush1.msra.mxu0 %v1503
    %1694 = vmatprep.subr.mxu0 %v1512
    %1695 = vmatpush1.msra.mxu0 %v1511
    %1696 = vmatprep.subr.mxu0 %v1520
    %1697 = vmatpush1.msra.mxu0 %v1519
    %1698 = vmatprep.subr.mxu0 %v1528
    %1699 = vmatpush1.msra.mxu0 %v1527
    %1700 = vmatprep.subr.mxu0 %v1536
    %1701 = vmatpush1.msra.mxu0 %v1535
    %1702 = vmatprep.subr.mxu0 %v1544
    %1703 = vmatpush1.msra.mxu0 %v1543
    %1704 = vmatprep.subr.mxu0 %v1552
    %1705 = vmatpush1.msra.mxu0 %v1551
    %1706 = vmatprep.subr.mxu0 %v1560
    %1707 = vmatpush1.msra.mxu0 %v1559
    %1708 = vmatprep.subr.mxu0 %v1568
    %1709 = vmatpush1.msra.mxu0 %v1567
    %1710 = vmatprep.subr.mxu0 %v1576
    %1711 = vmatpush1.msra.mxu0 %v1575
    %1712 = vmatprep.subr.mxu0 %v1584
    %1713 = vmatpush1.msra.mxu0 %v1583
    %1714 = vmatprep.subr.mxu0 %v1592
    %1715 = vmatpush1.msra.mxu0 %v1591
    %1716 = vmatprep.subr.mxu0 %v1600
    %1717 = vmatpush1.msra.mxu0 %v1599
    %1718 = vmatprep.subr.mxu0 %v1608
    %1719 = vmatpush1.msra.mxu0 %v1607
    %1720 = vmatprep.subr.mxu0 %v1616
    %1721 = vmatpush1.msra.mxu0 %v1615
    %1722 = vmatprep.subr.mxu0 %v1624
    %1723 = vmatpush1.msra.mxu0 %v1623
    %1724 = vmatprep.subr.mxu0 %v1632
    %1725 = vmatpush1.msra.mxu0 %v1631
    %1726 = vmatprep.subr.mxu0 %v1640
    %1727 = vmatpush1.msra.mxu0 %v1639
    %1728 = vmatprep.subr.mxu0 %v1648
    %1729 = vmatpush1.msra.mxu0 %v1647
    %1730 = vmatprep.mubr.f32.mxu0 %v1663
    %1731 = vmatmul.mubr.f32.gmra.mrb[0].mxu0 %v1662
    %v1732 = vpop.f32.mrb[0].mxu0
    %v1733 = vadd.f32 0.0, %v1732
    %v1734 = vpop.f32.mrb[0].mxu0
    %v1735 = vadd.f32 0.0, %v1734
    %1736 = vdwg.mxu0
    %1737 = vmatprep.subr.mxu0 %v1402
    %1738 = vmatpush1.msra.mxu0 %v1401
    %1739 = vmatprep.subr.mxu0 %v1410
    %1740 = vmatpush1.msra.mxu0 %v1409
    %1741 = vmatprep.subr.mxu0 %v1418
    %1742 = vmatpush1.msra.mxu0 %v1417
    %1743 = vmatprep.subr.mxu0 %v1426
    %1744 = vmatpush1.msra.mxu0 %v1425
    %1745 = vmatprep.subr.mxu0 %v1434
    %1746 = vmatpush1.msra.mxu0 %v1433
    %1747 = vmatprep.subr.mxu0 %v1442
    %1748 = vmatpush1.msra.mxu0 %v1441
    %1749 = vmatprep.subr.mxu0 %v1450
    %1750 = vmatpush1.msra.mxu0 %v1449
    %1751 = vmatprep.subr.mxu0 %v1458
    %1752 = vmatpush1.msra.mxu0 %v1457
    %1753 = vmatprep.subr.mxu0 %v1466
    %1754 = vmatpush1.msra.mxu0 %v1465
    %1755 = vmatprep.subr.mxu0 %v1474
    %1756 = vmatpush1.msra.mxu0 %v1473
    %1757 = vmatprep.subr.mxu0 %v1482
    %1758 = vmatpush1.msra.mxu0 %v1481
    %1759 = vmatprep.subr.mxu0 %v1490
    %1760 = vmatpush1.msra.mxu0 %v1489
    %1761 = vmatprep.subr.mxu0 %v1498
    %1762 = vmatpush1.msra.mxu0 %v1497
    %1763 = vmatprep.subr.mxu0 %v1506
    %1764 = vmatpush1.msra.mxu0 %v1505
    %1765 = vmatprep.subr.mxu0 %v1514
    %1766 = vmatpush1.msra.mxu0 %v1513
    %1767 = vmatprep.subr.mxu0 %v1522
    %1768 = vmatpush1.msra.mxu0 %v1521
    %1769 = vmatprep.subr.mxu0 %v1530
    %1770 = vmatpush1.msra.mxu0 %v1529
    %1771 = vmatprep.subr.mxu0 %v1538
    %1772 = vmatpush1.msra.mxu0 %v1537
    %1773 = vmatprep.subr.mxu0 %v1546
    %1774 = vmatpush1.msra.mxu0 %v1545
    %1775 = vmatprep.subr.mxu0 %v1554
    %1776 = vmatpush1.msra.mxu0 %v1553
    %1777 = vmatprep.subr.mxu0 %v1562
    %1778 = vmatpush1.msra.mxu0 %v1561
    %1779 = vmatprep.subr.mxu0 %v1570
    %1780 = vmatpush1.msra.mxu0 %v1569
    %1781 = vmatprep.subr.mxu0 %v1578
    %1782 = vmatpush1.msra.mxu0 %v1577
    %1783 = vmatprep.subr.mxu0 %v1586
    %1784 = vmatpush1.msra.mxu0 %v1585
    %1785 = vmatprep.subr.mxu0 %v1594
    %1786 = vmatpush1.msra.mxu0 %v1593
    %1787 = vmatprep.subr.mxu0 %v1602
    %1788 = vmatpush1.msra.mxu0 %v1601
    %1789 = vmatprep.subr.mxu0 %v1610
    %1790 = vmatpush1.msra.mxu0 %v1609
    %1791 = vmatprep.subr.mxu0 %v1618
    %1792 = vmatpush1.msra.mxu0 %v1617
    %1793 = vmatprep.subr.mxu0 %v1626
    %1794 = vmatpush1.msra.mxu0 %v1625
    %1795 = vmatprep.subr.mxu0 %v1634
    %1796 = vmatpush1.msra.mxu0 %v1633
    %1797 = vmatprep.subr.mxu0 %v1642
    %1798 = vmatpush1.msra.mxu0 %v1641
    %1799 = vmatprep.subr.mxu0 %v1650
    %1800 = vmatpush1.msra.mxu0 %v1649
    %1801 = vmatprep.mubr.f32.mxu0 %v1663
    %1802 = vmatmul.mubr.f32.gmra.mrb[0].mxu0 %v1662
    %v1803 = vpop.f32.mrb[0].mxu0
    %v1804 = vadd.f32 0.0, %v1803
    %v1805 = vpop.f32.mrb[0].mxu0
    %v1806 = vadd.f32 0.0, %v1805
    %1807 = vdwg.mxu0
    %1808 = vmatprep.subr.mxu0 %v1404
    %1809 = vmatpush1.msra.mxu0 %v1403
    %1810 = vmatprep.subr.mxu0 %v1412
    %1811 = vmatpush1.msra.mxu0 %v1411
    %1812 = vmatprep.subr.mxu0 %v1420
    %1813 = vmatpush1.msra.mxu0 %v1419
    %1814 = vmatprep.subr.mxu0 %v1428
    %1815 = vmatpush1.msra.mxu0 %v1427
    %1816 = vmatprep.subr.mxu0 %v1436
    %1817 = vmatpush1.msra.mxu0 %v1435
    %1818 = vmatprep.subr.mxu0 %v1444
    %1819 = vmatpush1.msra.mxu0 %v1443
    %1820 = vmatprep.subr.mxu0 %v1452
    %1821 = vmatpush1.msra.mxu0 %v1451
    %1822 = vmatprep.subr.mxu0 %v1460
    %1823 = vmatpush1.msra.mxu0 %v1459
    %1824 = vmatprep.subr.mxu0 %v1468
    %1825 = vmatpush1.msra.mxu0 %v1467
    %1826 = vmatprep.subr.mxu0 %v1476
    %1827 = vmatpush1.msra.mxu0 %v1475
    %1828 = vmatprep.subr.mxu0 %v1484
    %1829 = vmatpush1.msra.mxu0 %v1483
    %1830 = vmatprep.subr.mxu0 %v1492
    %1831 = vmatpush1.msra.mxu0 %v1491
    %1832 = vmatprep.subr.mxu0 %v1500
    %1833 = vmatpush1.msra.mxu0 %v1499
    %1834 = vmatprep.subr.mxu0 %v1508
    %1835 = vmatpush1.msra.mxu0 %v1507
    %1836 = vmatprep.subr.mxu0 %v1516
    %1837 = vmatpush1.msra.mxu0 %v1515
    %1838 = vmatprep.subr.mxu0 %v1524
    %1839 = vmatpush1.msra.mxu0 %v1523
    %1840 = vmatprep.subr.mxu0 %v1532
    %1841 = vmatpush1.msra.mxu0 %v1531
    %1842 = vmatprep.subr.mxu0 %v1540
    %1843 = vmatpush1.msra.mxu0 %v1539
    %1844 = vmatprep.subr.mxu0 %v1548
    %1845 = vmatpush1.msra.mxu0 %v1547
    %1846 = vmatprep.subr.mxu0 %v1556
    %1847 = vmatpush1.msra.mxu0 %v1555
    %1848 = vmatprep.subr.mxu0 %v1564
    %1849 = vmatpush1.msra.mxu0 %v1563
    %1850 = vmatprep.subr.mxu0 %v1572
    %1851 = vmatpush1.msra.mxu0 %v1571
    %1852 = vmatprep.subr.mxu0 %v1580
    %1853 = vmatpush1.msra.mxu0 %v1579
    %1854 = vmatprep.subr.mxu0 %v1588
    %1855 = vmatpush1.msra.mxu0 %v1587
    %1856 = vmatprep.subr.mxu0 %v1596
    %1857 = vmatpush1.msra.mxu0 %v1595
    %1858 = vmatprep.subr.mxu0 %v1604
    %1859 = vmatpush1.msra.mxu0 %v1603
    %1860 = vmatprep.subr.mxu0 %v1612
    %1861 = vmatpush1.msra.mxu0 %v1611
    %1862 = vmatprep.subr.mxu0 %v1620
    %1863 = vmatpush1.msra.mxu0 %v1619
    %1864 = vmatprep.subr.mxu0 %v1628
    %1865 = vmatpush1.msra.mxu0 %v1627
    %1866 = vmatprep.subr.mxu0 %v1636
    %1867 = vmatpush1.msra.mxu0 %v1635
    %1868 = vmatprep.subr.mxu0 %v1644
    %1869 = vmatpush1.msra.mxu0 %v1643
    %1870 = vmatprep.subr.mxu0 %v1652
    %1871 = vmatpush1.msra.mxu0 %v1651
    %1872 = vmatprep.mubr.f32.mxu0 %v1663
    %1873 = vmatmul.mubr.f32.gmra.mrb[0].mxu0 %v1662
    %v1874 = vpop.f32.mrb[0].mxu0
    %v1875 = vadd.f32 0.0, %v1874
    %v1876 = vpop.f32.mrb[0].mxu0
    %v1877 = vadd.f32 0.0, %v1876
    %1878 = vdwg.mxu0
    %1879 = vmatprep.subr.mxu0 %v1406
    %1880 = vmatpush1.msra.mxu0 %v1405
    %1881 = vmatprep.subr.mxu0 %v1414
    %1882 = vmatpush1.msra.mxu0 %v1413
    %1883 = vmatprep.subr.mxu0 %v1422
    %1884 = vmatpush1.msra.mxu0 %v1421
    %1885 = vmatprep.subr.mxu0 %v1430
    %1886 = vmatpush1.msra.mxu0 %v1429
    %1887 = vmatprep.subr.mxu0 %v1438
    %1888 = vmatpush1.msra.mxu0 %v1437
    %1889 = vmatprep.subr.mxu0 %v1446
    %1890 = vmatpush1.msra.mxu0 %v1445
    %1891 = vmatprep.subr.mxu0 %v1454
    %1892 = vmatpush1.msra.mxu0 %v1453
    %1893 = vmatprep.subr.mxu0 %v1462
    %1894 = vmatpush1.msra.mxu0 %v1461
    %1895 = vmatprep.subr.mxu0 %v1470
    %1896 = vmatpush1.msra.mxu0 %v1469
    %1897 = vmatprep.subr.mxu0 %v1478
    %1898 = vmatpush1.msra.mxu0 %v1477
    %1899 = vmatprep.subr.mxu0 %v1486
    %1900 = vmatpush1.msra.mxu0 %v1485
    %1901 = vmatprep.subr.mxu0 %v1494
    %1902 = vmatpush1.msra.mxu0 %v1493
    %1903 = vmatprep.subr.mxu0 %v1502
    %1904 = vmatpush1.msra.mxu0 %v1501
    %1905 = vmatprep.subr.mxu0 %v1510
    %1906 = vmatpush1.msra.mxu0 %v1509
    %1907 = vmatprep.subr.mxu0 %v1518
    %1908 = vmatpush1.msra.mxu0 %v1517
    %1909 = vmatprep.subr.mxu0 %v1526
    %1910 = vmatpush1.msra.mxu0 %v1525
    %1911 = vmatprep.subr.mxu0 %v1534
    %1912 = vmatpush1.msra.mxu0 %v1533
    %1913 = vmatprep.subr.mxu0 %v1542
    %1914 = vmatpush1.msra.mxu0 %v1541
    %1915 = vmatprep.subr.mxu0 %v1550
    %1916 = vmatpush1.msra.mxu0 %v1549
    %1917 = vmatprep.subr.mxu0 %v1558
    %1918 = vmatpush1.msra.mxu0 %v1557
    %1919 = vmatprep.subr.mxu0 %v1566
    %1920 = vmatpush1.msra.mxu0 %v1565
    %1921 = vmatprep.subr.mxu0 %v1574
    %1922 = vmatpush1.msra.mxu0 %v1573
    %1923 = vmatprep.subr.mxu0 %v1582
    %1924 = vmatpush1.msra.mxu0 %v1581
    %1925 = vmatprep.subr.mxu0 %v1590
    %1926 = vmatpush1.msra.mxu0 %v1589
    %1927 = vmatprep.subr.mxu0 %v1598
    %1928 = vmatpush1.msra.mxu0 %v1597
    %1929 = vmatprep.subr.mxu0 %v1606
    %1930 = vmatpush1.msra.mxu0 %v1605
    %1931 = vmatprep.subr.mxu0 %v1614
    %1932 = vmatpush1.msra.mxu0 %v1613
    %1933 = vmatprep.subr.mxu0 %v1622
    %1934 = vmatpush1.msra.mxu0 %v1621
    %1935 = vmatprep.subr.mxu0 %v1630
    %1936 = vmatpush1.msra.mxu0 %v1629
    %1937 = vmatprep.subr.mxu0 %v1638
    %1938 = vmatpush1.msra.mxu0 %v1637
    %1939 = vmatprep.subr.mxu0 %v1646
    %1940 = vmatpush1.msra.mxu0 %v1645
    %1941 = vmatprep.subr.mxu0 %v1654
    %1942 = vmatpush1.msra.mxu0 %v1653
    %1943 = vmatprep.mubr.f32.mxu0 %v1663
    %1944 = vmatmul.mubr.f32.gmra.mrb[0].mxu0 %v1662
    %v1945 = vpop.f32.mrb[0].mxu0
    %v1946 = vadd.f32 0.0, %v1945
    %v1947 = vpop.f32.mrb[0].mxu0
    %v1948 = vadd.f32 0.0, %v1947
    %1949 = vdwg.mxu0
    %v1958 = vcombine.low %v1733, %v1735
    %v1959 = vcombine.low %v1804, %v1806
    %v1961 = vunpack.c.l.s4 1983009808
    %v1962 = vunpack.c.0.s8 %v1961
    %v1963 = vlaneseq
    %v1964 = vshrl.u32 %v1963, 7
    %v1965 = vsub.s32 %v1962, %v1964
    %v1966 = vrot.slane %v1958, %v1965
    %v1968 = vunpack.c.l.s4 1983009808
    %v1969 = vunpack.c.0.s8 %v1968
    %v1970 = vlaneseq
    %v1971 = vshrl.u32 %v1970, 7
    %v1972 = vsub.s32 %v1969, %v1971
    %v1973 = vrot.slane %v1959, %v1972
    %v1974 = vcombine.low %v1966, %v1973
    %v1975 = vcombine.low %v1875, %v1877
    %v1976 = vcombine.low %v1946, %v1948
    %v1978 = vunpack.c.l.s4 1983009808
    %v1979 = vunpack.c.0.s8 %v1978
    %v1980 = vlaneseq
    %v1981 = vshrl.u32 %v1980, 7
    %v1982 = vsub.s32 %v1979, %v1981
    %v1983 = vrot.slane %v1975, %v1982
    %v1985 = vunpack.c.l.s4 1983009808
    %v1986 = vunpack.c.0.s8 %v1985
    %v1987 = vlaneseq
    %v1988 = vshrl.u32 %v1987, 7
    %v1989 = vsub.s32 %v1986, %v1988
    %v1990 = vrot.slane %v1976, %v1989
    %v1991 = vcombine.low %v1983, %v1990
    %v1994 = vadd.f32 %v1397, %v1974
    %v1995 = vadd.f32 %v1398, %v1991
    %v1996 = vxor.u32 %v1994, 2147483648
    %v1997 = vxor.u32 %v1995, 2147483648
    %v1998 = vmul.f32 %v1996, 1.442695
    %v1999 = vpow.pop %v1998
    %v2000 = vmul.f32 %v1997, 1.442695
    %v2001 = vpow.pop %v2000
    %v2002 = vadd.f32 %v1999, 1.0
    %v2003 = vadd.f32 %v2001, 1.0
    %v2004 = vrcp.pop %v2002
    %v2005 = vmul.f32 1.0, %v2004
    %v2006 = vrcp.pop %v2003
    %v2007 = vmul.f32 1.0, %v2006
    %v2009 = vrot.slane %v1995, 4
    %v2011 = vtanh.pop %v2009
    %v2013 = vrot.slane %v2005, 4
    %v2015 = vmul.f32 %v2013, %v1392
    %v2016 = vmul.f32 %v2005, %v2011
    %v2017 = vadd.f32 %v2015, %v2016
    %v2018 = vtanh.pop %v2017
    %v2019 = vmul.f32 %v2007, %v2018
    %s2020 = scalar_lea.vmem [#allocation3], 4
    %2021 = vst [vmem:[%s2020] sm:$0xf] %v2019
    %s2022 = scalar_lea.vmem [#allocation2], 32
    %v2023 = vld [vmem:[%s2022] sm:$0xff]
    %v2024 = vld [vmem:[%s2022 + $0x8] sm:$0xff]
    %v2025 = vld [vmem:[%s2] sm:$0xff]
    %v2026 = vld [vmem:[%s2 + $0x8] sm:$0xff]
    %v2027 = vld [vmem:[%s2 + $0x10] sm:$0xff]
    %v2028 = vld [vmem:[%s2 + $0x18] sm:$0xff]
    %v2029 = vld [vmem:[%s2 + $0x20] sm:$0xff]
    %v2030 = vld [vmem:[%s2 + $0x28] sm:$0xff]
    %v2031 = vld [vmem:[%s2 + $0x30] sm:$0xff]
    %v2032 = vld [vmem:[%s2 + $0x38] sm:$0xff]
    %v2033 = vld [vmem:[%s2 + $0x40] sm:$0xff]
    %v2034 = vld [vmem:[%s2 + $0x48] sm:$0xff]
    %v2035 = vld [vmem:[%s2 + $0x50] sm:$0xff]
    %v2036 = vld [vmem:[%s2 + $0x58] sm:$0xff]
    %v2037 = vld [vmem:[%s2 + $0x60] sm:$0xff]
    %v2038 = vld [vmem:[%s2 + $0x68] sm:$0xff]
    %v2039 = vld [vmem:[%s2 + $0x70] sm:$0xff]
    %v2040 = vld [vmem:[%s2 + $0x78] sm:$0xff]
    %v2041 = vld [vmem:[%s2 + $0x80] sm:$0xff]
    %v2042 = vld [vmem:[%s2 + $0x88] sm:$0xff]
    %v2043 = vld [vmem:[%s2 + $0x90] sm:$0xff]
    %v2044 = vld [vmem:[%s2 + $0x98] sm:$0xff]
    %v2045 = vld [vmem:[%s2 + $0xa0] sm:$0xff]
    %v2046 = vld [vmem:[%s2 + $0xa8] sm:$0xff]
    %v2047 = vld [vmem:[%s2 + $0xb0] sm:$0xff]
    %v2048 = vld [vmem:[%s2 + $0xb8] sm:$0xff]
    %v2049 = vld [vmem:[%s2 + $0xc0] sm:$0xff]
    %v2050 = vld [vmem:[%s2 + $0xc8] sm:$0xff]
    %v2051 = vld [vmem:[%s2 + $0xd0] sm:$0xff]
    %v2052 = vld [vmem:[%s2 + $0xd8] sm:$0xff]
    %v2053 = vld [vmem:[%s2 + $0xe0] sm:$0xff]
    %v2054 = vld [vmem:[%s2 + $0xe8] sm:$0xff]
    %v2055 = vld [vmem:[%s2 + $0xf0] sm:$0xff]
    %v2056 = vld [vmem:[%s2 + $0xf8] sm:$0xff]
    %v2057 = vld [vmem:[%s2 + $0x100] sm:$0xff]
    %v2058 = vld [vmem:[%s2 + $0x108] sm:$0xff]
    %v2059 = vld [vmem:[%s2 + $0x110] sm:$0xff]
    %v2060 = vld [vmem:[%s2 + $0x118] sm:$0xff]
    %v2061 = vld [vmem:[%s2 + $0x120] sm:$0xff]
    %v2062 = vld [vmem:[%s2 + $0x128] sm:$0xff]
    %v2063 = vld [vmem:[%s2 + $0x130] sm:$0xff]
    %v2064 = vld [vmem:[%s2 + $0x138] sm:$0xff]
    %v2065 = vld [vmem:[%s2 + $0x140] sm:$0xff]
    %v2066 = vld [vmem:[%s2 + $0x148] sm:$0xff]
    %v2067 = vld [vmem:[%s2 + $0x150] sm:$0xff]
    %v2068 = vld [vmem:[%s2 + $0x158] sm:$0xff]
    %v2069 = vld [vmem:[%s2 + $0x160] sm:$0xff]
    %v2070 = vld [vmem:[%s2 + $0x168] sm:$0xff]
    %v2071 = vld [vmem:[%s2 + $0x170] sm:$0xff]
    %v2072 = vld [vmem:[%s2 + $0x178] sm:$0xff]
    %v2073 = vld [vmem:[%s2 + $0x180] sm:$0xff]
    %v2074 = vld [vmem:[%s2 + $0x188] sm:$0xff]
    %v2075 = vld [vmem:[%s2 + $0x190] sm:$0xff]
    %v2076 = vld [vmem:[%s2 + $0x198] sm:$0xff]
    %v2077 = vld [vmem:[%s2 + $0x1a0] sm:$0xff]
    %v2078 = vld [vmem:[%s2 + $0x1a8] sm:$0xff]
    %v2079 = vld [vmem:[%s2 + $0x1b0] sm:$0xff]
    %v2080 = vld [vmem:[%s2 + $0x1b8] sm:$0xff]
    %v2081 = vld [vmem:[%s2 + $0x1c0] sm:$0xff]
    %v2082 = vld [vmem:[%s2 + $0x1c8] sm:$0xff]
    %v2083 = vld [vmem:[%s2 + $0x1d0] sm:$0xff]
    %v2084 = vld [vmem:[%s2 + $0x1d8] sm:$0xff]
    %v2085 = vld [vmem:[%s2 + $0x1e0] sm:$0xff]
    %v2086 = vld [vmem:[%s2 + $0x1e8] sm:$0xff]
    %v2087 = vld [vmem:[%s2 + $0x1f0] sm:$0xff]
    %v2088 = vld [vmem:[%s2 + $0x1f8] sm:$0xff]
    %v2089 = vld [vmem:[%s2 + $0x200] sm:$0xff]
    %v2090 = vld [vmem:[%s2 + $0x208] sm:$0xff]
    %v2091 = vld [vmem:[%s2 + $0x210] sm:$0xff]
    %v2092 = vld [vmem:[%s2 + $0x218] sm:$0xff]
    %v2093 = vld [vmem:[%s2 + $0x220] sm:$0xff]
    %v2094 = vld [vmem:[%s2 + $0x228] sm:$0xff]
    %v2095 = vld [vmem:[%s2 + $0x230] sm:$0xff]
    %v2096 = vld [vmem:[%s2 + $0x238] sm:$0xff]
    %v2097 = vld [vmem:[%s2 + $0x240] sm:$0xff]
    %v2098 = vld [vmem:[%s2 + $0x248] sm:$0xff]
    %v2099 = vld [vmem:[%s2 + $0x250] sm:$0xff]
    %v2100 = vld [vmem:[%s2 + $0x258] sm:$0xff]
    %v2101 = vld [vmem:[%s2 + $0x260] sm:$0xff]
    %v2102 = vld [vmem:[%s2 + $0x268] sm:$0xff]
    %v2103 = vld [vmem:[%s2 + $0x270] sm:$0xff]
    %v2104 = vld [vmem:[%s2 + $0x278] sm:$0xff]
    %v2105 = vld [vmem:[%s2 + $0x280] sm:$0xff]
    %v2106 = vld [vmem:[%s2 + $0x288] sm:$0xff]
    %v2107 = vld [vmem:[%s2 + $0x290] sm:$0xff]
    %v2108 = vld [vmem:[%s2 + $0x298] sm:$0xff]
    %v2109 = vld [vmem:[%s2 + $0x2a0] sm:$0xff]
    %v2110 = vld [vmem:[%s2 + $0x2a8] sm:$0xff]
    %v2111 = vld [vmem:[%s2 + $0x2b0] sm:$0xff]
    %v2112 = vld [vmem:[%s2 + $0x2b8] sm:$0xff]
    %v2113 = vld [vmem:[%s2 + $0x2c0] sm:$0xff]
    %v2114 = vld [vmem:[%s2 + $0x2c8] sm:$0xff]
    %v2115 = vld [vmem:[%s2 + $0x2d0] sm:$0xff]
    %v2116 = vld [vmem:[%s2 + $0x2d8] sm:$0xff]
    %v2117 = vld [vmem:[%s2 + $0x2e0] sm:$0xff]
    %v2118 = vld [vmem:[%s2 + $0x2e8] sm:$0xff]
    %v2119 = vld [vmem:[%s2 + $0x2f0] sm:$0xff]
    %v2120 = vld [vmem:[%s2 + $0x2f8] sm:$0xff]
    %v2121 = vld [vmem:[%s2 + $0x300] sm:$0xff]
    %v2122 = vld [vmem:[%s2 + $0x308] sm:$0xff]
    %v2123 = vld [vmem:[%s2 + $0x310] sm:$0xff]
    %v2124 = vld [vmem:[%s2 + $0x318] sm:$0xff]
    %v2125 = vld [vmem:[%s2 + $0x320] sm:$0xff]
    %v2126 = vld [vmem:[%s2 + $0x328] sm:$0xff]
    %v2127 = vld [vmem:[%s2 + $0x330] sm:$0xff]
    %v2128 = vld [vmem:[%s2 + $0x338] sm:$0xff]
    %v2129 = vld [vmem:[%s2 + $0x340] sm:$0xff]
    %v2130 = vld [vmem:[%s2 + $0x348] sm:$0xff]
    %v2131 = vld [vmem:[%s2 + $0x350] sm:$0xff]
    %v2132 = vld [vmem:[%s2 + $0x358] sm:$0xff]
    %v2133 = vld [vmem:[%s2 + $0x360] sm:$0xff]
    %v2134 = vld [vmem:[%s2 + $0x368] sm:$0xff]
    %v2135 = vld [vmem:[%s2 + $0x370] sm:$0xff]
    %v2136 = vld [vmem:[%s2 + $0x378] sm:$0xff]
    %v2137 = vld [vmem:[%s2 + $0x380] sm:$0xff]
    %v2138 = vld [vmem:[%s2 + $0x388] sm:$0xff]
    %v2139 = vld [vmem:[%s2 + $0x390] sm:$0xff]
    %v2140 = vld [vmem:[%s2 + $0x398] sm:$0xff]
    %v2141 = vld [vmem:[%s2 + $0x3a0] sm:$0xff]
    %v2142 = vld [vmem:[%s2 + $0x3a8] sm:$0xff]
    %v2143 = vld [vmem:[%s2 + $0x3b0] sm:$0xff]
    %v2144 = vld [vmem:[%s2 + $0x3b8] sm:$0xff]
    %v2145 = vld [vmem:[%s2 + $0x3c0] sm:$0xff]
    %v2146 = vld [vmem:[%s2 + $0x3c8] sm:$0xff]
    %v2147 = vld [vmem:[%s2 + $0x3d0] sm:$0xff]
    %v2148 = vld [vmem:[%s2 + $0x3d8] sm:$0xff]
    %v2149 = vld [vmem:[%s2 + $0x3e0] sm:$0xff]
    %v2150 = vld [vmem:[%s2 + $0x3e8] sm:$0xff]
    %v2151 = vld [vmem:[%s2 + $0x3f0] sm:$0xff]
    %v2152 = vld [vmem:[%s2 + $0x3f8] sm:$0xff]
    %v2153 = vld [vmem:[%s2 + $0x400] sm:$0xff]
    %v2154 = vld [vmem:[%s2 + $0x408] sm:$0xff]
    %v2155 = vld [vmem:[%s2 + $0x410] sm:$0xff]
    %v2156 = vld [vmem:[%s2 + $0x418] sm:$0xff]
    %v2157 = vld [vmem:[%s2 + $0x420] sm:$0xff]
    %v2158 = vld [vmem:[%s2 + $0x428] sm:$0xff]
    %v2159 = vld [vmem:[%s2 + $0x430] sm:$0xff]
    %v2160 = vld [vmem:[%s2 + $0x438] sm:$0xff]
    %v2161 = vld [vmem:[%s2 + $0x440] sm:$0xff]
    %v2162 = vld [vmem:[%s2 + $0x448] sm:$0xff]
    %v2163 = vld [vmem:[%s2 + $0x450] sm:$0xff]
    %v2164 = vld [vmem:[%s2 + $0x458] sm:$0xff]
    %v2165 = vld [vmem:[%s2 + $0x460] sm:$0xff]
    %v2166 = vld [vmem:[%s2 + $0x468] sm:$0xff]
    %v2167 = vld [vmem:[%s2 + $0x470] sm:$0xff]
    %v2168 = vld [vmem:[%s2 + $0x478] sm:$0xff]
    %v2169 = vld [vmem:[%s2 + $0x480] sm:$0xff]
    %v2170 = vld [vmem:[%s2 + $0x488] sm:$0xff]
    %v2171 = vld [vmem:[%s2 + $0x490] sm:$0xff]
    %v2172 = vld [vmem:[%s2 + $0x498] sm:$0xff]
    %v2173 = vld [vmem:[%s2 + $0x4a0] sm:$0xff]
    %v2174 = vld [vmem:[%s2 + $0x4a8] sm:$0xff]
    %v2175 = vld [vmem:[%s2 + $0x4b0] sm:$0xff]
    %v2176 = vld [vmem:[%s2 + $0x4b8] sm:$0xff]
    %v2177 = vld [vmem:[%s2 + $0x4c0] sm:$0xff]
    %v2178 = vld [vmem:[%s2 + $0x4c8] sm:$0xff]
    %v2179 = vld [vmem:[%s2 + $0x4d0] sm:$0xff]
    %v2180 = vld [vmem:[%s2 + $0x4d8] sm:$0xff]
    %v2181 = vld [vmem:[%s2 + $0x4e0] sm:$0xff]
    %v2182 = vld [vmem:[%s2 + $0x4e8] sm:$0xff]
    %v2183 = vld [vmem:[%s2 + $0x4f0] sm:$0xff]
    %v2184 = vld [vmem:[%s2 + $0x4f8] sm:$0xff]
    %v2185 = vld [vmem:[%s2 + $0x500] sm:$0xff]
    %v2186 = vld [vmem:[%s2 + $0x508] sm:$0xff]
    %v2187 = vld [vmem:[%s2 + $0x510] sm:$0xff]
    %v2188 = vld [vmem:[%s2 + $0x518] sm:$0xff]
    %v2189 = vld [vmem:[%s2 + $0x520] sm:$0xff]
    %v2190 = vld [vmem:[%s2 + $0x528] sm:$0xff]
    %v2191 = vld [vmem:[%s2 + $0x530] sm:$0xff]
    %v2192 = vld [vmem:[%s2 + $0x538] sm:$0xff]
    %v2193 = vld [vmem:[%s2 + $0x540] sm:$0xff]
    %v2194 = vld [vmem:[%s2 + $0x548] sm:$0xff]
    %v2195 = vld [vmem:[%s2 + $0x550] sm:$0xff]
    %v2196 = vld [vmem:[%s2 + $0x558] sm:$0xff]
    %v2197 = vld [vmem:[%s2 + $0x560] sm:$0xff]
    %v2198 = vld [vmem:[%s2 + $0x568] sm:$0xff]
    %v2199 = vld [vmem:[%s2 + $0x570] sm:$0xff]
    %v2200 = vld [vmem:[%s2 + $0x578] sm:$0xff]
    %v2201 = vld [vmem:[%s2 + $0x580] sm:$0xff]
    %v2202 = vld [vmem:[%s2 + $0x588] sm:$0xff]
    %v2203 = vld [vmem:[%s2 + $0x590] sm:$0xff]
    %v2204 = vld [vmem:[%s2 + $0x598] sm:$0xff]
    %v2205 = vld [vmem:[%s2 + $0x5a0] sm:$0xff]
    %v2206 = vld [vmem:[%s2 + $0x5a8] sm:$0xff]
    %v2207 = vld [vmem:[%s2 + $0x5b0] sm:$0xff]
    %v2208 = vld [vmem:[%s2 + $0x5b8] sm:$0xff]
    %v2209 = vld [vmem:[%s2 + $0x5c0] sm:$0xff]
    %v2210 = vld [vmem:[%s2 + $0x5c8] sm:$0xff]
    %v2211 = vld [vmem:[%s2 + $0x5d0] sm:$0xff]
    %v2212 = vld [vmem:[%s2 + $0x5d8] sm:$0xff]
    %v2213 = vld [vmem:[%s2 + $0x5e0] sm:$0xff]
    %v2214 = vld [vmem:[%s2 + $0x5e8] sm:$0xff]
    %v2215 = vld [vmem:[%s2 + $0x5f0] sm:$0xff]
    %v2216 = vld [vmem:[%s2 + $0x5f8] sm:$0xff]
    %v2217 = vld [vmem:[%s2 + $0x600] sm:$0xff]
    %v2218 = vld [vmem:[%s2 + $0x608] sm:$0xff]
    %v2219 = vld [vmem:[%s2 + $0x610] sm:$0xff]
    %v2220 = vld [vmem:[%s2 + $0x618] sm:$0xff]
    %v2221 = vld [vmem:[%s2 + $0x620] sm:$0xff]
    %v2222 = vld [vmem:[%s2 + $0x628] sm:$0xff]
    %v2223 = vld [vmem:[%s2 + $0x630] sm:$0xff]
    %v2224 = vld [vmem:[%s2 + $0x638] sm:$0xff]
    %v2225 = vld [vmem:[%s2 + $0x640] sm:$0xff]
    %v2226 = vld [vmem:[%s2 + $0x648] sm:$0xff]
    %v2227 = vld [vmem:[%s2 + $0x650] sm:$0xff]
    %v2228 = vld [vmem:[%s2 + $0x658] sm:$0xff]
    %v2229 = vld [vmem:[%s2 + $0x660] sm:$0xff]
    %v2230 = vld [vmem:[%s2 + $0x668] sm:$0xff]
    %v2231 = vld [vmem:[%s2 + $0x670] sm:$0xff]
    %v2232 = vld [vmem:[%s2 + $0x678] sm:$0xff]
    %v2233 = vld [vmem:[%s2 + $0x680] sm:$0xff]
    %v2234 = vld [vmem:[%s2 + $0x688] sm:$0xff]
    %v2235 = vld [vmem:[%s2 + $0x690] sm:$0xff]
    %v2236 = vld [vmem:[%s2 + $0x698] sm:$0xff]
    %v2237 = vld [vmem:[%s2 + $0x6a0] sm:$0xff]
    %v2238 = vld [vmem:[%s2 + $0x6a8] sm:$0xff]
    %v2239 = vld [vmem:[%s2 + $0x6b0] sm:$0xff]
    %v2240 = vld [vmem:[%s2 + $0x6b8] sm:$0xff]
    %v2241 = vld [vmem:[%s2 + $0x6c0] sm:$0xff]
    %v2242 = vld [vmem:[%s2 + $0x6c8] sm:$0xff]
    %v2243 = vld [vmem:[%s2 + $0x6d0] sm:$0xff]
    %v2244 = vld [vmem:[%s2 + $0x6d8] sm:$0xff]
    %v2245 = vld [vmem:[%s2 + $0x6e0] sm:$0xff]
    %v2246 = vld [vmem:[%s2 + $0x6e8] sm:$0xff]
    %v2247 = vld [vmem:[%s2 + $0x6f0] sm:$0xff]
    %v2248 = vld [vmem:[%s2 + $0x6f8] sm:$0xff]
    %v2249 = vld [vmem:[%s2 + $0x700] sm:$0xff]
    %v2250 = vld [vmem:[%s2 + $0x708] sm:$0xff]
    %v2251 = vld [vmem:[%s2 + $0x710] sm:$0xff]
    %v2252 = vld [vmem:[%s2 + $0x718] sm:$0xff]
    %v2253 = vld [vmem:[%s2 + $0x720] sm:$0xff]
    %v2254 = vld [vmem:[%s2 + $0x728] sm:$0xff]
    %v2255 = vld [vmem:[%s2 + $0x730] sm:$0xff]
    %v2256 = vld [vmem:[%s2 + $0x738] sm:$0xff]
    %v2257 = vld [vmem:[%s2 + $0x740] sm:$0xff]
    %v2258 = vld [vmem:[%s2 + $0x748] sm:$0xff]
    %v2259 = vld [vmem:[%s2 + $0x750] sm:$0xff]
    %v2260 = vld [vmem:[%s2 + $0x758] sm:$0xff]
    %v2261 = vld [vmem:[%s2 + $0x760] sm:$0xff]
    %v2262 = vld [vmem:[%s2 + $0x768] sm:$0xff]
    %v2263 = vld [vmem:[%s2 + $0x770] sm:$0xff]
    %v2264 = vld [vmem:[%s2 + $0x778] sm:$0xff]
    %v2265 = vld [vmem:[%s2 + $0x780] sm:$0xff]
    %v2266 = vld [vmem:[%s2 + $0x788] sm:$0xff]
    %v2267 = vld [vmem:[%s2 + $0x790] sm:$0xff]
    %v2268 = vld [vmem:[%s2 + $0x798] sm:$0xff]
    %v2269 = vld [vmem:[%s2 + $0x7a0] sm:$0xff]
    %v2270 = vld [vmem:[%s2 + $0x7a8] sm:$0xff]
    %v2271 = vld [vmem:[%s2 + $0x7b0] sm:$0xff]
    %v2272 = vld [vmem:[%s2 + $0x7b8] sm:$0xff]
    %v2273 = vld [vmem:[%s2 + $0x7c0] sm:$0xff]
    %v2274 = vld [vmem:[%s2 + $0x7c8] sm:$0xff]
    %v2275 = vld [vmem:[%s2 + $0x7d0] sm:$0xff]
    %v2276 = vld [vmem:[%s2 + $0x7d8] sm:$0xff]
    %v2277 = vld [vmem:[%s2 + $0x7e0] sm:$0xff]
    %v2278 = vld [vmem:[%s2 + $0x7e8] sm:$0xff]
    %v2279 = vld [vmem:[%s2 + $0x7f0] sm:$0xff]
    %v2280 = vld [vmem:[%s2 + $0x7f8] sm:$0xff]
    %v2283 = vunpack.c.l.s4 1983009808
    %v2284 = vunpack.c.0.s8 %v2283
    %v2285 = vlaneseq
    %v2286 = vshrl.u32 %v2285, 7
    %v2287 = vsub.s32 %v2284, %v2286
    %v2288 = vrot.slane %v2019, %v2287
    %v2289 = vcombine.high %v2288, %v2288
    %2292 = vmatprep.subr.mxu0 %v2026
    %2293 = vmatpush1.msra.mxu0 %v2025
    %2294 = vmatprep.subr.mxu0 %v2034
    %2295 = vmatpush1.msra.mxu0 %v2033
    %2296 = vmatprep.subr.mxu0 %v2042
    %2297 = vmatpush1.msra.mxu0 %v2041
    %2298 = vmatprep.subr.mxu0 %v2050
    %2299 = vmatpush1.msra.mxu0 %v2049
    %2300 = vmatprep.subr.mxu0 %v2058
    %2301 = vmatpush1.msra.mxu0 %v2057
    %2302 = vmatprep.subr.mxu0 %v2066
    %2303 = vmatpush1.msra.mxu0 %v2065
    %2304 = vmatprep.subr.mxu0 %v2074
    %2305 = vmatpush1.msra.mxu0 %v2073
    %2306 = vmatprep.subr.mxu0 %v2082
    %2307 = vmatpush1.msra.mxu0 %v2081
    %2308 = vmatprep.subr.mxu0 %v2090
    %2309 = vmatpush1.msra.mxu0 %v2089
    %2310 = vmatprep.subr.mxu0 %v2098
    %2311 = vmatpush1.msra.mxu0 %v2097
    %2312 = vmatprep.subr.mxu0 %v2106
    %2313 = vmatpush1.msra.mxu0 %v2105
    %2314 = vmatprep.subr.mxu0 %v2114
    %2315 = vmatpush1.msra.mxu0 %v2113
    %2316 = vmatprep.subr.mxu0 %v2122
    %2317 = vmatpush1.msra.mxu0 %v2121
    %2318 = vmatprep.subr.mxu0 %v2130
    %2319 = vmatpush1.msra.mxu0 %v2129
    %2320 = vmatprep.subr.mxu0 %v2138
    %2321 = vmatpush1.msra.mxu0 %v2137
    %2322 = vmatprep.subr.mxu0 %v2146
    %2323 = vmatpush1.msra.mxu0 %v2145
    %2324 = vmatprep.subr.mxu0 %v2154
    %2325 = vmatpush1.msra.mxu0 %v2153
    %2326 = vmatprep.subr.mxu0 %v2162
    %2327 = vmatpush1.msra.mxu0 %v2161
    %2328 = vmatprep.subr.mxu0 %v2170
    %2329 = vmatpush1.msra.mxu0 %v2169
    %2330 = vmatprep.subr.mxu0 %v2178
    %2331 = vmatpush1.msra.mxu0 %v2177
    %2332 = vmatprep.subr.mxu0 %v2186
    %2333 = vmatpush1.msra.mxu0 %v2185
    %2334 = vmatprep.subr.mxu0 %v2194
    %2335 = vmatpush1.msra.mxu0 %v2193
    %2336 = vmatprep.subr.mxu0 %v2202
    %2337 = vmatpush1.msra.mxu0 %v2201
    %2338 = vmatprep.subr.mxu0 %v2210
    %2339 = vmatpush1.msra.mxu0 %v2209
    %2340 = vmatprep.subr.mxu0 %v2218
    %2341 = vmatpush1.msra.mxu0 %v2217
    %2342 = vmatprep.subr.mxu0 %v2226
    %2343 = vmatpush1.msra.mxu0 %v2225
    %2344 = vmatprep.subr.mxu0 %v2234
    %2345 = vmatpush1.msra.mxu0 %v2233
    %2346 = vmatprep.subr.mxu0 %v2242
    %2347 = vmatpush1.msra.mxu0 %v2241
    %2348 = vmatprep.subr.mxu0 %v2250
    %2349 = vmatpush1.msra.mxu0 %v2249
    %2350 = vmatprep.subr.mxu0 %v2258
    %2351 = vmatpush1.msra.mxu0 %v2257
    %2352 = vmatprep.subr.mxu0 %v2266
    %2353 = vmatpush1.msra.mxu0 %v2265
    %2354 = vmatprep.subr.mxu0 %v2274
    %2355 = vmatpush1.msra.mxu0 %v2273
    %2356 = vmatprep.mubr.f32.mxu0 %v2289
    %2357 = vmatmul.mubr.f32.gmra.mrb[0].mxu0 %v2288
    %v2358 = vpop.f32.mrb[0].mxu0
    %v2359 = vadd.f32 0.0, %v2358
    %v2360 = vpop.f32.mrb[0].mxu0
    %v2361 = vadd.f32 0.0, %v2360
    %2362 = vdwg.mxu0
    %2363 = vmatprep.subr.mxu0 %v2028
    %2364 = vmatpush1.msra.mxu0 %v2027
    %2365 = vmatprep.subr.mxu0 %v2036
    %2366 = vmatpush1.msra.mxu0 %v2035
    %2367 = vmatprep.subr.mxu0 %v2044
    %2368 = vmatpush1.msra.mxu0 %v2043
    %2369 = vmatprep.subr.mxu0 %v2052
    %2370 = vmatpush1.msra.mxu0 %v2051
    %2371 = vmatprep.subr.mxu0 %v2060
    %2372 = vmatpush1.msra.mxu0 %v2059
    %2373 = vmatprep.subr.mxu0 %v2068
    %2374 = vmatpush1.msra.mxu0 %v2067
    %2375 = vmatprep.subr.mxu0 %v2076
    %2376 = vmatpush1.msra.mxu0 %v2075
    %2377 = vmatprep.subr.mxu0 %v2084
    %2378 = vmatpush1.msra.mxu0 %v2083
    %2379 = vmatprep.subr.mxu0 %v2092
    %2380 = vmatpush1.msra.mxu0 %v2091
    %2381 = vmatprep.subr.mxu0 %v2100
    %2382 = vmatpush1.msra.mxu0 %v2099
    %2383 = vmatprep.subr.mxu0 %v2108
    %2384 = vmatpush1.msra.mxu0 %v2107
    %2385 = vmatprep.subr.mxu0 %v2116
    %2386 = vmatpush1.msra.mxu0 %v2115
    %2387 = vmatprep.subr.mxu0 %v2124
    %2388 = vmatpush1.msra.mxu0 %v2123
    %2389 = vmatprep.subr.mxu0 %v2132
    %2390 = vmatpush1.msra.mxu0 %v2131
    %2391 = vmatprep.subr.mxu0 %v2140
    %2392 = vmatpush1.msra.mxu0 %v2139
    %2393 = vmatprep.subr.mxu0 %v2148
    %2394 = vmatpush1.msra.mxu0 %v2147
    %2395 = vmatprep.subr.mxu0 %v2156
    %2396 = vmatpush1.msra.mxu0 %v2155
    %2397 = vmatprep.subr.mxu0 %v2164
    %2398 = vmatpush1.msra.mxu0 %v2163
    %2399 = vmatprep.subr.mxu0 %v2172
    %2400 = vmatpush1.msra.mxu0 %v2171
    %2401 = vmatprep.subr.mxu0 %v2180
    %2402 = vmatpush1.msra.mxu0 %v2179
    %2403 = vmatprep.subr.mxu0 %v2188
    %2404 = vmatpush1.msra.mxu0 %v2187
    %2405 = vmatprep.subr.mxu0 %v2196
    %2406 = vmatpush1.msra.mxu0 %v2195
    %2407 = vmatprep.subr.mxu0 %v2204
    %2408 = vmatpush1.msra.mxu0 %v2203
    %2409 = vmatprep.subr.mxu0 %v2212
    %2410 = vmatpush1.msra.mxu0 %v2211
    %2411 = vmatprep.subr.mxu0 %v2220
    %2412 = vmatpush1.msra.mxu0 %v2219
    %2413 = vmatprep.subr.mxu0 %v2228
    %2414 = vmatpush1.msra.mxu0 %v2227
    %2415 = vmatprep.subr.mxu0 %v2236
    %2416 = vmatpush1.msra.mxu0 %v2235
    %2417 = vmatprep.subr.mxu0 %v2244
    %2418 = vmatpush1.msra.mxu0 %v2243
    %2419 = vmatprep.subr.mxu0 %v2252
    %2420 = vmatpush1.msra.mxu0 %v2251
    %2421 = vmatprep.subr.mxu0 %v2260
    %2422 = vmatpush1.msra.mxu0 %v2259
    %2423 = vmatprep.subr.mxu0 %v2268
    %2424 = vmatpush1.msra.mxu0 %v2267
    %2425 = vmatprep.subr.mxu0 %v2276
    %2426 = vmatpush1.msra.mxu0 %v2275
    %2427 = vmatprep.mubr.f32.mxu0 %v2289
    %2428 = vmatmul.mubr.f32.gmra.mrb[0].mxu0 %v2288
    %v2429 = vpop.f32.mrb[0].mxu0
    %v2430 = vadd.f32 0.0, %v2429
    %v2431 = vpop.f32.mrb[0].mxu0
    %v2432 = vadd.f32 0.0, %v2431
    %2433 = vdwg.mxu0
    %2434 = vmatprep.subr.mxu0 %v2030
    %2435 = vmatpush1.msra.mxu0 %v2029
    %2436 = vmatprep.subr.mxu0 %v2038
    %2437 = vmatpush1.msra.mxu0 %v2037
    %2438 = vmatprep.subr.mxu0 %v2046
    %2439 = vmatpush1.msra.mxu0 %v2045
    %2440 = vmatprep.subr.mxu0 %v2054
    %2441 = vmatpush1.msra.mxu0 %v2053
    %2442 = vmatprep.subr.mxu0 %v2062
    %2443 = vmatpush1.msra.mxu0 %v2061
    %2444 = vmatprep.subr.mxu0 %v2070
    %2445 = vmatpush1.msra.mxu0 %v2069
    %2446 = vmatprep.subr.mxu0 %v2078
    %2447 = vmatpush1.msra.mxu0 %v2077
    %2448 = vmatprep.subr.mxu0 %v2086
    %2449 = vmatpush1.msra.mxu0 %v2085
    %2450 = vmatprep.subr.mxu0 %v2094
    %2451 = vmatpush1.msra.mxu0 %v2093
    %2452 = vmatprep.subr.mxu0 %v2102
    %2453 = vmatpush1.msra.mxu0 %v2101
    %2454 = vmatprep.subr.mxu0 %v2110
    %2455 = vmatpush1.msra.mxu0 %v2109
    %2456 = vmatprep.subr.mxu0 %v2118
    %2457 = vmatpush1.msra.mxu0 %v2117
    %2458 = vmatprep.subr.mxu0 %v2126
    %2459 = vmatpush1.msra.mxu0 %v2125
    %2460 = vmatprep.subr.mxu0 %v2134
    %2461 = vmatpush1.msra.mxu0 %v2133
    %2462 = vmatprep.subr.mxu0 %v2142
    %2463 = vmatpush1.msra.mxu0 %v2141
    %2464 = vmatprep.subr.mxu0 %v2150
    %2465 = vmatpush1.msra.mxu0 %v2149
    %2466 = vmatprep.subr.mxu0 %v2158
    %2467 = vmatpush1.msra.mxu0 %v2157
    %2468 = vmatprep.subr.mxu0 %v2166
    %2469 = vmatpush1.msra.mxu0 %v2165
    %2470 = vmatprep.subr.mxu0 %v2174
    %2471 = vmatpush1.msra.mxu0 %v2173
    %2472 = vmatprep.subr.mxu0 %v2182
    %2473 = vmatpush1.msra.mxu0 %v2181
    %2474 = vmatprep.subr.mxu0 %v2190
    %2475 = vmatpush1.msra.mxu0 %v2189
    %2476 = vmatprep.subr.mxu0 %v2198
    %2477 = vmatpush1.msra.mxu0 %v2197
    %2478 = vmatprep.subr.mxu0 %v2206
    %2479 = vmatpush1.msra.mxu0 %v2205
    %2480 = vmatprep.subr.mxu0 %v2214
    %2481 = vmatpush1.msra.mxu0 %v2213
    %2482 = vmatprep.subr.mxu0 %v2222
    %2483 = vmatpush1.msra.mxu0 %v2221
    %2484 = vmatprep.subr.mxu0 %v2230
    %2485 = vmatpush1.msra.mxu0 %v2229
    %2486 = vmatprep.subr.mxu0 %v2238
    %2487 = vmatpush1.msra.mxu0 %v2237
    %2488 = vmatprep.subr.mxu0 %v2246
    %2489 = vmatpush1.msra.mxu0 %v2245
    %2490 = vmatprep.subr.mxu0 %v2254
    %2491 = vmatpush1.msra.mxu0 %v2253
    %2492 = vmatprep.subr.mxu0 %v2262
    %2493 = vmatpush1.msra.mxu0 %v2261
    %2494 = vmatprep.subr.mxu0 %v2270
    %2495 = vmatpush1.msra.mxu0 %v2269
    %2496 = vmatprep.subr.mxu0 %v2278
    %2497 = vmatpush1.msra.mxu0 %v2277
    %2498 = vmatprep.mubr.f32.mxu0 %v2289
    %2499 = vmatmul.mubr.f32.gmra.mrb[0].mxu0 %v2288
    %v2500 = vpop.f32.mrb[0].mxu0
    %v2501 = vadd.f32 0.0, %v2500
    %v2502 = vpop.f32.mrb[0].mxu0
    %v2503 = vadd.f32 0.0, %v2502
    %2504 = vdwg.mxu0
    %2505 = vmatprep.subr.mxu0 %v2032
    %2506 = vmatpush1.msra.mxu0 %v2031
    %2507 = vmatprep.subr.mxu0 %v2040
    %2508 = vmatpush1.msra.mxu0 %v2039
    %2509 = vmatprep.subr.mxu0 %v2048
    %2510 = vmatpush1.msra.mxu0 %v2047
    %2511 = vmatprep.subr.mxu0 %v2056
    %2512 = vmatpush1.msra.mxu0 %v2055
    %2513 = vmatprep.subr.mxu0 %v2064
    %2514 = vmatpush1.msra.mxu0 %v2063
    %2515 = vmatprep.subr.mxu0 %v2072
    %2516 = vmatpush1.msra.mxu0 %v2071
    %2517 = vmatprep.subr.mxu0 %v2080
    %2518 = vmatpush1.msra.mxu0 %v2079
    %2519 = vmatprep.subr.mxu0 %v2088
    %2520 = vmatpush1.msra.mxu0 %v2087
    %2521 = vmatprep.subr.mxu0 %v2096
    %2522 = vmatpush1.msra.mxu0 %v2095
    %2523 = vmatprep.subr.mxu0 %v2104
    %2524 = vmatpush1.msra.mxu0 %v2103
    %2525 = vmatprep.subr.mxu0 %v2112
    %2526 = vmatpush1.msra.mxu0 %v2111
    %2527 = vmatprep.subr.mxu0 %v2120
    %2528 = vmatpush1.msra.mxu0 %v2119
    %2529 = vmatprep.subr.mxu0 %v2128
    %2530 = vmatpush1.msra.mxu0 %v2127
    %2531 = vmatprep.subr.mxu0 %v2136
    %2532 = vmatpush1.msra.mxu0 %v2135
    %2533 = vmatprep.subr.mxu0 %v2144
    %2534 = vmatpush1.msra.mxu0 %v2143
    %2535 = vmatprep.subr.mxu0 %v2152
    %2536 = vmatpush1.msra.mxu0 %v2151
    %2537 = vmatprep.subr.mxu0 %v2160
    %2538 = vmatpush1.msra.mxu0 %v2159
    %2539 = vmatprep.subr.mxu0 %v2168
    %2540 = vmatpush1.msra.mxu0 %v2167
    %2541 = vmatprep.subr.mxu0 %v2176
    %2542 = vmatpush1.msra.mxu0 %v2175
    %2543 = vmatprep.subr.mxu0 %v2184
    %2544 = vmatpush1.msra.mxu0 %v2183
    %2545 = vmatprep.subr.mxu0 %v2192
    %2546 = vmatpush1.msra.mxu0 %v2191
    %2547 = vmatprep.subr.mxu0 %v2200
    %2548 = vmatpush1.msra.mxu0 %v2199
    %2549 = vmatprep.subr.mxu0 %v2208
    %2550 = vmatpush1.msra.mxu0 %v2207
    %2551 = vmatprep.subr.mxu0 %v2216
    %2552 = vmatpush1.msra.mxu0 %v2215
    %2553 = vmatprep.subr.mxu0 %v2224
    %2554 = vmatpush1.msra.mxu0 %v2223
    %2555 = vmatprep.subr.mxu0 %v2232
    %2556 = vmatpush1.msra.mxu0 %v2231
    %2557 = vmatprep.subr.mxu0 %v2240
    %2558 = vmatpush1.msra.mxu0 %v2239
    %2559 = vmatprep.subr.mxu0 %v2248
    %2560 = vmatpush1.msra.mxu0 %v2247
    %2561 = vmatprep.subr.mxu0 %v2256
    %2562 = vmatpush1.msra.mxu0 %v2255
    %2563 = vmatprep.subr.mxu0 %v2264
    %2564 = vmatpush1.msra.mxu0 %v2263
    %2565 = vmatprep.subr.mxu0 %v2272
    %2566 = vmatpush1.msra.mxu0 %v2271
    %2567 = vmatprep.subr.mxu0 %v2280
    %2568 = vmatpush1.msra.mxu0 %v2279
    %2569 = vmatprep.mubr.f32.mxu0 %v2289
    %2570 = vmatmul.mubr.f32.gmra.mrb[0].mxu0 %v2288
    %v2571 = vpop.f32.mrb[0].mxu0
    %v2572 = vadd.f32 0.0, %v2571
    %v2573 = vpop.f32.mrb[0].mxu0
    %v2574 = vadd.f32 0.0, %v2573
    %2575 = vdwg.mxu0
    %v2584 = vcombine.low %v2359, %v2361
    %v2585 = vcombine.low %v2430, %v2432
    %v2587 = vunpack.c.l.s4 1983009808
    %v2588 = vunpack.c.0.s8 %v2587
    %v2589 = vlaneseq
    %v2590 = vshrl.u32 %v2589, 7
    %v2591 = vsub.s32 %v2588, %v2590
    %v2592 = vrot.slane %v2584, %v2591
    %v2594 = vunpack.c.l.s4 1983009808
    %v2595 = vunpack.c.0.s8 %v2594
    %v2596 = vlaneseq
    %v2597 = vshrl.u32 %v2596, 7
    %v2598 = vsub.s32 %v2595, %v2597
    %v2599 = vrot.slane %v2585, %v2598
    %v2600 = vcombine.low %v2592, %v2599
    %v2601 = vcombine.low %v2501, %v2503
    %v2602 = vcombine.low %v2572, %v2574
    %v2604 = vunpack.c.l.s4 1983009808
    %v2605 = vunpack.c.0.s8 %v2604
    %v2606 = vlaneseq
    %v2607 = vshrl.u32 %v2606, 7
    %v2608 = vsub.s32 %v2605, %v2607
    %v2609 = vrot.slane %v2601, %v2608
    %v2611 = vunpack.c.l.s4 1983009808
    %v2612 = vunpack.c.0.s8 %v2611
    %v2613 = vlaneseq
    %v2614 = vshrl.u32 %v2613, 7
    %v2615 = vsub.s32 %v2612, %v2614
    %v2616 = vrot.slane %v2602, %v2615
    %v2617 = vcombine.low %v2609, %v2616
    %v2620 = vadd.f32 %v2023, %v2600
    %v2621 = vadd.f32 %v2024, %v2617
    %v2622 = vxor.u32 %v2620, 2147483648
    %v2623 = vxor.u32 %v2621, 2147483648
    %v2624 = vmul.f32 %v2622, 1.442695
    %v2625 = vpow.pop %v2624
    %v2626 = vmul.f32 %v2623, 1.442695
    %v2627 = vpow.pop %v2626
    %v2628 = vadd.f32 %v2625, 1.0
    %v2629 = vadd.f32 %v2627, 1.0
    %v2630 = vrcp.pop %v2628
    %v2631 = vmul.f32 1.0, %v2630
    %v2632 = vrcp.pop %v2629
    %v2633 = vmul.f32 1.0, %v2632
    %v2635 = vrot.slane %v2621, 4
    %v2637 = vtanh.pop %v2635
    %v2639 = vrot.slane %v2631, 4
    %v2641 = vmul.f32 %v2639, %v2017
    %v2642 = vmul.f32 %v2631, %v2637
    %v2643 = vadd.f32 %v2641, %v2642
    %v2644 = vtanh.pop %v2643
    %v2645 = vmul.f32 %v2633, %v2644
    %s2646 = scalar_lea.vmem [#allocation3], 8
    %2647 = vst [vmem:[%s2646] sm:$0xf] %v2645
    %s2648 = scalar_lea.vmem [#allocation2], 48
    %v2649 = vld [vmem:[%s2648] sm:$0xff]
    %v2650 = vld [vmem:[%s2648 + $0x8] sm:$0xff]
    %v2651 = vld [vmem:[%s2] sm:$0xff]
    %v2652 = vld [vmem:[%s2 + $0x8] sm:$0xff]
    %v2653 = vld [vmem:[%s2 + $0x10] sm:$0xff]
    %v2654 = vld [vmem:[%s2 + $0x18] sm:$0xff]
    %v2655 = vld [vmem:[%s2 + $0x20] sm:$0xff]
    %v2656 = vld [vmem:[%s2 + $0x28] sm:$0xff]
    %v2657 = vld [vmem:[%s2 + $0x30] sm:$0xff]
    %v2658 = vld [vmem:[%s2 + $0x38] sm:$0xff]
    %v2659 = vld [vmem:[%s2 + $0x40] sm:$0xff]
    %v2660 = vld [vmem:[%s2 + $0x48] sm:$0xff]
    %v2661 = vld [vmem:[%s2 + $0x50] sm:$0xff]
    %v2662 = vld [vmem:[%s2 + $0x58] sm:$0xff]
    %v2663 = vld [vmem:[%s2 + $0x60] sm:$0xff]
    %v2664 = vld [vmem:[%s2 + $0x68] sm:$0xff]
    %v2665 = vld [vmem:[%s2 + $0x70] sm:$0xff]
    %v2666 = vld [vmem:[%s2 + $0x78] sm:$0xff]
    %v2667 = vld [vmem:[%s2 + $0x80] sm:$0xff]
    %v2668 = vld [vmem:[%s2 + $0x88] sm:$0xff]
    %v2669 = vld [vmem:[%s2 + $0x90] sm:$0xff]
    %v2670 = vld [vmem:[%s2 + $0x98] sm:$0xff]
    %v2671 = vld [vmem:[%s2 + $0xa0] sm:$0xff]
    %v2672 = vld [vmem:[%s2 + $0xa8] sm:$0xff]
    %v2673 = vld [vmem:[%s2 + $0xb0] sm:$0xff]
    %v2674 = vld [vmem:[%s2 + $0xb8] sm:$0xff]
    %v2675 = vld [vmem:[%s2 + $0xc0] sm:$0xff]
    %v2676 = vld [vmem:[%s2 + $0xc8] sm:$0xff]
    %v2677 = vld [vmem:[%s2 + $0xd0] sm:$0xff]
    %v2678 = vld [vmem:[%s2 + $0xd8] sm:$0xff]
    %v2679 = vld [vmem:[%s2 + $0xe0] sm:$0xff]
    %v2680 = vld [vmem:[%s2 + $0xe8] sm:$0xff]
    %v2681 = vld [vmem:[%s2 + $0xf0] sm:$0xff]
    %v2682 = vld [vmem:[%s2 + $0xf8] sm:$0xff]
    %v2683 = vld [vmem:[%s2 + $0x100] sm:$0xff]
    %v2684 = vld [vmem:[%s2 + $0x108] sm:$0xff]
    %v2685 = vld [vmem:[%s2 + $0x110] sm:$0xff]
    %v2686 = vld [vmem:[%s2 + $0x118] sm:$0xff]
    %v2687 = vld [vmem:[%s2 + $0x120] sm:$0xff]
    %v2688 = vld [vmem:[%s2 + $0x128] sm:$0xff]
    %v2689 = vld [vmem:[%s2 + $0x130] sm:$0xff]
    %v2690 = vld [vmem:[%s2 + $0x138] sm:$0xff]
    %v2691 = vld [vmem:[%s2 + $0x140] sm:$0xff]
    %v2692 = vld [vmem:[%s2 + $0x148] sm:$0xff]
    %v2693 = vld [vmem:[%s2 + $0x150] sm:$0xff]
    %v2694 = vld [vmem:[%s2 + $0x158] sm:$0xff]
    %v2695 = vld [vmem:[%s2 + $0x160] sm:$0xff]
    %v2696 = vld [vmem:[%s2 + $0x168] sm:$0xff]
    %v2697 = vld [vmem:[%s2 + $0x170] sm:$0xff]
    %v2698 = vld [vmem:[%s2 + $0x178] sm:$0xff]
    %v2699 = vld [vmem:[%s2 + $0x180] sm:$0xff]
    %v2700 = vld [vmem:[%s2 + $0x188] sm:$0xff]
    %v2701 = vld [vmem:[%s2 + $0x190] sm:$0xff]
    %v2702 = vld [vmem:[%s2 + $0x198] sm:$0xff]
    %v2703 = vld [vmem:[%s2 + $0x1a0] sm:$0xff]
    %v2704 = vld [vmem:[%s2 + $0x1a8] sm:$0xff]
    %v2705 = vld [vmem:[%s2 + $0x1b0] sm:$0xff]
    %v2706 = vld [vmem:[%s2 + $0x1b8] sm:$0xff]
    %v2707 = vld [vmem:[%s2 + $0x1c0] sm:$0xff]
    %v2708 = vld [vmem:[%s2 + $0x1c8] sm:$0xff]
    %v2709 = vld [vmem:[%s2 + $0x1d0] sm:$0xff]
    %v2710 = vld [vmem:[%s2 + $0x1d8] sm:$0xff]
    %v2711 = vld [vmem:[%s2 + $0x1e0] sm:$0xff]
    %v2712 = vld [vmem:[%s2 + $0x1e8] sm:$0xff]
    %v2713 = vld [vmem:[%s2 + $0x1f0] sm:$0xff]
    %v2714 = vld [vmem:[%s2 + $0x1f8] sm:$0xff]
    %v2715 = vld [vmem:[%s2 + $0x200] sm:$0xff]
    %v2716 = vld [vmem:[%s2 + $0x208] sm:$0xff]
    %v2717 = vld [vmem:[%s2 + $0x210] sm:$0xff]
    %v2718 = vld [vmem:[%s2 + $0x218] sm:$0xff]
    %v2719 = vld [vmem:[%s2 + $0x220] sm:$0xff]
    %v2720 = vld [vmem:[%s2 + $0x228] sm:$0xff]
    %v2721 = vld [vmem:[%s2 + $0x230] sm:$0xff]
    %v2722 = vld [vmem:[%s2 + $0x238] sm:$0xff]
    %v2723 = vld [vmem:[%s2 + $0x240] sm:$0xff]
    %v2724 = vld [vmem:[%s2 + $0x248] sm:$0xff]
    %v2725 = vld [vmem:[%s2 + $0x250] sm:$0xff]
    %v2726 = vld [vmem:[%s2 + $0x258] sm:$0xff]
    %v2727 = vld [vmem:[%s2 + $0x260] sm:$0xff]
    %v2728 = vld [vmem:[%s2 + $0x268] sm:$0xff]
    %v2729 = vld [vmem:[%s2 + $0x270] sm:$0xff]
    %v2730 = vld [vmem:[%s2 + $0x278] sm:$0xff]
    %v2731 = vld [vmem:[%s2 + $0x280] sm:$0xff]
    %v2732 = vld [vmem:[%s2 + $0x288] sm:$0xff]
    %v2733 = vld [vmem:[%s2 + $0x290] sm:$0xff]
    %v2734 = vld [vmem:[%s2 + $0x298] sm:$0xff]
    %v2735 = vld [vmem:[%s2 + $0x2a0] sm:$0xff]
    %v2736 = vld [vmem:[%s2 + $0x2a8] sm:$0xff]
    %v2737 = vld [vmem:[%s2 + $0x2b0] sm:$0xff]
    %v2738 = vld [vmem:[%s2 + $0x2b8] sm:$0xff]
    %v2739 = vld [vmem:[%s2 + $0x2c0] sm:$0xff]
    %v2740 = vld [vmem:[%s2 + $0x2c8] sm:$0xff]
    %v2741 = vld [vmem:[%s2 + $0x2d0] sm:$0xff]
    %v2742 = vld [vmem:[%s2 + $0x2d8] sm:$0xff]
    %v2743 = vld [vmem:[%s2 + $0x2e0] sm:$0xff]
    %v2744 = vld [vmem:[%s2 + $0x2e8] sm:$0xff]
    %v2745 = vld [vmem:[%s2 + $0x2f0] sm:$0xff]
    %v2746 = vld [vmem:[%s2 + $0x2f8] sm:$0xff]
    %v2747 = vld [vmem:[%s2 + $0x300] sm:$0xff]
    %v2748 = vld [vmem:[%s2 + $0x308] sm:$0xff]
    %v2749 = vld [vmem:[%s2 + $0x310] sm:$0xff]
    %v2750 = vld [vmem:[%s2 + $0x318] sm:$0xff]
    %v2751 = vld [vmem:[%s2 + $0x320] sm:$0xff]
    %v2752 = vld [vmem:[%s2 + $0x328] sm:$0xff]
    %v2753 = vld [vmem:[%s2 + $0x330] sm:$0xff]
    %v2754 = vld [vmem:[%s2 + $0x338] sm:$0xff]
    %v2755 = vld [vmem:[%s2 + $0x340] sm:$0xff]
    %v2756 = vld [vmem:[%s2 + $0x348] sm:$0xff]
    %v2757 = vld [vmem:[%s2 + $0x350] sm:$0xff]
    %v2758 = vld [vmem:[%s2 + $0x358] sm:$0xff]
    %v2759 = vld [vmem:[%s2 + $0x360] sm:$0xff]
    %v2760 = vld [vmem:[%s2 + $0x368] sm:$0xff]
    %v2761 = vld [vmem:[%s2 + $0x370] sm:$0xff]
    %v2762 = vld [vmem:[%s2 + $0x378] sm:$0xff]
    %v2763 = vld [vmem:[%s2 + $0x380] sm:$0xff]
    %v2764 = vld [vmem:[%s2 + $0x388] sm:$0xff]
    %v2765 = vld [vmem:[%s2 + $0x390] sm:$0xff]
    %v2766 = vld [vmem:[%s2 + $0x398] sm:$0xff]
    %v2767 = vld [vmem:[%s2 + $0x3a0] sm:$0xff]
    %v2768 = vld [vmem:[%s2 + $0x3a8] sm:$0xff]
    %v2769 = vld [vmem:[%s2 + $0x3b0] sm:$0xff]
    %v2770 = vld [vmem:[%s2 + $0x3b8] sm:$0xff]
    %v2771 = vld [vmem:[%s2 + $0x3c0] sm:$0xff]
    %v2772 = vld [vmem:[%s2 + $0x3c8] sm:$0xff]
    %v2773 = vld [vmem:[%s2 + $0x3d0] sm:$0xff]
    %v2774 = vld [vmem:[%s2 + $0x3d8] sm:$0xff]
    %v2775 = vld [vmem:[%s2 + $0x3e0] sm:$0xff]
    %v2776 = vld [vmem:[%s2 + $0x3e8] sm:$0xff]
    %v2777 = vld [vmem:[%s2 + $0x3f0] sm:$0xff]
    %v2778 = vld [vmem:[%s2 + $0x3f8] sm:$0xff]
    %v2779 = vld [vmem:[%s2 + $0x400] sm:$0xff]
    %v2780 = vld [vmem:[%s2 + $0x408] sm:$0xff]
    %v2781 = vld [vmem:[%s2 + $0x410] sm:$0xff]
    %v2782 = vld [vmem:[%s2 + $0x418] sm:$0xff]
    %v2783 = vld [vmem:[%s2 + $0x420] sm:$0xff]
    %v2784 = vld [vmem:[%s2 + $0x428] sm:$0xff]
    %v2785 = vld [vmem:[%s2 + $0x430] sm:$0xff]
    %v2786 = vld [vmem:[%s2 + $0x438] sm:$0xff]
    %v2787 = vld [vmem:[%s2 + $0x440] sm:$0xff]
    %v2788 = vld [vmem:[%s2 + $0x448] sm:$0xff]
    %v2789 = vld [vmem:[%s2 + $0x450] sm:$0xff]
    %v2790 = vld [vmem:[%s2 + $0x458] sm:$0xff]
    %v2791 = vld [vmem:[%s2 + $0x460] sm:$0xff]
    %v2792 = vld [vmem:[%s2 + $0x468] sm:$0xff]
    %v2793 = vld [vmem:[%s2 + $0x470] sm:$0xff]
    %v2794 = vld [vmem:[%s2 + $0x478] sm:$0xff]
    %v2795 = vld [vmem:[%s2 + $0x480] sm:$0xff]
    %v2796 = vld [vmem:[%s2 + $0x488] sm:$0xff]
    %v2797 = vld [vmem:[%s2 + $0x490] sm:$0xff]
    %v2798 = vld [vmem:[%s2 + $0x498] sm:$0xff]
    %v2799 = vld [vmem:[%s2 + $0x4a0] sm:$0xff]
    %v2800 = vld [vmem:[%s2 + $0x4a8] sm:$0xff]
    %v2801 = vld [vmem:[%s2 + $0x4b0] sm:$0xff]
    %v2802 = vld [vmem:[%s2 + $0x4b8] sm:$0xff]
    %v2803 = vld [vmem:[%s2 + $0x4c0] sm:$0xff]
    %v2804 = vld [vmem:[%s2 + $0x4c8] sm:$0xff]
    %v2805 = vld [vmem:[%s2 + $0x4d0] sm:$0xff]
    %v2806 = vld [vmem:[%s2 + $0x4d8] sm:$0xff]
    %v2807 = vld [vmem:[%s2 + $0x4e0] sm:$0xff]
    %v2808 = vld [vmem:[%s2 + $0x4e8] sm:$0xff]
    %v2809 = vld [vmem:[%s2 + $0x4f0] sm:$0xff]
    %v2810 = vld [vmem:[%s2 + $0x4f8] sm:$0xff]
    %v2811 = vld [vmem:[%s2 + $0x500] sm:$0xff]
    %v2812 = vld [vmem:[%s2 + $0x508] sm:$0xff]
    %v2813 = vld [vmem:[%s2 + $0x510] sm:$0xff]
    %v2814 = vld [vmem:[%s2 + $0x518] sm:$0xff]
    %v2815 = vld [vmem:[%s2 + $0x520] sm:$0xff]
    %v2816 = vld [vmem:[%s2 + $0x528] sm:$0xff]
    %v2817 = vld [vmem:[%s2 + $0x530] sm:$0xff]
    %v2818 = vld [vmem:[%s2 + $0x538] sm:$0xff]
    %v2819 = vld [vmem:[%s2 + $0x540] sm:$0xff]
    %v2820 = vld [vmem:[%s2 + $0x548] sm:$0xff]
    %v2821 = vld [vmem:[%s2 + $0x550] sm:$0xff]
    %v2822 = vld [vmem:[%s2 + $0x558] sm:$0xff]
    %v2823 = vld [vmem:[%s2 + $0x560] sm:$0xff]
    %v2824 = vld [vmem:[%s2 + $0x568] sm:$0xff]
    %v2825 = vld [vmem:[%s2 + $0x570] sm:$0xff]
    %v2826 = vld [vmem:[%s2 + $0x578] sm:$0xff]
    %v2827 = vld [vmem:[%s2 + $0x580] sm:$0xff]
    %v2828 = vld [vmem:[%s2 + $0x588] sm:$0xff]
    %v2829 = vld [vmem:[%s2 + $0x590] sm:$0xff]
    %v2830 = vld [vmem:[%s2 + $0x598] sm:$0xff]
    %v2831 = vld [vmem:[%s2 + $0x5a0] sm:$0xff]
    %v2832 = vld [vmem:[%s2 + $0x5a8] sm:$0xff]
    %v2833 = vld [vmem:[%s2 + $0x5b0] sm:$0xff]
    %v2834 = vld [vmem:[%s2 + $0x5b8] sm:$0xff]
    %v2835 = vld [vmem:[%s2 + $0x5c0] sm:$0xff]
    %v2836 = vld [vmem:[%s2 + $0x5c8] sm:$0xff]
    %v2837 = vld [vmem:[%s2 + $0x5d0] sm:$0xff]
    %v2838 = vld [vmem:[%s2 + $0x5d8] sm:$0xff]
    %v2839 = vld [vmem:[%s2 + $0x5e0] sm:$0xff]
    %v2840 = vld [vmem:[%s2 + $0x5e8] sm:$0xff]
    %v2841 = vld [vmem:[%s2 + $0x5f0] sm:$0xff]
    %v2842 = vld [vmem:[%s2 + $0x5f8] sm:$0xff]
    %v2843 = vld [vmem:[%s2 + $0x600] sm:$0xff]
    %v2844 = vld [vmem:[%s2 + $0x608] sm:$0xff]
    %v2845 = vld [vmem:[%s2 + $0x610] sm:$0xff]
    %v2846 = vld [vmem:[%s2 + $0x618] sm:$0xff]
    %v2847 = vld [vmem:[%s2 + $0x620] sm:$0xff]
    %v2848 = vld [vmem:[%s2 + $0x628] sm:$0xff]
    %v2849 = vld [vmem:[%s2 + $0x630] sm:$0xff]
    %v2850 = vld [vmem:[%s2 + $0x638] sm:$0xff]
    %v2851 = vld [vmem:[%s2 + $0x640] sm:$0xff]
    %v2852 = vld [vmem:[%s2 + $0x648] sm:$0xff]
    %v2853 = vld [vmem:[%s2 + $0x650] sm:$0xff]
    %v2854 = vld [vmem:[%s2 + $0x658] sm:$0xff]
    %v2855 = vld [vmem:[%s2 + $0x660] sm:$0xff]
    %v2856 = vld [vmem:[%s2 + $0x668] sm:$0xff]
    %v2857 = vld [vmem:[%s2 + $0x670] sm:$0xff]
    %v2858 = vld [vmem:[%s2 + $0x678] sm:$0xff]
    %v2859 = vld [vmem:[%s2 + $0x680] sm:$0xff]
    %v2860 = vld [vmem:[%s2 + $0x688] sm:$0xff]
    %v2861 = vld [vmem:[%s2 + $0x690] sm:$0xff]
    %v2862 = vld [vmem:[%s2 + $0x698] sm:$0xff]
    %v2863 = vld [vmem:[%s2 + $0x6a0] sm:$0xff]
    %v2864 = vld [vmem:[%s2 + $0x6a8] sm:$0xff]
    %v2865 = vld [vmem:[%s2 + $0x6b0] sm:$0xff]
    %v2866 = vld [vmem:[%s2 + $0x6b8] sm:$0xff]
    %v2867 = vld [vmem:[%s2 + $0x6c0] sm:$0xff]
    %v2868 = vld [vmem:[%s2 + $0x6c8] sm:$0xff]
    %v2869 = vld [vmem:[%s2 + $0x6d0] sm:$0xff]
    %v2870 = vld [vmem:[%s2 + $0x6d8] sm:$0xff]
    %v2871 = vld [vmem:[%s2 + $0x6e0] sm:$0xff]
    %v2872 = vld [vmem:[%s2 + $0x6e8] sm:$0xff]
    %v2873 = vld [vmem:[%s2 + $0x6f0] sm:$0xff]
    %v2874 = vld [vmem:[%s2 + $0x6f8] sm:$0xff]
    %v2875 = vld [vmem:[%s2 + $0x700] sm:$0xff]
    %v2876 = vld [vmem:[%s2 + $0x708] sm:$0xff]
    %v2877 = vld [vmem:[%s2 + $0x710] sm:$0xff]
    %v2878 = vld [vmem:[%s2 + $0x718] sm:$0xff]
    %v2879 = vld [vmem:[%s2 + $0x720] sm:$0xff]
    %v2880 = vld [vmem:[%s2 + $0x728] sm:$0xff]
    %v2881 = vld [vmem:[%s2 + $0x730] sm:$0xff]
    %v2882 = vld [vmem:[%s2 + $0x738] sm:$0xff]
    %v2883 = vld [vmem:[%s2 + $0x740] sm:$0xff]
    %v2884 = vld [vmem:[%s2 + $0x748] sm:$0xff]
    %v2885 = vld [vmem:[%s2 + $0x750] sm:$0xff]
    %v2886 = vld [vmem:[%s2 + $0x758] sm:$0xff]
    %v2887 = vld [vmem:[%s2 + $0x760] sm:$0xff]
    %v2888 = vld [vmem:[%s2 + $0x768] sm:$0xff]
    %v2889 = vld [vmem:[%s2 + $0x770] sm:$0xff]
    %v2890 = vld [vmem:[%s2 + $0x778] sm:$0xff]
    %v2891 = vld [vmem:[%s2 + $0x780] sm:$0xff]
    %v2892 = vld [vmem:[%s2 + $0x788] sm:$0xff]
    %v2893 = vld [vmem:[%s2 + $0x790] sm:$0xff]
    %v2894 = vld [vmem:[%s2 + $0x798] sm:$0xff]
    %v2895 = vld [vmem:[%s2 + $0x7a0] sm:$0xff]
    %v2896 = vld [vmem:[%s2 + $0x7a8] sm:$0xff]
    %v2897 = vld [vmem:[%s2 + $0x7b0] sm:$0xff]
    %v2898 = vld [vmem:[%s2 + $0x7b8] sm:$0xff]
    %v2899 = vld [vmem:[%s2 + $0x7c0] sm:$0xff]
    %v2900 = vld [vmem:[%s2 + $0x7c8] sm:$0xff]
    %v2901 = vld [vmem:[%s2 + $0x7d0] sm:$0xff]
    %v2902 = vld [vmem:[%s2 + $0x7d8] sm:$0xff]
    %v2903 = vld [vmem:[%s2 + $0x7e0] sm:$0xff]
    %v2904 = vld [vmem:[%s2 + $0x7e8] sm:$0xff]
    %v2905 = vld [vmem:[%s2 + $0x7f0] sm:$0xff]
    %v2906 = vld [vmem:[%s2 + $0x7f8] sm:$0xff]
    %v2909 = vunpack.c.l.s4 1983009808
    %v2910 = vunpack.c.0.s8 %v2909
    %v2911 = vlaneseq
    %v2912 = vshrl.u32 %v2911, 7
    %v2913 = vsub.s32 %v2910, %v2912
    %v2914 = vrot.slane %v2645, %v2913
    %v2915 = vcombine.high %v2914, %v2914
    %2918 = vmatprep.subr.mxu0 %v2652
    %2919 = vmatpush1.msra.mxu0 %v2651
    %2920 = vmatprep.subr.mxu0 %v2660
    %2921 = vmatpush1.msra.mxu0 %v2659
    %2922 = vmatprep.subr.mxu0 %v2668
    %2923 = vmatpush1.msra.mxu0 %v2667
    %2924 = vmatprep.subr.mxu0 %v2676
    %2925 = vmatpush1.msra.mxu0 %v2675
    %2926 = vmatprep.subr.mxu0 %v2684
    %2927 = vmatpush1.msra.mxu0 %v2683
    %2928 = vmatprep.subr.mxu0 %v2692
    %2929 = vmatpush1.msra.mxu0 %v2691
    %2930 = vmatprep.subr.mxu0 %v2700
    %2931 = vmatpush1.msra.mxu0 %v2699
    %2932 = vmatprep.subr.mxu0 %v2708
    %2933 = vmatpush1.msra.mxu0 %v2707
    %2934 = vmatprep.subr.mxu0 %v2716
    %2935 = vmatpush1.msra.mxu0 %v2715
    %2936 = vmatprep.subr.mxu0 %v2724
    %2937 = vmatpush1.msra.mxu0 %v2723
    %2938 = vmatprep.subr.mxu0 %v2732
    %2939 = vmatpush1.msra.mxu0 %v2731
    %2940 = vmatprep.subr.mxu0 %v2740
    %2941 = vmatpush1.msra.mxu0 %v2739
    %2942 = vmatprep.subr.mxu0 %v2748
    %2943 = vmatpush1.msra.mxu0 %v2747
    %2944 = vmatprep.subr.mxu0 %v2756
    %2945 = vmatpush1.msra.mxu0 %v2755
    %2946 = vmatprep.subr.mxu0 %v2764
    %2947 = vmatpush1.msra.mxu0 %v2763
    %2948 = vmatprep.subr.mxu0 %v2772
    %2949 = vmatpush1.msra.mxu0 %v2771
    %2950 = vmatprep.subr.mxu0 %v2780
    %2951 = vmatpush1.msra.mxu0 %v2779
    %2952 = vmatprep.subr.mxu0 %v2788
    %2953 = vmatpush1.msra.mxu0 %v2787
    %2954 = vmatprep.subr.mxu0 %v2796
    %2955 = vmatpush1.msra.mxu0 %v2795
    %2956 = vmatprep.subr.mxu0 %v2804
    %2957 = vmatpush1.msra.mxu0 %v2803
    %2958 = vmatprep.subr.mxu0 %v2812
    %2959 = vmatpush1.msra.mxu0 %v2811
    %2960 = vmatprep.subr.mxu0 %v2820
    %2961 = vmatpush1.msra.mxu0 %v2819
    %2962 = vmatprep.subr.mxu0 %v2828
    %2963 = vmatpush1.msra.mxu0 %v2827
    %2964 = vmatprep.subr.mxu0 %v2836
    %2965 = vmatpush1.msra.mxu0 %v2835
    %2966 = vmatprep.subr.mxu0 %v2844
    %2967 = vmatpush1.msra.mxu0 %v2843
    %2968 = vmatprep.subr.mxu0 %v2852
    %2969 = vmatpush1.msra.mxu0 %v2851
    %2970 = vmatprep.subr.mxu0 %v2860
    %2971 = vmatpush1.msra.mxu0 %v2859
    %2972 = vmatprep.subr.mxu0 %v2868
    %2973 = vmatpush1.msra.mxu0 %v2867
    %2974 = vmatprep.subr.mxu0 %v2876
    %2975 = vmatpush1.msra.mxu0 %v2875
    %2976 = vmatprep.subr.mxu0 %v2884
    %2977 = vmatpush1.msra.mxu0 %v2883
    %2978 = vmatprep.subr.mxu0 %v2892
    %2979 = vmatpush1.msra.mxu0 %v2891
    %2980 = vmatprep.subr.mxu0 %v2900
    %2981 = vmatpush1.msra.mxu0 %v2899
    %2982 = vmatprep.mubr.f32.mxu0 %v2915
    %2983 = vmatmul.mubr.f32.gmra.mrb[0].mxu0 %v2914
    %v2984 = vpop.f32.mrb[0].mxu0
    %v2985 = vadd.f32 0.0, %v2984
    %v2986 = vpop.f32.mrb[0].mxu0
    %v2987 = vadd.f32 0.0, %v2986
    %2988 = vdwg.mxu0
    %2989 = vmatprep.subr.mxu0 %v2654
    %2990 = vmatpush1.msra.mxu0 %v2653
    %2991 = vmatprep.subr.mxu0 %v2662
    %2992 = vmatpush1.msra.mxu0 %v2661
    %2993 = vmatprep.subr.mxu0 %v2670
    %2994 = vmatpush1.msra.mxu0 %v2669
    %2995 = vmatprep.subr.mxu0 %v2678
    %2996 = vmatpush1.msra.mxu0 %v2677
    %2997 = vmatprep.subr.mxu0 %v2686
    %2998 = vmatpush1.msra.mxu0 %v2685
    %2999 = vmatprep.subr.mxu0 %v2694
    %3000 = vmatpush1.msra.mxu0 %v2693
    %3001 = vmatprep.subr.mxu0 %v2702
    %3002 = vmatpush1.msra.mxu0 %v2701
    %3003 = vmatprep.subr.mxu0 %v2710
    %3004 = vmatpush1.msra.mxu0 %v2709
    %3005 = vmatprep.subr.mxu0 %v2718
    %3006 = vmatpush1.msra.mxu0 %v2717
    %3007 = vmatprep.subr.mxu0 %v2726
    %3008 = vmatpush1.msra.mxu0 %v2725
    %3009 = vmatprep.subr.mxu0 %v2734
    %3010 = vmatpush1.msra.mxu0 %v2733
    %3011 = vmatprep.subr.mxu0 %v2742
    %3012 = vmatpush1.msra.mxu0 %v2741
    %3013 = vmatprep.subr.mxu0 %v2750
    %3014 = vmatpush1.msra.mxu0 %v2749
    %3015 = vmatprep.subr.mxu0 %v2758
    %3016 = vmatpush1.msra.mxu0 %v2757
    %3017 = vmatprep.subr.mxu0 %v2766
    %3018 = vmatpush1.msra.mxu0 %v2765
    %3019 = vmatprep.subr.mxu0 %v2774
    %3020 = vmatpush1.msra.mxu0 %v2773
    %3021 = vmatprep.subr.mxu0 %v2782
    %3022 = vmatpush1.msra.mxu0 %v2781
    %3023 = vmatprep.subr.mxu0 %v2790
    %3024 = vmatpush1.msra.mxu0 %v2789
    %3025 = vmatprep.subr.mxu0 %v2798
    %3026 = vmatpush1.msra.mxu0 %v2797
    %3027 = vmatprep.subr.mxu0 %v2806
    %3028 = vmatpush1.msra.mxu0 %v2805
    %3029 = vmatprep.subr.mxu0 %v2814
    %3030 = vmatpush1.msra.mxu0 %v2813
    %3031 = vmatprep.subr.mxu0 %v2822
    %3032 = vmatpush1.msra.mxu0 %v2821
    %3033 = vmatprep.subr.mxu0 %v2830
    %3034 = vmatpush1.msra.mxu0 %v2829
    %3035 = vmatprep.subr.mxu0 %v2838
    %3036 = vmatpush1.msra.mxu0 %v2837
    %3037 = vmatprep.subr.mxu0 %v2846
    %3038 = vmatpush1.msra.mxu0 %v2845
    %3039 = vmatprep.subr.mxu0 %v2854
    %3040 = vmatpush1.msra.mxu0 %v2853
    %3041 = vmatprep.subr.mxu0 %v2862
    %3042 = vmatpush1.msra.mxu0 %v2861
    %3043 = vmatprep.subr.mxu0 %v2870
    %3044 = vmatpush1.msra.mxu0 %v2869
    %3045 = vmatprep.subr.mxu0 %v2878
    %3046 = vmatpush1.msra.mxu0 %v2877
    %3047 = vmatprep.subr.mxu0 %v2886
    %3048 = vmatpush1.msra.mxu0 %v2885
    %3049 = vmatprep.subr.mxu0 %v2894
    %3050 = vmatpush1.msra.mxu0 %v2893
    %3051 = vmatprep.subr.mxu0 %v2902
    %3052 = vmatpush1.msra.mxu0 %v2901
    %3053 = vmatprep.mubr.f32.mxu0 %v2915
    %3054 = vmatmul.mubr.f32.gmra.mrb[0].mxu0 %v2914
    %v3055 = vpop.f32.mrb[0].mxu0
    %v3056 = vadd.f32 0.0, %v3055
    %v3057 = vpop.f32.mrb[0].mxu0
    %v3058 = vadd.f32 0.0, %v3057
    %3059 = vdwg.mxu0
    %3060 = vmatprep.subr.mxu0 %v2656
    %3061 = vmatpush1.msra.mxu0 %v2655
    %3062 = vmatprep.subr.mxu0 %v2664
    %3063 = vmatpush1.msra.mxu0 %v2663
    %3064 = vmatprep.subr.mxu0 %v2672
    %3065 = vmatpush1.msra.mxu0 %v2671
    %3066 = vmatprep.subr.mxu0 %v2680
    %3067 = vmatpush1.msra.mxu0 %v2679
    %3068 = vmatprep.subr.mxu0 %v2688
    %3069 = vmatpush1.msra.mxu0 %v2687
    %3070 = vmatprep.subr.mxu0 %v2696
    %3071 = vmatpush1.msra.mxu0 %v2695
    %3072 = vmatprep.subr.mxu0 %v2704
    %3073 = vmatpush1.msra.mxu0 %v2703
    %3074 = vmatprep.subr.mxu0 %v2712
    %3075 = vmatpush1.msra.mxu0 %v2711
    %3076 = vmatprep.subr.mxu0 %v2720
    %3077 = vmatpush1.msra.mxu0 %v2719
    %3078 = vmatprep.subr.mxu0 %v2728
    %3079 = vmatpush1.msra.mxu0 %v2727
    %3080 = vmatprep.subr.mxu0 %v2736
    %3081 = vmatpush1.msra.mxu0 %v2735
    %3082 = vmatprep.subr.mxu0 %v2744
    %3083 = vmatpush1.msra.mxu0 %v2743
    %3084 = vmatprep.subr.mxu0 %v2752
    %3085 = vmatpush1.msra.mxu0 %v2751
    %3086 = vmatprep.subr.mxu0 %v2760
    %3087 = vmatpush1.msra.mxu0 %v2759
    %3088 = vmatprep.subr.mxu0 %v2768
    %3089 = vmatpush1.msra.mxu0 %v2767
    %3090 = vmatprep.subr.mxu0 %v2776
    %3091 = vmatpush1.msra.mxu0 %v2775
    %3092 = vmatprep.subr.mxu0 %v2784
    %3093 = vmatpush1.msra.mxu0 %v2783
    %3094 = vmatprep.subr.mxu0 %v2792
    %3095 = vmatpush1.msra.mxu0 %v2791
    %3096 = vmatprep.subr.mxu0 %v2800
    %3097 = vmatpush1.msra.mxu0 %v2799
    %3098 = vmatprep.subr.mxu0 %v2808
    %3099 = vmatpush1.msra.mxu0 %v2807
    %3100 = vmatprep.subr.mxu0 %v2816
    %3101 = vmatpush1.msra.mxu0 %v2815
    %3102 = vmatprep.subr.mxu0 %v2824
    %3103 = vmatpush1.msra.mxu0 %v2823
    %3104 = vmatprep.subr.mxu0 %v2832
    %3105 = vmatpush1.msra.mxu0 %v2831
    %3106 = vmatprep.subr.mxu0 %v2840
    %3107 = vmatpush1.msra.mxu0 %v2839
    %3108 = vmatprep.subr.mxu0 %v2848
    %3109 = vmatpush1.msra.mxu0 %v2847
    %3110 = vmatprep.subr.mxu0 %v2856
    %3111 = vmatpush1.msra.mxu0 %v2855
    %3112 = vmatprep.subr.mxu0 %v2864
    %3113 = vmatpush1.msra.mxu0 %v2863
    %3114 = vmatprep.subr.mxu0 %v2872
    %3115 = vmatpush1.msra.mxu0 %v2871
    %3116 = vmatprep.subr.mxu0 %v2880
    %3117 = vmatpush1.msra.mxu0 %v2879
    %3118 = vmatprep.subr.mxu0 %v2888
    %3119 = vmatpush1.msra.mxu0 %v2887
    %3120 = vmatprep.subr.mxu0 %v2896
    %3121 = vmatpush1.msra.mxu0 %v2895
    %3122 = vmatprep.subr.mxu0 %v2904
    %3123 = vmatpush1.msra.mxu0 %v2903
    %3124 = vmatprep.mubr.f32.mxu0 %v2915
    %3125 = vmatmul.mubr.f32.gmra.mrb[0].mxu0 %v2914
    %v3126 = vpop.f32.mrb[0].mxu0
    %v3127 = vadd.f32 0.0, %v3126
    %v3128 = vpop.f32.mrb[0].mxu0
    %v3129 = vadd.f32 0.0, %v3128
    %3130 = vdwg.mxu0
    %3131 = vmatprep.subr.mxu0 %v2658
    %3132 = vmatpush1.msra.mxu0 %v2657
    %3133 = vmatprep.subr.mxu0 %v2666
    %3134 = vmatpush1.msra.mxu0 %v2665
    %3135 = vmatprep.subr.mxu0 %v2674
    %3136 = vmatpush1.msra.mxu0 %v2673
    %3137 = vmatprep.subr.mxu0 %v2682
    %3138 = vmatpush1.msra.mxu0 %v2681
    %3139 = vmatprep.subr.mxu0 %v2690
    %3140 = vmatpush1.msra.mxu0 %v2689
    %3141 = vmatprep.subr.mxu0 %v2698
    %3142 = vmatpush1.msra.mxu0 %v2697
    %3143 = vmatprep.subr.mxu0 %v2706
    %3144 = vmatpush1.msra.mxu0 %v2705
    %3145 = vmatprep.subr.mxu0 %v2714
    %3146 = vmatpush1.msra.mxu0 %v2713
    %3147 = vmatprep.subr.mxu0 %v2722
    %3148 = vmatpush1.msra.mxu0 %v2721
    %3149 = vmatprep.subr.mxu0 %v2730
    %3150 = vmatpush1.msra.mxu0 %v2729
    %3151 = vmatprep.subr.mxu0 %v2738
    %3152 = vmatpush1.msra.mxu0 %v2737
    %3153 = vmatprep.subr.mxu0 %v2746
    %3154 = vmatpush1.msra.mxu0 %v2745
    %3155 = vmatprep.subr.mxu0 %v2754
    %3156 = vmatpush1.msra.mxu0 %v2753
    %3157 = vmatprep.subr.mxu0 %v2762
    %3158 = vmatpush1.msra.mxu0 %v2761
    %3159 = vmatprep.subr.mxu0 %v2770
    %3160 = vmatpush1.msra.mxu0 %v2769
    %3161 = vmatprep.subr.mxu0 %v2778
    %3162 = vmatpush1.msra.mxu0 %v2777
    %3163 = vmatprep.subr.mxu0 %v2786
    %3164 = vmatpush1.msra.mxu0 %v2785
    %3165 = vmatprep.subr.mxu0 %v2794
    %3166 = vmatpush1.msra.mxu0 %v2793
    %3167 = vmatprep.subr.mxu0 %v2802
    %3168 = vmatpush1.msra.mxu0 %v2801
    %3169 = vmatprep.subr.mxu0 %v2810
    %3170 = vmatpush1.msra.mxu0 %v2809
    %3171 = vmatprep.subr.mxu0 %v2818
    %3172 = vmatpush1.msra.mxu0 %v2817
    %3173 = vmatprep.subr.mxu0 %v2826
    %3174 = vmatpush1.msra.mxu0 %v2825
    %3175 = vmatprep.subr.mxu0 %v2834
    %3176 = vmatpush1.msra.mxu0 %v2833
    %3177 = vmatprep.subr.mxu0 %v2842
    %3178 = vmatpush1.msra.mxu0 %v2841
    %3179 = vmatprep.subr.mxu0 %v2850
    %3180 = vmatpush1.msra.mxu0 %v2849
    %3181 = vmatprep.subr.mxu0 %v2858
    %3182 = vmatpush1.msra.mxu0 %v2857
    %3183 = vmatprep.subr.mxu0 %v2866
    %3184 = vmatpush1.msra.mxu0 %v2865
    %3185 = vmatprep.subr.mxu0 %v2874
    %3186 = vmatpush1.msra.mxu0 %v2873
    %3187 = vmatprep.subr.mxu0 %v2882
    %3188 = vmatpush1.msra.mxu0 %v2881
    %3189 = vmatprep.subr.mxu0 %v2890
    %3190 = vmatpush1.msra.mxu0 %v2889
    %3191 = vmatprep.subr.mxu0 %v2898
    %3192 = vmatpush1.msra.mxu0 %v2897
    %3193 = vmatprep.subr.mxu0 %v2906
    %3194 = vmatpush1.msra.mxu0 %v2905
    %3195 = vmatprep.mubr.f32.mxu0 %v2915
    %3196 = vmatmul.mubr.f32.gmra.mrb[0].mxu0 %v2914
    %v3197 = vpop.f32.mrb[0].mxu0
    %v3198 = vadd.f32 0.0, %v3197
    %v3199 = vpop.f32.mrb[0].mxu0
    %v3200 = vadd.f32 0.0, %v3199
    %3201 = vdwg.mxu0
    %v3210 = vcombine.low %v2985, %v2987
    %v3211 = vcombine.low %v3056, %v3058
    %v3213 = vunpack.c.l.s4 1983009808
    %v3214 = vunpack.c.0.s8 %v3213
    %v3215 = vlaneseq
    %v3216 = vshrl.u32 %v3215, 7
    %v3217 = vsub.s32 %v3214, %v3216
    %v3218 = vrot.slane %v3210, %v3217
    %v3220 = vunpack.c.l.s4 1983009808
    %v3221 = vunpack.c.0.s8 %v3220
    %v3222 = vlaneseq
    %v3223 = vshrl.u32 %v3222, 7
    %v3224 = vsub.s32 %v3221, %v3223
    %v3225 = vrot.slane %v3211, %v3224
    %v3226 = vcombine.low %v3218, %v3225
    %v3227 = vcombine.low %v3127, %v3129
    %v3228 = vcombine.low %v3198, %v3200
    %v3230 = vunpack.c.l.s4 1983009808
    %v3231 = vunpack.c.0.s8 %v3230
    %v3232 = vlaneseq
    %v3233 = vshrl.u32 %v3232, 7
    %v3234 = vsub.s32 %v3231, %v3233
    %v3235 = vrot.slane %v3227, %v3234
    %v3237 = vunpack.c.l.s4 1983009808
    %v3238 = vunpack.c.0.s8 %v3237
    %v3239 = vlaneseq
    %v3240 = vshrl.u32 %v3239, 7
    %v3241 = vsub.s32 %v3238, %v3240
    %v3242 = vrot.slane %v3228, %v3241
    %v3243 = vcombine.low %v3235, %v3242
    %v3246 = vadd.f32 %v2649, %v3226
    %v3247 = vadd.f32 %v2650, %v3243
    %v3248 = vxor.u32 %v3246, 2147483648
    %v3249 = vxor.u32 %v3247, 2147483648
    %v3250 = vmul.f32 %v3248, 1.442695
    %v3251 = vpow.pop %v3250
    %v3252 = vmul.f32 %v3249, 1.442695
    %v3253 = vpow.pop %v3252
    %v3254 = vadd.f32 %v3251, 1.0
    %v3255 = vadd.f32 %v3253, 1.0
    %v3256 = vrcp.pop %v3254
    %v3257 = vmul.f32 1.0, %v3256
    %v3258 = vrcp.pop %v3255
    %v3259 = vmul.f32 1.0, %v3258
    %v3261 = vrot.slane %v3247, 4
    %v3263 = vtanh.pop %v3261
    %v3265 = vrot.slane %v3257, 4
    %v3267 = vmul.f32 %v3265, %v2643
    %v3268 = vmul.f32 %v3257, %v3263
    %v3269 = vadd.f32 %v3267, %v3268
    %v3270 = vtanh.pop %v3269
    %v3271 = vmul.f32 %v3259, %v3270
    %s3272 = scalar_lea.vmem [#allocation3], 12
    %3273 = vst [vmem:[%s3272] sm:$0xf] %v3271
    %s3274 = scalar_lea.vmem [#allocation2], 64
    %v3275 = vld [vmem:[%s3274] sm:$0xff]
    %v3276 = vld [vmem:[%s3274 + $0x8] sm:$0xff]
    %v3277 = vld [vmem:[%s2] sm:$0xff]
    %v3278 = vld [vmem:[%s2 + $0x8] sm:$0xff]
    %v3279 = vld [vmem:[%s2 + $0x10] sm:$0xff]
    %v3280 = vld [vmem:[%s2 + $0x18] sm:$0xff]
    %v3281 = vld [vmem:[%s2 + $0x20] sm:$0xff]
    %v3282 = vld [vmem:[%s2 + $0x28] sm:$0xff]
    %v3283 = vld [vmem:[%s2 + $0x30] sm:$0xff]
    %v3284 = vld [vmem:[%s2 + $0x38] sm:$0xff]
    %v3285 = vld [vmem:[%s2 + $0x40] sm:$0xff]
    %v3286 = vld [vmem:[%s2 + $0x48] sm:$0xff]
    %v3287 = vld [vmem:[%s2 + $0x50] sm:$0xff]
    %v3288 = vld [vmem:[%s2 + $0x58] sm:$0xff]
    %v3289 = vld [vmem:[%s2 + $0x60] sm:$0xff]
    %v3290 = vld [vmem:[%s2 + $0x68] sm:$0xff]
    %v3291 = vld [vmem:[%s2 + $0x70] sm:$0xff]
    %v3292 = vld [vmem:[%s2 + $0x78] sm:$0xff]
    %v3293 = vld [vmem:[%s2 + $0x80] sm:$0xff]
    %v3294 = vld [vmem:[%s2 + $0x88] sm:$0xff]
    %v3295 = vld [vmem:[%s2 + $0x90] sm:$0xff]
    %v3296 = vld [vmem:[%s2 + $0x98] sm:$0xff]
    %v3297 = vld [vmem:[%s2 + $0xa0] sm:$0xff]
    %v3298 = vld [vmem:[%s2 + $0xa8] sm:$0xff]
    %v3299 = vld [vmem:[%s2 + $0xb0] sm:$0xff]
    %v3300 = vld [vmem:[%s2 + $0xb8] sm:$0xff]
    %v3301 = vld [vmem:[%s2 + $0xc0] sm:$0xff]
    %v3302 = vld [vmem:[%s2 + $0xc8] sm:$0xff]
    %v3303 = vld [vmem:[%s2 + $0xd0] sm:$0xff]
    %v3304 = vld [vmem:[%s2 + $0xd8] sm:$0xff]
    %v3305 = vld [vmem:[%s2 + $0xe0] sm:$0xff]
    %v3306 = vld [vmem:[%s2 + $0xe8] sm:$0xff]
    %v3307 = vld [vmem:[%s2 + $0xf0] sm:$0xff]
    %v3308 = vld [vmem:[%s2 + $0xf8] sm:$0xff]
    %v3309 = vld [vmem:[%s2 + $0x100] sm:$0xff]
    %v3310 = vld [vmem:[%s2 + $0x108] sm:$0xff]
    %v3311 = vld [vmem:[%s2 + $0x110] sm:$0xff]
    %v3312 = vld [vmem:[%s2 + $0x118] sm:$0xff]
    %v3313 = vld [vmem:[%s2 + $0x120] sm:$0xff]
    %v3314 = vld [vmem:[%s2 + $0x128] sm:$0xff]
    %v3315 = vld [vmem:[%s2 + $0x130] sm:$0xff]
    %v3316 = vld [vmem:[%s2 + $0x138] sm:$0xff]
    %v3317 = vld [vmem:[%s2 + $0x140] sm:$0xff]
    %v3318 = vld [vmem:[%s2 + $0x148] sm:$0xff]
    %v3319 = vld [vmem:[%s2 + $0x150] sm:$0xff]
    %v3320 = vld [vmem:[%s2 + $0x158] sm:$0xff]
    %v3321 = vld [vmem:[%s2 + $0x160] sm:$0xff]
    %v3322 = vld [vmem:[%s2 + $0x168] sm:$0xff]
    %v3323 = vld [vmem:[%s2 + $0x170] sm:$0xff]
    %v3324 = vld [vmem:[%s2 + $0x178] sm:$0xff]
    %v3325 = vld [vmem:[%s2 + $0x180] sm:$0xff]
    %v3326 = vld [vmem:[%s2 + $0x188] sm:$0xff]
    %v3327 = vld [vmem:[%s2 + $0x190] sm:$0xff]
    %v3328 = vld [vmem:[%s2 + $0x198] sm:$0xff]
    %v3329 = vld [vmem:[%s2 + $0x1a0] sm:$0xff]
    %v3330 = vld [vmem:[%s2 + $0x1a8] sm:$0xff]
    %v3331 = vld [vmem:[%s2 + $0x1b0] sm:$0xff]
    %v3332 = vld [vmem:[%s2 + $0x1b8] sm:$0xff]
    %v3333 = vld [vmem:[%s2 + $0x1c0] sm:$0xff]
    %v3334 = vld [vmem:[%s2 + $0x1c8] sm:$0xff]
    %v3335 = vld [vmem:[%s2 + $0x1d0] sm:$0xff]
    %v3336 = vld [vmem:[%s2 + $0x1d8] sm:$0xff]
    %v3337 = vld [vmem:[%s2 + $0x1e0] sm:$0xff]
    %v3338 = vld [vmem:[%s2 + $0x1e8] sm:$0xff]
    %v3339 = vld [vmem:[%s2 + $0x1f0] sm:$0xff]
    %v3340 = vld [vmem:[%s2 + $0x1f8] sm:$0xff]
    %v3341 = vld [vmem:[%s2 + $0x200] sm:$0xff]
    %v3342 = vld [vmem:[%s2 + $0x208] sm:$0xff]
    %v3343 = vld [vmem:[%s2 + $0x210] sm:$0xff]
    %v3344 = vld [vmem:[%s2 + $0x218] sm:$0xff]
    %v3345 = vld [vmem:[%s2 + $0x220] sm:$0xff]
    %v3346 = vld [vmem:[%s2 + $0x228] sm:$0xff]
    %v3347 = vld [vmem:[%s2 + $0x230] sm:$0xff]
    %v3348 = vld [vmem:[%s2 + $0x238] sm:$0xff]
    %v3349 = vld [vmem:[%s2 + $0x240] sm:$0xff]
    %v3350 = vld [vmem:[%s2 + $0x248] sm:$0xff]
    %v3351 = vld [vmem:[%s2 + $0x250] sm:$0xff]
    %v3352 = vld [vmem:[%s2 + $0x258] sm:$0xff]
    %v3353 = vld [vmem:[%s2 + $0x260] sm:$0xff]
    %v3354 = vld [vmem:[%s2 + $0x268] sm:$0xff]
    %v3355 = vld [vmem:[%s2 + $0x270] sm:$0xff]
    %v3356 = vld [vmem:[%s2 + $0x278] sm:$0xff]
    %v3357 = vld [vmem:[%s2 + $0x280] sm:$0xff]
    %v3358 = vld [vmem:[%s2 + $0x288] sm:$0xff]
    %v3359 = vld [vmem:[%s2 + $0x290] sm:$0xff]
    %v3360 = vld [vmem:[%s2 + $0x298] sm:$0xff]
    %v3361 = vld [vmem:[%s2 + $0x2a0] sm:$0xff]
    %v3362 = vld [vmem:[%s2 + $0x2a8] sm:$0xff]
    %v3363 = vld [vmem:[%s2 + $0x2b0] sm:$0xff]
    %v3364 = vld [vmem:[%s2 + $0x2b8] sm:$0xff]
    %v3365 = vld [vmem:[%s2 + $0x2c0] sm:$0xff]
    %v3366 = vld [vmem:[%s2 + $0x2c8] sm:$0xff]
    %v3367 = vld [vmem:[%s2 + $0x2d0] sm:$0xff]
    %v3368 = vld [vmem:[%s2 + $0x2d8] sm:$0xff]
    %v3369 = vld [vmem:[%s2 + $0x2e0] sm:$0xff]
    %v3370 = vld [vmem:[%s2 + $0x2e8] sm:$0xff]
    %v3371 = vld [vmem:[%s2 + $0x2f0] sm:$0xff]
    %v3372 = vld [vmem:[%s2 + $0x2f8] sm:$0xff]
    %v3373 = vld [vmem:[%s2 + $0x300] sm:$0xff]
    %v3374 = vld [vmem:[%s2 + $0x308] sm:$0xff]
    %v3375 = vld [vmem:[%s2 + $0x310] sm:$0xff]
    %v3376 = vld [vmem:[%s2 + $0x318] sm:$0xff]
    %v3377 = vld [vmem:[%s2 + $0x320] sm:$0xff]
    %v3378 = vld [vmem:[%s2 + $0x328] sm:$0xff]
    %v3379 = vld [vmem:[%s2 + $0x330] sm:$0xff]
    %v3380 = vld [vmem:[%s2 + $0x338] sm:$0xff]
    %v3381 = vld [vmem:[%s2 + $0x340] sm:$0xff]
    %v3382 = vld [vmem:[%s2 + $0x348] sm:$0xff]
    %v3383 = vld [vmem:[%s2 + $0x350] sm:$0xff]
    %v3384 = vld [vmem:[%s2 + $0x358] sm:$0xff]
    %v3385 = vld [vmem:[%s2 + $0x360] sm:$0xff]
    %v3386 = vld [vmem:[%s2 + $0x368] sm:$0xff]
    %v3387 = vld [vmem:[%s2 + $0x370] sm:$0xff]
    %v3388 = vld [vmem:[%s2 + $0x378] sm:$0xff]
    %v3389 = vld [vmem:[%s2 + $0x380] sm:$0xff]
    %v3390 = vld [vmem:[%s2 + $0x388] sm:$0xff]
    %v3391 = vld [vmem:[%s2 + $0x390] sm:$0xff]
    %v3392 = vld [vmem:[%s2 + $0x398] sm:$0xff]
    %v3393 = vld [vmem:[%s2 + $0x3a0] sm:$0xff]
    %v3394 = vld [vmem:[%s2 + $0x3a8] sm:$0xff]
    %v3395 = vld [vmem:[%s2 + $0x3b0] sm:$0xff]
    %v3396 = vld [vmem:[%s2 + $0x3b8] sm:$0xff]
    %v3397 = vld [vmem:[%s2 + $0x3c0] sm:$0xff]
    %v3398 = vld [vmem:[%s2 + $0x3c8] sm:$0xff]
    %v3399 = vld [vmem:[%s2 + $0x3d0] sm:$0xff]
    %v3400 = vld [vmem:[%s2 + $0x3d8] sm:$0xff]
    %v3401 = vld [vmem:[%s2 + $0x3e0] sm:$0xff]
    %v3402 = vld [vmem:[%s2 + $0x3e8] sm:$0xff]
    %v3403 = vld [vmem:[%s2 + $0x3f0] sm:$0xff]
    %v3404 = vld [vmem:[%s2 + $0x3f8] sm:$0xff]
    %v3405 = vld [vmem:[%s2 + $0x400] sm:$0xff]
    %v3406 = vld [vmem:[%s2 + $0x408] sm:$0xff]
    %v3407 = vld [vmem:[%s2 + $0x410] sm:$0xff]
    %v3408 = vld [vmem:[%s2 + $0x418] sm:$0xff]
    %v3409 = vld [vmem:[%s2 + $0x420] sm:$0xff]
    %v3410 = vld [vmem:[%s2 + $0x428] sm:$0xff]
    %v3411 = vld [vmem:[%s2 + $0x430] sm:$0xff]
    %v3412 = vld [vmem:[%s2 + $0x438] sm:$0xff]
    %v3413 = vld [vmem:[%s2 + $0x440] sm:$0xff]
    %v3414 = vld [vmem:[%s2 + $0x448] sm:$0xff]
    %v3415 = vld [vmem:[%s2 + $0x450] sm:$0xff]
    %v3416 = vld [vmem:[%s2 + $0x458] sm:$0xff]
    %v3417 = vld [vmem:[%s2 + $0x460] sm:$0xff]
    %v3418 = vld [vmem:[%s2 + $0x468] sm:$0xff]
    %v3419 = vld [vmem:[%s2 + $0x470] sm:$0xff]
    %v3420 = vld [vmem:[%s2 + $0x478] sm:$0xff]
    %v3421 = vld [vmem:[%s2 + $0x480] sm:$0xff]
    %v3422 = vld [vmem:[%s2 + $0x488] sm:$0xff]
    %v3423 = vld [vmem:[%s2 + $0x490] sm:$0xff]
    %v3424 = vld [vmem:[%s2 + $0x498] sm:$0xff]
    %v3425 = vld [vmem:[%s2 + $0x4a0] sm:$0xff]
    %v3426 = vld [vmem:[%s2 + $0x4a8] sm:$0xff]
    %v3427 = vld [vmem:[%s2 + $0x4b0] sm:$0xff]
    %v3428 = vld [vmem:[%s2 + $0x4b8] sm:$0xff]
    %v3429 = vld [vmem:[%s2 + $0x4c0] sm:$0xff]
    %v3430 = vld [vmem:[%s2 + $0x4c8] sm:$0xff]
    %v3431 = vld [vmem:[%s2 + $0x4d0] sm:$0xff]
    %v3432 = vld [vmem:[%s2 + $0x4d8] sm:$0xff]
    %v3433 = vld [vmem:[%s2 + $0x4e0] sm:$0xff]
    %v3434 = vld [vmem:[%s2 + $0x4e8] sm:$0xff]
    %v3435 = vld [vmem:[%s2 + $0x4f0] sm:$0xff]
    %v3436 = vld [vmem:[%s2 + $0x4f8] sm:$0xff]
    %v3437 = vld [vmem:[%s2 + $0x500] sm:$0xff]
    %v3438 = vld [vmem:[%s2 + $0x508] sm:$0xff]
    %v3439 = vld [vmem:[%s2 + $0x510] sm:$0xff]
    %v3440 = vld [vmem:[%s2 + $0x518] sm:$0xff]
    %v3441 = vld [vmem:[%s2 + $0x520] sm:$0xff]
    %v3442 = vld [vmem:[%s2 + $0x528] sm:$0xff]
    %v3443 = vld [vmem:[%s2 + $0x530] sm:$0xff]
    %v3444 = vld [vmem:[%s2 + $0x538] sm:$0xff]
    %v3445 = vld [vmem:[%s2 + $0x540] sm:$0xff]
    %v3446 = vld [vmem:[%s2 + $0x548] sm:$0xff]
    %v3447 = vld [vmem:[%s2 + $0x550] sm:$0xff]
    %v3448 = vld [vmem:[%s2 + $0x558] sm:$0xff]
    %v3449 = vld [vmem:[%s2 + $0x560] sm:$0xff]
    %v3450 = vld [vmem:[%s2 + $0x568] sm:$0xff]
    %v3451 = vld [vmem:[%s2 + $0x570] sm:$0xff]
    %v3452 = vld [vmem:[%s2 + $0x578] sm:$0xff]
    %v3453 = vld [vmem:[%s2 + $0x580] sm:$0xff]
    %v3454 = vld [vmem:[%s2 + $0x588] sm:$0xff]
    %v3455 = vld [vmem:[%s2 + $0x590] sm:$0xff]
    %v3456 = vld [vmem:[%s2 + $0x598] sm:$0xff]
    %v3457 = vld [vmem:[%s2 + $0x5a0] sm:$0xff]
    %v3458 = vld [vmem:[%s2 + $0x5a8] sm:$0xff]
    %v3459 = vld [vmem:[%s2 + $0x5b0] sm:$0xff]
    %v3460 = vld [vmem:[%s2 + $0x5b8] sm:$0xff]
    %v3461 = vld [vmem:[%s2 + $0x5c0] sm:$0xff]
    %v3462 = vld [vmem:[%s2 + $0x5c8] sm:$0xff]
    %v3463 = vld [vmem:[%s2 + $0x5d0] sm:$0xff]
    %v3464 = vld [vmem:[%s2 + $0x5d8] sm:$0xff]
    %v3465 = vld [vmem:[%s2 + $0x5e0] sm:$0xff]
    %v3466 = vld [vmem:[%s2 + $0x5e8] sm:$0xff]
    %v3467 = vld [vmem:[%s2 + $0x5f0] sm:$0xff]
    %v3468 = vld [vmem:[%s2 + $0x5f8] sm:$0xff]
    %v3469 = vld [vmem:[%s2 + $0x600] sm:$0xff]
    %v3470 = vld [vmem:[%s2 + $0x608] sm:$0xff]
    %v3471 = vld [vmem:[%s2 + $0x610] sm:$0xff]
    %v3472 = vld [vmem:[%s2 + $0x618] sm:$0xff]
    %v3473 = vld [vmem:[%s2 + $0x620] sm:$0xff]
    %v3474 = vld [vmem:[%s2 + $0x628] sm:$0xff]
    %v3475 = vld [vmem:[%s2 + $0x630] sm:$0xff]
    %v3476 = vld [vmem:[%s2 + $0x638] sm:$0xff]
    %v3477 = vld [vmem:[%s2 + $0x640] sm:$0xff]
    %v3478 = vld [vmem:[%s2 + $0x648] sm:$0xff]
    %v3479 = vld [vmem:[%s2 + $0x650] sm:$0xff]
    %v3480 = vld [vmem:[%s2 + $0x658] sm:$0xff]
    %v3481 = vld [vmem:[%s2 + $0x660] sm:$0xff]
    %v3482 = vld [vmem:[%s2 + $0x668] sm:$0xff]
    %v3483 = vld [vmem:[%s2 + $0x670] sm:$0xff]
    %v3484 = vld [vmem:[%s2 + $0x678] sm:$0xff]
    %v3485 = vld [vmem:[%s2 + $0x680] sm:$0xff]
    %v3486 = vld [vmem:[%s2 + $0x688] sm:$0xff]
    %v3487 = vld [vmem:[%s2 + $0x690] sm:$0xff]
    %v3488 = vld [vmem:[%s2 + $0x698] sm:$0xff]
    %v3489 = vld [vmem:[%s2 + $0x6a0] sm:$0xff]
    %v3490 = vld [vmem:[%s2 + $0x6a8] sm:$0xff]
    %v3491 = vld [vmem:[%s2 + $0x6b0] sm:$0xff]
    %v3492 = vld [vmem:[%s2 + $0x6b8] sm:$0xff]
    %v3493 = vld [vmem:[%s2 + $0x6c0] sm:$0xff]
    %v3494 = vld [vmem:[%s2 + $0x6c8] sm:$0xff]
    %v3495 = vld [vmem:[%s2 + $0x6d0] sm:$0xff]
    %v3496 = vld [vmem:[%s2 + $0x6d8] sm:$0xff]
    %v3497 = vld [vmem:[%s2 + $0x6e0] sm:$0xff]
    %v3498 = vld [vmem:[%s2 + $0x6e8] sm:$0xff]
    %v3499 = vld [vmem:[%s2 + $0x6f0] sm:$0xff]
    %v3500 = vld [vmem:[%s2 + $0x6f8] sm:$0xff]
    %v3501 = vld [vmem:[%s2 + $0x700] sm:$0xff]
    %v3502 = vld [vmem:[%s2 + $0x708] sm:$0xff]
    %v3503 = vld [vmem:[%s2 + $0x710] sm:$0xff]
    %v3504 = vld [vmem:[%s2 + $0x718] sm:$0xff]
    %v3505 = vld [vmem:[%s2 + $0x720] sm:$0xff]
    %v3506 = vld [vmem:[%s2 + $0x728] sm:$0xff]
    %v3507 = vld [vmem:[%s2 + $0x730] sm:$0xff]
    %v3508 = vld [vmem:[%s2 + $0x738] sm:$0xff]
    %v3509 = vld [vmem:[%s2 + $0x740] sm:$0xff]
    %v3510 = vld [vmem:[%s2 + $0x748] sm:$0xff]
    %v3511 = vld [vmem:[%s2 + $0x750] sm:$0xff]
    %v3512 = vld [vmem:[%s2 + $0x758] sm:$0xff]
    %v3513 = vld [vmem:[%s2 + $0x760] sm:$0xff]
    %v3514 = vld [vmem:[%s2 + $0x768] sm:$0xff]
    %v3515 = vld [vmem:[%s2 + $0x770] sm:$0xff]
    %v3516 = vld [vmem:[%s2 + $0x778] sm:$0xff]
    %v3517 = vld [vmem:[%s2 + $0x780] sm:$0xff]
    %v3518 = vld [vmem:[%s2 + $0x788] sm:$0xff]
    %v3519 = vld [vmem:[%s2 + $0x790] sm:$0xff]
    %v3520 = vld [vmem:[%s2 + $0x798] sm:$0xff]
    %v3521 = vld [vmem:[%s2 + $0x7a0] sm:$0xff]
    %v3522 = vld [vmem:[%s2 + $0x7a8] sm:$0xff]
    %v3523 = vld [vmem:[%s2 + $0x7b0] sm:$0xff]
    %v3524 = vld [vmem:[%s2 + $0x7b8] sm:$0xff]
    %v3525 = vld [vmem:[%s2 + $0x7c0] sm:$0xff]
    %v3526 = vld [vmem:[%s2 + $0x7c8] sm:$0xff]
    %v3527 = vld [vmem:[%s2 + $0x7d0] sm:$0xff]
    %v3528 = vld [vmem:[%s2 + $0x7d8] sm:$0xff]
    %v3529 = vld [vmem:[%s2 + $0x7e0] sm:$0xff]
    %v3530 = vld [vmem:[%s2 + $0x7e8] sm:$0xff]
    %v3531 = vld [vmem:[%s2 + $0x7f0] sm:$0xff]
    %v3532 = vld [vmem:[%s2 + $0x7f8] sm:$0xff]
    %v3535 = vunpack.c.l.s4 1983009808
    %v3536 = vunpack.c.0.s8 %v3535
    %v3537 = vlaneseq
    %v3538 = vshrl.u32 %v3537, 7
    %v3539 = vsub.s32 %v3536, %v3538
    %v3540 = vrot.slane %v3271, %v3539
    %v3541 = vcombine.high %v3540, %v3540
    %3544 = vmatprep.subr.mxu0 %v3278
    %3545 = vmatpush1.msra.mxu0 %v3277
    %3546 = vmatprep.subr.mxu0 %v3286
    %3547 = vmatpush1.msra.mxu0 %v3285
    %3548 = vmatprep.subr.mxu0 %v3294
    %3549 = vmatpush1.msra.mxu0 %v3293
    %3550 = vmatprep.subr.mxu0 %v3302
    %3551 = vmatpush1.msra.mxu0 %v3301
    %3552 = vmatprep.subr.mxu0 %v3310
    %3553 = vmatpush1.msra.mxu0 %v3309
    %3554 = vmatprep.subr.mxu0 %v3318
    %3555 = vmatpush1.msra.mxu0 %v3317
    %3556 = vmatprep.subr.mxu0 %v3326
    %3557 = vmatpush1.msra.mxu0 %v3325
    %3558 = vmatprep.subr.mxu0 %v3334
    %3559 = vmatpush1.msra.mxu0 %v3333
    %3560 = vmatprep.subr.mxu0 %v3342
    %3561 = vmatpush1.msra.mxu0 %v3341
    %3562 = vmatprep.subr.mxu0 %v3350
    %3563 = vmatpush1.msra.mxu0 %v3349
    %3564 = vmatprep.subr.mxu0 %v3358
    %3565 = vmatpush1.msra.mxu0 %v3357
    %3566 = vmatprep.subr.mxu0 %v3366
    %3567 = vmatpush1.msra.mxu0 %v3365
    %3568 = vmatprep.subr.mxu0 %v3374
    %3569 = vmatpush1.msra.mxu0 %v3373
    %3570 = vmatprep.subr.mxu0 %v3382
    %3571 = vmatpush1.msra.mxu0 %v3381
    %3572 = vmatprep.subr.mxu0 %v3390
    %3573 = vmatpush1.msra.mxu0 %v3389
    %3574 = vmatprep.subr.mxu0 %v3398
    %3575 = vmatpush1.msra.mxu0 %v3397
    %3576 = vmatprep.subr.mxu0 %v3406
    %3577 = vmatpush1.msra.mxu0 %v3405
    %3578 = vmatprep.subr.mxu0 %v3414
    %3579 = vmatpush1.msra.mxu0 %v3413
    %3580 = vmatprep.subr.mxu0 %v3422
    %3581 = vmatpush1.msra.mxu0 %v3421
    %3582 = vmatprep.subr.mxu0 %v3430
    %3583 = vmatpush1.msra.mxu0 %v3429
    %3584 = vmatprep.subr.mxu0 %v3438
    %3585 = vmatpush1.msra.mxu0 %v3437
    %3586 = vmatprep.subr.mxu0 %v3446
    %3587 = vmatpush1.msra.mxu0 %v3445
    %3588 = vmatprep.subr.mxu0 %v3454
    %3589 = vmatpush1.msra.mxu0 %v3453
    %3590 = vmatprep.subr.mxu0 %v3462
    %3591 = vmatpush1.msra.mxu0 %v3461
    %3592 = vmatprep.subr.mxu0 %v3470
    %3593 = vmatpush1.msra.mxu0 %v3469
    %3594 = vmatprep.subr.mxu0 %v3478
    %3595 = vmatpush1.msra.mxu0 %v3477
    %3596 = vmatprep.subr.mxu0 %v3486
    %3597 = vmatpush1.msra.mxu0 %v3485
    %3598 = vmatprep.subr.mxu0 %v3494
    %3599 = vmatpush1.msra.mxu0 %v3493
    %3600 = vmatprep.subr.mxu0 %v3502
    %3601 = vmatpush1.msra.mxu0 %v3501
    %3602 = vmatprep.subr.mxu0 %v3510
    %3603 = vmatpush1.msra.mxu0 %v3509
    %3604 = vmatprep.subr.mxu0 %v3518
    %3605 = vmatpush1.msra.mxu0 %v3517
    %3606 = vmatprep.subr.mxu0 %v3526
    %3607 = vmatpush1.msra.mxu0 %v3525
    %3608 = vmatprep.mubr.f32.mxu0 %v3541
    %3609 = vmatmul.mubr.f32.gmra.mrb[0].mxu0 %v3540
    %v3610 = vpop.f32.mrb[0].mxu0
    %v3611 = vadd.f32 0.0, %v3610
    %v3612 = vpop.f32.mrb[0].mxu0
    %v3613 = vadd.f32 0.0, %v3612
    %3614 = vdwg.mxu0
    %3615 = vmatprep.subr.mxu0 %v3280
    %3616 = vmatpush1.msra.mxu0 %v3279
    %3617 = vmatprep.subr.mxu0 %v3288
    %3618 = vmatpush1.msra.mxu0 %v3287
    %3619 = vmatprep.subr.mxu0 %v3296
    %3620 = vmatpush1.msra.mxu0 %v3295
    %3621 = vmatprep.subr.mxu0 %v3304
    %3622 = vmatpush1.msra.mxu0 %v3303
    %3623 = vmatprep.subr.mxu0 %v3312
    %3624 = vmatpush1.msra.mxu0 %v3311
    %3625 = vmatprep.subr.mxu0 %v3320
    %3626 = vmatpush1.msra.mxu0 %v3319
    %3627 = vmatprep.subr.mxu0 %v3328
    %3628 = vmatpush1.msra.mxu0 %v3327
    %3629 = vmatprep.subr.mxu0 %v3336
    %3630 = vmatpush1.msra.mxu0 %v3335
    %3631 = vmatprep.subr.mxu0 %v3344
    %3632 = vmatpush1.msra.mxu0 %v3343
    %3633 = vmatprep.subr.mxu0 %v3352
    %3634 = vmatpush1.msra.mxu0 %v3351
    %3635 = vmatprep.subr.mxu0 %v3360
    %3636 = vmatpush1.msra.mxu0 %v3359
    %3637 = vmatprep.subr.mxu0 %v3368
    %3638 = vmatpush1.msra.mxu0 %v3367
    %3639 = vmatprep.subr.mxu0 %v3376
    %3640 = vmatpush1.msra.mxu0 %v3375
    %3641 = vmatprep.subr.mxu0 %v3384
    %3642 = vmatpush1.msra.mxu0 %v3383
    %3643 = vmatprep.subr.mxu0 %v3392
    %3644 = vmatpush1.msra.mxu0 %v3391
    %3645 = vmatprep.subr.mxu0 %v3400
    %3646 = vmatpush1.msra.mxu0 %v3399
    %3647 = vmatprep.subr.mxu0 %v3408
    %3648 = vmatpush1.msra.mxu0 %v3407
    %3649 = vmatprep.subr.mxu0 %v3416
    %3650 = vmatpush1.msra.mxu0 %v3415
    %3651 = vmatprep.subr.mxu0 %v3424
    %3652 = vmatpush1.msra.mxu0 %v3423
    %3653 = vmatprep.subr.mxu0 %v3432
    %3654 = vmatpush1.msra.mxu0 %v3431
    %3655 = vmatprep.subr.mxu0 %v3440
    %3656 = vmatpush1.msra.mxu0 %v3439
    %3657 = vmatprep.subr.mxu0 %v3448
    %3658 = vmatpush1.msra.mxu0 %v3447
    %3659 = vmatprep.subr.mxu0 %v3456
    %3660 = vmatpush1.msra.mxu0 %v3455
    %3661 = vmatprep.subr.mxu0 %v3464
    %3662 = vmatpush1.msra.mxu0 %v3463
    %3663 = vmatprep.subr.mxu0 %v3472
    %3664 = vmatpush1.msra.mxu0 %v3471
    %3665 = vmatprep.subr.mxu0 %v3480
    %3666 = vmatpush1.msra.mxu0 %v3479
    %3667 = vmatprep.subr.mxu0 %v3488
    %3668 = vmatpush1.msra.mxu0 %v3487
    %3669 = vmatprep.subr.mxu0 %v3496
    %3670 = vmatpush1.msra.mxu0 %v3495
    %3671 = vmatprep.subr.mxu0 %v3504
    %3672 = vmatpush1.msra.mxu0 %v3503
    %3673 = vmatprep.subr.mxu0 %v3512
    %3674 = vmatpush1.msra.mxu0 %v3511
    %3675 = vmatprep.subr.mxu0 %v3520
    %3676 = vmatpush1.msra.mxu0 %v3519
    %3677 = vmatprep.subr.mxu0 %v3528
    %3678 = vmatpush1.msra.mxu0 %v3527
    %3679 = vmatprep.mubr.f32.mxu0 %v3541
    %3680 = vmatmul.mubr.f32.gmra.mrb[0].mxu0 %v3540
    %v3681 = vpop.f32.mrb[0].mxu0
    %v3682 = vadd.f32 0.0, %v3681
    %v3683 = vpop.f32.mrb[0].mxu0
    %v3684 = vadd.f32 0.0, %v3683
    %3685 = vdwg.mxu0
    %3686 = vmatprep.subr.mxu0 %v3282
    %3687 = vmatpush1.msra.mxu0 %v3281
    %3688 = vmatprep.subr.mxu0 %v3290
    %3689 = vmatpush1.msra.mxu0 %v3289
    %3690 = vmatprep.subr.mxu0 %v3298
    %3691 = vmatpush1.msra.mxu0 %v3297
    %3692 = vmatprep.subr.mxu0 %v3306
    %3693 = vmatpush1.msra.mxu0 %v3305
    %3694 = vmatprep.subr.mxu0 %v3314
    %3695 = vmatpush1.msra.mxu0 %v3313
    %3696 = vmatprep.subr.mxu0 %v3322
    %3697 = vmatpush1.msra.mxu0 %v3321
    %3698 = vmatprep.subr.mxu0 %v3330
    %3699 = vmatpush1.msra.mxu0 %v3329
    %3700 = vmatprep.subr.mxu0 %v3338
    %3701 = vmatpush1.msra.mxu0 %v3337
    %3702 = vmatprep.subr.mxu0 %v3346
    %3703 = vmatpush1.msra.mxu0 %v3345
    %3704 = vmatprep.subr.mxu0 %v3354
    %3705 = vmatpush1.msra.mxu0 %v3353
    %3706 = vmatprep.subr.mxu0 %v3362
    %3707 = vmatpush1.msra.mxu0 %v3361
    %3708 = vmatprep.subr.mxu0 %v3370
    %3709 = vmatpush1.msra.mxu0 %v3369
    %3710 = vmatprep.subr.mxu0 %v3378
    %3711 = vmatpush1.msra.mxu0 %v3377
    %3712 = vmatprep.subr.mxu0 %v3386
    %3713 = vmatpush1.msra.mxu0 %v3385
    %3714 = vmatprep.subr.mxu0 %v3394
    %3715 = vmatpush1.msra.mxu0 %v3393
    %3716 = vmatprep.subr.mxu0 %v3402
    %3717 = vmatpush1.msra.mxu0 %v3401
    %3718 = vmatprep.subr.mxu0 %v3410
    %3719 = vmatpush1.msra.mxu0 %v3409
    %3720 = vmatprep.subr.mxu0 %v3418
    %3721 = vmatpush1.msra.mxu0 %v3417
    %3722 = vmatprep.subr.mxu0 %v3426
    %3723 = vmatpush1.msra.mxu0 %v3425
    %3724 = vmatprep.subr.mxu0 %v3434
    %3725 = vmatpush1.msra.mxu0 %v3433
    %3726 = vmatprep.subr.mxu0 %v3442
    %3727 = vmatpush1.msra.mxu0 %v3441
    %3728 = vmatprep.subr.mxu0 %v3450
    %3729 = vmatpush1.msra.mxu0 %v3449
    %3730 = vmatprep.subr.mxu0 %v3458
    %3731 = vmatpush1.msra.mxu0 %v3457
    %3732 = vmatprep.subr.mxu0 %v3466
    %3733 = vmatpush1.msra.mxu0 %v3465
    %3734 = vmatprep.subr.mxu0 %v3474
    %3735 = vmatpush1.msra.mxu0 %v3473
    %3736 = vmatprep.subr.mxu0 %v3482
    %3737 = vmatpush1.msra.mxu0 %v3481
    %3738 = vmatprep.subr.mxu0 %v3490
    %3739 = vmatpush1.msra.mxu0 %v3489
    %3740 = vmatprep.subr.mxu0 %v3498
    %3741 = vmatpush1.msra.mxu0 %v3497
    %3742 = vmatprep.subr.mxu0 %v3506
    %3743 = vmatpush1.msra.mxu0 %v3505
    %3744 = vmatprep.subr.mxu0 %v3514
    %3745 = vmatpush1.msra.mxu0 %v3513
    %3746 = vmatprep.subr.mxu0 %v3522
    %3747 = vmatpush1.msra.mxu0 %v3521
    %3748 = vmatprep.subr.mxu0 %v3530
    %3749 = vmatpush1.msra.mxu0 %v3529
    %3750 = vmatprep.mubr.f32.mxu0 %v3541
    %3751 = vmatmul.mubr.f32.gmra.mrb[0].mxu0 %v3540
    %v3752 = vpop.f32.mrb[0].mxu0
    %v3753 = vadd.f32 0.0, %v3752
    %v3754 = vpop.f32.mrb[0].mxu0
    %v3755 = vadd.f32 0.0, %v3754
    %3756 = vdwg.mxu0
    %3757 = vmatprep.subr.mxu0 %v3284
    %3758 = vmatpush1.msra.mxu0 %v3283
    %3759 = vmatprep.subr.mxu0 %v3292
    %3760 = vmatpush1.msra.mxu0 %v3291
    %3761 = vmatprep.subr.mxu0 %v3300
    %3762 = vmatpush1.msra.mxu0 %v3299
    %3763 = vmatprep.subr.mxu0 %v3308
    %3764 = vmatpush1.msra.mxu0 %v3307
    %3765 = vmatprep.subr.mxu0 %v3316
    %3766 = vmatpush1.msra.mxu0 %v3315
    %3767 = vmatprep.subr.mxu0 %v3324
    %3768 = vmatpush1.msra.mxu0 %v3323
    %3769 = vmatprep.subr.mxu0 %v3332
    %3770 = vmatpush1.msra.mxu0 %v3331
    %3771 = vmatprep.subr.mxu0 %v3340
    %3772 = vmatpush1.msra.mxu0 %v3339
    %3773 = vmatprep.subr.mxu0 %v3348
    %3774 = vmatpush1.msra.mxu0 %v3347
    %3775 = vmatprep.subr.mxu0 %v3356
    %3776 = vmatpush1.msra.mxu0 %v3355
    %3777 = vmatprep.subr.mxu0 %v3364
    %3778 = vmatpush1.msra.mxu0 %v3363
    %3779 = vmatprep.subr.mxu0 %v3372
    %3780 = vmatpush1.msra.mxu0 %v3371
    %3781 = vmatprep.subr.mxu0 %v3380
    %3782 = vmatpush1.msra.mxu0 %v3379
    %3783 = vmatprep.subr.mxu0 %v3388
    %3784 = vmatpush1.msra.mxu0 %v3387
    %3785 = vmatprep.subr.mxu0 %v3396
    %3786 = vmatpush1.msra.mxu0 %v3395
    %3787 = vmatprep.subr.mxu0 %v3404
    %3788 = vmatpush1.msra.mxu0 %v3403
    %3789 = vmatprep.subr.mxu0 %v3412
    %3790 = vmatpush1.msra.mxu0 %v3411
    %3791 = vmatprep.subr.mxu0 %v3420
    %3792 = vmatpush1.msra.mxu0 %v3419
    %3793 = vmatprep.subr.mxu0 %v3428
    %3794 = vmatpush1.msra.mxu0 %v3427
    %3795 = vmatprep.subr.mxu0 %v3436
    %3796 = vmatpush1.msra.mxu0 %v3435
    %3797 = vmatprep.subr.mxu0 %v3444
    %3798 = vmatpush1.msra.mxu0 %v3443
    %3799 = vmatprep.subr.mxu0 %v3452
    %3800 = vmatpush1.msra.mxu0 %v3451
    %3801 = vmatprep.subr.mxu0 %v3460
    %3802 = vmatpush1.msra.mxu0 %v3459
    %3803 = vmatprep.subr.mxu0 %v3468
    %3804 = vmatpush1.msra.mxu0 %v3467
    %3805 = vmatprep.subr.mxu0 %v3476
    %3806 = vmatpush1.msra.mxu0 %v3475
    %3807 = vmatprep.subr.mxu0 %v3484
    %3808 = vmatpush1.msra.mxu0 %v3483
    %3809 = vmatprep.subr.mxu0 %v3492
    %3810 = vmatpush1.msra.mxu0 %v3491
    %3811 = vmatprep.subr.mxu0 %v3500
    %3812 = vmatpush1.msra.mxu0 %v3499
    %3813 = vmatprep.subr.mxu0 %v3508
    %3814 = vmatpush1.msra.mxu0 %v3507
    %3815 = vmatprep.subr.mxu0 %v3516
    %3816 = vmatpush1.msra.mxu0 %v3515
    %3817 = vmatprep.subr.mxu0 %v3524
    %3818 = vmatpush1.msra.mxu0 %v3523
    %3819 = vmatprep.subr.mxu0 %v3532
    %3820 = vmatpush1.msra.mxu0 %v3531
    %3821 = vmatprep.mubr.f32.mxu0 %v3541
    %3822 = vmatmul.mubr.f32.gmra.mrb[0].mxu0 %v3540
    %v3823 = vpop.f32.mrb[0].mxu0
    %v3824 = vadd.f32 0.0, %v3823
    %v3825 = vpop.f32.mrb[0].mxu0
    %v3826 = vadd.f32 0.0, %v3825
    %3827 = vdwg.mxu0
    %v3836 = vcombine.low %v3611, %v3613
    %v3837 = vcombine.low %v3682, %v3684
    %v3839 = vunpack.c.l.s4 1983009808
    %v3840 = vunpack.c.0.s8 %v3839
    %v3841 = vlaneseq
    %v3842 = vshrl.u32 %v3841, 7
    %v3843 = vsub.s32 %v3840, %v3842
    %v3844 = vrot.slane %v3836, %v3843
    %v3846 = vunpack.c.l.s4 1983009808
    %v3847 = vunpack.c.0.s8 %v3846
    %v3848 = vlaneseq
    %v3849 = vshrl.u32 %v3848, 7
    %v3850 = vsub.s32 %v3847, %v3849
    %v3851 = vrot.slane %v3837, %v3850
    %v3852 = vcombine.low %v3844, %v3851
    %v3853 = vcombine.low %v3753, %v3755
    %v3854 = vcombine.low %v3824, %v3826
    %v3856 = vunpack.c.l.s4 1983009808
    %v3857 = vunpack.c.0.s8 %v3856
    %v3858 = vlaneseq
    %v3859 = vshrl.u32 %v3858, 7
    %v3860 = vsub.s32 %v3857, %v3859
    %v3861 = vrot.slane %v3853, %v3860
    %v3863 = vunpack.c.l.s4 1983009808
    %v3864 = vunpack.c.0.s8 %v3863
    %v3865 = vlaneseq
    %v3866 = vshrl.u32 %v3865, 7
    %v3867 = vsub.s32 %v3864, %v3866
    %v3868 = vrot.slane %v3854, %v3867
    %v3869 = vcombine.low %v3861, %v3868
    %v3872 = vadd.f32 %v3275, %v3852
    %v3873 = vadd.f32 %v3276, %v3869
    %v3874 = vxor.u32 %v3872, 2147483648
    %v3875 = vxor.u32 %v3873, 2147483648
    %v3876 = vmul.f32 %v3874, 1.442695
    %v3877 = vpow.pop %v3876
    %v3878 = vmul.f32 %v3875, 1.442695
    %v3879 = vpow.pop %v3878
    %v3880 = vadd.f32 %v3877, 1.0
    %v3881 = vadd.f32 %v3879, 1.0
    %v3882 = vrcp.pop %v3880
    %v3883 = vmul.f32 1.0, %v3882
    %v3884 = vrcp.pop %v3881
    %v3885 = vmul.f32 1.0, %v3884
    %v3887 = vrot.slane %v3873, 4
    %v3889 = vtanh.pop %v3887
    %v3891 = vrot.slane %v3883, 4
    %v3893 = vmul.f32 %v3891, %v3269
    %v3894 = vmul.f32 %v3883, %v3889
    %v3895 = vadd.f32 %v3893, %v3894
    %v3896 = vtanh.pop %v3895
    %v3897 = vmul.f32 %v3885, %v3896
    %s3898 = scalar_lea.vmem [#allocation3], 16
    %3899 = vst [vmem:[%s3898] sm:$0xf] %v3897
    %s3900 = scalar_lea.vmem [#allocation2], 80
    %v3901 = vld [vmem:[%s3900] sm:$0xff]
    %v3902 = vld [vmem:[%s3900 + $0x8] sm:$0xff]
    %v3903 = vld [vmem:[%s2] sm:$0xff]
    %v3904 = vld [vmem:[%s2 + $0x8] sm:$0xff]
    %v3905 = vld [vmem:[%s2 + $0x10] sm:$0xff]
    %v3906 = vld [vmem:[%s2 + $0x18] sm:$0xff]
    %v3907 = vld [vmem:[%s2 + $0x20] sm:$0xff]
    %v3908 = vld [vmem:[%s2 + $0x28] sm:$0xff]
    %v3909 = vld [vmem:[%s2 + $0x30] sm:$0xff]
    %v3910 = vld [vmem:[%s2 + $0x38] sm:$0xff]
    %v3911 = vld [vmem:[%s2 + $0x40] sm:$0xff]
    %v3912 = vld [vmem:[%s2 + $0x48] sm:$0xff]
    %v3913 = vld [vmem:[%s2 + $0x50] sm:$0xff]
    %v3914 = vld [vmem:[%s2 + $0x58] sm:$0xff]
    %v3915 = vld [vmem:[%s2 + $0x60] sm:$0xff]
    %v3916 = vld [vmem:[%s2 + $0x68] sm:$0xff]
    %v3917 = vld [vmem:[%s2 + $0x70] sm:$0xff]
    %v3918 = vld [vmem:[%s2 + $0x78] sm:$0xff]
    %v3919 = vld [vmem:[%s2 + $0x80] sm:$0xff]
    %v3920 = vld [vmem:[%s2 + $0x88] sm:$0xff]
    %v3921 = vld [vmem:[%s2 + $0x90] sm:$0xff]
    %v3922 = vld [vmem:[%s2 + $0x98] sm:$0xff]
    %v3923 = vld [vmem:[%s2 + $0xa0] sm:$0xff]
    %v3924 = vld [vmem:[%s2 + $0xa8] sm:$0xff]
    %v3925 = vld [vmem:[%s2 + $0xb0] sm:$0xff]
    %v3926 = vld [vmem:[%s2 + $0xb8] sm:$0xff]
    %v3927 = vld [vmem:[%s2 + $0xc0] sm:$0xff]
    %v3928 = vld [vmem:[%s2 + $0xc8] sm:$0xff]
    %v3929 = vld [vmem:[%s2 + $0xd0] sm:$0xff]
    %v3930 = vld [vmem:[%s2 + $0xd8] sm:$0xff]
    %v3931 = vld [vmem:[%s2 + $0xe0] sm:$0xff]
    %v3932 = vld [vmem:[%s2 + $0xe8] sm:$0xff]
    %v3933 = vld [vmem:[%s2 + $0xf0] sm:$0xff]
    %v3934 = vld [vmem:[%s2 + $0xf8] sm:$0xff]
    %v3935 = vld [vmem:[%s2 + $0x100] sm:$0xff]
    %v3936 = vld [vmem:[%s2 + $0x108] sm:$0xff]
    %v3937 = vld [vmem:[%s2 + $0x110] sm:$0xff]
    %v3938 = vld [vmem:[%s2 + $0x118] sm:$0xff]
    %v3939 = vld [vmem:[%s2 + $0x120] sm:$0xff]
    %v3940 = vld [vmem:[%s2 + $0x128] sm:$0xff]
    %v3941 = vld [vmem:[%s2 + $0x130] sm:$0xff]
    %v3942 = vld [vmem:[%s2 + $0x138] sm:$0xff]
    %v3943 = vld [vmem:[%s2 + $0x140] sm:$0xff]
    %v3944 = vld [vmem:[%s2 + $0x148] sm:$0xff]
    %v3945 = vld [vmem:[%s2 + $0x150] sm:$0xff]
    %v3946 = vld [vmem:[%s2 + $0x158] sm:$0xff]
    %v3947 = vld [vmem:[%s2 + $0x160] sm:$0xff]
    %v3948 = vld [vmem:[%s2 + $0x168] sm:$0xff]
    %v3949 = vld [vmem:[%s2 + $0x170] sm:$0xff]
    %v3950 = vld [vmem:[%s2 + $0x178] sm:$0xff]
    %v3951 = vld [vmem:[%s2 + $0x180] sm:$0xff]
    %v3952 = vld [vmem:[%s2 + $0x188] sm:$0xff]
    %v3953 = vld [vmem:[%s2 + $0x190] sm:$0xff]
    %v3954 = vld [vmem:[%s2 + $0x198] sm:$0xff]
    %v3955 = vld [vmem:[%s2 + $0x1a0] sm:$0xff]
    %v3956 = vld [vmem:[%s2 + $0x1a8] sm:$0xff]
    %v3957 = vld [vmem:[%s2 + $0x1b0] sm:$0xff]
    %v3958 = vld [vmem:[%s2 + $0x1b8] sm:$0xff]
    %v3959 = vld [vmem:[%s2 + $0x1c0] sm:$0xff]
    %v3960 = vld [vmem:[%s2 + $0x1c8] sm:$0xff]
    %v3961 = vld [vmem:[%s2 + $0x1d0] sm:$0xff]
    %v3962 = vld [vmem:[%s2 + $0x1d8] sm:$0xff]
    %v3963 = vld [vmem:[%s2 + $0x1e0] sm:$0xff]
    %v3964 = vld [vmem:[%s2 + $0x1e8] sm:$0xff]
    %v3965 = vld [vmem:[%s2 + $0x1f0] sm:$0xff]
    %v3966 = vld [vmem:[%s2 + $0x1f8] sm:$0xff]
    %v3967 = vld [vmem:[%s2 + $0x200] sm:$0xff]
    %v3968 = vld [vmem:[%s2 + $0x208] sm:$0xff]
    %v3969 = vld [vmem:[%s2 + $0x210] sm:$0xff]
    %v3970 = vld [vmem:[%s2 + $0x218] sm:$0xff]
    %v3971 = vld [vmem:[%s2 + $0x220] sm:$0xff]
    %v3972 = vld [vmem:[%s2 + $0x228] sm:$0xff]
    %v3973 = vld [vmem:[%s2 + $0x230] sm:$0xff]
    %v3974 = vld [vmem:[%s2 + $0x238] sm:$0xff]
    %v3975 = vld [vmem:[%s2 + $0x240] sm:$0xff]
    %v3976 = vld [vmem:[%s2 + $0x248] sm:$0xff]
    %v3977 = vld [vmem:[%s2 + $0x250] sm:$0xff]
    %v3978 = vld [vmem:[%s2 + $0x258] sm:$0xff]
    %v3979 = vld [vmem:[%s2 + $0x260] sm:$0xff]
    %v3980 = vld [vmem:[%s2 + $0x268] sm:$0xff]
    %v3981 = vld [vmem:[%s2 + $0x270] sm:$0xff]
    %v3982 = vld [vmem:[%s2 + $0x278] sm:$0xff]
    %v3983 = vld [vmem:[%s2 + $0x280] sm:$0xff]
    %v3984 = vld [vmem:[%s2 + $0x288] sm:$0xff]
    %v3985 = vld [vmem:[%s2 + $0x290] sm:$0xff]
    %v3986 = vld [vmem:[%s2 + $0x298] sm:$0xff]
    %v3987 = vld [vmem:[%s2 + $0x2a0] sm:$0xff]
    %v3988 = vld [vmem:[%s2 + $0x2a8] sm:$0xff]
    %v3989 = vld [vmem:[%s2 + $0x2b0] sm:$0xff]
    %v3990 = vld [vmem:[%s2 + $0x2b8] sm:$0xff]
    %v3991 = vld [vmem:[%s2 + $0x2c0] sm:$0xff]
    %v3992 = vld [vmem:[%s2 + $0x2c8] sm:$0xff]
    %v3993 = vld [vmem:[%s2 + $0x2d0] sm:$0xff]
    %v3994 = vld [vmem:[%s2 + $0x2d8] sm:$0xff]
    %v3995 = vld [vmem:[%s2 + $0x2e0] sm:$0xff]
    %v3996 = vld [vmem:[%s2 + $0x2e8] sm:$0xff]
    %v3997 = vld [vmem:[%s2 + $0x2f0] sm:$0xff]
    %v3998 = vld [vmem:[%s2 + $0x2f8] sm:$0xff]
    %v3999 = vld [vmem:[%s2 + $0x300] sm:$0xff]
    %v4000 = vld [vmem:[%s2 + $0x308] sm:$0xff]
    %v4001 = vld [vmem:[%s2 + $0x310] sm:$0xff]
    %v4002 = vld [vmem:[%s2 + $0x318] sm:$0xff]
    %v4003 = vld [vmem:[%s2 + $0x320] sm:$0xff]
    %v4004 = vld [vmem:[%s2 + $0x328] sm:$0xff]
    %v4005 = vld [vmem:[%s2 + $0x330] sm:$0xff]
    %v4006 = vld [vmem:[%s2 + $0x338] sm:$0xff]
    %v4007 = vld [vmem:[%s2 + $0x340] sm:$0xff]
    %v4008 = vld [vmem:[%s2 + $0x348] sm:$0xff]
    %v4009 = vld [vmem:[%s2 + $0x350] sm:$0xff]
    %v4010 = vld [vmem:[%s2 + $0x358] sm:$0xff]
    %v4011 = vld [vmem:[%s2 + $0x360] sm:$0xff]
    %v4012 = vld [vmem:[%s2 + $0x368] sm:$0xff]
    %v4013 = vld [vmem:[%s2 + $0x370] sm:$0xff]
    %v4014 = vld [vmem:[%s2 + $0x378] sm:$0xff]
    %v4015 = vld [vmem:[%s2 + $0x380] sm:$0xff]
    %v4016 = vld [vmem:[%s2 + $0x388] sm:$0xff]
    %v4017 = vld [vmem:[%s2 + $0x390] sm:$0xff]
    %v4018 = vld [vmem:[%s2 + $0x398] sm:$0xff]
    %v4019 = vld [vmem:[%s2 + $0x3a0] sm:$0xff]
    %v4020 = vld [vmem:[%s2 + $0x3a8] sm:$0xff]
    %v4021 = vld [vmem:[%s2 + $0x3b0] sm:$0xff]
    %v4022 = vld [vmem:[%s2 + $0x3b8] sm:$0xff]
    %v4023 = vld [vmem:[%s2 + $0x3c0] sm:$0xff]
    %v4024 = vld [vmem:[%s2 + $0x3c8] sm:$0xff]
    %v4025 = vld [vmem:[%s2 + $0x3d0] sm:$0xff]
    %v4026 = vld [vmem:[%s2 + $0x3d8] sm:$0xff]
    %v4027 = vld [vmem:[%s2 + $0x3e0] sm:$0xff]
    %v4028 = vld [vmem:[%s2 + $0x3e8] sm:$0xff]
    %v4029 = vld [vmem:[%s2 + $0x3f0] sm:$0xff]
    %v4030 = vld [vmem:[%s2 + $0x3f8] sm:$0xff]
    %v4031 = vld [vmem:[%s2 + $0x400] sm:$0xff]
    %v4032 = vld [vmem:[%s2 + $0x408] sm:$0xff]
    %v4033 = vld [vmem:[%s2 + $0x410] sm:$0xff]
    %v4034 = vld [vmem:[%s2 + $0x418] sm:$0xff]
    %v4035 = vld [vmem:[%s2 + $0x420] sm:$0xff]
    %v4036 = vld [vmem:[%s2 + $0x428] sm:$0xff]
    %v4037 = vld [vmem:[%s2 + $0x430] sm:$0xff]
    %v4038 = vld [vmem:[%s2 + $0x438] sm:$0xff]
    %v4039 = vld [vmem:[%s2 + $0x440] sm:$0xff]
    %v4040 = vld [vmem:[%s2 + $0x448] sm:$0xff]
    %v4041 = vld [vmem:[%s2 + $0x450] sm:$0xff]
    %v4042 = vld [vmem:[%s2 + $0x458] sm:$0xff]
    %v4043 = vld [vmem:[%s2 + $0x460] sm:$0xff]
    %v4044 = vld [vmem:[%s2 + $0x468] sm:$0xff]
    %v4045 = vld [vmem:[%s2 + $0x470] sm:$0xff]
    %v4046 = vld [vmem:[%s2 + $0x478] sm:$0xff]
    %v4047 = vld [vmem:[%s2 + $0x480] sm:$0xff]
    %v4048 = vld [vmem:[%s2 + $0x488] sm:$0xff]
    %v4049 = vld [vmem:[%s2 + $0x490] sm:$0xff]
    %v4050 = vld [vmem:[%s2 + $0x498] sm:$0xff]
    %v4051 = vld [vmem:[%s2 + $0x4a0] sm:$0xff]
    %v4052 = vld [vmem:[%s2 + $0x4a8] sm:$0xff]
    %v4053 = vld [vmem:[%s2 + $0x4b0] sm:$0xff]
    %v4054 = vld [vmem:[%s2 + $0x4b8] sm:$0xff]
    %v4055 = vld [vmem:[%s2 + $0x4c0] sm:$0xff]
    %v4056 = vld [vmem:[%s2 + $0x4c8] sm:$0xff]
    %v4057 = vld [vmem:[%s2 + $0x4d0] sm:$0xff]
    %v4058 = vld [vmem:[%s2 + $0x4d8] sm:$0xff]
    %v4059 = vld [vmem:[%s2 + $0x4e0] sm:$0xff]
    %v4060 = vld [vmem:[%s2 + $0x4e8] sm:$0xff]
    %v4061 = vld [vmem:[%s2 + $0x4f0] sm:$0xff]
    %v4062 = vld [vmem:[%s2 + $0x4f8] sm:$0xff]
    %v4063 = vld [vmem:[%s2 + $0x500] sm:$0xff]
    %v4064 = vld [vmem:[%s2 + $0x508] sm:$0xff]
    %v4065 = vld [vmem:[%s2 + $0x510] sm:$0xff]
    %v4066 = vld [vmem:[%s2 + $0x518] sm:$0xff]
    %v4067 = vld [vmem:[%s2 + $0x520] sm:$0xff]
    %v4068 = vld [vmem:[%s2 + $0x528] sm:$0xff]
    %v4069 = vld [vmem:[%s2 + $0x530] sm:$0xff]
    %v4070 = vld [vmem:[%s2 + $0x538] sm:$0xff]
    %v4071 = vld [vmem:[%s2 + $0x540] sm:$0xff]
    %v4072 = vld [vmem:[%s2 + $0x548] sm:$0xff]
    %v4073 = vld [vmem:[%s2 + $0x550] sm:$0xff]
    %v4074 = vld [vmem:[%s2 + $0x558] sm:$0xff]
    %v4075 = vld [vmem:[%s2 + $0x560] sm:$0xff]
    %v4076 = vld [vmem:[%s2 + $0x568] sm:$0xff]
    %v4077 = vld [vmem:[%s2 + $0x570] sm:$0xff]
    %v4078 = vld [vmem:[%s2 + $0x578] sm:$0xff]
    %v4079 = vld [vmem:[%s2 + $0x580] sm:$0xff]
    %v4080 = vld [vmem:[%s2 + $0x588] sm:$0xff]
    %v4081 = vld [vmem:[%s2 + $0x590] sm:$0xff]
    %v4082 = vld [vmem:[%s2 + $0x598] sm:$0xff]
    %v4083 = vld [vmem:[%s2 + $0x5a0] sm:$0xff]
    %v4084 = vld [vmem:[%s2 + $0x5a8] sm:$0xff]
    %v4085 = vld [vmem:[%s2 + $0x5b0] sm:$0xff]
    %v4086 = vld [vmem:[%s2 + $0x5b8] sm:$0xff]
    %v4087 = vld [vmem:[%s2 + $0x5c0] sm:$0xff]
    %v4088 = vld [vmem:[%s2 + $0x5c8] sm:$0xff]
    %v4089 = vld [vmem:[%s2 + $0x5d0] sm:$0xff]
    %v4090 = vld [vmem:[%s2 + $0x5d8] sm:$0xff]
    %v4091 = vld [vmem:[%s2 + $0x5e0] sm:$0xff]
    %v4092 = vld [vmem:[%s2 + $0x5e8] sm:$0xff]
    %v4093 = vld [vmem:[%s2 + $0x5f0] sm:$0xff]
    %v4094 = vld [vmem:[%s2 + $0x5f8] sm:$0xff]
    %v4095 = vld [vmem:[%s2 + $0x600] sm:$0xff]
    %v4096 = vld [vmem:[%s2 + $0x608] sm:$0xff]
    %v4097 = vld [vmem:[%s2 + $0x610] sm:$0xff]
    %v4098 = vld [vmem:[%s2 + $0x618] sm:$0xff]
    %v4099 = vld [vmem:[%s2 + $0x620] sm:$0xff]
    %v4100 = vld [vmem:[%s2 + $0x628] sm:$0xff]
    %v4101 = vld [vmem:[%s2 + $0x630] sm:$0xff]
    %v4102 = vld [vmem:[%s2 + $0x638] sm:$0xff]
    %v4103 = vld [vmem:[%s2 + $0x640] sm:$0xff]
    %v4104 = vld [vmem:[%s2 + $0x648] sm:$0xff]
    %v4105 = vld [vmem:[%s2 + $0x650] sm:$0xff]
    %v4106 = vld [vmem:[%s2 + $0x658] sm:$0xff]
    %v4107 = vld [vmem:[%s2 + $0x660] sm:$0xff]
    %v4108 = vld [vmem:[%s2 + $0x668] sm:$0xff]
    %v4109 = vld [vmem:[%s2 + $0x670] sm:$0xff]
    %v4110 = vld [vmem:[%s2 + $0x678] sm:$0xff]
    %v4111 = vld [vmem:[%s2 + $0x680] sm:$0xff]
    %v4112 = vld [vmem:[%s2 + $0x688] sm:$0xff]
    %v4113 = vld [vmem:[%s2 + $0x690] sm:$0xff]
    %v4114 = vld [vmem:[%s2 + $0x698] sm:$0xff]
    %v4115 = vld [vmem:[%s2 + $0x6a0] sm:$0xff]
    %v4116 = vld [vmem:[%s2 + $0x6a8] sm:$0xff]
    %v4117 = vld [vmem:[%s2 + $0x6b0] sm:$0xff]
    %v4118 = vld [vmem:[%s2 + $0x6b8] sm:$0xff]
    %v4119 = vld [vmem:[%s2 + $0x6c0] sm:$0xff]
    %v4120 = vld [vmem:[%s2 + $0x6c8] sm:$0xff]
    %v4121 = vld [vmem:[%s2 + $0x6d0] sm:$0xff]
    %v4122 = vld [vmem:[%s2 + $0x6d8] sm:$0xff]
    %v4123 = vld [vmem:[%s2 + $0x6e0] sm:$0xff]
    %v4124 = vld [vmem:[%s2 + $0x6e8] sm:$0xff]
    %v4125 = vld [vmem:[%s2 + $0x6f0] sm:$0xff]
    %v4126 = vld [vmem:[%s2 + $0x6f8] sm:$0xff]
    %v4127 = vld [vmem:[%s2 + $0x700] sm:$0xff]
    %v4128 = vld [vmem:[%s2 + $0x708] sm:$0xff]
    %v4129 = vld [vmem:[%s2 + $0x710] sm:$0xff]
    %v4130 = vld [vmem:[%s2 + $0x718] sm:$0xff]
    %v4131 = vld [vmem:[%s2 + $0x720] sm:$0xff]
    %v4132 = vld [vmem:[%s2 + $0x728] sm:$0xff]
    %v4133 = vld [vmem:[%s2 + $0x730] sm:$0xff]
    %v4134 = vld [vmem:[%s2 + $0x738] sm:$0xff]
    %v4135 = vld [vmem:[%s2 + $0x740] sm:$0xff]
    %v4136 = vld [vmem:[%s2 + $0x748] sm:$0xff]
    %v4137 = vld [vmem:[%s2 + $0x750] sm:$0xff]
    %v4138 = vld [vmem:[%s2 + $0x758] sm:$0xff]
    %v4139 = vld [vmem:[%s2 + $0x760] sm:$0xff]
    %v4140 = vld [vmem:[%s2 + $0x768] sm:$0xff]
    %v4141 = vld [vmem:[%s2 + $0x770] sm:$0xff]
    %v4142 = vld [vmem:[%s2 + $0x778] sm:$0xff]
    %v4143 = vld [vmem:[%s2 + $0x780] sm:$0xff]
    %v4144 = vld [vmem:[%s2 + $0x788] sm:$0xff]
    %v4145 = vld [vmem:[%s2 + $0x790] sm:$0xff]
    %v4146 = vld [vmem:[%s2 + $0x798] sm:$0xff]
    %v4147 = vld [vmem:[%s2 + $0x7a0] sm:$0xff]
    %v4148 = vld [vmem:[%s2 + $0x7a8] sm:$0xff]
    %v4149 = vld [vmem:[%s2 + $0x7b0] sm:$0xff]
    %v4150 = vld [vmem:[%s2 + $0x7b8] sm:$0xff]
    %v4151 = vld [vmem:[%s2 + $0x7c0] sm:$0xff]
    %v4152 = vld [vmem:[%s2 + $0x7c8] sm:$0xff]
    %v4153 = vld [vmem:[%s2 + $0x7d0] sm:$0xff]
    %v4154 = vld [vmem:[%s2 + $0x7d8] sm:$0xff]
    %v4155 = vld [vmem:[%s2 + $0x7e0] sm:$0xff]
    %v4156 = vld [vmem:[%s2 + $0x7e8] sm:$0xff]
    %v4157 = vld [vmem:[%s2 + $0x7f0] sm:$0xff]
    %v4158 = vld [vmem:[%s2 + $0x7f8] sm:$0xff]
    %v4161 = vunpack.c.l.s4 1983009808
    %v4162 = vunpack.c.0.s8 %v4161
    %v4163 = vlaneseq
    %v4164 = vshrl.u32 %v4163, 7
    %v4165 = vsub.s32 %v4162, %v4164
    %v4166 = vrot.slane %v3897, %v4165
    %v4167 = vcombine.high %v4166, %v4166
    %4170 = vmatprep.subr.mxu0 %v3904
    %4171 = vmatpush1.msra.mxu0 %v3903
    %4172 = vmatprep.subr.mxu0 %v3912
    %4173 = vmatpush1.msra.mxu0 %v3911
    %4174 = vmatprep.subr.mxu0 %v3920
    %4175 = vmatpush1.msra.mxu0 %v3919
    %4176 = vmatprep.subr.mxu0 %v3928
    %4177 = vmatpush1.msra.mxu0 %v3927
    %4178 = vmatprep.subr.mxu0 %v3936
    %4179 = vmatpush1.msra.mxu0 %v3935
    %4180 = vmatprep.subr.mxu0 %v3944
    %4181 = vmatpush1.msra.mxu0 %v3943
    %4182 = vmatprep.subr.mxu0 %v3952
    %4183 = vmatpush1.msra.mxu0 %v3951
    %4184 = vmatprep.subr.mxu0 %v3960
    %4185 = vmatpush1.msra.mxu0 %v3959
    %4186 = vmatprep.subr.mxu0 %v3968
    %4187 = vmatpush1.msra.mxu0 %v3967
    %4188 = vmatprep.subr.mxu0 %v3976
    %4189 = vmatpush1.msra.mxu0 %v3975
    %4190 = vmatprep.subr.mxu0 %v3984
    %4191 = vmatpush1.msra.mxu0 %v3983
    %4192 = vmatprep.subr.mxu0 %v3992
    %4193 = vmatpush1.msra.mxu0 %v3991
    %4194 = vmatprep.subr.mxu0 %v4000
    %4195 = vmatpush1.msra.mxu0 %v3999
    %4196 = vmatprep.subr.mxu0 %v4008
    %4197 = vmatpush1.msra.mxu0 %v4007
    %4198 = vmatprep.subr.mxu0 %v4016
    %4199 = vmatpush1.msra.mxu0 %v4015
    %4200 = vmatprep.subr.mxu0 %v4024
    %4201 = vmatpush1.msra.mxu0 %v4023
    %4202 = vmatprep.subr.mxu0 %v4032
    %4203 = vmatpush1.msra.mxu0 %v4031
    %4204 = vmatprep.subr.mxu0 %v4040
    %4205 = vmatpush1.msra.mxu0 %v4039
    %4206 = vmatprep.subr.mxu0 %v4048
    %4207 = vmatpush1.msra.mxu0 %v4047
    %4208 = vmatprep.subr.mxu0 %v4056
    %4209 = vmatpush1.msra.mxu0 %v4055
    %4210 = vmatprep.subr.mxu0 %v4064
    %4211 = vmatpush1.msra.mxu0 %v4063
    %4212 = vmatprep.subr.mxu0 %v4072
    %4213 = vmatpush1.msra.mxu0 %v4071
    %4214 = vmatprep.subr.mxu0 %v4080
    %4215 = vmatpush1.msra.mxu0 %v4079
    %4216 = vmatprep.subr.mxu0 %v4088
    %4217 = vmatpush1.msra.mxu0 %v4087
    %4218 = vmatprep.subr.mxu0 %v4096
    %4219 = vmatpush1.msra.mxu0 %v4095
    %4220 = vmatprep.subr.mxu0 %v4104
    %4221 = vmatpush1.msra.mxu0 %v4103
    %4222 = vmatprep.subr.mxu0 %v4112
    %4223 = vmatpush1.msra.mxu0 %v4111
    %4224 = vmatprep.subr.mxu0 %v4120
    %4225 = vmatpush1.msra.mxu0 %v4119
    %4226 = vmatprep.subr.mxu0 %v4128
    %4227 = vmatpush1.msra.mxu0 %v4127
    %4228 = vmatprep.subr.mxu0 %v4136
    %4229 = vmatpush1.msra.mxu0 %v4135
    %4230 = vmatprep.subr.mxu0 %v4144
    %4231 = vmatpush1.msra.mxu0 %v4143
    %4232 = vmatprep.subr.mxu0 %v4152
    %4233 = vmatpush1.msra.mxu0 %v4151
    %4234 = vmatprep.mubr.f32.mxu0 %v4167
    %4235 = vmatmul.mubr.f32.gmra.mrb[0].mxu0 %v4166
    %v4236 = vpop.f32.mrb[0].mxu0
    %v4237 = vadd.f32 0.0, %v4236
    %v4238 = vpop.f32.mrb[0].mxu0
    %v4239 = vadd.f32 0.0, %v4238
    %4240 = vdwg.mxu0
    %4241 = vmatprep.subr.mxu0 %v3906
    %4242 = vmatpush1.msra.mxu0 %v3905
    %4243 = vmatprep.subr.mxu0 %v3914
    %4244 = vmatpush1.msra.mxu0 %v3913
    %4245 = vmatprep.subr.mxu0 %v3922
    %4246 = vmatpush1.msra.mxu0 %v3921
    %4247 = vmatprep.subr.mxu0 %v3930
    %4248 = vmatpush1.msra.mxu0 %v3929
    %4249 = vmatprep.subr.mxu0 %v3938
    %4250 = vmatpush1.msra.mxu0 %v3937
    %4251 = vmatprep.subr.mxu0 %v3946
    %4252 = vmatpush1.msra.mxu0 %v3945
    %4253 = vmatprep.subr.mxu0 %v3954
    %4254 = vmatpush1.msra.mxu0 %v3953
    %4255 = vmatprep.subr.mxu0 %v3962
    %4256 = vmatpush1.msra.mxu0 %v3961
    %4257 = vmatprep.subr.mxu0 %v3970
    %4258 = vmatpush1.msra.mxu0 %v3969
    %4259 = vmatprep.subr.mxu0 %v3978
    %4260 = vmatpush1.msra.mxu0 %v3977
    %4261 = vmatprep.subr.mxu0 %v3986
    %4262 = vmatpush1.msra.mxu0 %v3985
    %4263 = vmatprep.subr.mxu0 %v3994
    %4264 = vmatpush1.msra.mxu0 %v3993
    %4265 = vmatprep.subr.mxu0 %v4002
    %4266 = vmatpush1.msra.mxu0 %v4001
    %4267 = vmatprep.subr.mxu0 %v4010
    %4268 = vmatpush1.msra.mxu0 %v4009
    %4269 = vmatprep.subr.mxu0 %v4018
    %4270 = vmatpush1.msra.mxu0 %v4017
    %4271 = vmatprep.subr.mxu0 %v4026
    %4272 = vmatpush1.msra.mxu0 %v4025
    %4273 = vmatprep.subr.mxu0 %v4034
    %4274 = vmatpush1.msra.mxu0 %v4033
    %4275 = vmatprep.subr.mxu0 %v4042
    %4276 = vmatpush1.msra.mxu0 %v4041
    %4277 = vmatprep.subr.mxu0 %v4050
    %4278 = vmatpush1.msra.mxu0 %v4049
    %4279 = vmatprep.subr.mxu0 %v4058
    %4280 = vmatpush1.msra.mxu0 %v4057
    %4281 = vmatprep.subr.mxu0 %v4066
    %4282 = vmatpush1.msra.mxu0 %v4065
    %4283 = vmatprep.subr.mxu0 %v4074
    %4284 = vmatpush1.msra.mxu0 %v4073
    %4285 = vmatprep.subr.mxu0 %v4082
    %4286 = vmatpush1.msra.mxu0 %v4081
    %4287 = vmatprep.subr.mxu0 %v4090
    %4288 = vmatpush1.msra.mxu0 %v4089
    %4289 = vmatprep.subr.mxu0 %v4098
    %4290 = vmatpush1.msra.mxu0 %v4097
    %4291 = vmatprep.subr.mxu0 %v4106
    %4292 = vmatpush1.msra.mxu0 %v4105
    %4293 = vmatprep.subr.mxu0 %v4114
    %4294 = vmatpush1.msra.mxu0 %v4113
    %4295 = vmatprep.subr.mxu0 %v4122
    %4296 = vmatpush1.msra.mxu0 %v4121
    %4297 = vmatprep.subr.mxu0 %v4130
    %4298 = vmatpush1.msra.mxu0 %v4129
    %4299 = vmatprep.subr.mxu0 %v4138
    %4300 = vmatpush1.msra.mxu0 %v4137
    %4301 = vmatprep.subr.mxu0 %v4146
    %4302 = vmatpush1.msra.mxu0 %v4145
    %4303 = vmatprep.subr.mxu0 %v4154
    %4304 = vmatpush1.msra.mxu0 %v4153
    %4305 = vmatprep.mubr.f32.mxu0 %v4167
    %4306 = vmatmul.mubr.f32.gmra.mrb[0].mxu0 %v4166
    %v4307 = vpop.f32.mrb[0].mxu0
    %v4308 = vadd.f32 0.0, %v4307
    %v4309 = vpop.f32.mrb[0].mxu0
    %v4310 = vadd.f32 0.0, %v4309
    %4311 = vdwg.mxu0
    %4312 = vmatprep.subr.mxu0 %v3908
    %4313 = vmatpush1.msra.mxu0 %v3907
    %4314 = vmatprep.subr.mxu0 %v3916
    %4315 = vmatpush1.msra.mxu0 %v3915
    %4316 = vmatprep.subr.mxu0 %v3924
    %4317 = vmatpush1.msra.mxu0 %v3923
    %4318 = vmatprep.subr.mxu0 %v3932
    %4319 = vmatpush1.msra.mxu0 %v3931
    %4320 = vmatprep.subr.mxu0 %v3940
    %4321 = vmatpush1.msra.mxu0 %v3939
    %4322 = vmatprep.subr.mxu0 %v3948
    %4323 = vmatpush1.msra.mxu0 %v3947
    %4324 = vmatprep.subr.mxu0 %v3956
    %4325 = vmatpush1.msra.mxu0 %v3955
    %4326 = vmatprep.subr.mxu0 %v3964
    %4327 = vmatpush1.msra.mxu0 %v3963
    %4328 = vmatprep.subr.mxu0 %v3972
    %4329 = vmatpush1.msra.mxu0 %v3971
    %4330 = vmatprep.subr.mxu0 %v3980
    %4331 = vmatpush1.msra.mxu0 %v3979
    %4332 = vmatprep.subr.mxu0 %v3988
    %4333 = vmatpush1.msra.mxu0 %v3987
    %4334 = vmatprep.subr.mxu0 %v3996
    %4335 = vmatpush1.msra.mxu0 %v3995
    %4336 = vmatprep.subr.mxu0 %v4004
    %4337 = vmatpush1.msra.mxu0 %v4003
    %4338 = vmatprep.subr.mxu0 %v4012
    %4339 = vmatpush1.msra.mxu0 %v4011
    %4340 = vmatprep.subr.mxu0 %v4020
    %4341 = vmatpush1.msra.mxu0 %v4019
    %4342 = vmatprep.subr.mxu0 %v4028
    %4343 = vmatpush1.msra.mxu0 %v4027
    %4344 = vmatprep.subr.mxu0 %v4036
    %4345 = vmatpush1.msra.mxu0 %v4035
    %4346 = vmatprep.subr.mxu0 %v4044
    %4347 = vmatpush1.msra.mxu0 %v4043
    %4348 = vmatprep.subr.mxu0 %v4052
    %4349 = vmatpush1.msra.mxu0 %v4051
    %4350 = vmatprep.subr.mxu0 %v4060
    %4351 = vmatpush1.msra.mxu0 %v4059
    %4352 = vmatprep.subr.mxu0 %v4068
    %4353 = vmatpush1.msra.mxu0 %v4067
    %4354 = vmatprep.subr.mxu0 %v4076
    %4355 = vmatpush1.msra.mxu0 %v4075
    %4356 = vmatprep.subr.mxu0 %v4084
    %4357 = vmatpush1.msra.mxu0 %v4083
    %4358 = vmatprep.subr.mxu0 %v4092
    %4359 = vmatpush1.msra.mxu0 %v4091
    %4360 = vmatprep.subr.mxu0 %v4100
    %4361 = vmatpush1.msra.mxu0 %v4099
    %4362 = vmatprep.subr.mxu0 %v4108
    %4363 = vmatpush1.msra.mxu0 %v4107
    %4364 = vmatprep.subr.mxu0 %v4116
    %4365 = vmatpush1.msra.mxu0 %v4115
    %4366 = vmatprep.subr.mxu0 %v4124
    %4367 = vmatpush1.msra.mxu0 %v4123
    %4368 = vmatprep.subr.mxu0 %v4132
    %4369 = vmatpush1.msra.mxu0 %v4131
    %4370 = vmatprep.subr.mxu0 %v4140
    %4371 = vmatpush1.msra.mxu0 %v4139
    %4372 = vmatprep.subr.mxu0 %v4148
    %4373 = vmatpush1.msra.mxu0 %v4147
    %4374 = vmatprep.subr.mxu0 %v4156
    %4375 = vmatpush1.msra.mxu0 %v4155
    %4376 = vmatprep.mubr.f32.mxu0 %v4167
    %4377 = vmatmul.mubr.f32.gmra.mrb[0].mxu0 %v4166
    %v4378 = vpop.f32.mrb[0].mxu0
    %v4379 = vadd.f32 0.0, %v4378
    %v4380 = vpop.f32.mrb[0].mxu0
    %v4381 = vadd.f32 0.0, %v4380
    %4382 = vdwg.mxu0
    %4383 = vmatprep.subr.mxu0 %v3910
    %4384 = vmatpush1.msra.mxu0 %v3909
    %4385 = vmatprep.subr.mxu0 %v3918
    %4386 = vmatpush1.msra.mxu0 %v3917
    %4387 = vmatprep.subr.mxu0 %v3926
    %4388 = vmatpush1.msra.mxu0 %v3925
    %4389 = vmatprep.subr.mxu0 %v3934
    %4390 = vmatpush1.msra.mxu0 %v3933
    %4391 = vmatprep.subr.mxu0 %v3942
    %4392 = vmatpush1.msra.mxu0 %v3941
    %4393 = vmatprep.subr.mxu0 %v3950
    %4394 = vmatpush1.msra.mxu0 %v3949
    %4395 = vmatprep.subr.mxu0 %v3958
    %4396 = vmatpush1.msra.mxu0 %v3957
    %4397 = vmatprep.subr.mxu0 %v3966
    %4398 = vmatpush1.msra.mxu0 %v3965
    %4399 = vmatprep.subr.mxu0 %v3974
    %4400 = vmatpush1.msra.mxu0 %v3973
    %4401 = vmatprep.subr.mxu0 %v3982
    %4402 = vmatpush1.msra.mxu0 %v3981
    %4403 = vmatprep.subr.mxu0 %v3990
    %4404 = vmatpush1.msra.mxu0 %v3989
    %4405 = vmatprep.subr.mxu0 %v3998
    %4406 = vmatpush1.msra.mxu0 %v3997
    %4407 = vmatprep.subr.mxu0 %v4006
    %4408 = vmatpush1.msra.mxu0 %v4005
    %4409 = vmatprep.subr.mxu0 %v4014
    %4410 = vmatpush1.msra.mxu0 %v4013
    %4411 = vmatprep.subr.mxu0 %v4022
    %4412 = vmatpush1.msra.mxu0 %v4021
    %4413 = vmatprep.subr.mxu0 %v4030
    %4414 = vmatpush1.msra.mxu0 %v4029
    %4415 = vmatprep.subr.mxu0 %v4038
    %4416 = vmatpush1.msra.mxu0 %v4037
    %4417 = vmatprep.subr.mxu0 %v4046
    %4418 = vmatpush1.msra.mxu0 %v4045
    %4419 = vmatprep.subr.mxu0 %v4054
    %4420 = vmatpush1.msra.mxu0 %v4053
    %4421 = vmatprep.subr.mxu0 %v4062
    %4422 = vmatpush1.msra.mxu0 %v4061
    %4423 = vmatprep.subr.mxu0 %v4070
    %4424 = vmatpush1.msra.mxu0 %v4069
    %4425 = vmatprep.subr.mxu0 %v4078
    %4426 = vmatpush1.msra.mxu0 %v4077
    %4427 = vmatprep.subr.mxu0 %v4086
    %4428 = vmatpush1.msra.mxu0 %v4085
    %4429 = vmatprep.subr.mxu0 %v4094
    %4430 = vmatpush1.msra.mxu0 %v4093
    %4431 = vmatprep.subr.mxu0 %v4102
    %4432 = vmatpush1.msra.mxu0 %v4101
    %4433 = vmatprep.subr.mxu0 %v4110
    %4434 = vmatpush1.msra.mxu0 %v4109
    %4435 = vmatprep.subr.mxu0 %v4118
    %4436 = vmatpush1.msra.mxu0 %v4117
    %4437 = vmatprep.subr.mxu0 %v4126
    %4438 = vmatpush1.msra.mxu0 %v4125
    %4439 = vmatprep.subr.mxu0 %v4134
    %4440 = vmatpush1.msra.mxu0 %v4133
    %4441 = vmatprep.subr.mxu0 %v4142
    %4442 = vmatpush1.msra.mxu0 %v4141
    %4443 = vmatprep.subr.mxu0 %v4150
    %4444 = vmatpush1.msra.mxu0 %v4149
    %4445 = vmatprep.subr.mxu0 %v4158
    %4446 = vmatpush1.msra.mxu0 %v4157
    %4447 = vmatprep.mubr.f32.mxu0 %v4167
    %4448 = vmatmul.mubr.f32.gmra.mrb[0].mxu0 %v4166
    %v4449 = vpop.f32.mrb[0].mxu0
    %v4450 = vadd.f32 0.0, %v4449
    %v4451 = vpop.f32.mrb[0].mxu0
    %v4452 = vadd.f32 0.0, %v4451
    %4453 = vdwg.mxu0
    %v4462 = vcombine.low %v4237, %v4239
    %v4463 = vcombine.low %v4308, %v4310
    %v4465 = vunpack.c.l.s4 1983009808
    %v4466 = vunpack.c.0.s8 %v4465
    %v4467 = vlaneseq
    %v4468 = vshrl.u32 %v4467, 7
    %v4469 = vsub.s32 %v4466, %v4468
    %v4470 = vrot.slane %v4462, %v4469
    %v4472 = vunpack.c.l.s4 1983009808
    %v4473 = vunpack.c.0.s8 %v4472
    %v4474 = vlaneseq
    %v4475 = vshrl.u32 %v4474, 7
    %v4476 = vsub.s32 %v4473, %v4475
    %v4477 = vrot.slane %v4463, %v4476
    %v4478 = vcombine.low %v4470, %v4477
    %v4479 = vcombine.low %v4379, %v4381
    %v4480 = vcombine.low %v4450, %v4452
    %v4482 = vunpack.c.l.s4 1983009808
    %v4483 = vunpack.c.0.s8 %v4482
    %v4484 = vlaneseq
    %v4485 = vshrl.u32 %v4484, 7
    %v4486 = vsub.s32 %v4483, %v4485
    %v4487 = vrot.slane %v4479, %v4486
    %v4489 = vunpack.c.l.s4 1983009808
    %v4490 = vunpack.c.0.s8 %v4489
    %v4491 = vlaneseq
    %v4492 = vshrl.u32 %v4491, 7
    %v4493 = vsub.s32 %v4490, %v4492
    %v4494 = vrot.slane %v4480, %v4493
    %v4495 = vcombine.low %v4487, %v4494
    %v4498 = vadd.f32 %v3901, %v4478
    %v4499 = vadd.f32 %v3902, %v4495
    %v4500 = vxor.u32 %v4498, 2147483648
    %v4501 = vxor.u32 %v4499, 2147483648
    %v4502 = vmul.f32 %v4500, 1.442695
    %v4503 = vpow.pop %v4502
    %v4504 = vmul.f32 %v4501, 1.442695
    %v4505 = vpow.pop %v4504
    %v4506 = vadd.f32 %v4503, 1.0
    %v4507 = vadd.f32 %v4505, 1.0
    %v4508 = vrcp.pop %v4506
    %v4509 = vmul.f32 1.0, %v4508
    %v4510 = vrcp.pop %v4507
    %v4511 = vmul.f32 1.0, %v4510
    %v4513 = vrot.slane %v4499, 4
    %v4515 = vtanh.pop %v4513
    %v4517 = vrot.slane %v4509, 4
    %v4519 = vmul.f32 %v4517, %v3895
    %v4520 = vmul.f32 %v4509, %v4515
    %v4521 = vadd.f32 %v4519, %v4520
    %v4522 = vtanh.pop %v4521
    %v4523 = vmul.f32 %v4511, %v4522
    %s4524 = scalar_lea.vmem [#allocation3], 20
    %4525 = vst [vmem:[%s4524] sm:$0xf] %v4523
    %s4526 = scalar_lea.vmem [#allocation2], 96
    %v4527 = vld [vmem:[%s4526] sm:$0xff]
    %v4528 = vld [vmem:[%s4526 + $0x8] sm:$0xff]
    %v4529 = vld [vmem:[%s2] sm:$0xff]
    %v4530 = vld [vmem:[%s2 + $0x8] sm:$0xff]
    %v4531 = vld [vmem:[%s2 + $0x10] sm:$0xff]
    %v4532 = vld [vmem:[%s2 + $0x18] sm:$0xff]
    %v4533 = vld [vmem:[%s2 + $0x20] sm:$0xff]
    %v4534 = vld [vmem:[%s2 + $0x28] sm:$0xff]
    %v4535 = vld [vmem:[%s2 + $0x30] sm:$0xff]
    %v4536 = vld [vmem:[%s2 + $0x38] sm:$0xff]
    %v4537 = vld [vmem:[%s2 + $0x40] sm:$0xff]
    %v4538 = vld [vmem:[%s2 + $0x48] sm:$0xff]
    %v4539 = vld [vmem:[%s2 + $0x50] sm:$0xff]
    %v4540 = vld [vmem:[%s2 + $0x58] sm:$0xff]
    %v4541 = vld [vmem:[%s2 + $0x60] sm:$0xff]
    %v4542 = vld [vmem:[%s2 + $0x68] sm:$0xff]
    %v4543 = vld [vmem:[%s2 + $0x70] sm:$0xff]
    %v4544 = vld [vmem:[%s2 + $0x78] sm:$0xff]
    %v4545 = vld [vmem:[%s2 + $0x80] sm:$0xff]
    %v4546 = vld [vmem:[%s2 + $0x88] sm:$0xff]
    %v4547 = vld [vmem:[%s2 + $0x90] sm:$0xff]
    %v4548 = vld [vmem:[%s2 + $0x98] sm:$0xff]
    %v4549 = vld [vmem:[%s2 + $0xa0] sm:$0xff]
    %v4550 = vld [vmem:[%s2 + $0xa8] sm:$0xff]
    %v4551 = vld [vmem:[%s2 + $0xb0] sm:$0xff]
    %v4552 = vld [vmem:[%s2 + $0xb8] sm:$0xff]
    %v4553 = vld [vmem:[%s2 + $0xc0] sm:$0xff]
    %v4554 = vld [vmem:[%s2 + $0xc8] sm:$0xff]
    %v4555 = vld [vmem:[%s2 + $0xd0] sm:$0xff]
    %v4556 = vld [vmem:[%s2 + $0xd8] sm:$0xff]
    %v4557 = vld [vmem:[%s2 + $0xe0] sm:$0xff]
    %v4558 = vld [vmem:[%s2 + $0xe8] sm:$0xff]
    %v4559 = vld [vmem:[%s2 + $0xf0] sm:$0xff]
    %v4560 = vld [vmem:[%s2 + $0xf8] sm:$0xff]
    %v4561 = vld [vmem:[%s2 + $0x100] sm:$0xff]
    %v4562 = vld [vmem:[%s2 + $0x108] sm:$0xff]
    %v4563 = vld [vmem:[%s2 + $0x110] sm:$0xff]
    %v4564 = vld [vmem:[%s2 + $0x118] sm:$0xff]
    %v4565 = vld [vmem:[%s2 + $0x120] sm:$0xff]
    %v4566 = vld [vmem:[%s2 + $0x128] sm:$0xff]
    %v4567 = vld [vmem:[%s2 + $0x130] sm:$0xff]
    %v4568 = vld [vmem:[%s2 + $0x138] sm:$0xff]
    %v4569 = vld [vmem:[%s2 + $0x140] sm:$0xff]
    %v4570 = vld [vmem:[%s2 + $0x148] sm:$0xff]
    %v4571 = vld [vmem:[%s2 + $0x150] sm:$0xff]
    %v4572 = vld [vmem:[%s2 + $0x158] sm:$0xff]
    %v4573 = vld [vmem:[%s2 + $0x160] sm:$0xff]
    %v4574 = vld [vmem:[%s2 + $0x168] sm:$0xff]
    %v4575 = vld [vmem:[%s2 + $0x170] sm:$0xff]
    %v4576 = vld [vmem:[%s2 + $0x178] sm:$0xff]
    %v4577 = vld [vmem:[%s2 + $0x180] sm:$0xff]
    %v4578 = vld [vmem:[%s2 + $0x188] sm:$0xff]
    %v4579 = vld [vmem:[%s2 + $0x190] sm:$0xff]
    %v4580 = vld [vmem:[%s2 + $0x198] sm:$0xff]
    %v4581 = vld [vmem:[%s2 + $0x1a0] sm:$0xff]
    %v4582 = vld [vmem:[%s2 + $0x1a8] sm:$0xff]
    %v4583 = vld [vmem:[%s2 + $0x1b0] sm:$0xff]
    %v4584 = vld [vmem:[%s2 + $0x1b8] sm:$0xff]
    %v4585 = vld [vmem:[%s2 + $0x1c0] sm:$0xff]
    %v4586 = vld [vmem:[%s2 + $0x1c8] sm:$0xff]
    %v4587 = vld [vmem:[%s2 + $0x1d0] sm:$0xff]
    %v4588 = vld [vmem:[%s2 + $0x1d8] sm:$0xff]
    %v4589 = vld [vmem:[%s2 + $0x1e0] sm:$0xff]
    %v4590 = vld [vmem:[%s2 + $0x1e8] sm:$0xff]
    %v4591 = vld [vmem:[%s2 + $0x1f0] sm:$0xff]
    %v4592 = vld [vmem:[%s2 + $0x1f8] sm:$0xff]
    %v4593 = vld [vmem:[%s2 + $0x200] sm:$0xff]
    %v4594 = vld [vmem:[%s2 + $0x208] sm:$0xff]
    %v4595 = vld [vmem:[%s2 + $0x210] sm:$0xff]
    %v4596 = vld [vmem:[%s2 + $0x218] sm:$0xff]
    %v4597 = vld [vmem:[%s2 + $0x220] sm:$0xff]
    %v4598 = vld [vmem:[%s2 + $0x228] sm:$0xff]
    %v4599 = vld [vmem:[%s2 + $0x230] sm:$0xff]
    %v4600 = vld [vmem:[%s2 + $0x238] sm:$0xff]
    %v4601 = vld [vmem:[%s2 + $0x240] sm:$0xff]
    %v4602 = vld [vmem:[%s2 + $0x248] sm:$0xff]
    %v4603 = vld [vmem:[%s2 + $0x250] sm:$0xff]
    %v4604 = vld [vmem:[%s2 + $0x258] sm:$0xff]
    %v4605 = vld [vmem:[%s2 + $0x260] sm:$0xff]
    %v4606 = vld [vmem:[%s2 + $0x268] sm:$0xff]
    %v4607 = vld [vmem:[%s2 + $0x270] sm:$0xff]
    %v4608 = vld [vmem:[%s2 + $0x278] sm:$0xff]
    %v4609 = vld [vmem:[%s2 + $0x280] sm:$0xff]
    %v4610 = vld [vmem:[%s2 + $0x288] sm:$0xff]
    %v4611 = vld [vmem:[%s2 + $0x290] sm:$0xff]
    %v4612 = vld [vmem:[%s2 + $0x298] sm:$0xff]
    %v4613 = vld [vmem:[%s2 + $0x2a0] sm:$0xff]
    %v4614 = vld [vmem:[%s2 + $0x2a8] sm:$0xff]
    %v4615 = vld [vmem:[%s2 + $0x2b0] sm:$0xff]
    %v4616 = vld [vmem:[%s2 + $0x2b8] sm:$0xff]
    %v4617 = vld [vmem:[%s2 + $0x2c0] sm:$0xff]
    %v4618 = vld [vmem:[%s2 + $0x2c8] sm:$0xff]
    %v4619 = vld [vmem:[%s2 + $0x2d0] sm:$0xff]
    %v4620 = vld [vmem:[%s2 + $0x2d8] sm:$0xff]
    %v4621 = vld [vmem:[%s2 + $0x2e0] sm:$0xff]
    %v4622 = vld [vmem:[%s2 + $0x2e8] sm:$0xff]
    %v4623 = vld [vmem:[%s2 + $0x2f0] sm:$0xff]
    %v4624 = vld [vmem:[%s2 + $0x2f8] sm:$0xff]
    %v4625 = vld [vmem:[%s2 + $0x300] sm:$0xff]
    %v4626 = vld [vmem:[%s2 + $0x308] sm:$0xff]
    %v4627 = vld [vmem:[%s2 + $0x310] sm:$0xff]
    %v4628 = vld [vmem:[%s2 + $0x318] sm:$0xff]
    %v4629 = vld [vmem:[%s2 + $0x320] sm:$0xff]
    %v4630 = vld [vmem:[%s2 + $0x328] sm:$0xff]
    %v4631 = vld [vmem:[%s2 + $0x330] sm:$0xff]
    %v4632 = vld [vmem:[%s2 + $0x338] sm:$0xff]
    %v4633 = vld [vmem:[%s2 + $0x340] sm:$0xff]
    %v4634 = vld [vmem:[%s2 + $0x348] sm:$0xff]
    %v4635 = vld [vmem:[%s2 + $0x350] sm:$0xff]
    %v4636 = vld [vmem:[%s2 + $0x358] sm:$0xff]
    %v4637 = vld [vmem:[%s2 + $0x360] sm:$0xff]
    %v4638 = vld [vmem:[%s2 + $0x368] sm:$0xff]
    %v4639 = vld [vmem:[%s2 + $0x370] sm:$0xff]
    %v4640 = vld [vmem:[%s2 + $0x378] sm:$0xff]
    %v4641 = vld [vmem:[%s2 + $0x380] sm:$0xff]
    %v4642 = vld [vmem:[%s2 + $0x388] sm:$0xff]
    %v4643 = vld [vmem:[%s2 + $0x390] sm:$0xff]
    %v4644 = vld [vmem:[%s2 + $0x398] sm:$0xff]
    %v4645 = vld [vmem:[%s2 + $0x3a0] sm:$0xff]
    %v4646 = vld [vmem:[%s2 + $0x3a8] sm:$0xff]
    %v4647 = vld [vmem:[%s2 + $0x3b0] sm:$0xff]
    %v4648 = vld [vmem:[%s2 + $0x3b8] sm:$0xff]
    %v4649 = vld [vmem:[%s2 + $0x3c0] sm:$0xff]
    %v4650 = vld [vmem:[%s2 + $0x3c8] sm:$0xff]
    %v4651 = vld [vmem:[%s2 + $0x3d0] sm:$0xff]
    %v4652 = vld [vmem:[%s2 + $0x3d8] sm:$0xff]
    %v4653 = vld [vmem:[%s2 + $0x3e0] sm:$0xff]
    %v4654 = vld [vmem:[%s2 + $0x3e8] sm:$0xff]
    %v4655 = vld [vmem:[%s2 + $0x3f0] sm:$0xff]
    %v4656 = vld [vmem:[%s2 + $0x3f8] sm:$0xff]
    %v4657 = vld [vmem:[%s2 + $0x400] sm:$0xff]
    %v4658 = vld [vmem:[%s2 + $0x408] sm:$0xff]
    %v4659 = vld [vmem:[%s2 + $0x410] sm:$0xff]
    %v4660 = vld [vmem:[%s2 + $0x418] sm:$0xff]
    %v4661 = vld [vmem:[%s2 + $0x420] sm:$0xff]
    %v4662 = vld [vmem:[%s2 + $0x428] sm:$0xff]
    %v4663 = vld [vmem:[%s2 + $0x430] sm:$0xff]
    %v4664 = vld [vmem:[%s2 + $0x438] sm:$0xff]
    %v4665 = vld [vmem:[%s2 + $0x440] sm:$0xff]
    %v4666 = vld [vmem:[%s2 + $0x448] sm:$0xff]
    %v4667 = vld [vmem:[%s2 + $0x450] sm:$0xff]
    %v4668 = vld [vmem:[%s2 + $0x458] sm:$0xff]
    %v4669 = vld [vmem:[%s2 + $0x460] sm:$0xff]
    %v4670 = vld [vmem:[%s2 + $0x468] sm:$0xff]
    %v4671 = vld [vmem:[%s2 + $0x470] sm:$0xff]
    %v4672 = vld [vmem:[%s2 + $0x478] sm:$0xff]
    %v4673 = vld [vmem:[%s2 + $0x480] sm:$0xff]
    %v4674 = vld [vmem:[%s2 + $0x488] sm:$0xff]
    %v4675 = vld [vmem:[%s2 + $0x490] sm:$0xff]
    %v4676 = vld [vmem:[%s2 + $0x498] sm:$0xff]
    %v4677 = vld [vmem:[%s2 + $0x4a0] sm:$0xff]
    %v4678 = vld [vmem:[%s2 + $0x4a8] sm:$0xff]
    %v4679 = vld [vmem:[%s2 + $0x4b0] sm:$0xff]
    %v4680 = vld [vmem:[%s2 + $0x4b8] sm:$0xff]
    %v4681 = vld [vmem:[%s2 + $0x4c0] sm:$0xff]
    %v4682 = vld [vmem:[%s2 + $0x4c8] sm:$0xff]
    %v4683 = vld [vmem:[%s2 + $0x4d0] sm:$0xff]
    %v4684 = vld [vmem:[%s2 + $0x4d8] sm:$0xff]
    %v4685 = vld [vmem:[%s2 + $0x4e0] sm:$0xff]
    %v4686 = vld [vmem:[%s2 + $0x4e8] sm:$0xff]
    %v4687 = vld [vmem:[%s2 + $0x4f0] sm:$0xff]
    %v4688 = vld [vmem:[%s2 + $0x4f8] sm:$0xff]
    %v4689 = vld [vmem:[%s2 + $0x500] sm:$0xff]
    %v4690 = vld [vmem:[%s2 + $0x508] sm:$0xff]
    %v4691 = vld [vmem:[%s2 + $0x510] sm:$0xff]
    %v4692 = vld [vmem:[%s2 + $0x518] sm:$0xff]
    %v4693 = vld [vmem:[%s2 + $0x520] sm:$0xff]
    %v4694 = vld [vmem:[%s2 + $0x528] sm:$0xff]
    %v4695 = vld [vmem:[%s2 + $0x530] sm:$0xff]
    %v4696 = vld [vmem:[%s2 + $0x538] sm:$0xff]
    %v4697 = vld [vmem:[%s2 + $0x540] sm:$0xff]
    %v4698 = vld [vmem:[%s2 + $0x548] sm:$0xff]
    %v4699 = vld [vmem:[%s2 + $0x550] sm:$0xff]
    %v4700 = vld [vmem:[%s2 + $0x558] sm:$0xff]
    %v4701 = vld [vmem:[%s2 + $0x560] sm:$0xff]
    %v4702 = vld [vmem:[%s2 + $0x568] sm:$0xff]
    %v4703 = vld [vmem:[%s2 + $0x570] sm:$0xff]
    %v4704 = vld [vmem:[%s2 + $0x578] sm:$0xff]
    %v4705 = vld [vmem:[%s2 + $0x580] sm:$0xff]
    %v4706 = vld [vmem:[%s2 + $0x588] sm:$0xff]
    %v4707 = vld [vmem:[%s2 + $0x590] sm:$0xff]
    %v4708 = vld [vmem:[%s2 + $0x598] sm:$0xff]
    %v4709 = vld [vmem:[%s2 + $0x5a0] sm:$0xff]
    %v4710 = vld [vmem:[%s2 + $0x5a8] sm:$0xff]
    %v4711 = vld [vmem:[%s2 + $0x5b0] sm:$0xff]
    %v4712 = vld [vmem:[%s2 + $0x5b8] sm:$0xff]
    %v4713 = vld [vmem:[%s2 + $0x5c0] sm:$0xff]
    %v4714 = vld [vmem:[%s2 + $0x5c8] sm:$0xff]
    %v4715 = vld [vmem:[%s2 + $0x5d0] sm:$0xff]
    %v4716 = vld [vmem:[%s2 + $0x5d8] sm:$0xff]
    %v4717 = vld [vmem:[%s2 + $0x5e0] sm:$0xff]
    %v4718 = vld [vmem:[%s2 + $0x5e8] sm:$0xff]
    %v4719 = vld [vmem:[%s2 + $0x5f0] sm:$0xff]
    %v4720 = vld [vmem:[%s2 + $0x5f8] sm:$0xff]
    %v4721 = vld [vmem:[%s2 + $0x600] sm:$0xff]
    %v4722 = vld [vmem:[%s2 + $0x608] sm:$0xff]
    %v4723 = vld [vmem:[%s2 + $0x610] sm:$0xff]
    %v4724 = vld [vmem:[%s2 + $0x618] sm:$0xff]
    %v4725 = vld [vmem:[%s2 + $0x620] sm:$0xff]
    %v4726 = vld [vmem:[%s2 + $0x628] sm:$0xff]
    %v4727 = vld [vmem:[%s2 + $0x630] sm:$0xff]
    %v4728 = vld [vmem:[%s2 + $0x638] sm:$0xff]
    %v4729 = vld [vmem:[%s2 + $0x640] sm:$0xff]
    %v4730 = vld [vmem:[%s2 + $0x648] sm:$0xff]
    %v4731 = vld [vmem:[%s2 + $0x650] sm:$0xff]
    %v4732 = vld [vmem:[%s2 + $0x658] sm:$0xff]
    %v4733 = vld [vmem:[%s2 + $0x660] sm:$0xff]
    %v4734 = vld [vmem:[%s2 + $0x668] sm:$0xff]
    %v4735 = vld [vmem:[%s2 + $0x670] sm:$0xff]
    %v4736 = vld [vmem:[%s2 + $0x678] sm:$0xff]
    %v4737 = vld [vmem:[%s2 + $0x680] sm:$0xff]
    %v4738 = vld [vmem:[%s2 + $0x688] sm:$0xff]
    %v4739 = vld [vmem:[%s2 + $0x690] sm:$0xff]
    %v4740 = vld [vmem:[%s2 + $0x698] sm:$0xff]
    %v4741 = vld [vmem:[%s2 + $0x6a0] sm:$0xff]
    %v4742 = vld [vmem:[%s2 + $0x6a8] sm:$0xff]
    %v4743 = vld [vmem:[%s2 + $0x6b0] sm:$0xff]
    %v4744 = vld [vmem:[%s2 + $0x6b8] sm:$0xff]
    %v4745 = vld [vmem:[%s2 + $0x6c0] sm:$0xff]
    %v4746 = vld [vmem:[%s2 + $0x6c8] sm:$0xff]
    %v4747 = vld [vmem:[%s2 + $0x6d0] sm:$0xff]
    %v4748 = vld [vmem:[%s2 + $0x6d8] sm:$0xff]
    %v4749 = vld [vmem:[%s2 + $0x6e0] sm:$0xff]
    %v4750 = vld [vmem:[%s2 + $0x6e8] sm:$0xff]
    %v4751 = vld [vmem:[%s2 + $0x6f0] sm:$0xff]
    %v4752 = vld [vmem:[%s2 + $0x6f8] sm:$0xff]
    %v4753 = vld [vmem:[%s2 + $0x700] sm:$0xff]
    %v4754 = vld [vmem:[%s2 + $0x708] sm:$0xff]
    %v4755 = vld [vmem:[%s2 + $0x710] sm:$0xff]
    %v4756 = vld [vmem:[%s2 + $0x718] sm:$0xff]
    %v4757 = vld [vmem:[%s2 + $0x720] sm:$0xff]
    %v4758 = vld [vmem:[%s2 + $0x728] sm:$0xff]
    %v4759 = vld [vmem:[%s2 + $0x730] sm:$0xff]
    %v4760 = vld [vmem:[%s2 + $0x738] sm:$0xff]
    %v4761 = vld [vmem:[%s2 + $0x740] sm:$0xff]
    %v4762 = vld [vmem:[%s2 + $0x748] sm:$0xff]
    %v4763 = vld [vmem:[%s2 + $0x750] sm:$0xff]
    %v4764 = vld [vmem:[%s2 + $0x758] sm:$0xff]
    %v4765 = vld [vmem:[%s2 + $0x760] sm:$0xff]
    %v4766 = vld [vmem:[%s2 + $0x768] sm:$0xff]
    %v4767 = vld [vmem:[%s2 + $0x770] sm:$0xff]
    %v4768 = vld [vmem:[%s2 + $0x778] sm:$0xff]
    %v4769 = vld [vmem:[%s2 + $0x780] sm:$0xff]
    %v4770 = vld [vmem:[%s2 + $0x788] sm:$0xff]
    %v4771 = vld [vmem:[%s2 + $0x790] sm:$0xff]
    %v4772 = vld [vmem:[%s2 + $0x798] sm:$0xff]
    %v4773 = vld [vmem:[%s2 + $0x7a0] sm:$0xff]
    %v4774 = vld [vmem:[%s2 + $0x7a8] sm:$0xff]
    %v4775 = vld [vmem:[%s2 + $0x7b0] sm:$0xff]
    %v4776 = vld [vmem:[%s2 + $0x7b8] sm:$0xff]
    %v4777 = vld [vmem:[%s2 + $0x7c0] sm:$0xff]
    %v4778 = vld [vmem:[%s2 + $0x7c8] sm:$0xff]
    %v4779 = vld [vmem:[%s2 + $0x7d0] sm:$0xff]
    %v4780 = vld [vmem:[%s2 + $0x7d8] sm:$0xff]
    %v4781 = vld [vmem:[%s2 + $0x7e0] sm:$0xff]
    %v4782 = vld [vmem:[%s2 + $0x7e8] sm:$0xff]
    %v4783 = vld [vmem:[%s2 + $0x7f0] sm:$0xff]
    %v4784 = vld [vmem:[%s2 + $0x7f8] sm:$0xff]
    %v4787 = vunpack.c.l.s4 1983009808
    %v4788 = vunpack.c.0.s8 %v4787
    %v4789 = vlaneseq
    %v4790 = vshrl.u32 %v4789, 7
    %v4791 = vsub.s32 %v4788, %v4790
    %v4792 = vrot.slane %v4523, %v4791
    %v4793 = vcombine.high %v4792, %v4792
    %4796 = vmatprep.subr.mxu0 %v4530
    %4797 = vmatpush1.msra.mxu0 %v4529
    %4798 = vmatprep.subr.mxu0 %v4538
    %4799 = vmatpush1.msra.mxu0 %v4537
    %4800 = vmatprep.subr.mxu0 %v4546
    %4801 = vmatpush1.msra.mxu0 %v4545
    %4802 = vmatprep.subr.mxu0 %v4554
    %4803 = vmatpush1.msra.mxu0 %v4553
    %4804 = vmatprep.subr.mxu0 %v4562
    %4805 = vmatpush1.msra.mxu0 %v4561
    %4806 = vmatprep.subr.mxu0 %v4570
    %4807 = vmatpush1.msra.mxu0 %v4569
    %4808 = vmatprep.subr.mxu0 %v4578
    %4809 = vmatpush1.msra.mxu0 %v4577
    %4810 = vmatprep.subr.mxu0 %v4586
    %4811 = vmatpush1.msra.mxu0 %v4585
    %4812 = vmatprep.subr.mxu0 %v4594
    %4813 = vmatpush1.msra.mxu0 %v4593
    %4814 = vmatprep.subr.mxu0 %v4602
    %4815 = vmatpush1.msra.mxu0 %v4601
    %4816 = vmatprep.subr.mxu0 %v4610
    %4817 = vmatpush1.msra.mxu0 %v4609
    %4818 = vmatprep.subr.mxu0 %v4618
    %4819 = vmatpush1.msra.mxu0 %v4617
    %4820 = vmatprep.subr.mxu0 %v4626
    %4821 = vmatpush1.msra.mxu0 %v4625
    %4822 = vmatprep.subr.mxu0 %v4634
    %4823 = vmatpush1.msra.mxu0 %v4633
    %4824 = vmatprep.subr.mxu0 %v4642
    %4825 = vmatpush1.msra.mxu0 %v4641
    %4826 = vmatprep.subr.mxu0 %v4650
    %4827 = vmatpush1.msra.mxu0 %v4649
    %4828 = vmatprep.subr.mxu0 %v4658
    %4829 = vmatpush1.msra.mxu0 %v4657
    %4830 = vmatprep.subr.mxu0 %v4666
    %4831 = vmatpush1.msra.mxu0 %v4665
    %4832 = vmatprep.subr.mxu0 %v4674
    %4833 = vmatpush1.msra.mxu0 %v4673
    %4834 = vmatprep.subr.mxu0 %v4682
    %4835 = vmatpush1.msra.mxu0 %v4681
    %4836 = vmatprep.subr.mxu0 %v4690
    %4837 = vmatpush1.msra.mxu0 %v4689
    %4838 = vmatprep.subr.mxu0 %v4698
    %4839 = vmatpush1.msra.mxu0 %v4697
    %4840 = vmatprep.subr.mxu0 %v4706
    %4841 = vmatpush1.msra.mxu0 %v4705
    %4842 = vmatprep.subr.mxu0 %v4714
    %4843 = vmatpush1.msra.mxu0 %v4713
    %4844 = vmatprep.subr.mxu0 %v4722
    %4845 = vmatpush1.msra.mxu0 %v4721
    %4846 = vmatprep.subr.mxu0 %v4730
    %4847 = vmatpush1.msra.mxu0 %v4729
    %4848 = vmatprep.subr.mxu0 %v4738
    %4849 = vmatpush1.msra.mxu0 %v4737
    %4850 = vmatprep.subr.mxu0 %v4746
    %4851 = vmatpush1.msra.mxu0 %v4745
    %4852 = vmatprep.subr.mxu0 %v4754
    %4853 = vmatpush1.msra.mxu0 %v4753
    %4854 = vmatprep.subr.mxu0 %v4762
    %4855 = vmatpush1.msra.mxu0 %v4761
    %4856 = vmatprep.subr.mxu0 %v4770
    %4857 = vmatpush1.msra.mxu0 %v4769
    %4858 = vmatprep.subr.mxu0 %v4778
    %4859 = vmatpush1.msra.mxu0 %v4777
    %4860 = vmatprep.mubr.f32.mxu0 %v4793
    %4861 = vmatmul.mubr.f32.gmra.mrb[0].mxu0 %v4792
    %v4862 = vpop.f32.mrb[0].mxu0
    %v4863 = vadd.f32 0.0, %v4862
    %v4864 = vpop.f32.mrb[0].mxu0
    %v4865 = vadd.f32 0.0, %v4864
    %4866 = vdwg.mxu0
    %4867 = vmatprep.subr.mxu0 %v4532
    %4868 = vmatpush1.msra.mxu0 %v4531
    %4869 = vmatprep.subr.mxu0 %v4540
    %4870 = vmatpush1.msra.mxu0 %v4539
    %4871 = vmatprep.subr.mxu0 %v4548
    %4872 = vmatpush1.msra.mxu0 %v4547
    %4873 = vmatprep.subr.mxu0 %v4556
    %4874 = vmatpush1.msra.mxu0 %v4555
    %4875 = vmatprep.subr.mxu0 %v4564
    %4876 = vmatpush1.msra.mxu0 %v4563
    %4877 = vmatprep.subr.mxu0 %v4572
    %4878 = vmatpush1.msra.mxu0 %v4571
    %4879 = vmatprep.subr.mxu0 %v4580
    %4880 = vmatpush1.msra.mxu0 %v4579
    %4881 = vmatprep.subr.mxu0 %v4588
    %4882 = vmatpush1.msra.mxu0 %v4587
    %4883 = vmatprep.subr.mxu0 %v4596
    %4884 = vmatpush1.msra.mxu0 %v4595
    %4885 = vmatprep.subr.mxu0 %v4604
    %4886 = vmatpush1.msra.mxu0 %v4603
    %4887 = vmatprep.subr.mxu0 %v4612
    %4888 = vmatpush1.msra.mxu0 %v4611
    %4889 = vmatprep.subr.mxu0 %v4620
    %4890 = vmatpush1.msra.mxu0 %v4619
    %4891 = vmatprep.subr.mxu0 %v4628
    %4892 = vmatpush1.msra.mxu0 %v4627
    %4893 = vmatprep.subr.mxu0 %v4636
    %4894 = vmatpush1.msra.mxu0 %v4635
    %4895 = vmatprep.subr.mxu0 %v4644
    %4896 = vmatpush1.msra.mxu0 %v4643
    %4897 = vmatprep.subr.mxu0 %v4652
    %4898 = vmatpush1.msra.mxu0 %v4651
    %4899 = vmatprep.subr.mxu0 %v4660
    %4900 = vmatpush1.msra.mxu0 %v4659
    %4901 = vmatprep.subr.mxu0 %v4668
    %4902 = vmatpush1.msra.mxu0 %v4667
    %4903 = vmatprep.subr.mxu0 %v4676
    %4904 = vmatpush1.msra.mxu0 %v4675
    %4905 = vmatprep.subr.mxu0 %v4684
    %4906 = vmatpush1.msra.mxu0 %v4683
    %4907 = vmatprep.subr.mxu0 %v4692
    %4908 = vmatpush1.msra.mxu0 %v4691
    %4909 = vmatprep.subr.mxu0 %v4700
    %4910 = vmatpush1.msra.mxu0 %v4699
    %4911 = vmatprep.subr.mxu0 %v4708
    %4912 = vmatpush1.msra.mxu0 %v4707
    %4913 = vmatprep.subr.mxu0 %v4716
    %4914 = vmatpush1.msra.mxu0 %v4715
    %4915 = vmatprep.subr.mxu0 %v4724
    %4916 = vmatpush1.msra.mxu0 %v4723
    %4917 = vmatprep.subr.mxu0 %v4732
    %4918 = vmatpush1.msra.mxu0 %v4731
    %4919 = vmatprep.subr.mxu0 %v4740
    %4920 = vmatpush1.msra.mxu0 %v4739
    %4921 = vmatprep.subr.mxu0 %v4748
    %4922 = vmatpush1.msra.mxu0 %v4747
    %4923 = vmatprep.subr.mxu0 %v4756
    %4924 = vmatpush1.msra.mxu0 %v4755
    %4925 = vmatprep.subr.mxu0 %v4764
    %4926 = vmatpush1.msra.mxu0 %v4763
    %4927 = vmatprep.subr.mxu0 %v4772
    %4928 = vmatpush1.msra.mxu0 %v4771
    %4929 = vmatprep.subr.mxu0 %v4780
    %4930 = vmatpush1.msra.mxu0 %v4779
    %4931 = vmatprep.mubr.f32.mxu0 %v4793
    %4932 = vmatmul.mubr.f32.gmra.mrb[0].mxu0 %v4792
    %v4933 = vpop.f32.mrb[0].mxu0
    %v4934 = vadd.f32 0.0, %v4933
    %v4935 = vpop.f32.mrb[0].mxu0
    %v4936 = vadd.f32 0.0, %v4935
    %4937 = vdwg.mxu0
    %4938 = vmatprep.subr.mxu0 %v4534
    %4939 = vmatpush1.msra.mxu0 %v4533
    %4940 = vmatprep.subr.mxu0 %v4542
    %4941 = vmatpush1.msra.mxu0 %v4541
    %4942 = vmatprep.subr.mxu0 %v4550
    %4943 = vmatpush1.msra.mxu0 %v4549
    %4944 = vmatprep.subr.mxu0 %v4558
    %4945 = vmatpush1.msra.mxu0 %v4557
    %4946 = vmatprep.subr.mxu0 %v4566
    %4947 = vmatpush1.msra.mxu0 %v4565
    %4948 = vmatprep.subr.mxu0 %v4574
    %4949 = vmatpush1.msra.mxu0 %v4573
    %4950 = vmatprep.subr.mxu0 %v4582
    %4951 = vmatpush1.msra.mxu0 %v4581
    %4952 = vmatprep.subr.mxu0 %v4590
    %4953 = vmatpush1.msra.mxu0 %v4589
    %4954 = vmatprep.subr.mxu0 %v4598
    %4955 = vmatpush1.msra.mxu0 %v4597
    %4956 = vmatprep.subr.mxu0 %v4606
    %4957 = vmatpush1.msra.mxu0 %v4605
    %4958 = vmatprep.subr.mxu0 %v4614
    %4959 = vmatpush1.msra.mxu0 %v4613
    %4960 = vmatprep.subr.mxu0 %v4622
    %4961 = vmatpush1.msra.mxu0 %v4621
    %4962 = vmatprep.subr.mxu0 %v4630
    %4963 = vmatpush1.msra.mxu0 %v4629
    %4964 = vmatprep.subr.mxu0 %v4638
    %4965 = vmatpush1.msra.mxu0 %v4637
    %4966 = vmatprep.subr.mxu0 %v4646
    %4967 = vmatpush1.msra.mxu0 %v4645
    %4968 = vmatprep.subr.mxu0 %v4654
    %4969 = vmatpush1.msra.mxu0 %v4653
    %4970 = vmatprep.subr.mxu0 %v4662
    %4971 = vmatpush1.msra.mxu0 %v4661
    %4972 = vmatprep.subr.mxu0 %v4670
    %4973 = vmatpush1.msra.mxu0 %v4669
    %4974 = vmatprep.subr.mxu0 %v4678
    %4975 = vmatpush1.msra.mxu0 %v4677
    %4976 = vmatprep.subr.mxu0 %v4686
    %4977 = vmatpush1.msra.mxu0 %v4685
    %4978 = vmatprep.subr.mxu0 %v4694
    %4979 = vmatpush1.msra.mxu0 %v4693
    %4980 = vmatprep.subr.mxu0 %v4702
    %4981 = vmatpush1.msra.mxu0 %v4701
    %4982 = vmatprep.subr.mxu0 %v4710
    %4983 = vmatpush1.msra.mxu0 %v4709
    %4984 = vmatprep.subr.mxu0 %v4718
    %4985 = vmatpush1.msra.mxu0 %v4717
    %4986 = vmatprep.subr.mxu0 %v4726
    %4987 = vmatpush1.msra.mxu0 %v4725
    %4988 = vmatprep.subr.mxu0 %v4734
    %4989 = vmatpush1.msra.mxu0 %v4733
    %4990 = vmatprep.subr.mxu0 %v4742
    %4991 = vmatpush1.msra.mxu0 %v4741
    %4992 = vmatprep.subr.mxu0 %v4750
    %4993 = vmatpush1.msra.mxu0 %v4749
    %4994 = vmatprep.subr.mxu0 %v4758
    %4995 = vmatpush1.msra.mxu0 %v4757
    %4996 = vmatprep.subr.mxu0 %v4766
    %4997 = vmatpush1.msra.mxu0 %v4765
    %4998 = vmatprep.subr.mxu0 %v4774
    %4999 = vmatpush1.msra.mxu0 %v4773
    %5000 = vmatprep.subr.mxu0 %v4782
    %5001 = vmatpush1.msra.mxu0 %v4781
    %5002 = vmatprep.mubr.f32.mxu0 %v4793
    %5003 = vmatmul.mubr.f32.gmra.mrb[0].mxu0 %v4792
    %v5004 = vpop.f32.mrb[0].mxu0
    %v5005 = vadd.f32 0.0, %v5004
    %v5006 = vpop.f32.mrb[0].mxu0
    %v5007 = vadd.f32 0.0, %v5006
    %5008 = vdwg.mxu0
    %5009 = vmatprep.subr.mxu0 %v4536
    %5010 = vmatpush1.msra.mxu0 %v4535
    %5011 = vmatprep.subr.mxu0 %v4544
    %5012 = vmatpush1.msra.mxu0 %v4543
    %5013 = vmatprep.subr.mxu0 %v4552
    %5014 = vmatpush1.msra.mxu0 %v4551
    %5015 = vmatprep.subr.mxu0 %v4560
    %5016 = vmatpush1.msra.mxu0 %v4559
    %5017 = vmatprep.subr.mxu0 %v4568
    %5018 = vmatpush1.msra.mxu0 %v4567
    %5019 = vmatprep.subr.mxu0 %v4576
    %5020 = vmatpush1.msra.mxu0 %v4575
    %5021 = vmatprep.subr.mxu0 %v4584
    %5022 = vmatpush1.msra.mxu0 %v4583
    %5023 = vmatprep.subr.mxu0 %v4592
    %5024 = vmatpush1.msra.mxu0 %v4591
    %5025 = vmatprep.subr.mxu0 %v4600
    %5026 = vmatpush1.msra.mxu0 %v4599
    %5027 = vmatprep.subr.mxu0 %v4608
    %5028 = vmatpush1.msra.mxu0 %v4607
    %5029 = vmatprep.subr.mxu0 %v4616
    %5030 = vmatpush1.msra.mxu0 %v4615
    %5031 = vmatprep.subr.mxu0 %v4624
    %5032 = vmatpush1.msra.mxu0 %v4623
    %5033 = vmatprep.subr.mxu0 %v4632
    %5034 = vmatpush1.msra.mxu0 %v4631
    %5035 = vmatprep.subr.mxu0 %v4640
    %5036 = vmatpush1.msra.mxu0 %v4639
    %5037 = vmatprep.subr.mxu0 %v4648
    %5038 = vmatpush1.msra.mxu0 %v4647
    %5039 = vmatprep.subr.mxu0 %v4656
    %5040 = vmatpush1.msra.mxu0 %v4655
    %5041 = vmatprep.subr.mxu0 %v4664
    %5042 = vmatpush1.msra.mxu0 %v4663
    %5043 = vmatprep.subr.mxu0 %v4672
    %5044 = vmatpush1.msra.mxu0 %v4671
    %5045 = vmatprep.subr.mxu0 %v4680
    %5046 = vmatpush1.msra.mxu0 %v4679
    %5047 = vmatprep.subr.mxu0 %v4688
    %5048 = vmatpush1.msra.mxu0 %v4687
    %5049 = vmatprep.subr.mxu0 %v4696
    %5050 = vmatpush1.msra.mxu0 %v4695
    %5051 = vmatprep.subr.mxu0 %v4704
    %5052 = vmatpush1.msra.mxu0 %v4703
    %5053 = vmatprep.subr.mxu0 %v4712
    %5054 = vmatpush1.msra.mxu0 %v4711
    %5055 = vmatprep.subr.mxu0 %v4720
    %5056 = vmatpush1.msra.mxu0 %v4719
    %5057 = vmatprep.subr.mxu0 %v4728
    %5058 = vmatpush1.msra.mxu0 %v4727
    %5059 = vmatprep.subr.mxu0 %v4736
    %5060 = vmatpush1.msra.mxu0 %v4735
    %5061 = vmatprep.subr.mxu0 %v4744
    %5062 = vmatpush1.msra.mxu0 %v4743
    %5063 = vmatprep.subr.mxu0 %v4752
    %5064 = vmatpush1.msra.mxu0 %v4751
    %5065 = vmatprep.subr.mxu0 %v4760
    %5066 = vmatpush1.msra.mxu0 %v4759
    %5067 = vmatprep.subr.mxu0 %v4768
    %5068 = vmatpush1.msra.mxu0 %v4767
    %5069 = vmatprep.subr.mxu0 %v4776
    %5070 = vmatpush1.msra.mxu0 %v4775
    %5071 = vmatprep.subr.mxu0 %v4784
    %5072 = vmatpush1.msra.mxu0 %v4783
    %5073 = vmatprep.mubr.f32.mxu0 %v4793
    %5074 = vmatmul.mubr.f32.gmra.mrb[0].mxu0 %v4792
    %v5075 = vpop.f32.mrb[0].mxu0
    %v5076 = vadd.f32 0.0, %v5075
    %v5077 = vpop.f32.mrb[0].mxu0
    %v5078 = vadd.f32 0.0, %v5077
    %5079 = vdwg.mxu0
    %v5088 = vcombine.low %v4863, %v4865
    %v5089 = vcombine.low %v4934, %v4936
    %v5091 = vunpack.c.l.s4 1983009808
    %v5092 = vunpack.c.0.s8 %v5091
    %v5093 = vlaneseq
    %v5094 = vshrl.u32 %v5093, 7
    %v5095 = vsub.s32 %v5092, %v5094
    %v5096 = vrot.slane %v5088, %v5095
    %v5098 = vunpack.c.l.s4 1983009808
    %v5099 = vunpack.c.0.s8 %v5098
    %v5100 = vlaneseq
    %v5101 = vshrl.u32 %v5100, 7
    %v5102 = vsub.s32 %v5099, %v5101
    %v5103 = vrot.slane %v5089, %v5102
    %v5104 = vcombine.low %v5096, %v5103
    %v5105 = vcombine.low %v5005, %v5007
    %v5106 = vcombine.low %v5076, %v5078
    %v5108 = vunpack.c.l.s4 1983009808
    %v5109 = vunpack.c.0.s8 %v5108
    %v5110 = vlaneseq
    %v5111 = vshrl.u32 %v5110, 7
    %v5112 = vsub.s32 %v5109, %v5111
    %v5113 = vrot.slane %v5105, %v5112
    %v5115 = vunpack.c.l.s4 1983009808
    %v5116 = vunpack.c.0.s8 %v5115
    %v5117 = vlaneseq
    %v5118 = vshrl.u32 %v5117, 7
    %v5119 = vsub.s32 %v5116, %v5118
    %v5120 = vrot.slane %v5106, %v5119
    %v5121 = vcombine.low %v5113, %v5120
    %v5124 = vadd.f32 %v4527, %v5104
    %v5125 = vadd.f32 %v4528, %v5121
    %v5126 = vxor.u32 %v5124, 2147483648
    %v5127 = vxor.u32 %v5125, 2147483648
    %v5128 = vmul.f32 %v5126, 1.442695
    %v5129 = vpow.pop %v5128
    %v5130 = vmul.f32 %v5127, 1.442695
    %v5131 = vpow.pop %v5130
    %v5132 = vadd.f32 %v5129, 1.0
    %v5133 = vadd.f32 %v5131, 1.0
    %v5134 = vrcp.pop %v5132
    %v5135 = vmul.f32 1.0, %v5134
    %v5136 = vrcp.pop %v5133
    %v5137 = vmul.f32 1.0, %v5136
    %v5139 = vrot.slane %v5125, 4
    %v5141 = vtanh.pop %v5139
    %v5143 = vrot.slane %v5135, 4
    %v5145 = vmul.f32 %v5143, %v4521
    %v5146 = vmul.f32 %v5135, %v5141
    %v5147 = vadd.f32 %v5145, %v5146
    %v5148 = vtanh.pop %v5147
    %v5149 = vmul.f32 %v5137, %v5148
    %s5150 = scalar_lea.vmem [#allocation3], 24
    %5151 = vst [vmem:[%s5150] sm:$0xf] %v5149
    %s5152 = scalar_lea.vmem [#allocation2], 112
    %v5153 = vld [vmem:[%s5152] sm:$0xff]
    %v5154 = vld [vmem:[%s5152 + $0x8] sm:$0xff]
    %v5155 = vld [vmem:[%s2] sm:$0xff]
    %v5156 = vld [vmem:[%s2 + $0x8] sm:$0xff]
    %v5157 = vld [vmem:[%s2 + $0x10] sm:$0xff]
    %v5158 = vld [vmem:[%s2 + $0x18] sm:$0xff]
    %v5159 = vld [vmem:[%s2 + $0x20] sm:$0xff]
    %v5160 = vld [vmem:[%s2 + $0x28] sm:$0xff]
    %v5161 = vld [vmem:[%s2 + $0x30] sm:$0xff]
    %v5162 = vld [vmem:[%s2 + $0x38] sm:$0xff]
    %v5163 = vld [vmem:[%s2 + $0x40] sm:$0xff]
    %v5164 = vld [vmem:[%s2 + $0x48] sm:$0xff]
    %v5165 = vld [vmem:[%s2 + $0x50] sm:$0xff]
    %v5166 = vld [vmem:[%s2 + $0x58] sm:$0xff]
    %v5167 = vld [vmem:[%s2 + $0x60] sm:$0xff]
    %v5168 = vld [vmem:[%s2 + $0x68] sm:$0xff]
    %v5169 = vld [vmem:[%s2 + $0x70] sm:$0xff]
    %v5170 = vld [vmem:[%s2 + $0x78] sm:$0xff]
    %v5171 = vld [vmem:[%s2 + $0x80] sm:$0xff]
    %v5172 = vld [vmem:[%s2 + $0x88] sm:$0xff]
    %v5173 = vld [vmem:[%s2 + $0x90] sm:$0xff]
    %v5174 = vld [vmem:[%s2 + $0x98] sm:$0xff]
    %v5175 = vld [vmem:[%s2 + $0xa0] sm:$0xff]
    %v5176 = vld [vmem:[%s2 + $0xa8] sm:$0xff]
    %v5177 = vld [vmem:[%s2 + $0xb0] sm:$0xff]
    %v5178 = vld [vmem:[%s2 + $0xb8] sm:$0xff]
    %v5179 = vld [vmem:[%s2 + $0xc0] sm:$0xff]
    %v5180 = vld [vmem:[%s2 + $0xc8] sm:$0xff]
    %v5181 = vld [vmem:[%s2 + $0xd0] sm:$0xff]
    %v5182 = vld [vmem:[%s2 + $0xd8] sm:$0xff]
    %v5183 = vld [vmem:[%s2 + $0xe0] sm:$0xff]
    %v5184 = vld [vmem:[%s2 + $0xe8] sm:$0xff]
    %v5185 = vld [vmem:[%s2 + $0xf0] sm:$0xff]
    %v5186 = vld [vmem:[%s2 + $0xf8] sm:$0xff]
    %v5187 = vld [vmem:[%s2 + $0x100] sm:$0xff]
    %v5188 = vld [vmem:[%s2 + $0x108] sm:$0xff]
    %v5189 = vld [vmem:[%s2 + $0x110] sm:$0xff]
    %v5190 = vld [vmem:[%s2 + $0x118] sm:$0xff]
    %v5191 = vld [vmem:[%s2 + $0x120] sm:$0xff]
    %v5192 = vld [vmem:[%s2 + $0x128] sm:$0xff]
    %v5193 = vld [vmem:[%s2 + $0x130] sm:$0xff]
    %v5194 = vld [vmem:[%s2 + $0x138] sm:$0xff]
    %v5195 = vld [vmem:[%s2 + $0x140] sm:$0xff]
    %v5196 = vld [vmem:[%s2 + $0x148] sm:$0xff]
    %v5197 = vld [vmem:[%s2 + $0x150] sm:$0xff]
    %v5198 = vld [vmem:[%s2 + $0x158] sm:$0xff]
    %v5199 = vld [vmem:[%s2 + $0x160] sm:$0xff]
    %v5200 = vld [vmem:[%s2 + $0x168] sm:$0xff]
    %v5201 = vld [vmem:[%s2 + $0x170] sm:$0xff]
    %v5202 = vld [vmem:[%s2 + $0x178] sm:$0xff]
    %v5203 = vld [vmem:[%s2 + $0x180] sm:$0xff]
    %v5204 = vld [vmem:[%s2 + $0x188] sm:$0xff]
    %v5205 = vld [vmem:[%s2 + $0x190] sm:$0xff]
    %v5206 = vld [vmem:[%s2 + $0x198] sm:$0xff]
    %v5207 = vld [vmem:[%s2 + $0x1a0] sm:$0xff]
    %v5208 = vld [vmem:[%s2 + $0x1a8] sm:$0xff]
    %v5209 = vld [vmem:[%s2 + $0x1b0] sm:$0xff]
    %v5210 = vld [vmem:[%s2 + $0x1b8] sm:$0xff]
    %v5211 = vld [vmem:[%s2 + $0x1c0] sm:$0xff]
    %v5212 = vld [vmem:[%s2 + $0x1c8] sm:$0xff]
    %v5213 = vld [vmem:[%s2 + $0x1d0] sm:$0xff]
    %v5214 = vld [vmem:[%s2 + $0x1d8] sm:$0xff]
    %v5215 = vld [vmem:[%s2 + $0x1e0] sm:$0xff]
    %v5216 = vld [vmem:[%s2 + $0x1e8] sm:$0xff]
    %v5217 = vld [vmem:[%s2 + $0x1f0] sm:$0xff]
    %v5218 = vld [vmem:[%s2 + $0x1f8] sm:$0xff]
    %v5219 = vld [vmem:[%s2 + $0x200] sm:$0xff]
    %v5220 = vld [vmem:[%s2 + $0x208] sm:$0xff]
    %v5221 = vld [vmem:[%s2 + $0x210] sm:$0xff]
    %v5222 = vld [vmem:[%s2 + $0x218] sm:$0xff]
    %v5223 = vld [vmem:[%s2 + $0x220] sm:$0xff]
    %v5224 = vld [vmem:[%s2 + $0x228] sm:$0xff]
    %v5225 = vld [vmem:[%s2 + $0x230] sm:$0xff]
    %v5226 = vld [vmem:[%s2 + $0x238] sm:$0xff]
    %v5227 = vld [vmem:[%s2 + $0x240] sm:$0xff]
    %v5228 = vld [vmem:[%s2 + $0x248] sm:$0xff]
    %v5229 = vld [vmem:[%s2 + $0x250] sm:$0xff]
    %v5230 = vld [vmem:[%s2 + $0x258] sm:$0xff]
    %v5231 = vld [vmem:[%s2 + $0x260] sm:$0xff]
    %v5232 = vld [vmem:[%s2 + $0x268] sm:$0xff]
    %v5233 = vld [vmem:[%s2 + $0x270] sm:$0xff]
    %v5234 = vld [vmem:[%s2 + $0x278] sm:$0xff]
    %v5235 = vld [vmem:[%s2 + $0x280] sm:$0xff]
    %v5236 = vld [vmem:[%s2 + $0x288] sm:$0xff]
    %v5237 = vld [vmem:[%s2 + $0x290] sm:$0xff]
    %v5238 = vld [vmem:[%s2 + $0x298] sm:$0xff]
    %v5239 = vld [vmem:[%s2 + $0x2a0] sm:$0xff]
    %v5240 = vld [vmem:[%s2 + $0x2a8] sm:$0xff]
    %v5241 = vld [vmem:[%s2 + $0x2b0] sm:$0xff]
    %v5242 = vld [vmem:[%s2 + $0x2b8] sm:$0xff]
    %v5243 = vld [vmem:[%s2 + $0x2c0] sm:$0xff]
    %v5244 = vld [vmem:[%s2 + $0x2c8] sm:$0xff]
    %v5245 = vld [vmem:[%s2 + $0x2d0] sm:$0xff]
    %v5246 = vld [vmem:[%s2 + $0x2d8] sm:$0xff]
    %v5247 = vld [vmem:[%s2 + $0x2e0] sm:$0xff]
    %v5248 = vld [vmem:[%s2 + $0x2e8] sm:$0xff]
    %v5249 = vld [vmem:[%s2 + $0x2f0] sm:$0xff]
    %v5250 = vld [vmem:[%s2 + $0x2f8] sm:$0xff]
    %v5251 = vld [vmem:[%s2 + $0x300] sm:$0xff]
    %v5252 = vld [vmem:[%s2 + $0x308] sm:$0xff]
    %v5253 = vld [vmem:[%s2 + $0x310] sm:$0xff]
    %v5254 = vld [vmem:[%s2 + $0x318] sm:$0xff]
    %v5255 = vld [vmem:[%s2 + $0x320] sm:$0xff]
    %v5256 = vld [vmem:[%s2 + $0x328] sm:$0xff]
    %v5257 = vld [vmem:[%s2 + $0x330] sm:$0xff]
    %v5258 = vld [vmem:[%s2 + $0x338] sm:$0xff]
    %v5259 = vld [vmem:[%s2 + $0x340] sm:$0xff]
    %v5260 = vld [vmem:[%s2 + $0x348] sm:$0xff]
    %v5261 = vld [vmem:[%s2 + $0x350] sm:$0xff]
    %v5262 = vld [vmem:[%s2 + $0x358] sm:$0xff]
    %v5263 = vld [vmem:[%s2 + $0x360] sm:$0xff]
    %v5264 = vld [vmem:[%s2 + $0x368] sm:$0xff]
    %v5265 = vld [vmem:[%s2 + $0x370] sm:$0xff]
    %v5266 = vld [vmem:[%s2 + $0x378] sm:$0xff]
    %v5267 = vld [vmem:[%s2 + $0x380] sm:$0xff]
    %v5268 = vld [vmem:[%s2 + $0x388] sm:$0xff]
    %v5269 = vld [vmem:[%s2 + $0x390] sm:$0xff]
    %v5270 = vld [vmem:[%s2 + $0x398] sm:$0xff]
    %v5271 = vld [vmem:[%s2 + $0x3a0] sm:$0xff]
    %v5272 = vld [vmem:[%s2 + $0x3a8] sm:$0xff]
    %v5273 = vld [vmem:[%s2 + $0x3b0] sm:$0xff]
    %v5274 = vld [vmem:[%s2 + $0x3b8] sm:$0xff]
    %v5275 = vld [vmem:[%s2 + $0x3c0] sm:$0xff]
    %v5276 = vld [vmem:[%s2 + $0x3c8] sm:$0xff]
    %v5277 = vld [vmem:[%s2 + $0x3d0] sm:$0xff]
    %v5278 = vld [vmem:[%s2 + $0x3d8] sm:$0xff]
    %v5279 = vld [vmem:[%s2 + $0x3e0] sm:$0xff]
    %v5280 = vld [vmem:[%s2 + $0x3e8] sm:$0xff]
    %v5281 = vld [vmem:[%s2 + $0x3f0] sm:$0xff]
    %v5282 = vld [vmem:[%s2 + $0x3f8] sm:$0xff]
    %v5283 = vld [vmem:[%s2 + $0x400] sm:$0xff]
    %v5284 = vld [vmem:[%s2 + $0x408] sm:$0xff]
    %v5285 = vld [vmem:[%s2 + $0x410] sm:$0xff]
    %v5286 = vld [vmem:[%s2 + $0x418] sm:$0xff]
    %v5287 = vld [vmem:[%s2 + $0x420] sm:$0xff]
    %v5288 = vld [vmem:[%s2 + $0x428] sm:$0xff]
    %v5289 = vld [vmem:[%s2 + $0x430] sm:$0xff]
    %v5290 = vld [vmem:[%s2 + $0x438] sm:$0xff]
    %v5291 = vld [vmem:[%s2 + $0x440] sm:$0xff]
    %v5292 = vld [vmem:[%s2 + $0x448] sm:$0xff]
    %v5293 = vld [vmem:[%s2 + $0x450] sm:$0xff]
    %v5294 = vld [vmem:[%s2 + $0x458] sm:$0xff]
    %v5295 = vld [vmem:[%s2 + $0x460] sm:$0xff]
    %v5296 = vld [vmem:[%s2 + $0x468] sm:$0xff]
    %v5297 = vld [vmem:[%s2 + $0x470] sm:$0xff]
    %v5298 = vld [vmem:[%s2 + $0x478] sm:$0xff]
    %v5299 = vld [vmem:[%s2 + $0x480] sm:$0xff]
    %v5300 = vld [vmem:[%s2 + $0x488] sm:$0xff]
    %v5301 = vld [vmem:[%s2 + $0x490] sm:$0xff]
    %v5302 = vld [vmem:[%s2 + $0x498] sm:$0xff]
    %v5303 = vld [vmem:[%s2 + $0x4a0] sm:$0xff]
    %v5304 = vld [vmem:[%s2 + $0x4a8] sm:$0xff]
    %v5305 = vld [vmem:[%s2 + $0x4b0] sm:$0xff]
    %v5306 = vld [vmem:[%s2 + $0x4b8] sm:$0xff]
    %v5307 = vld [vmem:[%s2 + $0x4c0] sm:$0xff]
    %v5308 = vld [vmem:[%s2 + $0x4c8] sm:$0xff]
    %v5309 = vld [vmem:[%s2 + $0x4d0] sm:$0xff]
    %v5310 = vld [vmem:[%s2 + $0x4d8] sm:$0xff]
    %v5311 = vld [vmem:[%s2 + $0x4e0] sm:$0xff]
    %v5312 = vld [vmem:[%s2 + $0x4e8] sm:$0xff]
    %v5313 = vld [vmem:[%s2 + $0x4f0] sm:$0xff]
    %v5314 = vld [vmem:[%s2 + $0x4f8] sm:$0xff]
    %v5315 = vld [vmem:[%s2 + $0x500] sm:$0xff]
    %v5316 = vld [vmem:[%s2 + $0x508] sm:$0xff]
    %v5317 = vld [vmem:[%s2 + $0x510] sm:$0xff]
    %v5318 = vld [vmem:[%s2 + $0x518] sm:$0xff]
    %v5319 = vld [vmem:[%s2 + $0x520] sm:$0xff]
    %v5320 = vld [vmem:[%s2 + $0x528] sm:$0xff]
    %v5321 = vld [vmem:[%s2 + $0x530] sm:$0xff]
    %v5322 = vld [vmem:[%s2 + $0x538] sm:$0xff]
    %v5323 = vld [vmem:[%s2 + $0x540] sm:$0xff]
    %v5324 = vld [vmem:[%s2 + $0x548] sm:$0xff]
    %v5325 = vld [vmem:[%s2 + $0x550] sm:$0xff]
    %v5326 = vld [vmem:[%s2 + $0x558] sm:$0xff]
    %v5327 = vld [vmem:[%s2 + $0x560] sm:$0xff]
    %v5328 = vld [vmem:[%s2 + $0x568] sm:$0xff]
    %v5329 = vld [vmem:[%s2 + $0x570] sm:$0xff]
    %v5330 = vld [vmem:[%s2 + $0x578] sm:$0xff]
    %v5331 = vld [vmem:[%s2 + $0x580] sm:$0xff]
    %v5332 = vld [vmem:[%s2 + $0x588] sm:$0xff]
    %v5333 = vld [vmem:[%s2 + $0x590] sm:$0xff]
    %v5334 = vld [vmem:[%s2 + $0x598] sm:$0xff]
    %v5335 = vld [vmem:[%s2 + $0x5a0] sm:$0xff]
    %v5336 = vld [vmem:[%s2 + $0x5a8] sm:$0xff]
    %v5337 = vld [vmem:[%s2 + $0x5b0] sm:$0xff]
    %v5338 = vld [vmem:[%s2 + $0x5b8] sm:$0xff]
    %v5339 = vld [vmem:[%s2 + $0x5c0] sm:$0xff]
    %v5340 = vld [vmem:[%s2 + $0x5c8] sm:$0xff]
    %v5341 = vld [vmem:[%s2 + $0x5d0] sm:$0xff]
    %v5342 = vld [vmem:[%s2 + $0x5d8] sm:$0xff]
    %v5343 = vld [vmem:[%s2 + $0x5e0] sm:$0xff]
    %v5344 = vld [vmem:[%s2 + $0x5e8] sm:$0xff]
    %v5345 = vld [vmem:[%s2 + $0x5f0] sm:$0xff]
    %v5346 = vld [vmem:[%s2 + $0x5f8] sm:$0xff]
    %v5347 = vld [vmem:[%s2 + $0x600] sm:$0xff]
    %v5348 = vld [vmem:[%s2 + $0x608] sm:$0xff]
    %v5349 = vld [vmem:[%s2 + $0x610] sm:$0xff]
    %v5350 = vld [vmem:[%s2 + $0x618] sm:$0xff]
    %v5351 = vld [vmem:[%s2 + $0x620] sm:$0xff]
    %v5352 = vld [vmem:[%s2 + $0x628] sm:$0xff]
    %v5353 = vld [vmem:[%s2 + $0x630] sm:$0xff]
    %v5354 = vld [vmem:[%s2 + $0x638] sm:$0xff]
    %v5355 = vld [vmem:[%s2 + $0x640] sm:$0xff]
    %v5356 = vld [vmem:[%s2 + $0x648] sm:$0xff]
    %v5357 = vld [vmem:[%s2 + $0x650] sm:$0xff]
    %v5358 = vld [vmem:[%s2 + $0x658] sm:$0xff]
    %v5359 = vld [vmem:[%s2 + $0x660] sm:$0xff]
    %v5360 = vld [vmem:[%s2 + $0x668] sm:$0xff]
    %v5361 = vld [vmem:[%s2 + $0x670] sm:$0xff]
    %v5362 = vld [vmem:[%s2 + $0x678] sm:$0xff]
    %v5363 = vld [vmem:[%s2 + $0x680] sm:$0xff]
    %v5364 = vld [vmem:[%s2 + $0x688] sm:$0xff]
    %v5365 = vld [vmem:[%s2 + $0x690] sm:$0xff]
    %v5366 = vld [vmem:[%s2 + $0x698] sm:$0xff]
    %v5367 = vld [vmem:[%s2 + $0x6a0] sm:$0xff]
    %v5368 = vld [vmem:[%s2 + $0x6a8] sm:$0xff]
    %v5369 = vld [vmem:[%s2 + $0x6b0] sm:$0xff]
    %v5370 = vld [vmem:[%s2 + $0x6b8] sm:$0xff]
    %v5371 = vld [vmem:[%s2 + $0x6c0] sm:$0xff]
    %v5372 = vld [vmem:[%s2 + $0x6c8] sm:$0xff]
    %v5373 = vld [vmem:[%s2 + $0x6d0] sm:$0xff]
    %v5374 = vld [vmem:[%s2 + $0x6d8] sm:$0xff]
    %v5375 = vld [vmem:[%s2 + $0x6e0] sm:$0xff]
    %v5376 = vld [vmem:[%s2 + $0x6e8] sm:$0xff]
    %v5377 = vld [vmem:[%s2 + $0x6f0] sm:$0xff]
    %v5378 = vld [vmem:[%s2 + $0x6f8] sm:$0xff]
    %v5379 = vld [vmem:[%s2 + $0x700] sm:$0xff]
    %v5380 = vld [vmem:[%s2 + $0x708] sm:$0xff]
    %v5381 = vld [vmem:[%s2 + $0x710] sm:$0xff]
    %v5382 = vld [vmem:[%s2 + $0x718] sm:$0xff]
    %v5383 = vld [vmem:[%s2 + $0x720] sm:$0xff]
    %v5384 = vld [vmem:[%s2 + $0x728] sm:$0xff]
    %v5385 = vld [vmem:[%s2 + $0x730] sm:$0xff]
    %v5386 = vld [vmem:[%s2 + $0x738] sm:$0xff]
    %v5387 = vld [vmem:[%s2 + $0x740] sm:$0xff]
    %v5388 = vld [vmem:[%s2 + $0x748] sm:$0xff]
    %v5389 = vld [vmem:[%s2 + $0x750] sm:$0xff]
    %v5390 = vld [vmem:[%s2 + $0x758] sm:$0xff]
    %v5391 = vld [vmem:[%s2 + $0x760] sm:$0xff]
    %v5392 = vld [vmem:[%s2 + $0x768] sm:$0xff]
    %v5393 = vld [vmem:[%s2 + $0x770] sm:$0xff]
    %v5394 = vld [vmem:[%s2 + $0x778] sm:$0xff]
    %v5395 = vld [vmem:[%s2 + $0x780] sm:$0xff]
    %v5396 = vld [vmem:[%s2 + $0x788] sm:$0xff]
    %v5397 = vld [vmem:[%s2 + $0x790] sm:$0xff]
    %v5398 = vld [vmem:[%s2 + $0x798] sm:$0xff]
    %v5399 = vld [vmem:[%s2 + $0x7a0] sm:$0xff]
    %v5400 = vld [vmem:[%s2 + $0x7a8] sm:$0xff]
    %v5401 = vld [vmem:[%s2 + $0x7b0] sm:$0xff]
    %v5402 = vld [vmem:[%s2 + $0x7b8] sm:$0xff]
    %v5403 = vld [vmem:[%s2 + $0x7c0] sm:$0xff]
    %v5404 = vld [vmem:[%s2 + $0x7c8] sm:$0xff]
    %v5405 = vld [vmem:[%s2 + $0x7d0] sm:$0xff]
    %v5406 = vld [vmem:[%s2 + $0x7d8] sm:$0xff]
    %v5407 = vld [vmem:[%s2 + $0x7e0] sm:$0xff]
    %v5408 = vld [vmem:[%s2 + $0x7e8] sm:$0xff]
    %v5409 = vld [vmem:[%s2 + $0x7f0] sm:$0xff]
    %v5410 = vld [vmem:[%s2 + $0x7f8] sm:$0xff]
    %v5413 = vunpack.c.l.s4 1983009808
    %v5414 = vunpack.c.0.s8 %v5413
    %v5415 = vlaneseq
    %v5416 = vshrl.u32 %v5415, 7
    %v5417 = vsub.s32 %v5414, %v5416
    %v5418 = vrot.slane %v5149, %v5417
    %v5419 = vcombine.high %v5418, %v5418
    %5422 = vmatprep.subr.mxu0 %v5156
    %5423 = vmatpush1.msra.mxu0 %v5155
    %5424 = vmatprep.subr.mxu0 %v5164
    %5425 = vmatpush1.msra.mxu0 %v5163
    %5426 = vmatprep.subr.mxu0 %v5172
    %5427 = vmatpush1.msra.mxu0 %v5171
    %5428 = vmatprep.subr.mxu0 %v5180
    %5429 = vmatpush1.msra.mxu0 %v5179
    %5430 = vmatprep.subr.mxu0 %v5188
    %5431 = vmatpush1.msra.mxu0 %v5187
    %5432 = vmatprep.subr.mxu0 %v5196
    %5433 = vmatpush1.msra.mxu0 %v5195
    %5434 = vmatprep.subr.mxu0 %v5204
    %5435 = vmatpush1.msra.mxu0 %v5203
    %5436 = vmatprep.subr.mxu0 %v5212
    %5437 = vmatpush1.msra.mxu0 %v5211
    %5438 = vmatprep.subr.mxu0 %v5220
    %5439 = vmatpush1.msra.mxu0 %v5219
    %5440 = vmatprep.subr.mxu0 %v5228
    %5441 = vmatpush1.msra.mxu0 %v5227
    %5442 = vmatprep.subr.mxu0 %v5236
    %5443 = vmatpush1.msra.mxu0 %v5235
    %5444 = vmatprep.subr.mxu0 %v5244
    %5445 = vmatpush1.msra.mxu0 %v5243
    %5446 = vmatprep.subr.mxu0 %v5252
    %5447 = vmatpush1.msra.mxu0 %v5251
    %5448 = vmatprep.subr.mxu0 %v5260
    %5449 = vmatpush1.msra.mxu0 %v5259
    %5450 = vmatprep.subr.mxu0 %v5268
    %5451 = vmatpush1.msra.mxu0 %v5267
    %5452 = vmatprep.subr.mxu0 %v5276
    %5453 = vmatpush1.msra.mxu0 %v5275
    %5454 = vmatprep.subr.mxu0 %v5284
    %5455 = vmatpush1.msra.mxu0 %v5283
    %5456 = vmatprep.subr.mxu0 %v5292
    %5457 = vmatpush1.msra.mxu0 %v5291
    %5458 = vmatprep.subr.mxu0 %v5300
    %5459 = vmatpush1.msra.mxu0 %v5299
    %5460 = vmatprep.subr.mxu0 %v5308
    %5461 = vmatpush1.msra.mxu0 %v5307
    %5462 = vmatprep.subr.mxu0 %v5316
    %5463 = vmatpush1.msra.mxu0 %v5315
    %5464 = vmatprep.subr.mxu0 %v5324
    %5465 = vmatpush1.msra.mxu0 %v5323
    %5466 = vmatprep.subr.mxu0 %v5332
    %5467 = vmatpush1.msra.mxu0 %v5331
    %5468 = vmatprep.subr.mxu0 %v5340
    %5469 = vmatpush1.msra.mxu0 %v5339
    %5470 = vmatprep.subr.mxu0 %v5348
    %5471 = vmatpush1.msra.mxu0 %v5347
    %5472 = vmatprep.subr.mxu0 %v5356
    %5473 = vmatpush1.msra.mxu0 %v5355
    %5474 = vmatprep.subr.mxu0 %v5364
    %5475 = vmatpush1.msra.mxu0 %v5363
    %5476 = vmatprep.subr.mxu0 %v5372
    %5477 = vmatpush1.msra.mxu0 %v5371
    %5478 = vmatprep.subr.mxu0 %v5380
    %5479 = vmatpush1.msra.mxu0 %v5379
    %5480 = vmatprep.subr.mxu0 %v5388
    %5481 = vmatpush1.msra.mxu0 %v5387
    %5482 = vmatprep.subr.mxu0 %v5396
    %5483 = vmatpush1.msra.mxu0 %v5395
    %5484 = vmatprep.subr.mxu0 %v5404
    %5485 = vmatpush1.msra.mxu0 %v5403
    %5486 = vmatprep.mubr.f32.mxu0 %v5419
    %5487 = vmatmul.mubr.f32.gmra.mrb[0].mxu0 %v5418
    %v5488 = vpop.f32.mrb[0].mxu0
    %v5489 = vadd.f32 0.0, %v5488
    %v5490 = vpop.f32.mrb[0].mxu0
    %v5491 = vadd.f32 0.0, %v5490
    %5492 = vdwg.mxu0
    %5493 = vmatprep.subr.mxu0 %v5158
    %5494 = vmatpush1.msra.mxu0 %v5157
    %5495 = vmatprep.subr.mxu0 %v5166
    %5496 = vmatpush1.msra.mxu0 %v5165
    %5497 = vmatprep.subr.mxu0 %v5174
    %5498 = vmatpush1.msra.mxu0 %v5173
    %5499 = vmatprep.subr.mxu0 %v5182
    %5500 = vmatpush1.msra.mxu0 %v5181
    %5501 = vmatprep.subr.mxu0 %v5190
    %5502 = vmatpush1.msra.mxu0 %v5189
    %5503 = vmatprep.subr.mxu0 %v5198
    %5504 = vmatpush1.msra.mxu0 %v5197
    %5505 = vmatprep.subr.mxu0 %v5206
    %5506 = vmatpush1.msra.mxu0 %v5205
    %5507 = vmatprep.subr.mxu0 %v5214
    %5508 = vmatpush1.msra.mxu0 %v5213
    %5509 = vmatprep.subr.mxu0 %v5222
    %5510 = vmatpush1.msra.mxu0 %v5221
    %5511 = vmatprep.subr.mxu0 %v5230
    %5512 = vmatpush1.msra.mxu0 %v5229
    %5513 = vmatprep.subr.mxu0 %v5238
    %5514 = vmatpush1.msra.mxu0 %v5237
    %5515 = vmatprep.subr.mxu0 %v5246
    %5516 = vmatpush1.msra.mxu0 %v5245
    %5517 = vmatprep.subr.mxu0 %v5254
    %5518 = vmatpush1.msra.mxu0 %v5253
    %5519 = vmatprep.subr.mxu0 %v5262
    %5520 = vmatpush1.msra.mxu0 %v5261
    %5521 = vmatprep.subr.mxu0 %v5270
    %5522 = vmatpush1.msra.mxu0 %v5269
    %5523 = vmatprep.subr.mxu0 %v5278
    %5524 = vmatpush1.msra.mxu0 %v5277
    %5525 = vmatprep.subr.mxu0 %v5286
    %5526 = vmatpush1.msra.mxu0 %v5285
    %5527 = vmatprep.subr.mxu0 %v5294
    %5528 = vmatpush1.msra.mxu0 %v5293
    %5529 = vmatprep.subr.mxu0 %v5302
    %5530 = vmatpush1.msra.mxu0 %v5301
    %5531 = vmatprep.subr.mxu0 %v5310
    %5532 = vmatpush1.msra.mxu0 %v5309
    %5533 = vmatprep.subr.mxu0 %v5318
    %5534 = vmatpush1.msra.mxu0 %v5317
    %5535 = vmatprep.subr.mxu0 %v5326
    %5536 = vmatpush1.msra.mxu0 %v5325
    %5537 = vmatprep.subr.mxu0 %v5334
    %5538 = vmatpush1.msra.mxu0 %v5333
    %5539 = vmatprep.subr.mxu0 %v5342
    %5540 = vmatpush1.msra.mxu0 %v5341
    %5541 = vmatprep.subr.mxu0 %v5350
    %5542 = vmatpush1.msra.mxu0 %v5349
    %5543 = vmatprep.subr.mxu0 %v5358
    %5544 = vmatpush1.msra.mxu0 %v5357
    %5545 = vmatprep.subr.mxu0 %v5366
    %5546 = vmatpush1.msra.mxu0 %v5365
    %5547 = vmatprep.subr.mxu0 %v5374
    %5548 = vmatpush1.msra.mxu0 %v5373
    %5549 = vmatprep.subr.mxu0 %v5382
    %5550 = vmatpush1.msra.mxu0 %v5381
    %5551 = vmatprep.subr.mxu0 %v5390
    %5552 = vmatpush1.msra.mxu0 %v5389
    %5553 = vmatprep.subr.mxu0 %v5398
    %5554 = vmatpush1.msra.mxu0 %v5397
    %5555 = vmatprep.subr.mxu0 %v5406
    %5556 = vmatpush1.msra.mxu0 %v5405
    %5557 = vmatprep.mubr.f32.mxu0 %v5419
    %5558 = vmatmul.mubr.f32.gmra.mrb[0].mxu0 %v5418
    %v5559 = vpop.f32.mrb[0].mxu0
    %v5560 = vadd.f32 0.0, %v5559
    %v5561 = vpop.f32.mrb[0].mxu0
    %v5562 = vadd.f32 0.0, %v5561
    %5563 = vdwg.mxu0
    %5564 = vmatprep.subr.mxu0 %v5160
    %5565 = vmatpush1.msra.mxu0 %v5159
    %5566 = vmatprep.subr.mxu0 %v5168
    %5567 = vmatpush1.msra.mxu0 %v5167
    %5568 = vmatprep.subr.mxu0 %v5176
    %5569 = vmatpush1.msra.mxu0 %v5175
    %5570 = vmatprep.subr.mxu0 %v5184
    %5571 = vmatpush1.msra.mxu0 %v5183
    %5572 = vmatprep.subr.mxu0 %v5192
    %5573 = vmatpush1.msra.mxu0 %v5191
    %5574 = vmatprep.subr.mxu0 %v5200
    %5575 = vmatpush1.msra.mxu0 %v5199
    %5576 = vmatprep.subr.mxu0 %v5208
    %5577 = vmatpush1.msra.mxu0 %v5207
    %5578 = vmatprep.subr.mxu0 %v5216
    %5579 = vmatpush1.msra.mxu0 %v5215
    %5580 = vmatprep.subr.mxu0 %v5224
    %5581 = vmatpush1.msra.mxu0 %v5223
    %5582 = vmatprep.subr.mxu0 %v5232
    %5583 = vmatpush1.msra.mxu0 %v5231
    %5584 = vmatprep.subr.mxu0 %v5240
    %5585 = vmatpush1.msra.mxu0 %v5239
    %5586 = vmatprep.subr.mxu0 %v5248
    %5587 = vmatpush1.msra.mxu0 %v5247
    %5588 = vmatprep.subr.mxu0 %v5256
    %5589 = vmatpush1.msra.mxu0 %v5255
    %5590 = vmatprep.subr.mxu0 %v5264
    %5591 = vmatpush1.msra.mxu0 %v5263
    %5592 = vmatprep.subr.mxu0 %v5272
    %5593 = vmatpush1.msra.mxu0 %v5271
    %5594 = vmatprep.subr.mxu0 %v5280
    %5595 = vmatpush1.msra.mxu0 %v5279
    %5596 = vmatprep.subr.mxu0 %v5288
    %5597 = vmatpush1.msra.mxu0 %v5287
    %5598 = vmatprep.subr.mxu0 %v5296
    %5599 = vmatpush1.msra.mxu0 %v5295
    %5600 = vmatprep.subr.mxu0 %v5304
    %5601 = vmatpush1.msra.mxu0 %v5303
    %5602 = vmatprep.subr.mxu0 %v5312
    %5603 = vmatpush1.msra.mxu0 %v5311
    %5604 = vmatprep.subr.mxu0 %v5320
    %5605 = vmatpush1.msra.mxu0 %v5319
    %5606 = vmatprep.subr.mxu0 %v5328
    %5607 = vmatpush1.msra.mxu0 %v5327
    %5608 = vmatprep.subr.mxu0 %v5336
    %5609 = vmatpush1.msra.mxu0 %v5335
    %5610 = vmatprep.subr.mxu0 %v5344
    %5611 = vmatpush1.msra.mxu0 %v5343
    %5612 = vmatprep.subr.mxu0 %v5352
    %5613 = vmatpush1.msra.mxu0 %v5351
    %5614 = vmatprep.subr.mxu0 %v5360
    %5615 = vmatpush1.msra.mxu0 %v5359
    %5616 = vmatprep.subr.mxu0 %v5368
    %5617 = vmatpush1.msra.mxu0 %v5367
    %5618 = vmatprep.subr.mxu0 %v5376
    %5619 = vmatpush1.msra.mxu0 %v5375
    %5620 = vmatprep.subr.mxu0 %v5384
    %5621 = vmatpush1.msra.mxu0 %v5383
    %5622 = vmatprep.subr.mxu0 %v5392
    %5623 = vmatpush1.msra.mxu0 %v5391
    %5624 = vmatprep.subr.mxu0 %v5400
    %5625 = vmatpush1.msra.mxu0 %v5399
    %5626 = vmatprep.subr.mxu0 %v5408
    %5627 = vmatpush1.msra.mxu0 %v5407
    %5628 = vmatprep.mubr.f32.mxu0 %v5419
    %5629 = vmatmul.mubr.f32.gmra.mrb[0].mxu0 %v5418
    %v5630 = vpop.f32.mrb[0].mxu0
    %v5631 = vadd.f32 0.0, %v5630
    %v5632 = vpop.f32.mrb[0].mxu0
    %v5633 = vadd.f32 0.0, %v5632
    %5634 = vdwg.mxu0
    %5635 = vmatprep.subr.mxu0 %v5162
    %5636 = vmatpush1.msra.mxu0 %v5161
    %5637 = vmatprep.subr.mxu0 %v5170
    %5638 = vmatpush1.msra.mxu0 %v5169
    %5639 = vmatprep.subr.mxu0 %v5178
    %5640 = vmatpush1.msra.mxu0 %v5177
    %5641 = vmatprep.subr.mxu0 %v5186
    %5642 = vmatpush1.msra.mxu0 %v5185
    %5643 = vmatprep.subr.mxu0 %v5194
    %5644 = vmatpush1.msra.mxu0 %v5193
    %5645 = vmatprep.subr.mxu0 %v5202
    %5646 = vmatpush1.msra.mxu0 %v5201
    %5647 = vmatprep.subr.mxu0 %v5210
    %5648 = vmatpush1.msra.mxu0 %v5209
    %5649 = vmatprep.subr.mxu0 %v5218
    %5650 = vmatpush1.msra.mxu0 %v5217
    %5651 = vmatprep.subr.mxu0 %v5226
    %5652 = vmatpush1.msra.mxu0 %v5225
    %5653 = vmatprep.subr.mxu0 %v5234
    %5654 = vmatpush1.msra.mxu0 %v5233
    %5655 = vmatprep.subr.mxu0 %v5242
    %5656 = vmatpush1.msra.mxu0 %v5241
    %5657 = vmatprep.subr.mxu0 %v5250
    %5658 = vmatpush1.msra.mxu0 %v5249
    %5659 = vmatprep.subr.mxu0 %v5258
    %5660 = vmatpush1.msra.mxu0 %v5257
    %5661 = vmatprep.subr.mxu0 %v5266
    %5662 = vmatpush1.msra.mxu0 %v5265
    %5663 = vmatprep.subr.mxu0 %v5274
    %5664 = vmatpush1.msra.mxu0 %v5273
    %5665 = vmatprep.subr.mxu0 %v5282
    %5666 = vmatpush1.msra.mxu0 %v5281
    %5667 = vmatprep.subr.mxu0 %v5290
    %5668 = vmatpush1.msra.mxu0 %v5289
    %5669 = vmatprep.subr.mxu0 %v5298
    %5670 = vmatpush1.msra.mxu0 %v5297
    %5671 = vmatprep.subr.mxu0 %v5306
    %5672 = vmatpush1.msra.mxu0 %v5305
    %5673 = vmatprep.subr.mxu0 %v5314
    %5674 = vmatpush1.msra.mxu0 %v5313
    %5675 = vmatprep.subr.mxu0 %v5322
    %5676 = vmatpush1.msra.mxu0 %v5321
    %5677 = vmatprep.subr.mxu0 %v5330
    %5678 = vmatpush1.msra.mxu0 %v5329
    %5679 = vmatprep.subr.mxu0 %v5338
    %5680 = vmatpush1.msra.mxu0 %v5337
    %5681 = vmatprep.subr.mxu0 %v5346
    %5682 = vmatpush1.msra.mxu0 %v5345
    %5683 = vmatprep.subr.mxu0 %v5354
    %5684 = vmatpush1.msra.mxu0 %v5353
    %5685 = vmatprep.subr.mxu0 %v5362
    %5686 = vmatpush1.msra.mxu0 %v5361
    %5687 = vmatprep.subr.mxu0 %v5370
    %5688 = vmatpush1.msra.mxu0 %v5369
    %5689 = vmatprep.subr.mxu0 %v5378
    %5690 = vmatpush1.msra.mxu0 %v5377
    %5691 = vmatprep.subr.mxu0 %v5386
    %5692 = vmatpush1.msra.mxu0 %v5385
    %5693 = vmatprep.subr.mxu0 %v5394
    %5694 = vmatpush1.msra.mxu0 %v5393
    %5695 = vmatprep.subr.mxu0 %v5402
    %5696 = vmatpush1.msra.mxu0 %v5401
    %5697 = vmatprep.subr.mxu0 %v5410
    %5698 = vmatpush1.msra.mxu0 %v5409
    %5699 = vmatprep.mubr.f32.mxu0 %v5419
    %5700 = vmatmul.mubr.f32.gmra.mrb[0].mxu0 %v5418
    %v5701 = vpop.f32.mrb[0].mxu0
    %v5702 = vadd.f32 0.0, %v5701
    %v5703 = vpop.f32.mrb[0].mxu0
    %v5704 = vadd.f32 0.0, %v5703
    %5705 = vdwg.mxu0
    %v5714 = vcombine.low %v5489, %v5491
    %v5715 = vcombine.low %v5560, %v5562
    %v5717 = vunpack.c.l.s4 1983009808
    %v5718 = vunpack.c.0.s8 %v5717
    %v5719 = vlaneseq
    %v5720 = vshrl.u32 %v5719, 7
    %v5721 = vsub.s32 %v5718, %v5720
    %v5722 = vrot.slane %v5714, %v5721
    %v5724 = vunpack.c.l.s4 1983009808
    %v5725 = vunpack.c.0.s8 %v5724
    %v5726 = vlaneseq
    %v5727 = vshrl.u32 %v5726, 7
    %v5728 = vsub.s32 %v5725, %v5727
    %v5729 = vrot.slane %v5715, %v5728
    %v5730 = vcombine.low %v5722, %v5729
    %v5731 = vcombine.low %v5631, %v5633
    %v5732 = vcombine.low %v5702, %v5704
    %v5734 = vunpack.c.l.s4 1983009808
    %v5735 = vunpack.c.0.s8 %v5734
    %v5736 = vlaneseq
    %v5737 = vshrl.u32 %v5736, 7
    %v5738 = vsub.s32 %v5735, %v5737
    %v5739 = vrot.slane %v5731, %v5738
    %v5741 = vunpack.c.l.s4 1983009808
    %v5742 = vunpack.c.0.s8 %v5741
    %v5743 = vlaneseq
    %v5744 = vshrl.u32 %v5743, 7
    %v5745 = vsub.s32 %v5742, %v5744
    %v5746 = vrot.slane %v5732, %v5745
    %v5747 = vcombine.low %v5739, %v5746
    %v5750 = vadd.f32 %v5153, %v5730
    %v5751 = vadd.f32 %v5154, %v5747
    %v5752 = vxor.u32 %v5750, 2147483648
    %v5753 = vxor.u32 %v5751, 2147483648
    %v5754 = vmul.f32 %v5752, 1.442695
    %v5755 = vpow.pop %v5754
    %v5756 = vmul.f32 %v5753, 1.442695
    %v5757 = vpow.pop %v5756
    %v5758 = vadd.f32 %v5755, 1.0
    %v5759 = vadd.f32 %v5757, 1.0
    %v5760 = vrcp.pop %v5758
    %v5761 = vmul.f32 1.0, %v5760
    %v5762 = vrcp.pop %v5759
    %v5763 = vmul.f32 1.0, %v5762
    %v5765 = vrot.slane %v5751, 4
    %v5767 = vtanh.pop %v5765
    %v5769 = vrot.slane %v5761, 4
    %v5771 = vmul.f32 %v5769, %v5147
    %v5772 = vmul.f32 %v5761, %v5767
    %v5773 = vadd.f32 %v5771, %v5772
    %v5774 = vtanh.pop %v5773
    %v5775 = vmul.f32 %v5763, %v5774
    %s5776 = scalar_lea.vmem [#allocation3], 28
    %5777 = vst [vmem:[%s5776] sm:$0xf] %v5775
    %v5778 = vld [vmem:[#allocation3] sm:$0xf]
    %v5779 = vld [vmem:[#allocation3 + $0x4] sm:$0xf]
    %v5780 = vld [vmem:[#allocation3 + $0x8] sm:$0xf]
    %v5781 = vld [vmem:[#allocation3 + $0xc] sm:$0xf]
    %v5782 = vld [vmem:[#allocation3 + $0x10] sm:$0xf]
    %v5783 = vld [vmem:[#allocation3 + $0x14] sm:$0xf]
    %v5784 = vld [vmem:[#allocation3 + $0x18] sm:$0xf]
    %v5785 = vld [vmem:[#allocation3 + $0x1c] sm:$0xf]
    %v5786 = vld [vmem:[%s3] sm:$0xff]
    %v5787 = vld [vmem:[%s3 + $0x8] sm:$0xff]
    %v5788 = vld [vmem:[%s3 + $0x10] sm:$0xff]
    %v5789 = vld [vmem:[%s3 + $0x18] sm:$0xff]
    %v5790 = vld [vmem:[%s3 + $0x20] sm:$0xff]
    %v5791 = vld [vmem:[%s3 + $0x28] sm:$0xff]
    %v5792 = vld [vmem:[%s3 + $0x30] sm:$0xff]
    %v5793 = vld [vmem:[%s3 + $0x38] sm:$0xff]
    %v5794 = vld [vmem:[%s3 + $0x40] sm:$0xff]
    %v5795 = vld [vmem:[%s3 + $0x48] sm:$0xff]
    %v5796 = vld [vmem:[%s3 + $0x50] sm:$0xff]
    %v5797 = vld [vmem:[%s3 + $0x58] sm:$0xff]
    %v5798 = vld [vmem:[%s3 + $0x60] sm:$0xff]
    %v5799 = vld [vmem:[%s3 + $0x68] sm:$0xff]
    %v5800 = vld [vmem:[%s3 + $0x70] sm:$0xff]
    %v5801 = vld [vmem:[%s3 + $0x78] sm:$0xff]
    %v5802 = vld [vmem:[%s3 + $0x80] sm:$0xff]
    %v5803 = vld [vmem:[%s3 + $0x88] sm:$0xff]
    %v5804 = vld [vmem:[%s3 + $0x90] sm:$0xff]
    %v5805 = vld [vmem:[%s3 + $0x98] sm:$0xff]
    %v5806 = vld [vmem:[%s3 + $0xa0] sm:$0xff]
    %v5807 = vld [vmem:[%s3 + $0xa8] sm:$0xff]
    %v5808 = vld [vmem:[%s3 + $0xb0] sm:$0xff]
    %v5809 = vld [vmem:[%s3 + $0xb8] sm:$0xff]
    %v5810 = vld [vmem:[%s3 + $0xc0] sm:$0xff]
    %v5811 = vld [vmem:[%s3 + $0xc8] sm:$0xff]
    %v5812 = vld [vmem:[%s3 + $0xd0] sm:$0xff]
    %v5813 = vld [vmem:[%s3 + $0xd8] sm:$0xff]
    %v5814 = vld [vmem:[%s3 + $0xe0] sm:$0xff]
    %v5815 = vld [vmem:[%s3 + $0xe8] sm:$0xff]
    %v5816 = vld [vmem:[%s3 + $0xf0] sm:$0xff]
    %v5817 = vld [vmem:[%s3 + $0xf8] sm:$0xff]
    %v5818 = vld [vmem:[%s4] sm:$0x1]
    %v5820 = vlaneseq
    %v5821 = vshrl.u32 %v5820, 7
    %v5822 = vsub.s32 0, %v5821
    %v5823 = vrot.slane %v5818, %v5822
    %v5833 = vcombine.low %v5778, %v5779
    %v5834 = vcombine.low %v5780, %v5781
    %v5836 = vunpack.c.l.s4 1983009808
    %v5837 = vunpack.c.0.s8 %v5836
    %v5838 = vlaneseq
    %v5839 = vshrl.u32 %v5838, 7
    %v5840 = vsub.s32 %v5837, %v5839
    %v5841 = vrot.slane %v5833, %v5840
    %v5843 = vunpack.c.l.s4 1983009808
    %v5844 = vunpack.c.0.s8 %v5843
    %v5845 = vlaneseq
    %v5846 = vshrl.u32 %v5845, 7
    %v5847 = vsub.s32 %v5844, %v5846
    %v5848 = vrot.slane %v5834, %v5847
    %v5849 = vcombine.low %v5841, %v5848
    %v5850 = vcombine.high %v5841, %v5848
    %v5851 = vcombine.low %v5782, %v5783
    %v5852 = vcombine.low %v5784, %v5785
    %v5854 = vunpack.c.l.s4 1983009808
    %v5855 = vunpack.c.0.s8 %v5854
    %v5856 = vlaneseq
    %v5857 = vshrl.u32 %v5856, 7
    %v5858 = vsub.s32 %v5855, %v5857
    %v5859 = vrot.slane %v5851, %v5858
    %v5861 = vunpack.c.l.s4 1983009808
    %v5862 = vunpack.c.0.s8 %v5861
    %v5863 = vlaneseq
    %v5864 = vshrl.u32 %v5863, 7
    %v5865 = vsub.s32 %v5862, %v5864
    %v5866 = vrot.slane %v5852, %v5865
    %v5867 = vcombine.low %v5859, %v5866
    %v5868 = vcombine.high %v5859, %v5866
    %5873 = vmatprep.subr.mxu0 0.0
    %5874 = vmatpush1.msra.mxu0 %v5786
    %5875 = vmatprep.subr.mxu0 0.0
    %5876 = vmatpush1.msra.mxu0 %v5787
    %5877 = vmatprep.subr.mxu0 0.0
    %5878 = vmatpush1.msra.mxu0 %v5788
    %5879 = vmatprep.subr.mxu0 0.0
    %5880 = vmatpush1.msra.mxu0 %v5789
    %5881 = vmatprep.subr.mxu0 0.0
    %5882 = vmatpush1.msra.mxu0 %v5790
    %5883 = vmatprep.subr.mxu0 0.0
    %5884 = vmatpush1.msra.mxu0 %v5791
    %5885 = vmatprep.subr.mxu0 0.0
    %5886 = vmatpush1.msra.mxu0 %v5792
    %5887 = vmatprep.subr.mxu0 0.0
    %5888 = vmatpush1.msra.mxu0 %v5793
    %5889 = vmatprep.subr.mxu0 0.0
    %5890 = vmatpush1.msra.mxu0 %v5794
    %5891 = vmatprep.subr.mxu0 0.0
    %5892 = vmatpush1.msra.mxu0 %v5795
    %5893 = vmatprep.subr.mxu0 0.0
    %5894 = vmatpush1.msra.mxu0 %v5796
    %5895 = vmatprep.subr.mxu0 0.0
    %5896 = vmatpush1.msra.mxu0 %v5797
    %5897 = vmatprep.subr.mxu0 0.0
    %5898 = vmatpush1.msra.mxu0 %v5798
    %5899 = vmatprep.subr.mxu0 0.0
    %5900 = vmatpush1.msra.mxu0 %v5799
    %5901 = vmatprep.subr.mxu0 0.0
    %5902 = vmatpush1.msra.mxu0 %v5800
    %5903 = vmatprep.subr.mxu0 0.0
    %5904 = vmatpush1.msra.mxu0 %v5801
    %5905 = vmatprep.subr.mxu0 0.0
    %5906 = vmatpush1.msra.mxu0 %v5802
    %5907 = vmatprep.subr.mxu0 0.0
    %5908 = vmatpush1.msra.mxu0 %v5803
    %5909 = vmatprep.subr.mxu0 0.0
    %5910 = vmatpush1.msra.mxu0 %v5804
    %5911 = vmatprep.subr.mxu0 0.0
    %5912 = vmatpush1.msra.mxu0 %v5805
    %5913 = vmatprep.subr.mxu0 0.0
    %5914 = vmatpush1.msra.mxu0 %v5806
    %5915 = vmatprep.subr.mxu0 0.0
    %5916 = vmatpush1.msra.mxu0 %v5807
    %5917 = vmatprep.subr.mxu0 0.0
    %5918 = vmatpush1.msra.mxu0 %v5808
    %5919 = vmatprep.subr.mxu0 0.0
    %5920 = vmatpush1.msra.mxu0 %v5809
    %5921 = vmatprep.subr.mxu0 0.0
    %5922 = vmatpush1.msra.mxu0 %v5810
    %5923 = vmatprep.subr.mxu0 0.0
    %5924 = vmatpush1.msra.mxu0 %v5811
    %5925 = vmatprep.subr.mxu0 0.0
    %5926 = vmatpush1.msra.mxu0 %v5812
    %5927 = vmatprep.subr.mxu0 0.0
    %5928 = vmatpush1.msra.mxu0 %v5813
    %5929 = vmatprep.subr.mxu0 0.0
    %5930 = vmatpush1.msra.mxu0 %v5814
    %5931 = vmatprep.subr.mxu0 0.0
    %5932 = vmatpush1.msra.mxu0 %v5815
    %5933 = vmatprep.subr.mxu0 0.0
    %5934 = vmatpush1.msra.mxu0 %v5816
    %5935 = vmatprep.subr.mxu0 0.0
    %5936 = vmatpush1.msra.mxu0 %v5817
    %5937 = vmatprep.mubr.f32.mxu0 %v5850
    %5938 = vmatmul.mubr.f32.gmra.mrb[0].mxu0 %v5849
    %v5939 = vpop.f32.mrb[0].mxu0
    %v5940 = vadd.f32 %v5823, %v5939
    %v5941 = vpop.f32.mrb[0].mxu0
    %5942 = vmatprep.mubr.f32.mxu0 %v5868
    %5943 = vmatmul.mubr.f32.gmra.mrb[0].mxu0 %v5867
    %v5944 = vpop.f32.mrb[0].mxu0
    %v5945 = vadd.f32 %v5823, %v5944
    %v5946 = vpop.f32.mrb[0].mxu0
    %5947 = vdwg.mxu0
    %v5950 = vcombine.high %v5940, %v5940
    %v5952 = vunpack.c.l.s4 1983009808
    %v5953 = vunpack.c.0.s8 %v5952
    %v5954 = vlaneseq
    %v5955 = vshrl.u32 %v5954, 7
    %v5956 = vsub.s32 %v5953, %v5955
    %v5957 = vrot.slane %v5940, %v5956
    %v5959 = vunpack.c.l.s4 1983009808
    %v5960 = vunpack.c.0.s8 %v5959
    %v5961 = vlaneseq
    %v5962 = vshrl.u32 %v5961, 7
    %v5963 = vsub.s32 %v5960, %v5962
    %v5964 = vrot.slane %v5950, %v5963
    %v5965 = vcombine.high %v5957, %v5957
    %v5966 = vcombine.high %v5964, %v5964
    %v5967 = vcombine.high %v5945, %v5945
    %v5969 = vunpack.c.l.s4 1983009808
    %v5970 = vunpack.c.0.s8 %v5969
    %v5971 = vlaneseq
    %v5972 = vshrl.u32 %v5971, 7
    %v5973 = vsub.s32 %v5970, %v5972
    %v5974 = vrot.slane %v5945, %v5973
    %v5976 = vunpack.c.l.s4 1983009808
    %v5977 = vunpack.c.0.s8 %v5976
    %v5978 = vlaneseq
    %v5979 = vshrl.u32 %v5978, 7
    %v5980 = vsub.s32 %v5977, %v5979
    %v5981 = vrot.slane %v5967, %v5980
    %v5982 = vcombine.high %v5974, %v5974
    %v5983 = vcombine.high %v5981, %v5981
    %5992 = vst [vmem:[%s6] sm:$0x3] %v5957
    %5993 = vst [vmem:[%s6 + $0x2] sm:$0x3] %v5965
    %5994 = vst [vmem:[%s6 + $0x4] sm:$0x3] %v5964
    %5995 = vst [vmem:[%s6 + $0x6] sm:$0x3] %v5966
    %5996 = vst [vmem:[%s6 + $0x8] sm:$0x3] %v5974
    %5997 = vst [vmem:[%s6 + $0xa] sm:$0x3] %v5982
    %5998 = vst [vmem:[%s6 + $0xc] sm:$0x3] %v5981
    %5999 = vst [vmem:[%s6 + $0xe] sm:$0x3] %v5983
    // Predicated region
    $region26: #{rnn_base_forward.2} parent=1 // pred_check
      _
    $region27: #{rnn_base_forward.2} parent=1 // pred_check_branch
      %6001 = sbr.rel (0) target = $region29
    $region28: #{rnn_base_forward.2} parent=1 // pred_region
      _
    $region29: #{rnn_base_forward.2} parent=1 // pred_fallthru
      _
    // Predicated region
    $region30: #{rnn_base_forward.2} parent=1 // pred_check
      _
    $region31: #{rnn_base_forward.2} parent=1 // pred_check_branch
      %6003 = sbr.rel (0) target = $region33
    $region32: #{rnn_base_forward.2} parent=1 // pred_region
      _
    $region33: #{rnn_base_forward.2} parent=1 // pred_fallthru
      _

</llo_original>
